<compile_context>
chip_gen: v6e
topology: v6e:2x2x1
jax: 0.10.0
libtpu: 0.0.40
codegen_flags: <defaults>
</compile_context>

<pallas_src>
import functools
import math

import jax
import jax.numpy as jnp
from jax import lax
from jax.experimental import pallas as pl
from jax.experimental.pallas import tpu as pltpu


def _leaky(x):
    return jnp.where(x > 0, x, 0.2 * x)


# -----------------------------------------------------------------------------
# Fused kernel: one grid step = one batch element, whole (half-res) image on lanes.
# -----------------------------------------------------------------------------
def _fused_block_kernel(xpp_ref, iv_ref, jv_ref,
                        w1c_ref, w1xy_ref, b1_ref,
                        w2c_ref, w2xy_ref, b2_ref,
                        wp_ref, bp_ref,
                        out_ref,
                        *, Cin, P, H, W, n_pad, cdt):
    f32 = jnp.float32
    Hh, Wh = H // 2, W // 2
    iv = iv_ref[...]                       # (1, n_pad) f32: half-res row index i
    jv = jv_ref[...]                       # (1, n_pad) f32: half-res col index j
    sx = 2.0 / (H - 1)
    sy = 2.0 / (W - 1)

    # Preload the 4 input parity planes (Cin, n_pad); reused across taps.
    xpl = [xpp_ref[0, i] for i in range(4)]

    def shifted_access(u, v):
        """Parity / half-res shift / in-bounds mask / coord channels for an access of
        the full-res grid at (2*i + u, 2*j + v), expressed on the half-res lanes."""
        pu, pv = u % 2, v % 2
        du, dv = (u - pu) // 2, (v - pv) // 2
        cond = None
        if du < 0:
            cond = iv >= float(-du)
        if du > 0:
            c = iv <= float(Hh - 1 - du)
            cond = c if cond is None else (cond & c)
        if dv < 0:
            c = jv >= float(-dv)
            cond = c if cond is None else (cond & c)
        if dv > 0:
            c = jv <= float(Wh - 1 - dv)
            cond = c if cond is None else (cond & c)
        maskf = None if cond is None else jnp.where(cond, 1.0, 0.0)   # (1, n_pad) f32
        xx = (2.0 * iv + float(u)) * sx - 1.0     # AddCoords xx varies along H
        yy = (2.0 * jv + float(v)) * sy - 1.0     # AddCoords yy varies along W
        if maskf is not None:
            xx = xx * maskf
            yy = yy * maskf
        return pu * 2 + pv, du * Wh + dv, maskf, xx, yy

    def gather(plane, shift, maskf):
        if shift != 0:
            plane = pltpu.roll(plane, shift=(-shift) % n_pad, axis=1)
        if maskf is not None:
            plane = plane * maskf.astype(plane.dtype)
        return plane

    # ---------------- CoordConv1: 3x3 / stride 1 / pad 1 + LeakyReLU --------------
    b1 = b1_ref[...]
    y1 = [None] * 4
    for pa in (0, 1):
        for pb in (0, 1):
            acc = jnp.zeros((P, n_pad), f32) + b1
            for kh in range(3):
                for kw in range(3):
                    t = kh * 3 + kw
                    par, shift, maskf, xx, yy = shifted_access(pa + kh - 1,
                                                               pb + kw - 1)
                    xop = gather(xpl[par], shift, maskf)          # (Cin, n_pad)
                    acc = acc + jnp.dot(w1c_ref[t], xop,
                                        preferred_element_type=f32)
                    acc = acc + w1xy_ref[t, 0] * xx + w1xy_ref[t, 1] * yy
            y1[pa * 2 + pb] = _leaky(acc).astype(cdt)

    # ------------- CoordConv2: 3x3 / stride 2 / pad 1 + LeakyReLU -----------------
    acc2 = jnp.zeros((P, n_pad), f32) + b2_ref[...]
    for kh in range(3):
        for kw in range(3):
            t = kh * 3 + kw
            par, shift, maskf, xx, yy = shifted_access(kh - 1, kw - 1)
            yop = gather(y1[par], shift, maskf)                   # (P, n_pad)
            acc2 = acc2 + jnp.dot(w2c_ref[t], yop, preferred_element_type=f32)
            acc2 = acc2 + w2xy_ref[t, 0] * xx + w2xy_ref[t, 1] * yy
    y2 = _leaky(acc2)

    # ------------- residual 1x1 stride-2 projection (parity (0,0) of x) -----------
    x00 = xpl[0]
    proj = jnp.zeros((P, n_pad), f32) + bp_ref[...]
    if Cin >= 64:
        proj = proj + jnp.dot(wp_ref[...].astype(cdt), x00,
                              preferred_element_type=f32)
    else:
        # tiny-K projection on the VPU: avoids a wasted MXU push/pop per tile
        wpv = wp_ref[...]                                         # (P, Cin) f32
        for c in range(Cin):
            proj = proj + wpv[:, c:c + 1] * x00[c:c + 1, :].astype(f32)

    out_ref[0] = (y2 + proj).astype(out_ref.dtype)


# -----------------------------------------------------------------------------
# Wrapper: NCHW in / NCHW out, like the PyTorch module
# -----------------------------------------------------------------------------
def residual_cc_block(x_nchw, params, compute_dtype=jnp.bfloat16):
    B, Cin, H, W = x_nchw.shape
    P = params["w1"].shape[0]
    if H % 2 or W % 2 or H < 2 or W < 2:
        # TODO(synk): odd / degenerate spatial sizes need an extra boundary parity.
        raise NotImplementedError("fused Pallas path assumes even H, W >= 2")
    out_dtype = x_nchw.dtype
    cdt = compute_dtype
    f32 = jnp.float32

    Hh, Wh = H // 2, W // 2
    n = Hh * Wh
    n_pad = max(128, -(-n // 128) * 128)          # lane-dense (multiple of 128)

    # Polyphase (space-to-depth) split of x: 4 planes, same total bytes as x.
    xpp = jnp.stack([x_nchw[:, :, a::2, b::2].reshape(B, Cin, n)
                     for a in (0, 1) for b in (0, 1)], axis=1)     # (B, 4, Cin, n)
    xpp = jnp.pad(xpp, ((0, 0), (0, 0), (0, 0), (0, n_pad - n))).astype(cdt)

    pidx = jnp.arange(n_pad, dtype=jnp.int32)
    iv = (pidx // Wh).astype(f32).reshape(1, n_pad)
    jv = (pidx % Wh).astype(f32).reshape(1, n_pad)

    def split_w(w, cin):
        # (P, cin+2, 3, 3) -> per-tap conv part (9, P, cin) + coord part (9, 2, P, 1)
        wc = jnp.transpose(w[:, :cin], (2, 3, 0, 1)).reshape(9, P, cin).astype(cdt)
        wxy = jnp.transpose(w[:, cin:cin + 2], (2, 3, 1, 0)).reshape(9, 2, P, 1)
        return wc, wxy.astype(f32)

    w1c, w1xy = split_w(params["w1"], Cin)
    w2c, w2xy = split_w(params["w2"], P)
    b1 = params["b1"].astype(f32).reshape(P, 1)
    b2 = params["b2"].astype(f32).reshape(P, 1)
    wp = params["wp"].reshape(P, Cin).astype(f32)
    bp = params["bp"].astype(f32).reshape(P, 1)

    kernel = functools.partial(_fused_block_kernel, Cin=Cin, P=P, H=H, W=W,
                               n_pad=n_pad, cdt=cdt)

    # VMEM budget hint: double-buffered blocks + resident intermediates.
    # (v5e's default scoped limit is 16 MiB; cap at v7x's 64 MiB physical VMEM.)
    def nbytes(a):
        return math.prod(a.shape) * a.dtype.itemsize
    blk = (nbytes(xpp) // B + nbytes(iv) + nbytes(jv)
           + nbytes(w1c) + nbytes(w1xy) + nbytes(b1)
           + nbytes(w2c) + nbytes(w2xy) + nbytes(b2)
           + nbytes(wp) + nbytes(bp)
           + P * n_pad * jnp.dtype(out_dtype).itemsize)
    live = 4 * P * n_pad * jnp.dtype(cdt).itemsize + 6 * P * n_pad * 4
    vmem_limit = int(min(64 * 2 ** 20, max(32 * 2 ** 20, 2 * blk + live)))

    out = pl.pallas_call(
        kernel,
        out_shape=jax.ShapeDtypeStruct((B, P, n_pad), out_dtype),
        grid=(B,),
        in_specs=[
            pl.BlockSpec((1, 4, Cin, n_pad), lambda b: (b, 0, 0, 0)),
            pl.BlockSpec((1, n_pad), lambda b: (0, 0)),
            pl.BlockSpec((1, n_pad), lambda b: (0, 0)),
            pl.BlockSpec((9, P, Cin), lambda b: (0, 0, 0)),
            pl.BlockSpec((9, 2, P, 1), lambda b: (0, 0, 0, 0)),
            pl.BlockSpec((P, 1), lambda b: (0, 0)),
            pl.BlockSpec((9, P, P), lambda b: (0, 0, 0)),
            pl.BlockSpec((9, 2, P, 1), lambda b: (0, 0, 0, 0)),
            pl.BlockSpec((P, 1), lambda b: (0, 0)),
            pl.BlockSpec((P, Cin), lambda b: (0, 0)),
            pl.BlockSpec((P, 1), lambda b: (0, 0)),
        ],
        out_specs=pl.BlockSpec((1, P, n_pad), lambda b: (b, 0, 0)),
        compiler_params=pltpu.CompilerParams(
            dimension_semantics=("parallel",),
            vmem_limit_bytes=vmem_limit),
    )(xpp, iv, jv, w1c, w1xy, b1, w2c, w2xy, b2, wp, bp)

    return out[:, :, :n].reshape(B, P, Hh, Wh)


# -----------------------------------------------------------------------------
# Pure-JAX reference (mirrors the PyTorch module, NCHW, f32) for correctness
# -----------------------------------------------------------------------------
def _add_coords_nchw(x):
    B, C, H, W = x.shape
    xx = (jnp.arange(H, dtype=x.dtype) / (H - 1)) * 2 - 1
    yy = (jnp.arange(W, dtype=x.dtype) / (W - 1)) * 2 - 1
    xx_ch = jnp.broadcast_to(xx[None, None, :, None], (B, 1, H, W))
    yy_ch = jnp.broadcast_to(yy[None, None, None, :], (B, 1, H, W))
    return jnp.concatenate([x, xx_ch, yy_ch], axis=1)


def _conv_nchw(x, w, b, stride, padding):
    out = lax.conv_general_dilated(
        x, w, (stride, stride), ((padding, padding), (padding, padding)),
        dimension_numbers=("NCHW", "OIHW", "NCHW"),
        precision=lax.Precision.HIGHEST)
    return out + b[None, :, None, None]


def _ref_forward(x, params):
    h = _add_coords_nchw(x)
    h = _conv_nchw(h, params["w1"], params["b1"], 1, 1)
    h = _leaky(h)
    h = _add_coords_nchw(h)
    h = _conv_nchw(h, params["w2"], params["b2"], 2, 1)
    h = _leaky(h)
    identity = _conv_nchw(x, params["wp"], params["bp"], 2, 0)
    return h + identity


# -----------------------------------------------------------------------------
# Deterministic parameter init (kaiming-normal, a=0.2, fan_in, like the module)
# -----------------------------------------------------------------------------
def _init_params(key, inplanes, planes):
    C1, C2 = inplanes + 2, planes + 2
    ks = jax.random.split(key, 6)
    gain = math.sqrt(2.0 / (1.0 + 0.2 ** 2))

    fan1 = C1 * 9
    w1 = gain / math.sqrt(fan1) * jax.random.normal(ks[0], (planes, C1, 3, 3), jnp.float32)
    b1 = jax.random.uniform(ks[1], (planes,), jnp.float32,
                            -1.0 / math.sqrt(fan1), 1.0 / math.sqrt(fan1))
    fan2 = C2 * 9
    w2 = gain / math.sqrt(fan2) * jax.random.normal(ks[2], (planes, C2, 3, 3), jnp.float32)
    b2 = jax.random.uniform(ks[3], (planes,), jnp.float32,
                            -1.0 / math.sqrt(fan2), 1.0 / math.sqrt(fan2))
    fanp = inplanes
    wp = (1.0 / math.sqrt(fanp)) * jax.random.normal(ks[4], (planes, inplanes, 1, 1), jnp.float32)
    bp = jax.random.uniform(ks[5], (planes,), jnp.float32,
                            -1.0 / math.sqrt(fanp), 1.0 / math.sqrt(fanp))
    return {"w1": w1, "b1": b1, "w2": w2, "b2": b2, "wp": wp, "bp": bp}


if __name__ == "__main__":
    B, Cin, P, H, W = 2, 4, 32, 16, 16
    key = jax.random.PRNGKey(0)
    kx, kp = jax.random.split(key)
    x = jax.random.normal(kx, (B, Cin, H, W), jnp.float32)
    params = _init_params(kp, Cin, P)

    ref = _ref_forward(x, params)

    # Exact-semantics path (f32 end-to-end) — tight tolerance.
    f32_fn = jax.jit(functools.partial(residual_cc_block, compute_dtype=jnp.float32))
    out_f32 = f32_fn(x, params)
    jax.block_until_ready(out_f32)
    assert out_f32.shape == ref.shape == (B, P, H // 2, W // 2)
    err_f32 = float(jnp.max(jnp.abs(out_f32 - ref)))
    assert err_f32 < 1e-2, f"f32 path mismatch vs reference: {err_f32}"

    # Default fast path (bf16 MXU feeds, f32 accumulate/epilogue) — loose tolerance.
    fast_fn = jax.jit(residual_cc_block)
    out_bf16 = fast_fn(x, params)
    jax.block_until_ready(out_bf16)
    assert out_bf16.shape == ref.shape
    err_bf16 = float(jnp.max(jnp.abs(out_bf16.astype(jnp.float32) - ref)))
    assert err_bf16 < 2.5e-1, f"bf16 path mismatch vs reference: {err_bf16}"

    print("KERNEL_OK")
</pallas_src>

<mosaic_0001>
module attributes {stable_mosaic.version = 11 : i64} {
  func.func @_fused_block_kernel(%arg0: i32, %arg1: memref<1x4x4x128xf32, #tpu.memory_space<vmem>>, %arg2: memref<1x128xf32, #tpu.memory_space<vmem>>, %arg3: memref<1x128xf32, #tpu.memory_space<vmem>>, %arg4: memref<9x32x4xf32, #tpu.memory_space<vmem>>, %arg5: memref<9x2x32x1xf32, #tpu.memory_space<vmem>>, %arg6: memref<32x1xf32, #tpu.memory_space<vmem>>, %arg7: memref<9x32x32xf32, #tpu.memory_space<vmem>>, %arg8: memref<9x2x32x1xf32, #tpu.memory_space<vmem>>, %arg9: memref<32x1xf32, #tpu.memory_space<vmem>>, %arg10: memref<32x4xf32, #tpu.memory_space<vmem>>, %arg11: memref<32x1xf32, #tpu.memory_space<vmem>>, %arg12: memref<1x32x128xf32, #tpu.memory_space<vmem>>) attributes {dimension_semantics = [#tpu.dimension_semantics<parallel>], iteration_bounds = array<i64: 2>, scalar_prefetch = 0 : i64, scratch_operands = 0 : i64, tpu.core_type = #tpu.core_type<tc>, window_params = [{transform_indices = @transform_0, window_bounds = array<i64: 1, 4, 4, 128>}, {pipeline_mode = #tpu.pipeline_mode<synchronous>, transform_indices = @transform_1, window_bounds = array<i64: 1, 128>}, {pipeline_mode = #tpu.pipeline_mode<synchronous>, transform_indices = @transform_2, window_bounds = array<i64: 1, 128>}, {pipeline_mode = #tpu.pipeline_mode<synchronous>, transform_indices = @transform_3, window_bounds = array<i64: 9, 32, 4>}, {pipeline_mode = #tpu.pipeline_mode<synchronous>, transform_indices = @transform_4, window_bounds = array<i64: 9, 2, 32, 1>}, {pipeline_mode = #tpu.pipeline_mode<synchronous>, transform_indices = @transform_5, window_bounds = array<i64: 32, 1>}, {pipeline_mode = #tpu.pipeline_mode<synchronous>, transform_indices = @transform_6, window_bounds = array<i64: 9, 32, 32>}, {pipeline_mode = #tpu.pipeline_mode<synchronous>, transform_indices = @transform_7, window_bounds = array<i64: 9, 2, 32, 1>}, {pipeline_mode = #tpu.pipeline_mode<synchronous>, transform_indices = @transform_8, window_bounds = array<i64: 32, 1>}, {pipeline_mode = #tpu.pipeline_mode<synchronous>, transform_indices = @transform_9, window_bounds = array<i64: 32, 4>}, {pipeline_mode = #tpu.pipeline_mode<synchronous>, transform_indices = @transform_10, window_bounds = array<i64: 32, 1>}, {transform_indices = @transform_11, window_bounds = array<i64: 1, 32, 128>}]} {
    %c0 = arith.constant 0 : index
    %c0_0 = arith.constant 0 : index
    %0 = vector.load %arg2[%c0, %c0_0] : memref<1x128xf32, #tpu.memory_space<vmem>>, vector<1x128xf32>
    %c0_1 = arith.constant 0 : index
    %c0_2 = arith.constant 0 : index
    %1 = vector.load %arg3[%c0_1, %c0_2] : memref<1x128xf32, #tpu.memory_space<vmem>>, vector<1x128xf32>
    %c0_3 = arith.constant 0 : index
    %c0_4 = arith.constant 0 : index
    %c0_5 = arith.constant 0 : index
    %c0_6 = arith.constant 0 : index
    %2 = vector.load %arg1[%c0_3, %c0_4, %c0_5, %c0_6] : memref<1x4x4x128xf32, #tpu.memory_space<vmem>>, vector<1x1x4x128xf32>
    %3 = vector.shape_cast %2 : vector<1x1x4x128xf32> to vector<4x128xf32>
    %c0_7 = arith.constant 0 : index
    %c1 = arith.constant 1 : index
    %c0_8 = arith.constant 0 : index
    %c0_9 = arith.constant 0 : index
    %4 = vector.load %arg1[%c0_7, %c1, %c0_8, %c0_9] : memref<1x4x4x128xf32, #tpu.memory_space<vmem>>, vector<1x1x4x128xf32>
    %5 = vector.shape_cast %4 : vector<1x1x4x128xf32> to vector<4x128xf32>
    %c0_10 = arith.constant 0 : index
    %c2 = arith.constant 2 : index
    %c0_11 = arith.constant 0 : index
    %c0_12 = arith.constant 0 : index
    %6 = vector.load %arg1[%c0_10, %c2, %c0_11, %c0_12] : memref<1x4x4x128xf32, #tpu.memory_space<vmem>>, vector<1x1x4x128xf32>
    %7 = vector.shape_cast %6 : vector<1x1x4x128xf32> to vector<4x128xf32>
    %c0_13 = arith.constant 0 : index
    %c3 = arith.constant 3 : index
    %c0_14 = arith.constant 0 : index
    %c0_15 = arith.constant 0 : index
    %8 = vector.load %arg1[%c0_13, %c3, %c0_14, %c0_15] : memref<1x4x4x128xf32, #tpu.memory_space<vmem>>, vector<1x1x4x128xf32>
    %9 = vector.shape_cast %8 : vector<1x1x4x128xf32> to vector<4x128xf32>
    %c0_16 = arith.constant 0 : index
    %c0_17 = arith.constant 0 : index
    %10 = vector.load %arg6[%c0_16, %c0_17] : memref<32x1xf32, #tpu.memory_space<vmem>>, vector<32x1xf32>
    %cst = arith.constant 0.000000e+00 : f32
    %11 = vector.broadcast %cst : f32 to vector<32x128xf32>
    %12 = vector.broadcast %10 : vector<32x1xf32> to vector<32x128xf32>
    %13 = arith.addf %11, %12 : vector<32x128xf32>
    %cst_18 = arith.constant 1.000000e+00 : f32
    %14 = vector.broadcast %cst_18 : f32 to vector<1x128xf32>
    %15 = arith.cmpf oge, %0, %14 : vector<1x128xf32>
    %cst_19 = arith.constant 1.000000e+00 : f32
    %16 = vector.broadcast %cst_19 : f32 to vector<1x128xf32>
    %17 = arith.cmpf oge, %1, %16 : vector<1x128xf32>
    %18 = arith.andi %15, %17 : vector<1x128xi1>
    %cst_20 = arith.constant 1.000000e+00 : f32
    %cst_21 = arith.constant 0.000000e+00 : f32
    %19 = vector.broadcast %cst_20 : f32 to vector<1x128xf32>
    %20 = vector.broadcast %cst_21 : f32 to vector<1x128xf32>
    %21 = arith.select %18, %19, %20 : vector<1x128xi1>, vector<1x128xf32>
    %cst_22 = arith.constant 2.000000e+00 : f32
    %22 = vector.broadcast %cst_22 : f32 to vector<1x128xf32>
    %23 = arith.mulf %22, %0 : vector<1x128xf32>
    %cst_23 = arith.constant -1.000000e+00 : f32
    %24 = vector.broadcast %cst_23 : f32 to vector<1x128xf32>
    %25 = arith.addf %23, %24 : vector<1x128xf32>
    %cst_24 = arith.constant 0.13333334 : f32
    %26 = vector.broadcast %cst_24 : f32 to vector<1x128xf32>
    %27 = arith.mulf %25, %26 : vector<1x128xf32>
    %cst_25 = arith.constant 1.000000e+00 : f32
    %28 = vector.broadcast %cst_25 : f32 to vector<1x128xf32>
    %29 = arith.subf %27, %28 : vector<1x128xf32>
    %cst_26 = arith.constant 2.000000e+00 : f32
    %30 = vector.broadcast %cst_26 : f32 to vector<1x128xf32>
    %31 = arith.mulf %30, %1 : vector<1x128xf32>
    %cst_27 = arith.constant -1.000000e+00 : f32
    %32 = vector.broadcast %cst_27 : f32 to vector<1x128xf32>
    %33 = arith.addf %31, %32 : vector<1x128xf32>
    %cst_28 = arith.constant 0.13333334 : f32
    %34 = vector.broadcast %cst_28 : f32 to vector<1x128xf32>
    %35 = arith.mulf %33, %34 : vector<1x128xf32>
    %cst_29 = arith.constant 1.000000e+00 : f32
    %36 = vector.broadcast %cst_29 : f32 to vector<1x128xf32>
    %37 = arith.subf %35, %36 : vector<1x128xf32>
    %38 = arith.mulf %29, %21 : vector<1x128xf32>
    %39 = arith.mulf %37, %21 : vector<1x128xf32>
    %c9_i32 = arith.constant 9 : i32
    %40 = tpu.dynamic_rotate %9 by %c9_i32 dim 1 : vector<4x128xf32>, i32 -> vector<4x128xf32>
    %41 = vector.broadcast %21 : vector<1x128xf32> to vector<4x128xf32>
    %42 = arith.mulf %40, %41 : vector<4x128xf32>
    %c0_30 = arith.constant 0 : index
    %c0_31 = arith.constant 0 : index
    %c0_32 = arith.constant 0 : index
    %43 = vector.load %arg4[%c0_30, %c0_31, %c0_32] : memref<9x32x4xf32, #tpu.memory_space<vmem>>, vector<1x32x4xf32>
    %44 = vector.shape_cast %43 : vector<1x32x4xf32> to vector<32x4xf32>
    %cst_33 = arith.constant dense<0.000000e+00> : vector<32x128xf32>
    %45 = tpu.matmul %44, %42, %cst_33 {dimension_numbers = #tpu.dot_dimension_numbers<[1], [0], [0], [1], [0, 0, 1, 1], [], []>} : vector<32x4xf32>, vector<4x128xf32>, vector<32x128xf32> -> vector<32x128xf32>
    %46 = arith.addf %13, %45 : vector<32x128xf32>
    %c0_34 = arith.constant 0 : index
    %c0_35 = arith.constant 0 : index
    %c0_36 = arith.constant 0 : index
    %c0_37 = arith.constant 0 : index
    %47 = vector.load %arg5[%c0_34, %c0_35, %c0_36, %c0_37] : memref<9x2x32x1xf32, #tpu.memory_space<vmem>>, vector<1x1x32x1xf32>
    %48 = vector.shape_cast %47 : vector<1x1x32x1xf32> to vector<32x1xf32>
    %49 = vector.broadcast %48 : vector<32x1xf32> to vector<32x128xf32>
    %50 = vector.broadcast %38 : vector<1x128xf32> to vector<32x128xf32>
    %51 = arith.mulf %49, %50 : vector<32x128xf32>
    %52 = arith.addf %46, %51 : vector<32x128xf32>
    %c0_38 = arith.constant 0 : index
    %c1_39 = arith.constant 1 : index
    %c0_40 = arith.constant 0 : index
    %c0_41 = arith.constant 0 : index
    %53 = vector.load %arg5[%c0_38, %c1_39, %c0_40, %c0_41] : memref<9x2x32x1xf32, #tpu.memory_space<vmem>>, vector<1x1x32x1xf32>
    %54 = vector.shape_cast %53 : vector<1x1x32x1xf32> to vector<32x1xf32>
    %55 = vector.broadcast %54 : vector<32x1xf32> to vector<32x128xf32>
    %56 = vector.broadcast %39 : vector<1x128xf32> to vector<32x128xf32>
    %57 = arith.mulf %55, %56 : vector<32x128xf32>
    %58 = arith.addf %52, %57 : vector<32x128xf32>
    %cst_42 = arith.constant 1.000000e+00 : f32
    %59 = vector.broadcast %cst_42 : f32 to vector<1x128xf32>
    %60 = arith.cmpf oge, %0, %59 : vector<1x128xf32>
    %cst_43 = arith.constant 1.000000e+00 : f32
    %cst_44 = arith.constant 0.000000e+00 : f32
    %61 = vector.broadcast %cst_43 : f32 to vector<1x128xf32>
    %62 = vector.broadcast %cst_44 : f32 to vector<1x128xf32>
    %63 = arith.select %60, %61, %62 : vector<1x128xi1>, vector<1x128xf32>
    %cst_45 = arith.constant 2.000000e+00 : f32
    %64 = vector.broadcast %cst_45 : f32 to vector<1x128xf32>
    %65 = arith.mulf %64, %0 : vector<1x128xf32>
    %cst_46 = arith.constant -1.000000e+00 : f32
    %66 = vector.broadcast %cst_46 : f32 to vector<1x128xf32>
    %67 = arith.addf %65, %66 : vector<1x128xf32>
    %cst_47 = arith.constant 0.13333334 : f32
    %68 = vector.broadcast %cst_47 : f32 to vector<1x128xf32>
    %69 = arith.mulf %67, %68 : vector<1x128xf32>
    %cst_48 = arith.constant 1.000000e+00 : f32
    %70 = vector.broadcast %cst_48 : f32 to vector<1x128xf32>
    %71 = arith.subf %69, %70 : vector<1x128xf32>
    %cst_49 = arith.constant 2.000000e+00 : f32
    %72 = vector.broadcast %cst_49 : f32 to vector<1x128xf32>
    %73 = arith.mulf %72, %1 : vector<1x128xf32>
    %cst_50 = arith.constant 0.000000e+00 : f32
    %74 = vector.broadcast %cst_50 : f32 to vector<1x128xf32>
    %75 = arith.addf %73, %74 : vector<1x128xf32>
    %cst_51 = arith.constant 0.13333334 : f32
    %76 = vector.broadcast %cst_51 : f32 to vector<1x128xf32>
    %77 = arith.mulf %75, %76 : vector<1x128xf32>
    %cst_52 = arith.constant 1.000000e+00 : f32
    %78 = vector.broadcast %cst_52 : f32 to vector<1x128xf32>
    %79 = arith.subf %77, %78 : vector<1x128xf32>
    %80 = arith.mulf %71, %63 : vector<1x128xf32>
    %81 = arith.mulf %79, %63 : vector<1x128xf32>
    %c8_i32 = arith.constant 8 : i32
    %82 = tpu.dynamic_rotate %7 by %c8_i32 dim 1 : vector<4x128xf32>, i32 -> vector<4x128xf32>
    %83 = vector.broadcast %63 : vector<1x128xf32> to vector<4x128xf32>
    %84 = arith.mulf %82, %83 : vector<4x128xf32>
    %c1_53 = arith.constant 1 : index
    %c0_54 = arith.constant 0 : index
    %c0_55 = arith.constant 0 : index
    %85 = vector.load %arg4[%c1_53, %c0_54, %c0_55] : memref<9x32x4xf32, #tpu.memory_space<vmem>>, vector<1x32x4xf32>
    %86 = vector.shape_cast %85 : vector<1x32x4xf32> to vector<32x4xf32>
    %cst_56 = arith.constant dense<0.000000e+00> : vector<32x128xf32>
    %87 = tpu.matmul %86, %84, %cst_56 {dimension_numbers = #tpu.dot_dimension_numbers<[1], [0], [0], [1], [0, 0, 1, 1], [], []>} : vector<32x4xf32>, vector<4x128xf32>, vector<32x128xf32> -> vector<32x128xf32>
    %88 = arith.addf %58, %87 : vector<32x128xf32>
    %c1_57 = arith.constant 1 : index
    %c0_58 = arith.constant 0 : index
    %c0_59 = arith.constant 0 : index
    %c0_60 = arith.constant 0 : index
    %89 = vector.load %arg5[%c1_57, %c0_58, %c0_59, %c0_60] : memref<9x2x32x1xf32, #tpu.memory_space<vmem>>, vector<1x1x32x1xf32>
    %90 = vector.shape_cast %89 : vector<1x1x32x1xf32> to vector<32x1xf32>
    %91 = vector.broadcast %90 : vector<32x1xf32> to vector<32x128xf32>
    %92 = vector.broadcast %80 : vector<1x128xf32> to vector<32x128xf32>
    %93 = arith.mulf %91, %92 : vector<32x128xf32>
    %94 = arith.addf %88, %93 : vector<32x128xf32>
    %c1_61 = arith.constant 1 : index
    %c1_62 = arith.constant 1 : index
    %c0_63 = arith.constant 0 : index
    %c0_64 = arith.constant 0 : index
    %95 = vector.load %arg5[%c1_61, %c1_62, %c0_63, %c0_64] : memref<9x2x32x1xf32, #tpu.memory_space<vmem>>, vector<1x1x32x1xf32>
    %96 = vector.shape_cast %95 : vector<1x1x32x1xf32> to vector<32x1xf32>
    %97 = vector.broadcast %96 : vector<32x1xf32> to vector<32x128xf32>
    %98 = vector.broadcast %81 : vector<1x128xf32> to vector<32x128xf32>
    %99 = arith.mulf %97, %98 : vector<32x128xf32>
    %100 = arith.addf %94, %99 : vector<32x128xf32>
    %cst_65 = arith.constant 1.000000e+00 : f32
    %101 = vector.broadcast %cst_65 : f32 to vector<1x128xf32>
    %102 = arith.cmpf oge, %0, %101 : vector<1x128xf32>
    %cst_66 = arith.constant 1.000000e+00 : f32
    %cst_67 = arith.constant 0.000000e+00 : f32
    %103 = vector.broadcast %cst_66 : f32 to vector<1x128xf32>
    %104 = vector.broadcast %cst_67 : f32 to vector<1x128xf32>
    %105 = arith.select %102, %103, %104 : vector<1x128xi1>, vector<1x128xf32>
    %cst_68 = arith.constant 2.000000e+00 : f32
    %106 = vector.broadcast %cst_68 : f32 to vector<1x128xf32>
    %107 = arith.mulf %106, %0 : vector<1x128xf32>
    %cst_69 = arith.constant -1.000000e+00 : f32
    %108 = vector.broadcast %cst_69 : f32 to vector<1x128xf32>
    %109 = arith.addf %107, %108 : vector<1x128xf32>
    %cst_70 = arith.constant 0.13333334 : f32
    %110 = vector.broadcast %cst_70 : f32 to vector<1x128xf32>
    %111 = arith.mulf %109, %110 : vector<1x128xf32>
    %cst_71 = arith.constant 1.000000e+00 : f32
    %112 = vector.broadcast %cst_71 : f32 to vector<1x128xf32>
    %113 = arith.subf %111, %112 : vector<1x128xf32>
    %cst_72 = arith.constant 2.000000e+00 : f32
    %114 = vector.broadcast %cst_72 : f32 to vector<1x128xf32>
    %115 = arith.mulf %114, %1 : vector<1x128xf32>
    %cst_73 = arith.constant 1.000000e+00 : f32
    %116 = vector.broadcast %cst_73 : f32 to vector<1x128xf32>
    %117 = arith.addf %115, %116 : vector<1x128xf32>
    %cst_74 = arith.constant 0.13333334 : f32
    %118 = vector.broadcast %cst_74 : f32 to vector<1x128xf32>
    %119 = arith.mulf %117, %118 : vector<1x128xf32>
    %cst_75 = arith.constant 1.000000e+00 : f32
    %120 = vector.broadcast %cst_75 : f32 to vector<1x128xf32>
    %121 = arith.subf %119, %120 : vector<1x128xf32>
    %122 = arith.mulf %113, %105 : vector<1x128xf32>
    %123 = arith.mulf %121, %105 : vector<1x128xf32>
    %c8_i32_76 = arith.constant 8 : i32
    %124 = tpu.dynamic_rotate %9 by %c8_i32_76 dim 1 : vector<4x128xf32>, i32 -> vector<4x128xf32>
    %125 = vector.broadcast %105 : vector<1x128xf32> to vector<4x128xf32>
    %126 = arith.mulf %124, %125 : vector<4x128xf32>
    %c2_77 = arith.constant 2 : index
    %c0_78 = arith.constant 0 : index
    %c0_79 = arith.constant 0 : index
    %127 = vector.load %arg4[%c2_77, %c0_78, %c0_79] : memref<9x32x4xf32, #tpu.memory_space<vmem>>, vector<1x32x4xf32>
    %128 = vector.shape_cast %127 : vector<1x32x4xf32> to vector<32x4xf32>
    %cst_80 = arith.constant dense<0.000000e+00> : vector<32x128xf32>
    %129 = tpu.matmul %128, %126, %cst_80 {dimension_numbers = #tpu.dot_dimension_numbers<[1], [0], [0], [1], [0, 0, 1, 1], [], []>} : vector<32x4xf32>, vector<4x128xf32>, vector<32x128xf32> -> vector<32x128xf32>
    %130 = arith.addf %100, %129 : vector<32x128xf32>
    %c2_81 = arith.constant 2 : index
    %c0_82 = arith.constant 0 : index
    %c0_83 = arith.constant 0 : index
    %c0_84 = arith.constant 0 : index
    %131 = vector.load %arg5[%c2_81, %c0_82, %c0_83, %c0_84] : memref<9x2x32x1xf32, #tpu.memory_space<vmem>>, vector<1x1x32x1xf32>
    %132 = vector.shape_cast %131 : vector<1x1x32x1xf32> to vector<32x1xf32>
    %133 = vector.broadcast %132 : vector<32x1xf32> to vector<32x128xf32>
    %134 = vector.broadcast %122 : vector<1x128xf32> to vector<32x128xf32>
    %135 = arith.mulf %133, %134 : vector<32x128xf32>
    %136 = arith.addf %130, %135 : vector<32x128xf32>
    %c2_85 = arith.constant 2 : index
    %c1_86 = arith.constant 1 : index
    %c0_87 = arith.constant 0 : index
    %c0_88 = arith.constant 0 : index
    %137 = vector.load %arg5[%c2_85, %c1_86, %c0_87, %c0_88] : memref<9x2x32x1xf32, #tpu.memory_space<vmem>>, vector<1x1x32x1xf32>
    %138 = vector.shape_cast %137 : vector<1x1x32x1xf32> to vector<32x1xf32>
    %139 = vector.broadcast %138 : vector<32x1xf32> to vector<32x128xf32>
    %140 = vector.broadcast %123 : vector<1x128xf32> to vector<32x128xf32>
    %141 = arith.mulf %139, %140 : vector<32x128xf32>
    %142 = arith.addf %136, %141 : vector<32x128xf32>
    %cst_89 = arith.constant 1.000000e+00 : f32
    %143 = vector.broadcast %cst_89 : f32 to vector<1x128xf32>
    %144 = arith.cmpf oge, %1, %143 : vector<1x128xf32>
    %cst_90 = arith.constant 1.000000e+00 : f32
    %cst_91 = arith.constant 0.000000e+00 : f32
    %145 = vector.broadcast %cst_90 : f32 to vector<1x128xf32>
    %146 = vector.broadcast %cst_91 : f32 to vector<1x128xf32>
    %147 = arith.select %144, %145, %146 : vector<1x128xi1>, vector<1x128xf32>
    %cst_92 = arith.constant 2.000000e+00 : f32
    %148 = vector.broadcast %cst_92 : f32 to vector<1x128xf32>
    %149 = arith.mulf %148, %0 : vector<1x128xf32>
    %cst_93 = arith.constant 0.000000e+00 : f32
    %150 = vector.broadcast %cst_93 : f32 to vector<1x128xf32>
    %151 = arith.addf %149, %150 : vector<1x128xf32>
    %cst_94 = arith.constant 0.13333334 : f32
    %152 = vector.broadcast %cst_94 : f32 to vector<1x128xf32>
    %153 = arith.mulf %151, %152 : vector<1x128xf32>
    %cst_95 = arith.constant 1.000000e+00 : f32
    %154 = vector.broadcast %cst_95 : f32 to vector<1x128xf32>
    %155 = arith.subf %153, %154 : vector<1x128xf32>
    %cst_96 = arith.constant 2.000000e+00 : f32
    %156 = vector.broadcast %cst_96 : f32 to vector<1x128xf32>
    %157 = arith.mulf %156, %1 : vector<1x128xf32>
    %cst_97 = arith.constant -1.000000e+00 : f32
    %158 = vector.broadcast %cst_97 : f32 to vector<1x128xf32>
    %159 = arith.addf %157, %158 : vector<1x128xf32>
    %cst_98 = arith.constant 0.13333334 : f32
    %160 = vector.broadcast %cst_98 : f32 to vector<1x128xf32>
    %161 = arith.mulf %159, %160 : vector<1x128xf32>
    %cst_99 = arith.constant 1.000000e+00 : f32
    %162 = vector.broadcast %cst_99 : f32 to vector<1x128xf32>
    %163 = arith.subf %161, %162 : vector<1x128xf32>
    %164 = arith.mulf %155, %147 : vector<1x128xf32>
    %165 = arith.mulf %163, %147 : vector<1x128xf32>
    %c1_i32 = arith.constant 1 : i32
    %166 = tpu.dynamic_rotate %5 by %c1_i32 dim 1 : vector<4x128xf32>, i32 -> vector<4x128xf32>
    %167 = vector.broadcast %147 : vector<1x128xf32> to vector<4x128xf32>
    %168 = arith.mulf %166, %167 : vector<4x128xf32>
    %c3_100 = arith.constant 3 : index
    %c0_101 = arith.constant 0 : index
    %c0_102 = arith.constant 0 : index
    %169 = vector.load %arg4[%c3_100, %c0_101, %c0_102] : memref<9x32x4xf32, #tpu.memory_space<vmem>>, vector<1x32x4xf32>
    %170 = vector.shape_cast %169 : vector<1x32x4xf32> to vector<32x4xf32>
    %cst_103 = arith.constant dense<0.000000e+00> : vector<32x128xf32>
    %171 = tpu.matmul %170, %168, %cst_103 {dimension_numbers = #tpu.dot_dimension_numbers<[1], [0], [0], [1], [0, 0, 1, 1], [], []>} : vector<32x4xf32>, vector<4x128xf32>, vector<32x128xf32> -> vector<32x128xf32>
    %172 = arith.addf %142, %171 : vector<32x128xf32>
    %c3_104 = arith.constant 3 : index
    %c0_105 = arith.constant 0 : index
    %c0_106 = arith.constant 0 : index
    %c0_107 = arith.constant 0 : index
    %173 = vector.load %arg5[%c3_104, %c0_105, %c0_106, %c0_107] : memref<9x2x32x1xf32, #tpu.memory_space<vmem>>, vector<1x1x32x1xf32>
    %174 = vector.shape_cast %173 : vector<1x1x32x1xf32> to vector<32x1xf32>
    %175 = vector.broadcast %174 : vector<32x1xf32> to vector<32x128xf32>
    %176 = vector.broadcast %164 : vector<1x128xf32> to vector<32x128xf32>
    %177 = arith.mulf %175, %176 : vector<32x128xf32>
    %178 = arith.addf %172, %177 : vector<32x128xf32>
    %c3_108 = arith.constant 3 : index
    %c1_109 = arith.constant 1 : index
    %c0_110 = arith.constant 0 : index
    %c0_111 = arith.constant 0 : index
    %179 = vector.load %arg5[%c3_108, %c1_109, %c0_110, %c0_111] : memref<9x2x32x1xf32, #tpu.memory_space<vmem>>, vector<1x1x32x1xf32>
    %180 = vector.shape_cast %179 : vector<1x1x32x1xf32> to vector<32x1xf32>
    %181 = vector.broadcast %180 : vector<32x1xf32> to vector<32x128xf32>
    %182 = vector.broadcast %165 : vector<1x128xf32> to vector<32x128xf32>
    %183 = arith.mulf %181, %182 : vector<32x128xf32>
    %184 = arith.addf %178, %183 : vector<32x128xf32>
    %cst_112 = arith.constant 2.000000e+00 : f32
    %185 = vector.broadcast %cst_112 : f32 to vector<1x128xf32>
    %186 = arith.mulf %185, %0 : vector<1x128xf32>
    %cst_113 = arith.constant 0.000000e+00 : f32
    %187 = vector.broadcast %cst_113 : f32 to vector<1x128xf32>
    %188 = arith.addf %186, %187 : vector<1x128xf32>
    %cst_114 = arith.constant 0.13333334 : f32
    %189 = vector.broadcast %cst_114 : f32 to vector<1x128xf32>
    %190 = arith.mulf %188, %189 : vector<1x128xf32>
    %cst_115 = arith.constant 1.000000e+00 : f32
    %191 = vector.broadcast %cst_115 : f32 to vector<1x128xf32>
    %192 = arith.subf %190, %191 : vector<1x128xf32>
    %cst_116 = arith.constant 2.000000e+00 : f32
    %193 = vector.broadcast %cst_116 : f32 to vector<1x128xf32>
    %194 = arith.mulf %193, %1 : vector<1x128xf32>
    %cst_117 = arith.constant 0.000000e+00 : f32
    %195 = vector.broadcast %cst_117 : f32 to vector<1x128xf32>
    %196 = arith.addf %194, %195 : vector<1x128xf32>
    %cst_118 = arith.constant 0.13333334 : f32
    %197 = vector.broadcast %cst_118 : f32 to vector<1x128xf32>
    %198 = arith.mulf %196, %197 : vector<1x128xf32>
    %cst_119 = arith.constant 1.000000e+00 : f32
    %199 = vector.broadcast %cst_119 : f32 to vector<1x128xf32>
    %200 = arith.subf %198, %199 : vector<1x128xf32>
    %c4 = arith.constant 4 : index
    %c0_120 = arith.constant 0 : index
    %c0_121 = arith.constant 0 : index
    %201 = vector.load %arg4[%c4, %c0_120, %c0_121] : memref<9x32x4xf32, #tpu.memory_space<vmem>>, vector<1x32x4xf32>
    %202 = vector.shape_cast %201 : vector<1x32x4xf32> to vector<32x4xf32>
    %cst_122 = arith.constant dense<0.000000e+00> : vector<32x128xf32>
    %203 = tpu.matmul %202, %3, %cst_122 {dimension_numbers = #tpu.dot_dimension_numbers<[1], [0], [0], [1], [0, 0, 1, 1], [], []>} : vector<32x4xf32>, vector<4x128xf32>, vector<32x128xf32> -> vector<32x128xf32>
    %204 = arith.addf %184, %203 : vector<32x128xf32>
    %c4_123 = arith.constant 4 : index
    %c0_124 = arith.constant 0 : index
    %c0_125 = arith.constant 0 : index
    %c0_126 = arith.constant 0 : index
    %205 = vector.load %arg5[%c4_123, %c0_124, %c0_125, %c0_126] : memref<9x2x32x1xf32, #tpu.memory_space<vmem>>, vector<1x1x32x1xf32>
    %206 = vector.shape_cast %205 : vector<1x1x32x1xf32> to vector<32x1xf32>
    %207 = vector.broadcast %206 : vector<32x1xf32> to vector<32x128xf32>
    %208 = vector.broadcast %192 : vector<1x128xf32> to vector<32x128xf32>
    %209 = arith.mulf %207, %208 : vector<32x128xf32>
    %210 = arith.addf %204, %209 : vector<32x128xf32>
    %c4_127 = arith.constant 4 : index
    %c1_128 = arith.constant 1 : index
    %c0_129 = arith.constant 0 : index
    %c0_130 = arith.constant 0 : index
    %211 = vector.load %arg5[%c4_127, %c1_128, %c0_129, %c0_130] : memref<9x2x32x1xf32, #tpu.memory_space<vmem>>, vector<1x1x32x1xf32>
    %212 = vector.shape_cast %211 : vector<1x1x32x1xf32> to vector<32x1xf32>
    %213 = vector.broadcast %212 : vector<32x1xf32> to vector<32x128xf32>
    %214 = vector.broadcast %200 : vector<1x128xf32> to vector<32x128xf32>
    %215 = arith.mulf %213, %214 : vector<32x128xf32>
    %216 = arith.addf %210, %215 : vector<32x128xf32>
    %cst_131 = arith.constant 2.000000e+00 : f32
    %217 = vector.broadcast %cst_131 : f32 to vector<1x128xf32>
    %218 = arith.mulf %217, %0 : vector<1x128xf32>
    %cst_132 = arith.constant 0.000000e+00 : f32
    %219 = vector.broadcast %cst_132 : f32 to vector<1x128xf32>
    %220 = arith.addf %218, %219 : vector<1x128xf32>
    %cst_133 = arith.constant 0.13333334 : f32
    %221 = vector.broadcast %cst_133 : f32 to vector<1x128xf32>
    %222 = arith.mulf %220, %221 : vector<1x128xf32>
    %cst_134 = arith.constant 1.000000e+00 : f32
    %223 = vector.broadcast %cst_134 : f32 to vector<1x128xf32>
    %224 = arith.subf %222, %223 : vector<1x128xf32>
    %cst_135 = arith.constant 2.000000e+00 : f32
    %225 = vector.broadcast %cst_135 : f32 to vector<1x128xf32>
    %226 = arith.mulf %225, %1 : vector<1x128xf32>
    %cst_136 = arith.constant 1.000000e+00 : f32
    %227 = vector.broadcast %cst_136 : f32 to vector<1x128xf32>
    %228 = arith.addf %226, %227 : vector<1x128xf32>
    %cst_137 = arith.constant 0.13333334 : f32
    %229 = vector.broadcast %cst_137 : f32 to vector<1x128xf32>
    %230 = arith.mulf %228, %229 : vector<1x128xf32>
    %cst_138 = arith.constant 1.000000e+00 : f32
    %231 = vector.broadcast %cst_138 : f32 to vector<1x128xf32>
    %232 = arith.subf %230, %231 : vector<1x128xf32>
    %c5 = arith.constant 5 : index
    %c0_139 = arith.constant 0 : index
    %c0_140 = arith.constant 0 : index
    %233 = vector.load %arg4[%c5, %c0_139, %c0_140] : memref<9x32x4xf32, #tpu.memory_space<vmem>>, vector<1x32x4xf32>
    %234 = vector.shape_cast %233 : vector<1x32x4xf32> to vector<32x4xf32>
    %cst_141 = arith.constant dense<0.000000e+00> : vector<32x128xf32>
    %235 = tpu.matmul %234, %5, %cst_141 {dimension_numbers = #tpu.dot_dimension_numbers<[1], [0], [0], [1], [0, 0, 1, 1], [], []>} : vector<32x4xf32>, vector<4x128xf32>, vector<32x128xf32> -> vector<32x128xf32>
    %236 = arith.addf %216, %235 : vector<32x128xf32>
    %c5_142 = arith.constant 5 : index
    %c0_143 = arith.constant 0 : index
    %c0_144 = arith.constant 0 : index
    %c0_145 = arith.constant 0 : index
    %237 = vector.load %arg5[%c5_142, %c0_143, %c0_144, %c0_145] : memref<9x2x32x1xf32, #tpu.memory_space<vmem>>, vector<1x1x32x1xf32>
    %238 = vector.shape_cast %237 : vector<1x1x32x1xf32> to vector<32x1xf32>
    %239 = vector.broadcast %238 : vector<32x1xf32> to vector<32x128xf32>
    %240 = vector.broadcast %224 : vector<1x128xf32> to vector<32x128xf32>
    %241 = arith.mulf %239, %240 : vector<32x128xf32>
    %242 = arith.addf %236, %241 : vector<32x128xf32>
    %c5_146 = arith.constant 5 : index
    %c1_147 = arith.constant 1 : index
    %c0_148 = arith.constant 0 : index
    %c0_149 = arith.constant 0 : index
    %243 = vector.load %arg5[%c5_146, %c1_147, %c0_148, %c0_149] : memref<9x2x32x1xf32, #tpu.memory_space<vmem>>, vector<1x1x32x1xf32>
    %244 = vector.shape_cast %243 : vector<1x1x32x1xf32> to vector<32x1xf32>
    %245 = vector.broadcast %244 : vector<32x1xf32> to vector<32x128xf32>
    %246 = vector.broadcast %232 : vector<1x128xf32> to vector<32x128xf32>
    %247 = arith.mulf %245, %246 : vector<32x128xf32>
    %248 = arith.addf %242, %247 : vector<32x128xf32>
    %cst_150 = arith.constant 1.000000e+00 : f32
    %249 = vector.broadcast %cst_150 : f32 to vector<1x128xf32>
    %250 = arith.cmpf oge, %1, %249 : vector<1x128xf32>
    %cst_151 = arith.constant 1.000000e+00 : f32
    %cst_152 = arith.constant 0.000000e+00 : f32
    %251 = vector.broadcast %cst_151 : f32 to vector<1x128xf32>
    %252 = vector.broadcast %cst_152 : f32 to vector<1x128xf32>
    %253 = arith.select %250, %251, %252 : vector<1x128xi1>, vector<1x128xf32>
    %cst_153 = arith.constant 2.000000e+00 : f32
    %254 = vector.broadcast %cst_153 : f32 to vector<1x128xf32>
    %255 = arith.mulf %254, %0 : vector<1x128xf32>
    %cst_154 = arith.constant 1.000000e+00 : f32
    %256 = vector.broadcast %cst_154 : f32 to vector<1x128xf32>
    %257 = arith.addf %255, %256 : vector<1x128xf32>
    %cst_155 = arith.constant 0.13333334 : f32
    %258 = vector.broadcast %cst_155 : f32 to vector<1x128xf32>
    %259 = arith.mulf %257, %258 : vector<1x128xf32>
    %cst_156 = arith.constant 1.000000e+00 : f32
    %260 = vector.broadcast %cst_156 : f32 to vector<1x128xf32>
    %261 = arith.subf %259, %260 : vector<1x128xf32>
    %cst_157 = arith.constant 2.000000e+00 : f32
    %262 = vector.broadcast %cst_157 : f32 to vector<1x128xf32>
    %263 = arith.mulf %262, %1 : vector<1x128xf32>
    %cst_158 = arith.constant -1.000000e+00 : f32
    %264 = vector.broadcast %cst_158 : f32 to vector<1x128xf32>
    %265 = arith.addf %263, %264 : vector<1x128xf32>
    %cst_159 = arith.constant 0.13333334 : f32
    %266 = vector.broadcast %cst_159 : f32 to vector<1x128xf32>
    %267 = arith.mulf %265, %266 : vector<1x128xf32>
    %cst_160 = arith.constant 1.000000e+00 : f32
    %268 = vector.broadcast %cst_160 : f32 to vector<1x128xf32>
    %269 = arith.subf %267, %268 : vector<1x128xf32>
    %270 = arith.mulf %261, %253 : vector<1x128xf32>
    %271 = arith.mulf %269, %253 : vector<1x128xf32>
    %c1_i32_161 = arith.constant 1 : i32
    %272 = tpu.dynamic_rotate %9 by %c1_i32_161 dim 1 : vector<4x128xf32>, i32 -> vector<4x128xf32>
    %273 = vector.broadcast %253 : vector<1x128xf32> to vector<4x128xf32>
    %274 = arith.mulf %272, %273 : vector<4x128xf32>
    %c6 = arith.constant 6 : index
    %c0_162 = arith.constant 0 : index
    %c0_163 = arith.constant 0 : index
    %275 = vector.load %arg4[%c6, %c0_162, %c0_163] : memref<9x32x4xf32, #tpu.memory_space<vmem>>, vector<1x32x4xf32>
    %276 = vector.shape_cast %275 : vector<1x32x4xf32> to vector<32x4xf32>
    %cst_164 = arith.constant dense<0.000000e+00> : vector<32x128xf32>
    %277 = tpu.matmul %276, %274, %cst_164 {dimension_numbers = #tpu.dot_dimension_numbers<[1], [0], [0], [1], [0, 0, 1, 1], [], []>} : vector<32x4xf32>, vector<4x128xf32>, vector<32x128xf32> -> vector<32x128xf32>
    %278 = arith.addf %248, %277 : vector<32x128xf32>
    %c6_165 = arith.constant 6 : index
    %c0_166 = arith.constant 0 : index
    %c0_167 = arith.constant 0 : index
    %c0_168 = arith.constant 0 : index
    %279 = vector.load %arg5[%c6_165, %c0_166, %c0_167, %c0_168] : memref<9x2x32x1xf32, #tpu.memory_space<vmem>>, vector<1x1x32x1xf32>
    %280 = vector.shape_cast %279 : vector<1x1x32x1xf32> to vector<32x1xf32>
    %281 = vector.broadcast %280 : vector<32x1xf32> to vector<32x128xf32>
    %282 = vector.broadcast %270 : vector<1x128xf32> to vector<32x128xf32>
    %283 = arith.mulf %281, %282 : vector<32x128xf32>
    %284 = arith.addf %278, %283 : vector<32x128xf32>
    %c6_169 = arith.constant 6 : index
    %c1_170 = arith.constant 1 : index
    %c0_171 = arith.constant 0 : index
    %c0_172 = arith.constant 0 : index
    %285 = vector.load %arg5[%c6_169, %c1_170, %c0_171, %c0_172] : memref<9x2x32x1xf32, #tpu.memory_space<vmem>>, vector<1x1x32x1xf32>
    %286 = vector.shape_cast %285 : vector<1x1x32x1xf32> to vector<32x1xf32>
    %287 = vector.broadcast %286 : vector<32x1xf32> to vector<32x128xf32>
    %288 = vector.broadcast %271 : vector<1x128xf32> to vector<32x128xf32>
    %289 = arith.mulf %287, %288 : vector<32x128xf32>
    %290 = arith.addf %284, %289 : vector<32x128xf32>
    %cst_173 = arith.constant 2.000000e+00 : f32
    %291 = vector.broadcast %cst_173 : f32 to vector<1x128xf32>
    %292 = arith.mulf %291, %0 : vector<1x128xf32>
    %cst_174 = arith.constant 1.000000e+00 : f32
    %293 = vector.broadcast %cst_174 : f32 to vector<1x128xf32>
    %294 = arith.addf %292, %293 : vector<1x128xf32>
    %cst_175 = arith.constant 0.13333334 : f32
    %295 = vector.broadcast %cst_175 : f32 to vector<1x128xf32>
    %296 = arith.mulf %294, %295 : vector<1x128xf32>
    %cst_176 = arith.constant 1.000000e+00 : f32
    %297 = vector.broadcast %cst_176 : f32 to vector<1x128xf32>
    %298 = arith.subf %296, %297 : vector<1x128xf32>
    %cst_177 = arith.constant 2.000000e+00 : f32
    %299 = vector.broadcast %cst_177 : f32 to vector<1x128xf32>
    %300 = arith.mulf %299, %1 : vector<1x128xf32>
    %cst_178 = arith.constant 0.000000e+00 : f32
    %301 = vector.broadcast %cst_178 : f32 to vector<1x128xf32>
    %302 = arith.addf %300, %301 : vector<1x128xf32>
    %cst_179 = arith.constant 0.13333334 : f32
    %303 = vector.broadcast %cst_179 : f32 to vector<1x128xf32>
    %304 = arith.mulf %302, %303 : vector<1x128xf32>
    %cst_180 = arith.constant 1.000000e+00 : f32
    %305 = vector.broadcast %cst_180 : f32 to vector<1x128xf32>
    %306 = arith.subf %304, %305 : vector<1x128xf32>
    %c7 = arith.constant 7 : index
    %c0_181 = arith.constant 0 : index
    %c0_182 = arith.constant 0 : index
    %307 = vector.load %arg4[%c7, %c0_181, %c0_182] : memref<9x32x4xf32, #tpu.memory_space<vmem>>, vector<1x32x4xf32>
    %308 = vector.shape_cast %307 : vector<1x32x4xf32> to vector<32x4xf32>
    %cst_183 = arith.constant dense<0.000000e+00> : vector<32x128xf32>
    %309 = tpu.matmul %308, %7, %cst_183 {dimension_numbers = #tpu.dot_dimension_numbers<[1], [0], [0], [1], [0, 0, 1, 1], [], []>} : vector<32x4xf32>, vector<4x128xf32>, vector<32x128xf32> -> vector<32x128xf32>
    %310 = arith.addf %290, %309 : vector<32x128xf32>
    %c7_184 = arith.constant 7 : index
    %c0_185 = arith.constant 0 : index
    %c0_186 = arith.constant 0 : index
    %c0_187 = arith.constant 0 : index
    %311 = vector.load %arg5[%c7_184, %c0_185, %c0_186, %c0_187] : memref<9x2x32x1xf32, #tpu.memory_space<vmem>>, vector<1x1x32x1xf32>
    %312 = vector.shape_cast %311 : vector<1x1x32x1xf32> to vector<32x1xf32>
    %313 = vector.broadcast %312 : vector<32x1xf32> to vector<32x128xf32>
    %314 = vector.broadcast %298 : vector<1x128xf32> to vector<32x128xf32>
    %315 = arith.mulf %313, %314 : vector<32x128xf32>
    %316 = arith.addf %310, %315 : vector<32x128xf32>
    %c7_188 = arith.constant 7 : index
    %c1_189 = arith.constant 1 : index
    %c0_190 = arith.constant 0 : index
    %c0_191 = arith.constant 0 : index
    %317 = vector.load %arg5[%c7_188, %c1_189, %c0_190, %c0_191] : memref<9x2x32x1xf32, #tpu.memory_space<vmem>>, vector<1x1x32x1xf32>
    %318 = vector.shape_cast %317 : vector<1x1x32x1xf32> to vector<32x1xf32>
    %319 = vector.broadcast %318 : vector<32x1xf32> to vector<32x128xf32>
    %320 = vector.broadcast %306 : vector<1x128xf32> to vector<32x128xf32>
    %321 = arith.mulf %319, %320 : vector<32x128xf32>
    %322 = arith.addf %316, %321 : vector<32x128xf32>
    %cst_192 = arith.constant 2.000000e+00 : f32
    %323 = vector.broadcast %cst_192 : f32 to vector<1x128xf32>
    %324 = arith.mulf %323, %0 : vector<1x128xf32>
    %cst_193 = arith.constant 1.000000e+00 : f32
    %325 = vector.broadcast %cst_193 : f32 to vector<1x128xf32>
    %326 = arith.addf %324, %325 : vector<1x128xf32>
    %cst_194 = arith.constant 0.13333334 : f32
    %327 = vector.broadcast %cst_194 : f32 to vector<1x128xf32>
    %328 = arith.mulf %326, %327 : vector<1x128xf32>
    %cst_195 = arith.constant 1.000000e+00 : f32
    %329 = vector.broadcast %cst_195 : f32 to vector<1x128xf32>
    %330 = arith.subf %328, %329 : vector<1x128xf32>
    %cst_196 = arith.constant 2.000000e+00 : f32
    %331 = vector.broadcast %cst_196 : f32 to vector<1x128xf32>
    %332 = arith.mulf %331, %1 : vector<1x128xf32>
    %cst_197 = arith.constant 1.000000e+00 : f32
    %333 = vector.broadcast %cst_197 : f32 to vector<1x128xf32>
    %334 = arith.addf %332, %333 : vector<1x128xf32>
    %cst_198 = arith.constant 0.13333334 : f32
    %335 = vector.broadcast %cst_198 : f32 to vector<1x128xf32>
    %336 = arith.mulf %334, %335 : vector<1x128xf32>
    %cst_199 = arith.constant 1.000000e+00 : f32
    %337 = vector.broadcast %cst_199 : f32 to vector<1x128xf32>
    %338 = arith.subf %336, %337 : vector<1x128xf32>
    %c8 = arith.constant 8 : index
    %c0_200 = arith.constant 0 : index
    %c0_201 = arith.constant 0 : index
    %339 = vector.load %arg4[%c8, %c0_200, %c0_201] : memref<9x32x4xf32, #tpu.memory_space<vmem>>, vector<1x32x4xf32>
    %340 = vector.shape_cast %339 : vector<1x32x4xf32> to vector<32x4xf32>
    %cst_202 = arith.constant dense<0.000000e+00> : vector<32x128xf32>
    %341 = tpu.matmul %340, %9, %cst_202 {dimension_numbers = #tpu.dot_dimension_numbers<[1], [0], [0], [1], [0, 0, 1, 1], [], []>} : vector<32x4xf32>, vector<4x128xf32>, vector<32x128xf32> -> vector<32x128xf32>
    %342 = arith.addf %322, %341 : vector<32x128xf32>
    %c8_203 = arith.constant 8 : index
    %c0_204 = arith.constant 0 : index
    %c0_205 = arith.constant 0 : index
    %c0_206 = arith.constant 0 : index
    %343 = vector.load %arg5[%c8_203, %c0_204, %c0_205, %c0_206] : memref<9x2x32x1xf32, #tpu.memory_space<vmem>>, vector<1x1x32x1xf32>
    %344 = vector.shape_cast %343 : vector<1x1x32x1xf32> to vector<32x1xf32>
    %345 = vector.broadcast %344 : vector<32x1xf32> to vector<32x128xf32>
    %346 = vector.broadcast %330 : vector<1x128xf32> to vector<32x128xf32>
    %347 = arith.mulf %345, %346 : vector<32x128xf32>
    %348 = arith.addf %342, %347 : vector<32x128xf32>
    %c8_207 = arith.constant 8 : index
    %c1_208 = arith.constant 1 : index
    %c0_209 = arith.constant 0 : index
    %c0_210 = arith.constant 0 : index
    %349 = vector.load %arg5[%c8_207, %c1_208, %c0_209, %c0_210] : memref<9x2x32x1xf32, #tpu.memory_space<vmem>>, vector<1x1x32x1xf32>
    %350 = vector.shape_cast %349 : vector<1x1x32x1xf32> to vector<32x1xf32>
    %351 = vector.broadcast %350 : vector<32x1xf32> to vector<32x128xf32>
    %352 = vector.broadcast %338 : vector<1x128xf32> to vector<32x128xf32>
    %353 = arith.mulf %351, %352 : vector<32x128xf32>
    %354 = arith.addf %348, %353 : vector<32x128xf32>
    %cst_211 = arith.constant 0.000000e+00 : f32
    %355 = vector.broadcast %cst_211 : f32 to vector<32x128xf32>
    %356 = arith.cmpf ogt, %354, %355 : vector<32x128xf32>
    %cst_212 = arith.constant 2.000000e-01 : f32
    %357 = vector.broadcast %cst_212 : f32 to vector<32x128xf32>
    %358 = arith.mulf %357, %354 : vector<32x128xf32>
    %359 = arith.select %356, %354, %358 : vector<32x128xi1>, vector<32x128xf32>
    %cst_213 = arith.constant 0.000000e+00 : f32
    %360 = vector.broadcast %cst_213 : f32 to vector<32x128xf32>
    %361 = vector.broadcast %10 : vector<32x1xf32> to vector<32x128xf32>
    %362 = arith.addf %360, %361 : vector<32x128xf32>
    %cst_214 = arith.constant 1.000000e+00 : f32
    %363 = vector.broadcast %cst_214 : f32 to vector<1x128xf32>
    %364 = arith.cmpf oge, %0, %363 : vector<1x128xf32>
    %cst_215 = arith.constant 1.000000e+00 : f32
    %cst_216 = arith.constant 0.000000e+00 : f32
    %365 = vector.broadcast %cst_215 : f32 to vector<1x128xf32>
    %366 = vector.broadcast %cst_216 : f32 to vector<1x128xf32>
    %367 = arith.select %364, %365, %366 : vector<1x128xi1>, vector<1x128xf32>
    %cst_217 = arith.constant 2.000000e+00 : f32
    %368 = vector.broadcast %cst_217 : f32 to vector<1x128xf32>
    %369 = arith.mulf %368, %0 : vector<1x128xf32>
    %cst_218 = arith.constant -1.000000e+00 : f32
    %370 = vector.broadcast %cst_218 : f32 to vector<1x128xf32>
    %371 = arith.addf %369, %370 : vector<1x128xf32>
    %cst_219 = arith.constant 0.13333334 : f32
    %372 = vector.broadcast %cst_219 : f32 to vector<1x128xf32>
    %373 = arith.mulf %371, %372 : vector<1x128xf32>
    %cst_220 = arith.constant 1.000000e+00 : f32
    %374 = vector.broadcast %cst_220 : f32 to vector<1x128xf32>
    %375 = arith.subf %373, %374 : vector<1x128xf32>
    %cst_221 = arith.constant 2.000000e+00 : f32
    %376 = vector.broadcast %cst_221 : f32 to vector<1x128xf32>
    %377 = arith.mulf %376, %1 : vector<1x128xf32>
    %cst_222 = arith.constant 0.000000e+00 : f32
    %378 = vector.broadcast %cst_222 : f32 to vector<1x128xf32>
    %379 = arith.addf %377, %378 : vector<1x128xf32>
    %cst_223 = arith.constant 0.13333334 : f32
    %380 = vector.broadcast %cst_223 : f32 to vector<1x128xf32>
    %381 = arith.mulf %379, %380 : vector<1x128xf32>
    %cst_224 = arith.constant 1.000000e+00 : f32
    %382 = vector.broadcast %cst_224 : f32 to vector<1x128xf32>
    %383 = arith.subf %381, %382 : vector<1x128xf32>
    %384 = arith.mulf %375, %367 : vector<1x128xf32>
    %385 = arith.mulf %383, %367 : vector<1x128xf32>
    %c8_i32_225 = arith.constant 8 : i32
    %386 = tpu.dynamic_rotate %7 by %c8_i32_225 dim 1 : vector<4x128xf32>, i32 -> vector<4x128xf32>
    %387 = vector.broadcast %367 : vector<1x128xf32> to vector<4x128xf32>
    %388 = arith.mulf %386, %387 : vector<4x128xf32>
    %c0_226 = arith.constant 0 : index
    %c0_227 = arith.constant 0 : index
    %c0_228 = arith.constant 0 : index
    %389 = vector.load %arg4[%c0_226, %c0_227, %c0_228] : memref<9x32x4xf32, #tpu.memory_space<vmem>>, vector<1x32x4xf32>
    %390 = vector.shape_cast %389 : vector<1x32x4xf32> to vector<32x4xf32>
    %cst_229 = arith.constant dense<0.000000e+00> : vector<32x128xf32>
    %391 = tpu.matmul %390, %388, %cst_229 {dimension_numbers = #tpu.dot_dimension_numbers<[1], [0], [0], [1], [0, 0, 1, 1], [], []>} : vector<32x4xf32>, vector<4x128xf32>, vector<32x128xf32> -> vector<32x128xf32>
    %392 = arith.addf %362, %391 : vector<32x128xf32>
    %c0_230 = arith.constant 0 : index
    %c0_231 = arith.constant 0 : index
    %c0_232 = arith.constant 0 : index
    %c0_233 = arith.constant 0 : index
    %393 = vector.load %arg5[%c0_230, %c0_231, %c0_232, %c0_233] : memref<9x2x32x1xf32, #tpu.memory_space<vmem>>, vector<1x1x32x1xf32>
    %394 = vector.shape_cast %393 : vector<1x1x32x1xf32> to vector<32x1xf32>
    %395 = vector.broadcast %394 : vector<32x1xf32> to vector<32x128xf32>
    %396 = vector.broadcast %384 : vector<1x128xf32> to vector<32x128xf32>
    %397 = arith.mulf %395, %396 : vector<32x128xf32>
    %398 = arith.addf %392, %397 : vector<32x128xf32>
    %c0_234 = arith.constant 0 : index
    %c1_235 = arith.constant 1 : index
    %c0_236 = arith.constant 0 : index
    %c0_237 = arith.constant 0 : index
    %399 = vector.load %arg5[%c0_234, %c1_235, %c0_236, %c0_237] : memref<9x2x32x1xf32, #tpu.memory_space<vmem>>, vector<1x1x32x1xf32>
    %400 = vector.shape_cast %399 : vector<1x1x32x1xf32> to vector<32x1xf32>
    %401 = vector.broadcast %400 : vector<32x1xf32> to vector<32x128xf32>
    %402 = vector.broadcast %385 : vector<1x128xf32> to vector<32x128xf32>
    %403 = arith.mulf %401, %402 : vector<32x128xf32>
    %404 = arith.addf %398, %403 : vector<32x128xf32>
    %cst_238 = arith.constant 1.000000e+00 : f32
    %405 = vector.broadcast %cst_238 : f32 to vector<1x128xf32>
    %406 = arith.cmpf oge, %0, %405 : vector<1x128xf32>
    %cst_239 = arith.constant 1.000000e+00 : f32
    %cst_240 = arith.constant 0.000000e+00 : f32
    %407 = vector.broadcast %cst_239 : f32 to vector<1x128xf32>
    %408 = vector.broadcast %cst_240 : f32 to vector<1x128xf32>
    %409 = arith.select %406, %407, %408 : vector<1x128xi1>, vector<1x128xf32>
    %cst_241 = arith.constant 2.000000e+00 : f32
    %410 = vector.broadcast %cst_241 : f32 to vector<1x128xf32>
    %411 = arith.mulf %410, %0 : vector<1x128xf32>
    %cst_242 = arith.constant -1.000000e+00 : f32
    %412 = vector.broadcast %cst_242 : f32 to vector<1x128xf32>
    %413 = arith.addf %411, %412 : vector<1x128xf32>
    %cst_243 = arith.constant 0.13333334 : f32
    %414 = vector.broadcast %cst_243 : f32 to vector<1x128xf32>
    %415 = arith.mulf %413, %414 : vector<1x128xf32>
    %cst_244 = arith.constant 1.000000e+00 : f32
    %416 = vector.broadcast %cst_244 : f32 to vector<1x128xf32>
    %417 = arith.subf %415, %416 : vector<1x128xf32>
    %cst_245 = arith.constant 2.000000e+00 : f32
    %418 = vector.broadcast %cst_245 : f32 to vector<1x128xf32>
    %419 = arith.mulf %418, %1 : vector<1x128xf32>
    %cst_246 = arith.constant 1.000000e+00 : f32
    %420 = vector.broadcast %cst_246 : f32 to vector<1x128xf32>
    %421 = arith.addf %419, %420 : vector<1x128xf32>
    %cst_247 = arith.constant 0.13333334 : f32
    %422 = vector.broadcast %cst_247 : f32 to vector<1x128xf32>
    %423 = arith.mulf %421, %422 : vector<1x128xf32>
    %cst_248 = arith.constant 1.000000e+00 : f32
    %424 = vector.broadcast %cst_248 : f32 to vector<1x128xf32>
    %425 = arith.subf %423, %424 : vector<1x128xf32>
    %426 = arith.mulf %417, %409 : vector<1x128xf32>
    %427 = arith.mulf %425, %409 : vector<1x128xf32>
    %c8_i32_249 = arith.constant 8 : i32
    %428 = tpu.dynamic_rotate %9 by %c8_i32_249 dim 1 : vector<4x128xf32>, i32 -> vector<4x128xf32>
    %429 = vector.broadcast %409 : vector<1x128xf32> to vector<4x128xf32>
    %430 = arith.mulf %428, %429 : vector<4x128xf32>
    %c1_250 = arith.constant 1 : index
    %c0_251 = arith.constant 0 : index
    %c0_252 = arith.constant 0 : index
    %431 = vector.load %arg4[%c1_250, %c0_251, %c0_252] : memref<9x32x4xf32, #tpu.memory_space<vmem>>, vector<1x32x4xf32>
    %432 = vector.shape_cast %431 : vector<1x32x4xf32> to vector<32x4xf32>
    %cst_253 = arith.constant dense<0.000000e+00> : vector<32x128xf32>
    %433 = tpu.matmul %432, %430, %cst_253 {dimension_numbers = #tpu.dot_dimension_numbers<[1], [0], [0], [1], [0, 0, 1, 1], [], []>} : vector<32x4xf32>, vector<4x128xf32>, vector<32x128xf32> -> vector<32x128xf32>
    %434 = arith.addf %404, %433 : vector<32x128xf32>
    %c1_254 = arith.constant 1 : index
    %c0_255 = arith.constant 0 : index
    %c0_256 = arith.constant 0 : index
    %c0_257 = arith.constant 0 : index
    %435 = vector.load %arg5[%c1_254, %c0_255, %c0_256, %c0_257] : memref<9x2x32x1xf32, #tpu.memory_space<vmem>>, vector<1x1x32x1xf32>
    %436 = vector.shape_cast %435 : vector<1x1x32x1xf32> to vector<32x1xf32>
    %437 = vector.broadcast %436 : vector<32x1xf32> to vector<32x128xf32>
    %438 = vector.broadcast %426 : vector<1x128xf32> to vector<32x128xf32>
    %439 = arith.mulf %437, %438 : vector<32x128xf32>
    %440 = arith.addf %434, %439 : vector<32x128xf32>
    %c1_258 = arith.constant 1 : index
    %c1_259 = arith.constant 1 : index
    %c0_260 = arith.constant 0 : index
    %c0_261 = arith.constant 0 : index
    %441 = vector.load %arg5[%c1_258, %c1_259, %c0_260, %c0_261] : memref<9x2x32x1xf32, #tpu.memory_space<vmem>>, vector<1x1x32x1xf32>
    %442 = vector.shape_cast %441 : vector<1x1x32x1xf32> to vector<32x1xf32>
    %443 = vector.broadcast %442 : vector<32x1xf32> to vector<32x128xf32>
    %444 = vector.broadcast %427 : vector<1x128xf32> to vector<32x128xf32>
    %445 = arith.mulf %443, %444 : vector<32x128xf32>
    %446 = arith.addf %440, %445 : vector<32x128xf32>
    %cst_262 = arith.constant 1.000000e+00 : f32
    %447 = vector.broadcast %cst_262 : f32 to vector<1x128xf32>
    %448 = arith.cmpf oge, %0, %447 : vector<1x128xf32>
    %cst_263 = arith.constant 6.000000e+00 : f32
    %449 = vector.broadcast %cst_263 : f32 to vector<1x128xf32>
    %450 = arith.cmpf ole, %1, %449 : vector<1x128xf32>
    %451 = arith.andi %448, %450 : vector<1x128xi1>
    %cst_264 = arith.constant 1.000000e+00 : f32
    %cst_265 = arith.constant 0.000000e+00 : f32
    %452 = vector.broadcast %cst_264 : f32 to vector<1x128xf32>
    %453 = vector.broadcast %cst_265 : f32 to vector<1x128xf32>
    %454 = arith.select %451, %452, %453 : vector<1x128xi1>, vector<1x128xf32>
    %cst_266 = arith.constant 2.000000e+00 : f32
    %455 = vector.broadcast %cst_266 : f32 to vector<1x128xf32>
    %456 = arith.mulf %455, %0 : vector<1x128xf32>
    %cst_267 = arith.constant -1.000000e+00 : f32
    %457 = vector.broadcast %cst_267 : f32 to vector<1x128xf32>
    %458 = arith.addf %456, %457 : vector<1x128xf32>
    %cst_268 = arith.constant 0.13333334 : f32
    %459 = vector.broadcast %cst_268 : f32 to vector<1x128xf32>
    %460 = arith.mulf %458, %459 : vector<1x128xf32>
    %cst_269 = arith.constant 1.000000e+00 : f32
    %461 = vector.broadcast %cst_269 : f32 to vector<1x128xf32>
    %462 = arith.subf %460, %461 : vector<1x128xf32>
    %cst_270 = arith.constant 2.000000e+00 : f32
    %463 = vector.broadcast %cst_270 : f32 to vector<1x128xf32>
    %464 = arith.mulf %463, %1 : vector<1x128xf32>
    %cst_271 = arith.constant 2.000000e+00 : f32
    %465 = vector.broadcast %cst_271 : f32 to vector<1x128xf32>
    %466 = arith.addf %464, %465 : vector<1x128xf32>
    %cst_272 = arith.constant 0.13333334 : f32
    %467 = vector.broadcast %cst_272 : f32 to vector<1x128xf32>
    %468 = arith.mulf %466, %467 : vector<1x128xf32>
    %cst_273 = arith.constant 1.000000e+00 : f32
    %469 = vector.broadcast %cst_273 : f32 to vector<1x128xf32>
    %470 = arith.subf %468, %469 : vector<1x128xf32>
    %471 = arith.mulf %462, %454 : vector<1x128xf32>
    %472 = arith.mulf %470, %454 : vector<1x128xf32>
    %c7_i32 = arith.constant 7 : i32
    %473 = tpu.dynamic_rotate %7 by %c7_i32 dim 1 : vector<4x128xf32>, i32 -> vector<4x128xf32>
    %474 = vector.broadcast %454 : vector<1x128xf32> to vector<4x128xf32>
    %475 = arith.mulf %473, %474 : vector<4x128xf32>
    %c2_274 = arith.constant 2 : index
    %c0_275 = arith.constant 0 : index
    %c0_276 = arith.constant 0 : index
    %476 = vector.load %arg4[%c2_274, %c0_275, %c0_276] : memref<9x32x4xf32, #tpu.memory_space<vmem>>, vector<1x32x4xf32>
    %477 = vector.shape_cast %476 : vector<1x32x4xf32> to vector<32x4xf32>
    %cst_277 = arith.constant dense<0.000000e+00> : vector<32x128xf32>
    %478 = tpu.matmul %477, %475, %cst_277 {dimension_numbers = #tpu.dot_dimension_numbers<[1], [0], [0], [1], [0, 0, 1, 1], [], []>} : vector<32x4xf32>, vector<4x128xf32>, vector<32x128xf32> -> vector<32x128xf32>
    %479 = arith.addf %446, %478 : vector<32x128xf32>
    %c2_278 = arith.constant 2 : index
    %c0_279 = arith.constant 0 : index
    %c0_280 = arith.constant 0 : index
    %c0_281 = arith.constant 0 : index
    %480 = vector.load %arg5[%c2_278, %c0_279, %c0_280, %c0_281] : memref<9x2x32x1xf32, #tpu.memory_space<vmem>>, vector<1x1x32x1xf32>
    %481 = vector.shape_cast %480 : vector<1x1x32x1xf32> to vector<32x1xf32>
    %482 = vector.broadcast %481 : vector<32x1xf32> to vector<32x128xf32>
    %483 = vector.broadcast %471 : vector<1x128xf32> to vector<32x128xf32>
    %484 = arith.mulf %482, %483 : vector<32x128xf32>
    %485 = arith.addf %479, %484 : vector<32x128xf32>
    %c2_282 = arith.constant 2 : index
    %c1_283 = arith.constant 1 : index
    %c0_284 = arith.constant 0 : index
    %c0_285 = arith.constant 0 : index
    %486 = vector.load %arg5[%c2_282, %c1_283, %c0_284, %c0_285] : memref<9x2x32x1xf32, #tpu.memory_space<vmem>>, vector<1x1x32x1xf32>
    %487 = vector.shape_cast %486 : vector<1x1x32x1xf32> to vector<32x1xf32>
    %488 = vector.broadcast %487 : vector<32x1xf32> to vector<32x128xf32>
    %489 = vector.broadcast %472 : vector<1x128xf32> to vector<32x128xf32>
    %490 = arith.mulf %488, %489 : vector<32x128xf32>
    %491 = arith.addf %485, %490 : vector<32x128xf32>
    %cst_286 = arith.constant 2.000000e+00 : f32
    %492 = vector.broadcast %cst_286 : f32 to vector<1x128xf32>
    %493 = arith.mulf %492, %0 : vector<1x128xf32>
    %cst_287 = arith.constant 0.000000e+00 : f32
    %494 = vector.broadcast %cst_287 : f32 to vector<1x128xf32>
    %495 = arith.addf %493, %494 : vector<1x128xf32>
    %cst_288 = arith.constant 0.13333334 : f32
    %496 = vector.broadcast %cst_288 : f32 to vector<1x128xf32>
    %497 = arith.mulf %495, %496 : vector<1x128xf32>
    %cst_289 = arith.constant 1.000000e+00 : f32
    %498 = vector.broadcast %cst_289 : f32 to vector<1x128xf32>
    %499 = arith.subf %497, %498 : vector<1x128xf32>
    %cst_290 = arith.constant 2.000000e+00 : f32
    %500 = vector.broadcast %cst_290 : f32 to vector<1x128xf32>
    %501 = arith.mulf %500, %1 : vector<1x128xf32>
    %cst_291 = arith.constant 0.000000e+00 : f32
    %502 = vector.broadcast %cst_291 : f32 to vector<1x128xf32>
    %503 = arith.addf %501, %502 : vector<1x128xf32>
    %cst_292 = arith.constant 0.13333334 : f32
    %504 = vector.broadcast %cst_292 : f32 to vector<1x128xf32>
    %505 = arith.mulf %503, %504 : vector<1x128xf32>
    %cst_293 = arith.constant 1.000000e+00 : f32
    %506 = vector.broadcast %cst_293 : f32 to vector<1x128xf32>
    %507 = arith.subf %505, %506 : vector<1x128xf32>
    %c3_294 = arith.constant 3 : index
    %c0_295 = arith.constant 0 : index
    %c0_296 = arith.constant 0 : index
    %508 = vector.load %arg4[%c3_294, %c0_295, %c0_296] : memref<9x32x4xf32, #tpu.memory_space<vmem>>, vector<1x32x4xf32>
    %509 = vector.shape_cast %508 : vector<1x32x4xf32> to vector<32x4xf32>
    %cst_297 = arith.constant dense<0.000000e+00> : vector<32x128xf32>
    %510 = tpu.matmul %509, %3, %cst_297 {dimension_numbers = #tpu.dot_dimension_numbers<[1], [0], [0], [1], [0, 0, 1, 1], [], []>} : vector<32x4xf32>, vector<4x128xf32>, vector<32x128xf32> -> vector<32x128xf32>
    %511 = arith.addf %491, %510 : vector<32x128xf32>
    %c3_298 = arith.constant 3 : index
    %c0_299 = arith.constant 0 : index
    %c0_300 = arith.constant 0 : index
    %c0_301 = arith.constant 0 : index
    %512 = vector.load %arg5[%c3_298, %c0_299, %c0_300, %c0_301] : memref<9x2x32x1xf32, #tpu.memory_space<vmem>>, vector<1x1x32x1xf32>
    %513 = vector.shape_cast %512 : vector<1x1x32x1xf32> to vector<32x1xf32>
    %514 = vector.broadcast %513 : vector<32x1xf32> to vector<32x128xf32>
    %515 = vector.broadcast %499 : vector<1x128xf32> to vector<32x128xf32>
    %516 = arith.mulf %514, %515 : vector<32x128xf32>
    %517 = arith.addf %511, %516 : vector<32x128xf32>
    %c3_302 = arith.constant 3 : index
    %c1_303 = arith.constant 1 : index
    %c0_304 = arith.constant 0 : index
    %c0_305 = arith.constant 0 : index
    %518 = vector.load %arg5[%c3_302, %c1_303, %c0_304, %c0_305] : memref<9x2x32x1xf32, #tpu.memory_space<vmem>>, vector<1x1x32x1xf32>
    %519 = vector.shape_cast %518 : vector<1x1x32x1xf32> to vector<32x1xf32>
    %520 = vector.broadcast %519 : vector<32x1xf32> to vector<32x128xf32>
    %521 = vector.broadcast %507 : vector<1x128xf32> to vector<32x128xf32>
    %522 = arith.mulf %520, %521 : vector<32x128xf32>
    %523 = arith.addf %517, %522 : vector<32x128xf32>
    %cst_306 = arith.constant 2.000000e+00 : f32
    %524 = vector.broadcast %cst_306 : f32 to vector<1x128xf32>
    %525 = arith.mulf %524, %0 : vector<1x128xf32>
    %cst_307 = arith.constant 0.000000e+00 : f32
    %526 = vector.broadcast %cst_307 : f32 to vector<1x128xf32>
    %527 = arith.addf %525, %526 : vector<1x128xf32>
    %cst_308 = arith.constant 0.13333334 : f32
    %528 = vector.broadcast %cst_308 : f32 to vector<1x128xf32>
    %529 = arith.mulf %527, %528 : vector<1x128xf32>
    %cst_309 = arith.constant 1.000000e+00 : f32
    %530 = vector.broadcast %cst_309 : f32 to vector<1x128xf32>
    %531 = arith.subf %529, %530 : vector<1x128xf32>
    %cst_310 = arith.constant 2.000000e+00 : f32
    %532 = vector.broadcast %cst_310 : f32 to vector<1x128xf32>
    %533 = arith.mulf %532, %1 : vector<1x128xf32>
    %cst_311 = arith.constant 1.000000e+00 : f32
    %534 = vector.broadcast %cst_311 : f32 to vector<1x128xf32>
    %535 = arith.addf %533, %534 : vector<1x128xf32>
    %cst_312 = arith.constant 0.13333334 : f32
    %536 = vector.broadcast %cst_312 : f32 to vector<1x128xf32>
    %537 = arith.mulf %535, %536 : vector<1x128xf32>
    %cst_313 = arith.constant 1.000000e+00 : f32
    %538 = vector.broadcast %cst_313 : f32 to vector<1x128xf32>
    %539 = arith.subf %537, %538 : vector<1x128xf32>
    %c4_314 = arith.constant 4 : index
    %c0_315 = arith.constant 0 : index
    %c0_316 = arith.constant 0 : index
    %540 = vector.load %arg4[%c4_314, %c0_315, %c0_316] : memref<9x32x4xf32, #tpu.memory_space<vmem>>, vector<1x32x4xf32>
    %541 = vector.shape_cast %540 : vector<1x32x4xf32> to vector<32x4xf32>
    %cst_317 = arith.constant dense<0.000000e+00> : vector<32x128xf32>
    %542 = tpu.matmul %541, %5, %cst_317 {dimension_numbers = #tpu.dot_dimension_numbers<[1], [0], [0], [1], [0, 0, 1, 1], [], []>} : vector<32x4xf32>, vector<4x128xf32>, vector<32x128xf32> -> vector<32x128xf32>
    %543 = arith.addf %523, %542 : vector<32x128xf32>
    %c4_318 = arith.constant 4 : index
    %c0_319 = arith.constant 0 : index
    %c0_320 = arith.constant 0 : index
    %c0_321 = arith.constant 0 : index
    %544 = vector.load %arg5[%c4_318, %c0_319, %c0_320, %c0_321] : memref<9x2x32x1xf32, #tpu.memory_space<vmem>>, vector<1x1x32x1xf32>
    %545 = vector.shape_cast %544 : vector<1x1x32x1xf32> to vector<32x1xf32>
    %546 = vector.broadcast %545 : vector<32x1xf32> to vector<32x128xf32>
    %547 = vector.broadcast %531 : vector<1x128xf32> to vector<32x128xf32>
    %548 = arith.mulf %546, %547 : vector<32x128xf32>
    %549 = arith.addf %543, %548 : vector<32x128xf32>
    %c4_322 = arith.constant 4 : index
    %c1_323 = arith.constant 1 : index
    %c0_324 = arith.constant 0 : index
    %c0_325 = arith.constant 0 : index
    %550 = vector.load %arg5[%c4_322, %c1_323, %c0_324, %c0_325] : memref<9x2x32x1xf32, #tpu.memory_space<vmem>>, vector<1x1x32x1xf32>
    %551 = vector.shape_cast %550 : vector<1x1x32x1xf32> to vector<32x1xf32>
    %552 = vector.broadcast %551 : vector<32x1xf32> to vector<32x128xf32>
    %553 = vector.broadcast %539 : vector<1x128xf32> to vector<32x128xf32>
    %554 = arith.mulf %552, %553 : vector<32x128xf32>
    %555 = arith.addf %549, %554 : vector<32x128xf32>
    %cst_326 = arith.constant 6.000000e+00 : f32
    %556 = vector.broadcast %cst_326 : f32 to vector<1x128xf32>
    %557 = arith.cmpf ole, %1, %556 : vector<1x128xf32>
    %cst_327 = arith.constant 1.000000e+00 : f32
    %cst_328 = arith.constant 0.000000e+00 : f32
    %558 = vector.broadcast %cst_327 : f32 to vector<1x128xf32>
    %559 = vector.broadcast %cst_328 : f32 to vector<1x128xf32>
    %560 = arith.select %557, %558, %559 : vector<1x128xi1>, vector<1x128xf32>
    %cst_329 = arith.constant 2.000000e+00 : f32
    %561 = vector.broadcast %cst_329 : f32 to vector<1x128xf32>
    %562 = arith.mulf %561, %0 : vector<1x128xf32>
    %cst_330 = arith.constant 0.000000e+00 : f32
    %563 = vector.broadcast %cst_330 : f32 to vector<1x128xf32>
    %564 = arith.addf %562, %563 : vector<1x128xf32>
    %cst_331 = arith.constant 0.13333334 : f32
    %565 = vector.broadcast %cst_331 : f32 to vector<1x128xf32>
    %566 = arith.mulf %564, %565 : vector<1x128xf32>
    %cst_332 = arith.constant 1.000000e+00 : f32
    %567 = vector.broadcast %cst_332 : f32 to vector<1x128xf32>
    %568 = arith.subf %566, %567 : vector<1x128xf32>
    %cst_333 = arith.constant 2.000000e+00 : f32
    %569 = vector.broadcast %cst_333 : f32 to vector<1x128xf32>
    %570 = arith.mulf %569, %1 : vector<1x128xf32>
    %cst_334 = arith.constant 2.000000e+00 : f32
    %571 = vector.broadcast %cst_334 : f32 to vector<1x128xf32>
    %572 = arith.addf %570, %571 : vector<1x128xf32>
    %cst_335 = arith.constant 0.13333334 : f32
    %573 = vector.broadcast %cst_335 : f32 to vector<1x128xf32>
    %574 = arith.mulf %572, %573 : vector<1x128xf32>
    %cst_336 = arith.constant 1.000000e+00 : f32
    %575 = vector.broadcast %cst_336 : f32 to vector<1x128xf32>
    %576 = arith.subf %574, %575 : vector<1x128xf32>
    %577 = arith.mulf %568, %560 : vector<1x128xf32>
    %578 = arith.mulf %576, %560 : vector<1x128xf32>
    %c127_i32 = arith.constant 127 : i32
    %579 = tpu.dynamic_rotate %3 by %c127_i32 dim 1 : vector<4x128xf32>, i32 -> vector<4x128xf32>
    %580 = vector.broadcast %560 : vector<1x128xf32> to vector<4x128xf32>
    %581 = arith.mulf %579, %580 : vector<4x128xf32>
    %c5_337 = arith.constant 5 : index
    %c0_338 = arith.constant 0 : index
    %c0_339 = arith.constant 0 : index
    %582 = vector.load %arg4[%c5_337, %c0_338, %c0_339] : memref<9x32x4xf32, #tpu.memory_space<vmem>>, vector<1x32x4xf32>
    %583 = vector.shape_cast %582 : vector<1x32x4xf32> to vector<32x4xf32>
    %cst_340 = arith.constant dense<0.000000e+00> : vector<32x128xf32>
    %584 = tpu.matmul %583, %581, %cst_340 {dimension_numbers = #tpu.dot_dimension_numbers<[1], [0], [0], [1], [0, 0, 1, 1], [], []>} : vector<32x4xf32>, vector<4x128xf32>, vector<32x128xf32> -> vector<32x128xf32>
    %585 = arith.addf %555, %584 : vector<32x128xf32>
    %c5_341 = arith.constant 5 : index
    %c0_342 = arith.constant 0 : index
    %c0_343 = arith.constant 0 : index
    %c0_344 = arith.constant 0 : index
    %586 = vector.load %arg5[%c5_341, %c0_342, %c0_343, %c0_344] : memref<9x2x32x1xf32, #tpu.memory_space<vmem>>, vector<1x1x32x1xf32>
    %587 = vector.shape_cast %586 : vector<1x1x32x1xf32> to vector<32x1xf32>
    %588 = vector.broadcast %587 : vector<32x1xf32> to vector<32x128xf32>
    %589 = vector.broadcast %577 : vector<1x128xf32> to vector<32x128xf32>
    %590 = arith.mulf %588, %589 : vector<32x128xf32>
    %591 = arith.addf %585, %590 : vector<32x128xf32>
    %c5_345 = arith.constant 5 : index
    %c1_346 = arith.constant 1 : index
    %c0_347 = arith.constant 0 : index
    %c0_348 = arith.constant 0 : index
    %592 = vector.load %arg5[%c5_345, %c1_346, %c0_347, %c0_348] : memref<9x2x32x1xf32, #tpu.memory_space<vmem>>, vector<1x1x32x1xf32>
    %593 = vector.shape_cast %592 : vector<1x1x32x1xf32> to vector<32x1xf32>
    %594 = vector.broadcast %593 : vector<32x1xf32> to vector<32x128xf32>
    %595 = vector.broadcast %578 : vector<1x128xf32> to vector<32x128xf32>
    %596 = arith.mulf %594, %595 : vector<32x128xf32>
    %597 = arith.addf %591, %596 : vector<32x128xf32>
    %cst_349 = arith.constant 2.000000e+00 : f32
    %598 = vector.broadcast %cst_349 : f32 to vector<1x128xf32>
    %599 = arith.mulf %598, %0 : vector<1x128xf32>
    %cst_350 = arith.constant 1.000000e+00 : f32
    %600 = vector.broadcast %cst_350 : f32 to vector<1x128xf32>
    %601 = arith.addf %599, %600 : vector<1x128xf32>
    %cst_351 = arith.constant 0.13333334 : f32
    %602 = vector.broadcast %cst_351 : f32 to vector<1x128xf32>
    %603 = arith.mulf %601, %602 : vector<1x128xf32>
    %cst_352 = arith.constant 1.000000e+00 : f32
    %604 = vector.broadcast %cst_352 : f32 to vector<1x128xf32>
    %605 = arith.subf %603, %604 : vector<1x128xf32>
    %cst_353 = arith.constant 2.000000e+00 : f32
    %606 = vector.broadcast %cst_353 : f32 to vector<1x128xf32>
    %607 = arith.mulf %606, %1 : vector<1x128xf32>
    %cst_354 = arith.constant 0.000000e+00 : f32
    %608 = vector.broadcast %cst_354 : f32 to vector<1x128xf32>
    %609 = arith.addf %607, %608 : vector<1x128xf32>
    %cst_355 = arith.constant 0.13333334 : f32
    %610 = vector.broadcast %cst_355 : f32 to vector<1x128xf32>
    %611 = arith.mulf %609, %610 : vector<1x128xf32>
    %cst_356 = arith.constant 1.000000e+00 : f32
    %612 = vector.broadcast %cst_356 : f32 to vector<1x128xf32>
    %613 = arith.subf %611, %612 : vector<1x128xf32>
    %c6_357 = arith.constant 6 : index
    %c0_358 = arith.constant 0 : index
    %c0_359 = arith.constant 0 : index
    %614 = vector.load %arg4[%c6_357, %c0_358, %c0_359] : memref<9x32x4xf32, #tpu.memory_space<vmem>>, vector<1x32x4xf32>
    %615 = vector.shape_cast %614 : vector<1x32x4xf32> to vector<32x4xf32>
    %cst_360 = arith.constant dense<0.000000e+00> : vector<32x128xf32>
    %616 = tpu.matmul %615, %7, %cst_360 {dimension_numbers = #tpu.dot_dimension_numbers<[1], [0], [0], [1], [0, 0, 1, 1], [], []>} : vector<32x4xf32>, vector<4x128xf32>, vector<32x128xf32> -> vector<32x128xf32>
    %617 = arith.addf %597, %616 : vector<32x128xf32>
    %c6_361 = arith.constant 6 : index
    %c0_362 = arith.constant 0 : index
    %c0_363 = arith.constant 0 : index
    %c0_364 = arith.constant 0 : index
    %618 = vector.load %arg5[%c6_361, %c0_362, %c0_363, %c0_364] : memref<9x2x32x1xf32, #tpu.memory_space<vmem>>, vector<1x1x32x1xf32>
    %619 = vector.shape_cast %618 : vector<1x1x32x1xf32> to vector<32x1xf32>
    %620 = vector.broadcast %619 : vector<32x1xf32> to vector<32x128xf32>
    %621 = vector.broadcast %605 : vector<1x128xf32> to vector<32x128xf32>
    %622 = arith.mulf %620, %621 : vector<32x128xf32>
    %623 = arith.addf %617, %622 : vector<32x128xf32>
    %c6_365 = arith.constant 6 : index
    %c1_366 = arith.constant 1 : index
    %c0_367 = arith.constant 0 : index
    %c0_368 = arith.constant 0 : index
    %624 = vector.load %arg5[%c6_365, %c1_366, %c0_367, %c0_368] : memref<9x2x32x1xf32, #tpu.memory_space<vmem>>, vector<1x1x32x1xf32>
    %625 = vector.shape_cast %624 : vector<1x1x32x1xf32> to vector<32x1xf32>
    %626 = vector.broadcast %625 : vector<32x1xf32> to vector<32x128xf32>
    %627 = vector.broadcast %613 : vector<1x128xf32> to vector<32x128xf32>
    %628 = arith.mulf %626, %627 : vector<32x128xf32>
    %629 = arith.addf %623, %628 : vector<32x128xf32>
    %cst_369 = arith.constant 2.000000e+00 : f32
    %630 = vector.broadcast %cst_369 : f32 to vector<1x128xf32>
    %631 = arith.mulf %630, %0 : vector<1x128xf32>
    %cst_370 = arith.constant 1.000000e+00 : f32
    %632 = vector.broadcast %cst_370 : f32 to vector<1x128xf32>
    %633 = arith.addf %631, %632 : vector<1x128xf32>
    %cst_371 = arith.constant 0.13333334 : f32
    %634 = vector.broadcast %cst_371 : f32 to vector<1x128xf32>
    %635 = arith.mulf %633, %634 : vector<1x128xf32>
    %cst_372 = arith.constant 1.000000e+00 : f32
    %636 = vector.broadcast %cst_372 : f32 to vector<1x128xf32>
    %637 = arith.subf %635, %636 : vector<1x128xf32>
    %cst_373 = arith.constant 2.000000e+00 : f32
    %638 = vector.broadcast %cst_373 : f32 to vector<1x128xf32>
    %639 = arith.mulf %638, %1 : vector<1x128xf32>
    %cst_374 = arith.constant 1.000000e+00 : f32
    %640 = vector.broadcast %cst_374 : f32 to vector<1x128xf32>
    %641 = arith.addf %639, %640 : vector<1x128xf32>
    %cst_375 = arith.constant 0.13333334 : f32
    %642 = vector.broadcast %cst_375 : f32 to vector<1x128xf32>
    %643 = arith.mulf %641, %642 : vector<1x128xf32>
    %cst_376 = arith.constant 1.000000e+00 : f32
    %644 = vector.broadcast %cst_376 : f32 to vector<1x128xf32>
    %645 = arith.subf %643, %644 : vector<1x128xf32>
    %c7_377 = arith.constant 7 : index
    %c0_378 = arith.constant 0 : index
    %c0_379 = arith.constant 0 : index
    %646 = vector.load %arg4[%c7_377, %c0_378, %c0_379] : memref<9x32x4xf32, #tpu.memory_space<vmem>>, vector<1x32x4xf32>
    %647 = vector.shape_cast %646 : vector<1x32x4xf32> to vector<32x4xf32>
    %cst_380 = arith.constant dense<0.000000e+00> : vector<32x128xf32>
    %648 = tpu.matmul %647, %9, %cst_380 {dimension_numbers = #tpu.dot_dimension_numbers<[1], [0], [0], [1], [0, 0, 1, 1], [], []>} : vector<32x4xf32>, vector<4x128xf32>, vector<32x128xf32> -> vector<32x128xf32>
    %649 = arith.addf %629, %648 : vector<32x128xf32>
    %c7_381 = arith.constant 7 : index
    %c0_382 = arith.constant 0 : index
    %c0_383 = arith.constant 0 : index
    %c0_384 = arith.constant 0 : index
    %650 = vector.load %arg5[%c7_381, %c0_382, %c0_383, %c0_384] : memref<9x2x32x1xf32, #tpu.memory_space<vmem>>, vector<1x1x32x1xf32>
    %651 = vector.shape_cast %650 : vector<1x1x32x1xf32> to vector<32x1xf32>
    %652 = vector.broadcast %651 : vector<32x1xf32> to vector<32x128xf32>
    %653 = vector.broadcast %637 : vector<1x128xf32> to vector<32x128xf32>
    %654 = arith.mulf %652, %653 : vector<32x128xf32>
    %655 = arith.addf %649, %654 : vector<32x128xf32>
    %c7_385 = arith.constant 7 : index
    %c1_386 = arith.constant 1 : index
    %c0_387 = arith.constant 0 : index
    %c0_388 = arith.constant 0 : index
    %656 = vector.load %arg5[%c7_385, %c1_386, %c0_387, %c0_388] : memref<9x2x32x1xf32, #tpu.memory_space<vmem>>, vector<1x1x32x1xf32>
    %657 = vector.shape_cast %656 : vector<1x1x32x1xf32> to vector<32x1xf32>
    %658 = vector.broadcast %657 : vector<32x1xf32> to vector<32x128xf32>
    %659 = vector.broadcast %645 : vector<1x128xf32> to vector<32x128xf32>
    %660 = arith.mulf %658, %659 : vector<32x128xf32>
    %661 = arith.addf %655, %660 : vector<32x128xf32>
    %cst_389 = arith.constant 6.000000e+00 : f32
    %662 = vector.broadcast %cst_389 : f32 to vector<1x128xf32>
    %663 = arith.cmpf ole, %1, %662 : vector<1x128xf32>
    %cst_390 = arith.constant 1.000000e+00 : f32
    %cst_391 = arith.constant 0.000000e+00 : f32
    %664 = vector.broadcast %cst_390 : f32 to vector<1x128xf32>
    %665 = vector.broadcast %cst_391 : f32 to vector<1x128xf32>
    %666 = arith.select %663, %664, %665 : vector<1x128xi1>, vector<1x128xf32>
    %cst_392 = arith.constant 2.000000e+00 : f32
    %667 = vector.broadcast %cst_392 : f32 to vector<1x128xf32>
    %668 = arith.mulf %667, %0 : vector<1x128xf32>
    %cst_393 = arith.constant 1.000000e+00 : f32
    %669 = vector.broadcast %cst_393 : f32 to vector<1x128xf32>
    %670 = arith.addf %668, %669 : vector<1x128xf32>
    %cst_394 = arith.constant 0.13333334 : f32
    %671 = vector.broadcast %cst_394 : f32 to vector<1x128xf32>
    %672 = arith.mulf %670, %671 : vector<1x128xf32>
    %cst_395 = arith.constant 1.000000e+00 : f32
    %673 = vector.broadcast %cst_395 : f32 to vector<1x128xf32>
    %674 = arith.subf %672, %673 : vector<1x128xf32>
    %cst_396 = arith.constant 2.000000e+00 : f32
    %675 = vector.broadcast %cst_396 : f32 to vector<1x128xf32>
    %676 = arith.mulf %675, %1 : vector<1x128xf32>
    %cst_397 = arith.constant 2.000000e+00 : f32
    %677 = vector.broadcast %cst_397 : f32 to vector<1x128xf32>
    %678 = arith.addf %676, %677 : vector<1x128xf32>
    %cst_398 = arith.constant 0.13333334 : f32
    %679 = vector.broadcast %cst_398 : f32 to vector<1x128xf32>
    %680 = arith.mulf %678, %679 : vector<1x128xf32>
    %cst_399 = arith.constant 1.000000e+00 : f32
    %681 = vector.broadcast %cst_399 : f32 to vector<1x128xf32>
    %682 = arith.subf %680, %681 : vector<1x128xf32>
    %683 = arith.mulf %674, %666 : vector<1x128xf32>
    %684 = arith.mulf %682, %666 : vector<1x128xf32>
    %c127_i32_400 = arith.constant 127 : i32
    %685 = tpu.dynamic_rotate %7 by %c127_i32_400 dim 1 : vector<4x128xf32>, i32 -> vector<4x128xf32>
    %686 = vector.broadcast %666 : vector<1x128xf32> to vector<4x128xf32>
    %687 = arith.mulf %685, %686 : vector<4x128xf32>
    %c8_401 = arith.constant 8 : index
    %c0_402 = arith.constant 0 : index
    %c0_403 = arith.constant 0 : index
    %688 = vector.load %arg4[%c8_401, %c0_402, %c0_403] : memref<9x32x4xf32, #tpu.memory_space<vmem>>, vector<1x32x4xf32>
    %689 = vector.shape_cast %688 : vector<1x32x4xf32> to vector<32x4xf32>
    %cst_404 = arith.constant dense<0.000000e+00> : vector<32x128xf32>
    %690 = tpu.matmul %689, %687, %cst_404 {dimension_numbers = #tpu.dot_dimension_numbers<[1], [0], [0], [1], [0, 0, 1, 1], [], []>} : vector<32x4xf32>, vector<4x128xf32>, vector<32x128xf32> -> vector<32x128xf32>
    %691 = arith.addf %661, %690 : vector<32x128xf32>
    %c8_405 = arith.constant 8 : index
    %c0_406 = arith.constant 0 : index
    %c0_407 = arith.constant 0 : index
    %c0_408 = arith.constant 0 : index
    %692 = vector.load %arg5[%c8_405, %c0_406, %c0_407, %c0_408] : memref<9x2x32x1xf32, #tpu.memory_space<vmem>>, vector<1x1x32x1xf32>
    %693 = vector.shape_cast %692 : vector<1x1x32x1xf32> to vector<32x1xf32>
    %694 = vector.broadcast %693 : vector<32x1xf32> to vector<32x128xf32>
    %695 = vector.broadcast %683 : vector<1x128xf32> to vector<32x128xf32>
    %696 = arith.mulf %694, %695 : vector<32x128xf32>
    %697 = arith.addf %691, %696 : vector<32x128xf32>
    %c8_409 = arith.constant 8 : index
    %c1_410 = arith.constant 1 : index
    %c0_411 = arith.constant 0 : index
    %c0_412 = arith.constant 0 : index
    %698 = vector.load %arg5[%c8_409, %c1_410, %c0_411, %c0_412] : memref<9x2x32x1xf32, #tpu.memory_space<vmem>>, vector<1x1x32x1xf32>
    %699 = vector.shape_cast %698 : vector<1x1x32x1xf32> to vector<32x1xf32>
    %700 = vector.broadcast %699 : vector<32x1xf32> to vector<32x128xf32>
    %701 = vector.broadcast %684 : vector<1x128xf32> to vector<32x128xf32>
    %702 = arith.mulf %700, %701 : vector<32x128xf32>
    %703 = arith.addf %697, %702 : vector<32x128xf32>
    %cst_413 = arith.constant 0.000000e+00 : f32
    %704 = vector.broadcast %cst_413 : f32 to vector<32x128xf32>
    %705 = arith.cmpf ogt, %703, %704 : vector<32x128xf32>
    %cst_414 = arith.constant 2.000000e-01 : f32
    %706 = vector.broadcast %cst_414 : f32 to vector<32x128xf32>
    %707 = arith.mulf %706, %703 : vector<32x128xf32>
    %708 = arith.select %705, %703, %707 : vector<32x128xi1>, vector<32x128xf32>
    %cst_415 = arith.constant 0.000000e+00 : f32
    %709 = vector.broadcast %cst_415 : f32 to vector<32x128xf32>
    %710 = vector.broadcast %10 : vector<32x1xf32> to vector<32x128xf32>
    %711 = arith.addf %709, %710 : vector<32x128xf32>
    %cst_416 = arith.constant 1.000000e+00 : f32
    %712 = vector.broadcast %cst_416 : f32 to vector<1x128xf32>
    %713 = arith.cmpf oge, %1, %712 : vector<1x128xf32>
    %cst_417 = arith.constant 1.000000e+00 : f32
    %cst_418 = arith.constant 0.000000e+00 : f32
    %714 = vector.broadcast %cst_417 : f32 to vector<1x128xf32>
    %715 = vector.broadcast %cst_418 : f32 to vector<1x128xf32>
    %716 = arith.select %713, %714, %715 : vector<1x128xi1>, vector<1x128xf32>
    %cst_419 = arith.constant 2.000000e+00 : f32
    %717 = vector.broadcast %cst_419 : f32 to vector<1x128xf32>
    %718 = arith.mulf %717, %0 : vector<1x128xf32>
    %cst_420 = arith.constant 0.000000e+00 : f32
    %719 = vector.broadcast %cst_420 : f32 to vector<1x128xf32>
    %720 = arith.addf %718, %719 : vector<1x128xf32>
    %cst_421 = arith.constant 0.13333334 : f32
    %721 = vector.broadcast %cst_421 : f32 to vector<1x128xf32>
    %722 = arith.mulf %720, %721 : vector<1x128xf32>
    %cst_422 = arith.constant 1.000000e+00 : f32
    %723 = vector.broadcast %cst_422 : f32 to vector<1x128xf32>
    %724 = arith.subf %722, %723 : vector<1x128xf32>
    %cst_423 = arith.constant 2.000000e+00 : f32
    %725 = vector.broadcast %cst_423 : f32 to vector<1x128xf32>
    %726 = arith.mulf %725, %1 : vector<1x128xf32>
    %cst_424 = arith.constant -1.000000e+00 : f32
    %727 = vector.broadcast %cst_424 : f32 to vector<1x128xf32>
    %728 = arith.addf %726, %727 : vector<1x128xf32>
    %cst_425 = arith.constant 0.13333334 : f32
    %729 = vector.broadcast %cst_425 : f32 to vector<1x128xf32>
    %730 = arith.mulf %728, %729 : vector<1x128xf32>
    %cst_426 = arith.constant 1.000000e+00 : f32
    %731 = vector.broadcast %cst_426 : f32 to vector<1x128xf32>
    %732 = arith.subf %730, %731 : vector<1x128xf32>
    %733 = arith.mulf %724, %716 : vector<1x128xf32>
    %734 = arith.mulf %732, %716 : vector<1x128xf32>
    %c1_i32_427 = arith.constant 1 : i32
    %735 = tpu.dynamic_rotate %5 by %c1_i32_427 dim 1 : vector<4x128xf32>, i32 -> vector<4x128xf32>
    %736 = vector.broadcast %716 : vector<1x128xf32> to vector<4x128xf32>
    %737 = arith.mulf %735, %736 : vector<4x128xf32>
    %c0_428 = arith.constant 0 : index
    %c0_429 = arith.constant 0 : index
    %c0_430 = arith.constant 0 : index
    %738 = vector.load %arg4[%c0_428, %c0_429, %c0_430] : memref<9x32x4xf32, #tpu.memory_space<vmem>>, vector<1x32x4xf32>
    %739 = vector.shape_cast %738 : vector<1x32x4xf32> to vector<32x4xf32>
    %cst_431 = arith.constant dense<0.000000e+00> : vector<32x128xf32>
    %740 = tpu.matmul %739, %737, %cst_431 {dimension_numbers = #tpu.dot_dimension_numbers<[1], [0], [0], [1], [0, 0, 1, 1], [], []>} : vector<32x4xf32>, vector<4x128xf32>, vector<32x128xf32> -> vector<32x128xf32>
    %741 = arith.addf %711, %740 : vector<32x128xf32>
    %c0_432 = arith.constant 0 : index
    %c0_433 = arith.constant 0 : index
    %c0_434 = arith.constant 0 : index
    %c0_435 = arith.constant 0 : index
    %742 = vector.load %arg5[%c0_432, %c0_433, %c0_434, %c0_435] : memref<9x2x32x1xf32, #tpu.memory_space<vmem>>, vector<1x1x32x1xf32>
    %743 = vector.shape_cast %742 : vector<1x1x32x1xf32> to vector<32x1xf32>
    %744 = vector.broadcast %743 : vector<32x1xf32> to vector<32x128xf32>
    %745 = vector.broadcast %733 : vector<1x128xf32> to vector<32x128xf32>
    %746 = arith.mulf %744, %745 : vector<32x128xf32>
    %747 = arith.addf %741, %746 : vector<32x128xf32>
    %c0_436 = arith.constant 0 : index
    %c1_437 = arith.constant 1 : index
    %c0_438 = arith.constant 0 : index
    %c0_439 = arith.constant 0 : index
    %748 = vector.load %arg5[%c0_436, %c1_437, %c0_438, %c0_439] : memref<9x2x32x1xf32, #tpu.memory_space<vmem>>, vector<1x1x32x1xf32>
    %749 = vector.shape_cast %748 : vector<1x1x32x1xf32> to vector<32x1xf32>
    %750 = vector.broadcast %749 : vector<32x1xf32> to vector<32x128xf32>
    %751 = vector.broadcast %734 : vector<1x128xf32> to vector<32x128xf32>
    %752 = arith.mulf %750, %751 : vector<32x128xf32>
    %753 = arith.addf %747, %752 : vector<32x128xf32>
    %cst_440 = arith.constant 2.000000e+00 : f32
    %754 = vector.broadcast %cst_440 : f32 to vector<1x128xf32>
    %755 = arith.mulf %754, %0 : vector<1x128xf32>
    %cst_441 = arith.constant 0.000000e+00 : f32
    %756 = vector.broadcast %cst_441 : f32 to vector<1x128xf32>
    %757 = arith.addf %755, %756 : vector<1x128xf32>
    %cst_442 = arith.constant 0.13333334 : f32
    %758 = vector.broadcast %cst_442 : f32 to vector<1x128xf32>
    %759 = arith.mulf %757, %758 : vector<1x128xf32>
    %cst_443 = arith.constant 1.000000e+00 : f32
    %760 = vector.broadcast %cst_443 : f32 to vector<1x128xf32>
    %761 = arith.subf %759, %760 : vector<1x128xf32>
    %cst_444 = arith.constant 2.000000e+00 : f32
    %762 = vector.broadcast %cst_444 : f32 to vector<1x128xf32>
    %763 = arith.mulf %762, %1 : vector<1x128xf32>
    %cst_445 = arith.constant 0.000000e+00 : f32
    %764 = vector.broadcast %cst_445 : f32 to vector<1x128xf32>
    %765 = arith.addf %763, %764 : vector<1x128xf32>
    %cst_446 = arith.constant 0.13333334 : f32
    %766 = vector.broadcast %cst_446 : f32 to vector<1x128xf32>
    %767 = arith.mulf %765, %766 : vector<1x128xf32>
    %cst_447 = arith.constant 1.000000e+00 : f32
    %768 = vector.broadcast %cst_447 : f32 to vector<1x128xf32>
    %769 = arith.subf %767, %768 : vector<1x128xf32>
    %c1_448 = arith.constant 1 : index
    %c0_449 = arith.constant 0 : index
    %c0_450 = arith.constant 0 : index
    %770 = vector.load %arg4[%c1_448, %c0_449, %c0_450] : memref<9x32x4xf32, #tpu.memory_space<vmem>>, vector<1x32x4xf32>
    %771 = vector.shape_cast %770 : vector<1x32x4xf32> to vector<32x4xf32>
    %cst_451 = arith.constant dense<0.000000e+00> : vector<32x128xf32>
    %772 = tpu.matmul %771, %3, %cst_451 {dimension_numbers = #tpu.dot_dimension_numbers<[1], [0], [0], [1], [0, 0, 1, 1], [], []>} : vector<32x4xf32>, vector<4x128xf32>, vector<32x128xf32> -> vector<32x128xf32>
    %773 = arith.addf %753, %772 : vector<32x128xf32>
    %c1_452 = arith.constant 1 : index
    %c0_453 = arith.constant 0 : index
    %c0_454 = arith.constant 0 : index
    %c0_455 = arith.constant 0 : index
    %774 = vector.load %arg5[%c1_452, %c0_453, %c0_454, %c0_455] : memref<9x2x32x1xf32, #tpu.memory_space<vmem>>, vector<1x1x32x1xf32>
    %775 = vector.shape_cast %774 : vector<1x1x32x1xf32> to vector<32x1xf32>
    %776 = vector.broadcast %775 : vector<32x1xf32> to vector<32x128xf32>
    %777 = vector.broadcast %761 : vector<1x128xf32> to vector<32x128xf32>
    %778 = arith.mulf %776, %777 : vector<32x128xf32>
    %779 = arith.addf %773, %778 : vector<32x128xf32>
    %c1_456 = arith.constant 1 : index
    %c1_457 = arith.constant 1 : index
    %c0_458 = arith.constant 0 : index
    %c0_459 = arith.constant 0 : index
    %780 = vector.load %arg5[%c1_456, %c1_457, %c0_458, %c0_459] : memref<9x2x32x1xf32, #tpu.memory_space<vmem>>, vector<1x1x32x1xf32>
    %781 = vector.shape_cast %780 : vector<1x1x32x1xf32> to vector<32x1xf32>
    %782 = vector.broadcast %781 : vector<32x1xf32> to vector<32x128xf32>
    %783 = vector.broadcast %769 : vector<1x128xf32> to vector<32x128xf32>
    %784 = arith.mulf %782, %783 : vector<32x128xf32>
    %785 = arith.addf %779, %784 : vector<32x128xf32>
    %cst_460 = arith.constant 2.000000e+00 : f32
    %786 = vector.broadcast %cst_460 : f32 to vector<1x128xf32>
    %787 = arith.mulf %786, %0 : vector<1x128xf32>
    %cst_461 = arith.constant 0.000000e+00 : f32
    %788 = vector.broadcast %cst_461 : f32 to vector<1x128xf32>
    %789 = arith.addf %787, %788 : vector<1x128xf32>
    %cst_462 = arith.constant 0.13333334 : f32
    %790 = vector.broadcast %cst_462 : f32 to vector<1x128xf32>
    %791 = arith.mulf %789, %790 : vector<1x128xf32>
    %cst_463 = arith.constant 1.000000e+00 : f32
    %792 = vector.broadcast %cst_463 : f32 to vector<1x128xf32>
    %793 = arith.subf %791, %792 : vector<1x128xf32>
    %cst_464 = arith.constant 2.000000e+00 : f32
    %794 = vector.broadcast %cst_464 : f32 to vector<1x128xf32>
    %795 = arith.mulf %794, %1 : vector<1x128xf32>
    %cst_465 = arith.constant 1.000000e+00 : f32
    %796 = vector.broadcast %cst_465 : f32 to vector<1x128xf32>
    %797 = arith.addf %795, %796 : vector<1x128xf32>
    %cst_466 = arith.constant 0.13333334 : f32
    %798 = vector.broadcast %cst_466 : f32 to vector<1x128xf32>
    %799 = arith.mulf %797, %798 : vector<1x128xf32>
    %cst_467 = arith.constant 1.000000e+00 : f32
    %800 = vector.broadcast %cst_467 : f32 to vector<1x128xf32>
    %801 = arith.subf %799, %800 : vector<1x128xf32>
    %c2_468 = arith.constant 2 : index
    %c0_469 = arith.constant 0 : index
    %c0_470 = arith.constant 0 : index
    %802 = vector.load %arg4[%c2_468, %c0_469, %c0_470] : memref<9x32x4xf32, #tpu.memory_space<vmem>>, vector<1x32x4xf32>
    %803 = vector.shape_cast %802 : vector<1x32x4xf32> to vector<32x4xf32>
    %cst_471 = arith.constant dense<0.000000e+00> : vector<32x128xf32>
    %804 = tpu.matmul %803, %5, %cst_471 {dimension_numbers = #tpu.dot_dimension_numbers<[1], [0], [0], [1], [0, 0, 1, 1], [], []>} : vector<32x4xf32>, vector<4x128xf32>, vector<32x128xf32> -> vector<32x128xf32>
    %805 = arith.addf %785, %804 : vector<32x128xf32>
    %c2_472 = arith.constant 2 : index
    %c0_473 = arith.constant 0 : index
    %c0_474 = arith.constant 0 : index
    %c0_475 = arith.constant 0 : index
    %806 = vector.load %arg5[%c2_472, %c0_473, %c0_474, %c0_475] : memref<9x2x32x1xf32, #tpu.memory_space<vmem>>, vector<1x1x32x1xf32>
    %807 = vector.shape_cast %806 : vector<1x1x32x1xf32> to vector<32x1xf32>
    %808 = vector.broadcast %807 : vector<32x1xf32> to vector<32x128xf32>
    %809 = vector.broadcast %793 : vector<1x128xf32> to vector<32x128xf32>
    %810 = arith.mulf %808, %809 : vector<32x128xf32>
    %811 = arith.addf %805, %810 : vector<32x128xf32>
    %c2_476 = arith.constant 2 : index
    %c1_477 = arith.constant 1 : index
    %c0_478 = arith.constant 0 : index
    %c0_479 = arith.constant 0 : index
    %812 = vector.load %arg5[%c2_476, %c1_477, %c0_478, %c0_479] : memref<9x2x32x1xf32, #tpu.memory_space<vmem>>, vector<1x1x32x1xf32>
    %813 = vector.shape_cast %812 : vector<1x1x32x1xf32> to vector<32x1xf32>
    %814 = vector.broadcast %813 : vector<32x1xf32> to vector<32x128xf32>
    %815 = vector.broadcast %801 : vector<1x128xf32> to vector<32x128xf32>
    %816 = arith.mulf %814, %815 : vector<32x128xf32>
    %817 = arith.addf %811, %816 : vector<32x128xf32>
    %cst_480 = arith.constant 1.000000e+00 : f32
    %818 = vector.broadcast %cst_480 : f32 to vector<1x128xf32>
    %819 = arith.cmpf oge, %1, %818 : vector<1x128xf32>
    %cst_481 = arith.constant 1.000000e+00 : f32
    %cst_482 = arith.constant 0.000000e+00 : f32
    %820 = vector.broadcast %cst_481 : f32 to vector<1x128xf32>
    %821 = vector.broadcast %cst_482 : f32 to vector<1x128xf32>
    %822 = arith.select %819, %820, %821 : vector<1x128xi1>, vector<1x128xf32>
    %cst_483 = arith.constant 2.000000e+00 : f32
    %823 = vector.broadcast %cst_483 : f32 to vector<1x128xf32>
    %824 = arith.mulf %823, %0 : vector<1x128xf32>
    %cst_484 = arith.constant 1.000000e+00 : f32
    %825 = vector.broadcast %cst_484 : f32 to vector<1x128xf32>
    %826 = arith.addf %824, %825 : vector<1x128xf32>
    %cst_485 = arith.constant 0.13333334 : f32
    %827 = vector.broadcast %cst_485 : f32 to vector<1x128xf32>
    %828 = arith.mulf %826, %827 : vector<1x128xf32>
    %cst_486 = arith.constant 1.000000e+00 : f32
    %829 = vector.broadcast %cst_486 : f32 to vector<1x128xf32>
    %830 = arith.subf %828, %829 : vector<1x128xf32>
    %cst_487 = arith.constant 2.000000e+00 : f32
    %831 = vector.broadcast %cst_487 : f32 to vector<1x128xf32>
    %832 = arith.mulf %831, %1 : vector<1x128xf32>
    %cst_488 = arith.constant -1.000000e+00 : f32
    %833 = vector.broadcast %cst_488 : f32 to vector<1x128xf32>
    %834 = arith.addf %832, %833 : vector<1x128xf32>
    %cst_489 = arith.constant 0.13333334 : f32
    %835 = vector.broadcast %cst_489 : f32 to vector<1x128xf32>
    %836 = arith.mulf %834, %835 : vector<1x128xf32>
    %cst_490 = arith.constant 1.000000e+00 : f32
    %837 = vector.broadcast %cst_490 : f32 to vector<1x128xf32>
    %838 = arith.subf %836, %837 : vector<1x128xf32>
    %839 = arith.mulf %830, %822 : vector<1x128xf32>
    %840 = arith.mulf %838, %822 : vector<1x128xf32>
    %c1_i32_491 = arith.constant 1 : i32
    %841 = tpu.dynamic_rotate %9 by %c1_i32_491 dim 1 : vector<4x128xf32>, i32 -> vector<4x128xf32>
    %842 = vector.broadcast %822 : vector<1x128xf32> to vector<4x128xf32>
    %843 = arith.mulf %841, %842 : vector<4x128xf32>
    %c3_492 = arith.constant 3 : index
    %c0_493 = arith.constant 0 : index
    %c0_494 = arith.constant 0 : index
    %844 = vector.load %arg4[%c3_492, %c0_493, %c0_494] : memref<9x32x4xf32, #tpu.memory_space<vmem>>, vector<1x32x4xf32>
    %845 = vector.shape_cast %844 : vector<1x32x4xf32> to vector<32x4xf32>
    %cst_495 = arith.constant dense<0.000000e+00> : vector<32x128xf32>
    %846 = tpu.matmul %845, %843, %cst_495 {dimension_numbers = #tpu.dot_dimension_numbers<[1], [0], [0], [1], [0, 0, 1, 1], [], []>} : vector<32x4xf32>, vector<4x128xf32>, vector<32x128xf32> -> vector<32x128xf32>
    %847 = arith.addf %817, %846 : vector<32x128xf32>
    %c3_496 = arith.constant 3 : index
    %c0_497 = arith.constant 0 : index
    %c0_498 = arith.constant 0 : index
    %c0_499 = arith.constant 0 : index
    %848 = vector.load %arg5[%c3_496, %c0_497, %c0_498, %c0_499] : memref<9x2x32x1xf32, #tpu.memory_space<vmem>>, vector<1x1x32x1xf32>
    %849 = vector.shape_cast %848 : vector<1x1x32x1xf32> to vector<32x1xf32>
    %850 = vector.broadcast %849 : vector<32x1xf32> to vector<32x128xf32>
    %851 = vector.broadcast %839 : vector<1x128xf32> to vector<32x128xf32>
    %852 = arith.mulf %850, %851 : vector<32x128xf32>
    %853 = arith.addf %847, %852 : vector<32x128xf32>
    %c3_500 = arith.constant 3 : index
    %c1_501 = arith.constant 1 : index
    %c0_502 = arith.constant 0 : index
    %c0_503 = arith.constant 0 : index
    %854 = vector.load %arg5[%c3_500, %c1_501, %c0_502, %c0_503] : memref<9x2x32x1xf32, #tpu.memory_space<vmem>>, vector<1x1x32x1xf32>
    %855 = vector.shape_cast %854 : vector<1x1x32x1xf32> to vector<32x1xf32>
    %856 = vector.broadcast %855 : vector<32x1xf32> to vector<32x128xf32>
    %857 = vector.broadcast %840 : vector<1x128xf32> to vector<32x128xf32>
    %858 = arith.mulf %856, %857 : vector<32x128xf32>
    %859 = arith.addf %853, %858 : vector<32x128xf32>
    %cst_504 = arith.constant 2.000000e+00 : f32
    %860 = vector.broadcast %cst_504 : f32 to vector<1x128xf32>
    %861 = arith.mulf %860, %0 : vector<1x128xf32>
    %cst_505 = arith.constant 1.000000e+00 : f32
    %862 = vector.broadcast %cst_505 : f32 to vector<1x128xf32>
    %863 = arith.addf %861, %862 : vector<1x128xf32>
    %cst_506 = arith.constant 0.13333334 : f32
    %864 = vector.broadcast %cst_506 : f32 to vector<1x128xf32>
    %865 = arith.mulf %863, %864 : vector<1x128xf32>
    %cst_507 = arith.constant 1.000000e+00 : f32
    %866 = vector.broadcast %cst_507 : f32 to vector<1x128xf32>
    %867 = arith.subf %865, %866 : vector<1x128xf32>
    %cst_508 = arith.constant 2.000000e+00 : f32
    %868 = vector.broadcast %cst_508 : f32 to vector<1x128xf32>
    %869 = arith.mulf %868, %1 : vector<1x128xf32>
    %cst_509 = arith.constant 0.000000e+00 : f32
    %870 = vector.broadcast %cst_509 : f32 to vector<1x128xf32>
    %871 = arith.addf %869, %870 : vector<1x128xf32>
    %cst_510 = arith.constant 0.13333334 : f32
    %872 = vector.broadcast %cst_510 : f32 to vector<1x128xf32>
    %873 = arith.mulf %871, %872 : vector<1x128xf32>
    %cst_511 = arith.constant 1.000000e+00 : f32
    %874 = vector.broadcast %cst_511 : f32 to vector<1x128xf32>
    %875 = arith.subf %873, %874 : vector<1x128xf32>
    %c4_512 = arith.constant 4 : index
    %c0_513 = arith.constant 0 : index
    %c0_514 = arith.constant 0 : index
    %876 = vector.load %arg4[%c4_512, %c0_513, %c0_514] : memref<9x32x4xf32, #tpu.memory_space<vmem>>, vector<1x32x4xf32>
    %877 = vector.shape_cast %876 : vector<1x32x4xf32> to vector<32x4xf32>
    %cst_515 = arith.constant dense<0.000000e+00> : vector<32x128xf32>
    %878 = tpu.matmul %877, %7, %cst_515 {dimension_numbers = #tpu.dot_dimension_numbers<[1], [0], [0], [1], [0, 0, 1, 1], [], []>} : vector<32x4xf32>, vector<4x128xf32>, vector<32x128xf32> -> vector<32x128xf32>
    %879 = arith.addf %859, %878 : vector<32x128xf32>
    %c4_516 = arith.constant 4 : index
    %c0_517 = arith.constant 0 : index
    %c0_518 = arith.constant 0 : index
    %c0_519 = arith.constant 0 : index
    %880 = vector.load %arg5[%c4_516, %c0_517, %c0_518, %c0_519] : memref<9x2x32x1xf32, #tpu.memory_space<vmem>>, vector<1x1x32x1xf32>
    %881 = vector.shape_cast %880 : vector<1x1x32x1xf32> to vector<32x1xf32>
    %882 = vector.broadcast %881 : vector<32x1xf32> to vector<32x128xf32>
    %883 = vector.broadcast %867 : vector<1x128xf32> to vector<32x128xf32>
    %884 = arith.mulf %882, %883 : vector<32x128xf32>
    %885 = arith.addf %879, %884 : vector<32x128xf32>
    %c4_520 = arith.constant 4 : index
    %c1_521 = arith.constant 1 : index
    %c0_522 = arith.constant 0 : index
    %c0_523 = arith.constant 0 : index
    %886 = vector.load %arg5[%c4_520, %c1_521, %c0_522, %c0_523] : memref<9x2x32x1xf32, #tpu.memory_space<vmem>>, vector<1x1x32x1xf32>
    %887 = vector.shape_cast %886 : vector<1x1x32x1xf32> to vector<32x1xf32>
    %888 = vector.broadcast %887 : vector<32x1xf32> to vector<32x128xf32>
    %889 = vector.broadcast %875 : vector<1x128xf32> to vector<32x128xf32>
    %890 = arith.mulf %888, %889 : vector<32x128xf32>
    %891 = arith.addf %885, %890 : vector<32x128xf32>
    %cst_524 = arith.constant 2.000000e+00 : f32
    %892 = vector.broadcast %cst_524 : f32 to vector<1x128xf32>
    %893 = arith.mulf %892, %0 : vector<1x128xf32>
    %cst_525 = arith.constant 1.000000e+00 : f32
    %894 = vector.broadcast %cst_525 : f32 to vector<1x128xf32>
    %895 = arith.addf %893, %894 : vector<1x128xf32>
    %cst_526 = arith.constant 0.13333334 : f32
    %896 = vector.broadcast %cst_526 : f32 to vector<1x128xf32>
    %897 = arith.mulf %895, %896 : vector<1x128xf32>
    %cst_527 = arith.constant 1.000000e+00 : f32
    %898 = vector.broadcast %cst_527 : f32 to vector<1x128xf32>
    %899 = arith.subf %897, %898 : vector<1x128xf32>
    %cst_528 = arith.constant 2.000000e+00 : f32
    %900 = vector.broadcast %cst_528 : f32 to vector<1x128xf32>
    %901 = arith.mulf %900, %1 : vector<1x128xf32>
    %cst_529 = arith.constant 1.000000e+00 : f32
    %902 = vector.broadcast %cst_529 : f32 to vector<1x128xf32>
    %903 = arith.addf %901, %902 : vector<1x128xf32>
    %cst_530 = arith.constant 0.13333334 : f32
    %904 = vector.broadcast %cst_530 : f32 to vector<1x128xf32>
    %905 = arith.mulf %903, %904 : vector<1x128xf32>
    %cst_531 = arith.constant 1.000000e+00 : f32
    %906 = vector.broadcast %cst_531 : f32 to vector<1x128xf32>
    %907 = arith.subf %905, %906 : vector<1x128xf32>
    %c5_532 = arith.constant 5 : index
    %c0_533 = arith.constant 0 : index
    %c0_534 = arith.constant 0 : index
    %908 = vector.load %arg4[%c5_532, %c0_533, %c0_534] : memref<9x32x4xf32, #tpu.memory_space<vmem>>, vector<1x32x4xf32>
    %909 = vector.shape_cast %908 : vector<1x32x4xf32> to vector<32x4xf32>
    %cst_535 = arith.constant dense<0.000000e+00> : vector<32x128xf32>
    %910 = tpu.matmul %909, %9, %cst_535 {dimension_numbers = #tpu.dot_dimension_numbers<[1], [0], [0], [1], [0, 0, 1, 1], [], []>} : vector<32x4xf32>, vector<4x128xf32>, vector<32x128xf32> -> vector<32x128xf32>
    %911 = arith.addf %891, %910 : vector<32x128xf32>
    %c5_536 = arith.constant 5 : index
    %c0_537 = arith.constant 0 : index
    %c0_538 = arith.constant 0 : index
    %c0_539 = arith.constant 0 : index
    %912 = vector.load %arg5[%c5_536, %c0_537, %c0_538, %c0_539] : memref<9x2x32x1xf32, #tpu.memory_space<vmem>>, vector<1x1x32x1xf32>
    %913 = vector.shape_cast %912 : vector<1x1x32x1xf32> to vector<32x1xf32>
    %914 = vector.broadcast %913 : vector<32x1xf32> to vector<32x128xf32>
    %915 = vector.broadcast %899 : vector<1x128xf32> to vector<32x128xf32>
    %916 = arith.mulf %914, %915 : vector<32x128xf32>
    %917 = arith.addf %911, %916 : vector<32x128xf32>
    %c5_540 = arith.constant 5 : index
    %c1_541 = arith.constant 1 : index
    %c0_542 = arith.constant 0 : index
    %c0_543 = arith.constant 0 : index
    %918 = vector.load %arg5[%c5_540, %c1_541, %c0_542, %c0_543] : memref<9x2x32x1xf32, #tpu.memory_space<vmem>>, vector<1x1x32x1xf32>
    %919 = vector.shape_cast %918 : vector<1x1x32x1xf32> to vector<32x1xf32>
    %920 = vector.broadcast %919 : vector<32x1xf32> to vector<32x128xf32>
    %921 = vector.broadcast %907 : vector<1x128xf32> to vector<32x128xf32>
    %922 = arith.mulf %920, %921 : vector<32x128xf32>
    %923 = arith.addf %917, %922 : vector<32x128xf32>
    %cst_544 = arith.constant 6.000000e+00 : f32
    %924 = vector.broadcast %cst_544 : f32 to vector<1x128xf32>
    %925 = arith.cmpf ole, %0, %924 : vector<1x128xf32>
    %cst_545 = arith.constant 1.000000e+00 : f32
    %926 = vector.broadcast %cst_545 : f32 to vector<1x128xf32>
    %927 = arith.cmpf oge, %1, %926 : vector<1x128xf32>
    %928 = arith.andi %925, %927 : vector<1x128xi1>
    %cst_546 = arith.constant 1.000000e+00 : f32
    %cst_547 = arith.constant 0.000000e+00 : f32
    %929 = vector.broadcast %cst_546 : f32 to vector<1x128xf32>
    %930 = vector.broadcast %cst_547 : f32 to vector<1x128xf32>
    %931 = arith.select %928, %929, %930 : vector<1x128xi1>, vector<1x128xf32>
    %cst_548 = arith.constant 2.000000e+00 : f32
    %932 = vector.broadcast %cst_548 : f32 to vector<1x128xf32>
    %933 = arith.mulf %932, %0 : vector<1x128xf32>
    %cst_549 = arith.constant 2.000000e+00 : f32
    %934 = vector.broadcast %cst_549 : f32 to vector<1x128xf32>
    %935 = arith.addf %933, %934 : vector<1x128xf32>
    %cst_550 = arith.constant 0.13333334 : f32
    %936 = vector.broadcast %cst_550 : f32 to vector<1x128xf32>
    %937 = arith.mulf %935, %936 : vector<1x128xf32>
    %cst_551 = arith.constant 1.000000e+00 : f32
    %938 = vector.broadcast %cst_551 : f32 to vector<1x128xf32>
    %939 = arith.subf %937, %938 : vector<1x128xf32>
    %cst_552 = arith.constant 2.000000e+00 : f32
    %940 = vector.broadcast %cst_552 : f32 to vector<1x128xf32>
    %941 = arith.mulf %940, %1 : vector<1x128xf32>
    %cst_553 = arith.constant -1.000000e+00 : f32
    %942 = vector.broadcast %cst_553 : f32 to vector<1x128xf32>
    %943 = arith.addf %941, %942 : vector<1x128xf32>
    %cst_554 = arith.constant 0.13333334 : f32
    %944 = vector.broadcast %cst_554 : f32 to vector<1x128xf32>
    %945 = arith.mulf %943, %944 : vector<1x128xf32>
    %cst_555 = arith.constant 1.000000e+00 : f32
    %946 = vector.broadcast %cst_555 : f32 to vector<1x128xf32>
    %947 = arith.subf %945, %946 : vector<1x128xf32>
    %948 = arith.mulf %939, %931 : vector<1x128xf32>
    %949 = arith.mulf %947, %931 : vector<1x128xf32>
    %c121_i32 = arith.constant 121 : i32
    %950 = tpu.dynamic_rotate %5 by %c121_i32 dim 1 : vector<4x128xf32>, i32 -> vector<4x128xf32>
    %951 = vector.broadcast %931 : vector<1x128xf32> to vector<4x128xf32>
    %952 = arith.mulf %950, %951 : vector<4x128xf32>
    %c6_556 = arith.constant 6 : index
    %c0_557 = arith.constant 0 : index
    %c0_558 = arith.constant 0 : index
    %953 = vector.load %arg4[%c6_556, %c0_557, %c0_558] : memref<9x32x4xf32, #tpu.memory_space<vmem>>, vector<1x32x4xf32>
    %954 = vector.shape_cast %953 : vector<1x32x4xf32> to vector<32x4xf32>
    %cst_559 = arith.constant dense<0.000000e+00> : vector<32x128xf32>
    %955 = tpu.matmul %954, %952, %cst_559 {dimension_numbers = #tpu.dot_dimension_numbers<[1], [0], [0], [1], [0, 0, 1, 1], [], []>} : vector<32x4xf32>, vector<4x128xf32>, vector<32x128xf32> -> vector<32x128xf32>
    %956 = arith.addf %923, %955 : vector<32x128xf32>
    %c6_560 = arith.constant 6 : index
    %c0_561 = arith.constant 0 : index
    %c0_562 = arith.constant 0 : index
    %c0_563 = arith.constant 0 : index
    %957 = vector.load %arg5[%c6_560, %c0_561, %c0_562, %c0_563] : memref<9x2x32x1xf32, #tpu.memory_space<vmem>>, vector<1x1x32x1xf32>
    %958 = vector.shape_cast %957 : vector<1x1x32x1xf32> to vector<32x1xf32>
    %959 = vector.broadcast %958 : vector<32x1xf32> to vector<32x128xf32>
    %960 = vector.broadcast %948 : vector<1x128xf32> to vector<32x128xf32>
    %961 = arith.mulf %959, %960 : vector<32x128xf32>
    %962 = arith.addf %956, %961 : vector<32x128xf32>
    %c6_564 = arith.constant 6 : index
    %c1_565 = arith.constant 1 : index
    %c0_566 = arith.constant 0 : index
    %c0_567 = arith.constant 0 : index
    %963 = vector.load %arg5[%c6_564, %c1_565, %c0_566, %c0_567] : memref<9x2x32x1xf32, #tpu.memory_space<vmem>>, vector<1x1x32x1xf32>
    %964 = vector.shape_cast %963 : vector<1x1x32x1xf32> to vector<32x1xf32>
    %965 = vector.broadcast %964 : vector<32x1xf32> to vector<32x128xf32>
    %966 = vector.broadcast %949 : vector<1x128xf32> to vector<32x128xf32>
    %967 = arith.mulf %965, %966 : vector<32x128xf32>
    %968 = arith.addf %962, %967 : vector<32x128xf32>
    %cst_568 = arith.constant 6.000000e+00 : f32
    %969 = vector.broadcast %cst_568 : f32 to vector<1x128xf32>
    %970 = arith.cmpf ole, %0, %969 : vector<1x128xf32>
    %cst_569 = arith.constant 1.000000e+00 : f32
    %cst_570 = arith.constant 0.000000e+00 : f32
    %971 = vector.broadcast %cst_569 : f32 to vector<1x128xf32>
    %972 = vector.broadcast %cst_570 : f32 to vector<1x128xf32>
    %973 = arith.select %970, %971, %972 : vector<1x128xi1>, vector<1x128xf32>
    %cst_571 = arith.constant 2.000000e+00 : f32
    %974 = vector.broadcast %cst_571 : f32 to vector<1x128xf32>
    %975 = arith.mulf %974, %0 : vector<1x128xf32>
    %cst_572 = arith.constant 2.000000e+00 : f32
    %976 = vector.broadcast %cst_572 : f32 to vector<1x128xf32>
    %977 = arith.addf %975, %976 : vector<1x128xf32>
    %cst_573 = arith.constant 0.13333334 : f32
    %978 = vector.broadcast %cst_573 : f32 to vector<1x128xf32>
    %979 = arith.mulf %977, %978 : vector<1x128xf32>
    %cst_574 = arith.constant 1.000000e+00 : f32
    %980 = vector.broadcast %cst_574 : f32 to vector<1x128xf32>
    %981 = arith.subf %979, %980 : vector<1x128xf32>
    %cst_575 = arith.constant 2.000000e+00 : f32
    %982 = vector.broadcast %cst_575 : f32 to vector<1x128xf32>
    %983 = arith.mulf %982, %1 : vector<1x128xf32>
    %cst_576 = arith.constant 0.000000e+00 : f32
    %984 = vector.broadcast %cst_576 : f32 to vector<1x128xf32>
    %985 = arith.addf %983, %984 : vector<1x128xf32>
    %cst_577 = arith.constant 0.13333334 : f32
    %986 = vector.broadcast %cst_577 : f32 to vector<1x128xf32>
    %987 = arith.mulf %985, %986 : vector<1x128xf32>
    %cst_578 = arith.constant 1.000000e+00 : f32
    %988 = vector.broadcast %cst_578 : f32 to vector<1x128xf32>
    %989 = arith.subf %987, %988 : vector<1x128xf32>
    %990 = arith.mulf %981, %973 : vector<1x128xf32>
    %991 = arith.mulf %989, %973 : vector<1x128xf32>
    %c120_i32 = arith.constant 120 : i32
    %992 = tpu.dynamic_rotate %3 by %c120_i32 dim 1 : vector<4x128xf32>, i32 -> vector<4x128xf32>
    %993 = vector.broadcast %973 : vector<1x128xf32> to vector<4x128xf32>
    %994 = arith.mulf %992, %993 : vector<4x128xf32>
    %c7_579 = arith.constant 7 : index
    %c0_580 = arith.constant 0 : index
    %c0_581 = arith.constant 0 : index
    %995 = vector.load %arg4[%c7_579, %c0_580, %c0_581] : memref<9x32x4xf32, #tpu.memory_space<vmem>>, vector<1x32x4xf32>
    %996 = vector.shape_cast %995 : vector<1x32x4xf32> to vector<32x4xf32>
    %cst_582 = arith.constant dense<0.000000e+00> : vector<32x128xf32>
    %997 = tpu.matmul %996, %994, %cst_582 {dimension_numbers = #tpu.dot_dimension_numbers<[1], [0], [0], [1], [0, 0, 1, 1], [], []>} : vector<32x4xf32>, vector<4x128xf32>, vector<32x128xf32> -> vector<32x128xf32>
    %998 = arith.addf %968, %997 : vector<32x128xf32>
    %c7_583 = arith.constant 7 : index
    %c0_584 = arith.constant 0 : index
    %c0_585 = arith.constant 0 : index
    %c0_586 = arith.constant 0 : index
    %999 = vector.load %arg5[%c7_583, %c0_584, %c0_585, %c0_586] : memref<9x2x32x1xf32, #tpu.memory_space<vmem>>, vector<1x1x32x1xf32>
    %1000 = vector.shape_cast %999 : vector<1x1x32x1xf32> to vector<32x1xf32>
    %1001 = vector.broadcast %1000 : vector<32x1xf32> to vector<32x128xf32>
    %1002 = vector.broadcast %990 : vector<1x128xf32> to vector<32x128xf32>
    %1003 = arith.mulf %1001, %1002 : vector<32x128xf32>
    %1004 = arith.addf %998, %1003 : vector<32x128xf32>
    %c7_587 = arith.constant 7 : index
    %c1_588 = arith.constant 1 : index
    %c0_589 = arith.constant 0 : index
    %c0_590 = arith.constant 0 : index
    %1005 = vector.load %arg5[%c7_587, %c1_588, %c0_589, %c0_590] : memref<9x2x32x1xf32, #tpu.memory_space<vmem>>, vector<1x1x32x1xf32>
    %1006 = vector.shape_cast %1005 : vector<1x1x32x1xf32> to vector<32x1xf32>
    %1007 = vector.broadcast %1006 : vector<32x1xf32> to vector<32x128xf32>
    %1008 = vector.broadcast %991 : vector<1x128xf32> to vector<32x128xf32>
    %1009 = arith.mulf %1007, %1008 : vector<32x128xf32>
    %1010 = arith.addf %1004, %1009 : vector<32x128xf32>
    %cst_591 = arith.constant 6.000000e+00 : f32
    %1011 = vector.broadcast %cst_591 : f32 to vector<1x128xf32>
    %1012 = arith.cmpf ole, %0, %1011 : vector<1x128xf32>
    %cst_592 = arith.constant 1.000000e+00 : f32
    %cst_593 = arith.constant 0.000000e+00 : f32
    %1013 = vector.broadcast %cst_592 : f32 to vector<1x128xf32>
    %1014 = vector.broadcast %cst_593 : f32 to vector<1x128xf32>
    %1015 = arith.select %1012, %1013, %1014 : vector<1x128xi1>, vector<1x128xf32>
    %cst_594 = arith.constant 2.000000e+00 : f32
    %1016 = vector.broadcast %cst_594 : f32 to vector<1x128xf32>
    %1017 = arith.mulf %1016, %0 : vector<1x128xf32>
    %cst_595 = arith.constant 2.000000e+00 : f32
    %1018 = vector.broadcast %cst_595 : f32 to vector<1x128xf32>
    %1019 = arith.addf %1017, %1018 : vector<1x128xf32>
    %cst_596 = arith.constant 0.13333334 : f32
    %1020 = vector.broadcast %cst_596 : f32 to vector<1x128xf32>
    %1021 = arith.mulf %1019, %1020 : vector<1x128xf32>
    %cst_597 = arith.constant 1.000000e+00 : f32
    %1022 = vector.broadcast %cst_597 : f32 to vector<1x128xf32>
    %1023 = arith.subf %1021, %1022 : vector<1x128xf32>
    %cst_598 = arith.constant 2.000000e+00 : f32
    %1024 = vector.broadcast %cst_598 : f32 to vector<1x128xf32>
    %1025 = arith.mulf %1024, %1 : vector<1x128xf32>
    %cst_599 = arith.constant 1.000000e+00 : f32
    %1026 = vector.broadcast %cst_599 : f32 to vector<1x128xf32>
    %1027 = arith.addf %1025, %1026 : vector<1x128xf32>
    %cst_600 = arith.constant 0.13333334 : f32
    %1028 = vector.broadcast %cst_600 : f32 to vector<1x128xf32>
    %1029 = arith.mulf %1027, %1028 : vector<1x128xf32>
    %cst_601 = arith.constant 1.000000e+00 : f32
    %1030 = vector.broadcast %cst_601 : f32 to vector<1x128xf32>
    %1031 = arith.subf %1029, %1030 : vector<1x128xf32>
    %1032 = arith.mulf %1023, %1015 : vector<1x128xf32>
    %1033 = arith.mulf %1031, %1015 : vector<1x128xf32>
    %c120_i32_602 = arith.constant 120 : i32
    %1034 = tpu.dynamic_rotate %5 by %c120_i32_602 dim 1 : vector<4x128xf32>, i32 -> vector<4x128xf32>
    %1035 = vector.broadcast %1015 : vector<1x128xf32> to vector<4x128xf32>
    %1036 = arith.mulf %1034, %1035 : vector<4x128xf32>
    %c8_603 = arith.constant 8 : index
    %c0_604 = arith.constant 0 : index
    %c0_605 = arith.constant 0 : index
    %1037 = vector.load %arg4[%c8_603, %c0_604, %c0_605] : memref<9x32x4xf32, #tpu.memory_space<vmem>>, vector<1x32x4xf32>
    %1038 = vector.shape_cast %1037 : vector<1x32x4xf32> to vector<32x4xf32>
    %cst_606 = arith.constant dense<0.000000e+00> : vector<32x128xf32>
    %1039 = tpu.matmul %1038, %1036, %cst_606 {dimension_numbers = #tpu.dot_dimension_numbers<[1], [0], [0], [1], [0, 0, 1, 1], [], []>} : vector<32x4xf32>, vector<4x128xf32>, vector<32x128xf32> -> vector<32x128xf32>
    %1040 = arith.addf %1010, %1039 : vector<32x128xf32>
    %c8_607 = arith.constant 8 : index
    %c0_608 = arith.constant 0 : index
    %c0_609 = arith.constant 0 : index
    %c0_610 = arith.constant 0 : index
    %1041 = vector.load %arg5[%c8_607, %c0_608, %c0_609, %c0_610] : memref<9x2x32x1xf32, #tpu.memory_space<vmem>>, vector<1x1x32x1xf32>
    %1042 = vector.shape_cast %1041 : vector<1x1x32x1xf32> to vector<32x1xf32>
    %1043 = vector.broadcast %1042 : vector<32x1xf32> to vector<32x128xf32>
    %1044 = vector.broadcast %1032 : vector<1x128xf32> to vector<32x128xf32>
    %1045 = arith.mulf %1043, %1044 : vector<32x128xf32>
    %1046 = arith.addf %1040, %1045 : vector<32x128xf32>
    %c8_611 = arith.constant 8 : index
    %c1_612 = arith.constant 1 : index
    %c0_613 = arith.constant 0 : index
    %c0_614 = arith.constant 0 : index
    %1047 = vector.load %arg5[%c8_611, %c1_612, %c0_613, %c0_614] : memref<9x2x32x1xf32, #tpu.memory_space<vmem>>, vector<1x1x32x1xf32>
    %1048 = vector.shape_cast %1047 : vector<1x1x32x1xf32> to vector<32x1xf32>
    %1049 = vector.broadcast %1048 : vector<32x1xf32> to vector<32x128xf32>
    %1050 = vector.broadcast %1033 : vector<1x128xf32> to vector<32x128xf32>
    %1051 = arith.mulf %1049, %1050 : vector<32x128xf32>
    %1052 = arith.addf %1046, %1051 : vector<32x128xf32>
    %cst_615 = arith.constant 0.000000e+00 : f32
    %1053 = vector.broadcast %cst_615 : f32 to vector<32x128xf32>
    %1054 = arith.cmpf ogt, %1052, %1053 : vector<32x128xf32>
    %cst_616 = arith.constant 2.000000e-01 : f32
    %1055 = vector.broadcast %cst_616 : f32 to vector<32x128xf32>
    %1056 = arith.mulf %1055, %1052 : vector<32x128xf32>
    %1057 = arith.select %1054, %1052, %1056 : vector<32x128xi1>, vector<32x128xf32>
    %cst_617 = arith.constant 0.000000e+00 : f32
    %1058 = vector.broadcast %cst_617 : f32 to vector<32x128xf32>
    %1059 = vector.broadcast %10 : vector<32x1xf32> to vector<32x128xf32>
    %1060 = arith.addf %1058, %1059 : vector<32x128xf32>
    %cst_618 = arith.constant 2.000000e+00 : f32
    %1061 = vector.broadcast %cst_618 : f32 to vector<1x128xf32>
    %1062 = arith.mulf %1061, %0 : vector<1x128xf32>
    %cst_619 = arith.constant 0.000000e+00 : f32
    %1063 = vector.broadcast %cst_619 : f32 to vector<1x128xf32>
    %1064 = arith.addf %1062, %1063 : vector<1x128xf32>
    %cst_620 = arith.constant 0.13333334 : f32
    %1065 = vector.broadcast %cst_620 : f32 to vector<1x128xf32>
    %1066 = arith.mulf %1064, %1065 : vector<1x128xf32>
    %cst_621 = arith.constant 1.000000e+00 : f32
    %1067 = vector.broadcast %cst_621 : f32 to vector<1x128xf32>
    %1068 = arith.subf %1066, %1067 : vector<1x128xf32>
    %cst_622 = arith.constant 2.000000e+00 : f32
    %1069 = vector.broadcast %cst_622 : f32 to vector<1x128xf32>
    %1070 = arith.mulf %1069, %1 : vector<1x128xf32>
    %cst_623 = arith.constant 0.000000e+00 : f32
    %1071 = vector.broadcast %cst_623 : f32 to vector<1x128xf32>
    %1072 = arith.addf %1070, %1071 : vector<1x128xf32>
    %cst_624 = arith.constant 0.13333334 : f32
    %1073 = vector.broadcast %cst_624 : f32 to vector<1x128xf32>
    %1074 = arith.mulf %1072, %1073 : vector<1x128xf32>
    %cst_625 = arith.constant 1.000000e+00 : f32
    %1075 = vector.broadcast %cst_625 : f32 to vector<1x128xf32>
    %1076 = arith.subf %1074, %1075 : vector<1x128xf32>
    %c0_626 = arith.constant 0 : index
    %c0_627 = arith.constant 0 : index
    %c0_628 = arith.constant 0 : index
    %1077 = vector.load %arg4[%c0_626, %c0_627, %c0_628] : memref<9x32x4xf32, #tpu.memory_space<vmem>>, vector<1x32x4xf32>
    %1078 = vector.shape_cast %1077 : vector<1x32x4xf32> to vector<32x4xf32>
    %cst_629 = arith.constant dense<0.000000e+00> : vector<32x128xf32>
    %1079 = tpu.matmul %1078, %3, %cst_629 {dimension_numbers = #tpu.dot_dimension_numbers<[1], [0], [0], [1], [0, 0, 1, 1], [], []>} : vector<32x4xf32>, vector<4x128xf32>, vector<32x128xf32> -> vector<32x128xf32>
    %1080 = arith.addf %1060, %1079 : vector<32x128xf32>
    %c0_630 = arith.constant 0 : index
    %c0_631 = arith.constant 0 : index
    %c0_632 = arith.constant 0 : index
    %c0_633 = arith.constant 0 : index
    %1081 = vector.load %arg5[%c0_630, %c0_631, %c0_632, %c0_633] : memref<9x2x32x1xf32, #tpu.memory_space<vmem>>, vector<1x1x32x1xf32>
    %1082 = vector.shape_cast %1081 : vector<1x1x32x1xf32> to vector<32x1xf32>
    %1083 = vector.broadcast %1082 : vector<32x1xf32> to vector<32x128xf32>
    %1084 = vector.broadcast %1068 : vector<1x128xf32> to vector<32x128xf32>
    %1085 = arith.mulf %1083, %1084 : vector<32x128xf32>
    %1086 = arith.addf %1080, %1085 : vector<32x128xf32>
    %c0_634 = arith.constant 0 : index
    %c1_635 = arith.constant 1 : index
    %c0_636 = arith.constant 0 : index
    %c0_637 = arith.constant 0 : index
    %1087 = vector.load %arg5[%c0_634, %c1_635, %c0_636, %c0_637] : memref<9x2x32x1xf32, #tpu.memory_space<vmem>>, vector<1x1x32x1xf32>
    %1088 = vector.shape_cast %1087 : vector<1x1x32x1xf32> to vector<32x1xf32>
    %1089 = vector.broadcast %1088 : vector<32x1xf32> to vector<32x128xf32>
    %1090 = vector.broadcast %1076 : vector<1x128xf32> to vector<32x128xf32>
    %1091 = arith.mulf %1089, %1090 : vector<32x128xf32>
    %1092 = arith.addf %1086, %1091 : vector<32x128xf32>
    %cst_638 = arith.constant 2.000000e+00 : f32
    %1093 = vector.broadcast %cst_638 : f32 to vector<1x128xf32>
    %1094 = arith.mulf %1093, %0 : vector<1x128xf32>
    %cst_639 = arith.constant 0.000000e+00 : f32
    %1095 = vector.broadcast %cst_639 : f32 to vector<1x128xf32>
    %1096 = arith.addf %1094, %1095 : vector<1x128xf32>
    %cst_640 = arith.constant 0.13333334 : f32
    %1097 = vector.broadcast %cst_640 : f32 to vector<1x128xf32>
    %1098 = arith.mulf %1096, %1097 : vector<1x128xf32>
    %cst_641 = arith.constant 1.000000e+00 : f32
    %1099 = vector.broadcast %cst_641 : f32 to vector<1x128xf32>
    %1100 = arith.subf %1098, %1099 : vector<1x128xf32>
    %cst_642 = arith.constant 2.000000e+00 : f32
    %1101 = vector.broadcast %cst_642 : f32 to vector<1x128xf32>
    %1102 = arith.mulf %1101, %1 : vector<1x128xf32>
    %cst_643 = arith.constant 1.000000e+00 : f32
    %1103 = vector.broadcast %cst_643 : f32 to vector<1x128xf32>
    %1104 = arith.addf %1102, %1103 : vector<1x128xf32>
    %cst_644 = arith.constant 0.13333334 : f32
    %1105 = vector.broadcast %cst_644 : f32 to vector<1x128xf32>
    %1106 = arith.mulf %1104, %1105 : vector<1x128xf32>
    %cst_645 = arith.constant 1.000000e+00 : f32
    %1107 = vector.broadcast %cst_645 : f32 to vector<1x128xf32>
    %1108 = arith.subf %1106, %1107 : vector<1x128xf32>
    %c1_646 = arith.constant 1 : index
    %c0_647 = arith.constant 0 : index
    %c0_648 = arith.constant 0 : index
    %1109 = vector.load %arg4[%c1_646, %c0_647, %c0_648] : memref<9x32x4xf32, #tpu.memory_space<vmem>>, vector<1x32x4xf32>
    %1110 = vector.shape_cast %1109 : vector<1x32x4xf32> to vector<32x4xf32>
    %cst_649 = arith.constant dense<0.000000e+00> : vector<32x128xf32>
    %1111 = tpu.matmul %1110, %5, %cst_649 {dimension_numbers = #tpu.dot_dimension_numbers<[1], [0], [0], [1], [0, 0, 1, 1], [], []>} : vector<32x4xf32>, vector<4x128xf32>, vector<32x128xf32> -> vector<32x128xf32>
    %1112 = arith.addf %1092, %1111 : vector<32x128xf32>
    %c1_650 = arith.constant 1 : index
    %c0_651 = arith.constant 0 : index
    %c0_652 = arith.constant 0 : index
    %c0_653 = arith.constant 0 : index
    %1113 = vector.load %arg5[%c1_650, %c0_651, %c0_652, %c0_653] : memref<9x2x32x1xf32, #tpu.memory_space<vmem>>, vector<1x1x32x1xf32>
    %1114 = vector.shape_cast %1113 : vector<1x1x32x1xf32> to vector<32x1xf32>
    %1115 = vector.broadcast %1114 : vector<32x1xf32> to vector<32x128xf32>
    %1116 = vector.broadcast %1100 : vector<1x128xf32> to vector<32x128xf32>
    %1117 = arith.mulf %1115, %1116 : vector<32x128xf32>
    %1118 = arith.addf %1112, %1117 : vector<32x128xf32>
    %c1_654 = arith.constant 1 : index
    %c1_655 = arith.constant 1 : index
    %c0_656 = arith.constant 0 : index
    %c0_657 = arith.constant 0 : index
    %1119 = vector.load %arg5[%c1_654, %c1_655, %c0_656, %c0_657] : memref<9x2x32x1xf32, #tpu.memory_space<vmem>>, vector<1x1x32x1xf32>
    %1120 = vector.shape_cast %1119 : vector<1x1x32x1xf32> to vector<32x1xf32>
    %1121 = vector.broadcast %1120 : vector<32x1xf32> to vector<32x128xf32>
    %1122 = vector.broadcast %1108 : vector<1x128xf32> to vector<32x128xf32>
    %1123 = arith.mulf %1121, %1122 : vector<32x128xf32>
    %1124 = arith.addf %1118, %1123 : vector<32x128xf32>
    %cst_658 = arith.constant 6.000000e+00 : f32
    %1125 = vector.broadcast %cst_658 : f32 to vector<1x128xf32>
    %1126 = arith.cmpf ole, %1, %1125 : vector<1x128xf32>
    %cst_659 = arith.constant 1.000000e+00 : f32
    %cst_660 = arith.constant 0.000000e+00 : f32
    %1127 = vector.broadcast %cst_659 : f32 to vector<1x128xf32>
    %1128 = vector.broadcast %cst_660 : f32 to vector<1x128xf32>
    %1129 = arith.select %1126, %1127, %1128 : vector<1x128xi1>, vector<1x128xf32>
    %cst_661 = arith.constant 2.000000e+00 : f32
    %1130 = vector.broadcast %cst_661 : f32 to vector<1x128xf32>
    %1131 = arith.mulf %1130, %0 : vector<1x128xf32>
    %cst_662 = arith.constant 0.000000e+00 : f32
    %1132 = vector.broadcast %cst_662 : f32 to vector<1x128xf32>
    %1133 = arith.addf %1131, %1132 : vector<1x128xf32>
    %cst_663 = arith.constant 0.13333334 : f32
    %1134 = vector.broadcast %cst_663 : f32 to vector<1x128xf32>
    %1135 = arith.mulf %1133, %1134 : vector<1x128xf32>
    %cst_664 = arith.constant 1.000000e+00 : f32
    %1136 = vector.broadcast %cst_664 : f32 to vector<1x128xf32>
    %1137 = arith.subf %1135, %1136 : vector<1x128xf32>
    %cst_665 = arith.constant 2.000000e+00 : f32
    %1138 = vector.broadcast %cst_665 : f32 to vector<1x128xf32>
    %1139 = arith.mulf %1138, %1 : vector<1x128xf32>
    %cst_666 = arith.constant 2.000000e+00 : f32
    %1140 = vector.broadcast %cst_666 : f32 to vector<1x128xf32>
    %1141 = arith.addf %1139, %1140 : vector<1x128xf32>
    %cst_667 = arith.constant 0.13333334 : f32
    %1142 = vector.broadcast %cst_667 : f32 to vector<1x128xf32>
    %1143 = arith.mulf %1141, %1142 : vector<1x128xf32>
    %cst_668 = arith.constant 1.000000e+00 : f32
    %1144 = vector.broadcast %cst_668 : f32 to vector<1x128xf32>
    %1145 = arith.subf %1143, %1144 : vector<1x128xf32>
    %1146 = arith.mulf %1137, %1129 : vector<1x128xf32>
    %1147 = arith.mulf %1145, %1129 : vector<1x128xf32>
    %c127_i32_669 = arith.constant 127 : i32
    %1148 = tpu.dynamic_rotate %3 by %c127_i32_669 dim 1 : vector<4x128xf32>, i32 -> vector<4x128xf32>
    %1149 = vector.broadcast %1129 : vector<1x128xf32> to vector<4x128xf32>
    %1150 = arith.mulf %1148, %1149 : vector<4x128xf32>
    %c2_670 = arith.constant 2 : index
    %c0_671 = arith.constant 0 : index
    %c0_672 = arith.constant 0 : index
    %1151 = vector.load %arg4[%c2_670, %c0_671, %c0_672] : memref<9x32x4xf32, #tpu.memory_space<vmem>>, vector<1x32x4xf32>
    %1152 = vector.shape_cast %1151 : vector<1x32x4xf32> to vector<32x4xf32>
    %cst_673 = arith.constant dense<0.000000e+00> : vector<32x128xf32>
    %1153 = tpu.matmul %1152, %1150, %cst_673 {dimension_numbers = #tpu.dot_dimension_numbers<[1], [0], [0], [1], [0, 0, 1, 1], [], []>} : vector<32x4xf32>, vector<4x128xf32>, vector<32x128xf32> -> vector<32x128xf32>
    %1154 = arith.addf %1124, %1153 : vector<32x128xf32>
    %c2_674 = arith.constant 2 : index
    %c0_675 = arith.constant 0 : index
    %c0_676 = arith.constant 0 : index
    %c0_677 = arith.constant 0 : index
    %1155 = vector.load %arg5[%c2_674, %c0_675, %c0_676, %c0_677] : memref<9x2x32x1xf32, #tpu.memory_space<vmem>>, vector<1x1x32x1xf32>
    %1156 = vector.shape_cast %1155 : vector<1x1x32x1xf32> to vector<32x1xf32>
    %1157 = vector.broadcast %1156 : vector<32x1xf32> to vector<32x128xf32>
    %1158 = vector.broadcast %1146 : vector<1x128xf32> to vector<32x128xf32>
    %1159 = arith.mulf %1157, %1158 : vector<32x128xf32>
    %1160 = arith.addf %1154, %1159 : vector<32x128xf32>
    %c2_678 = arith.constant 2 : index
    %c1_679 = arith.constant 1 : index
    %c0_680 = arith.constant 0 : index
    %c0_681 = arith.constant 0 : index
    %1161 = vector.load %arg5[%c2_678, %c1_679, %c0_680, %c0_681] : memref<9x2x32x1xf32, #tpu.memory_space<vmem>>, vector<1x1x32x1xf32>
    %1162 = vector.shape_cast %1161 : vector<1x1x32x1xf32> to vector<32x1xf32>
    %1163 = vector.broadcast %1162 : vector<32x1xf32> to vector<32x128xf32>
    %1164 = vector.broadcast %1147 : vector<1x128xf32> to vector<32x128xf32>
    %1165 = arith.mulf %1163, %1164 : vector<32x128xf32>
    %1166 = arith.addf %1160, %1165 : vector<32x128xf32>
    %cst_682 = arith.constant 2.000000e+00 : f32
    %1167 = vector.broadcast %cst_682 : f32 to vector<1x128xf32>
    %1168 = arith.mulf %1167, %0 : vector<1x128xf32>
    %cst_683 = arith.constant 1.000000e+00 : f32
    %1169 = vector.broadcast %cst_683 : f32 to vector<1x128xf32>
    %1170 = arith.addf %1168, %1169 : vector<1x128xf32>
    %cst_684 = arith.constant 0.13333334 : f32
    %1171 = vector.broadcast %cst_684 : f32 to vector<1x128xf32>
    %1172 = arith.mulf %1170, %1171 : vector<1x128xf32>
    %cst_685 = arith.constant 1.000000e+00 : f32
    %1173 = vector.broadcast %cst_685 : f32 to vector<1x128xf32>
    %1174 = arith.subf %1172, %1173 : vector<1x128xf32>
    %cst_686 = arith.constant 2.000000e+00 : f32
    %1175 = vector.broadcast %cst_686 : f32 to vector<1x128xf32>
    %1176 = arith.mulf %1175, %1 : vector<1x128xf32>
    %cst_687 = arith.constant 0.000000e+00 : f32
    %1177 = vector.broadcast %cst_687 : f32 to vector<1x128xf32>
    %1178 = arith.addf %1176, %1177 : vector<1x128xf32>
    %cst_688 = arith.constant 0.13333334 : f32
    %1179 = vector.broadcast %cst_688 : f32 to vector<1x128xf32>
    %1180 = arith.mulf %1178, %1179 : vector<1x128xf32>
    %cst_689 = arith.constant 1.000000e+00 : f32
    %1181 = vector.broadcast %cst_689 : f32 to vector<1x128xf32>
    %1182 = arith.subf %1180, %1181 : vector<1x128xf32>
    %c3_690 = arith.constant 3 : index
    %c0_691 = arith.constant 0 : index
    %c0_692 = arith.constant 0 : index
    %1183 = vector.load %arg4[%c3_690, %c0_691, %c0_692] : memref<9x32x4xf32, #tpu.memory_space<vmem>>, vector<1x32x4xf32>
    %1184 = vector.shape_cast %1183 : vector<1x32x4xf32> to vector<32x4xf32>
    %cst_693 = arith.constant dense<0.000000e+00> : vector<32x128xf32>
    %1185 = tpu.matmul %1184, %7, %cst_693 {dimension_numbers = #tpu.dot_dimension_numbers<[1], [0], [0], [1], [0, 0, 1, 1], [], []>} : vector<32x4xf32>, vector<4x128xf32>, vector<32x128xf32> -> vector<32x128xf32>
    %1186 = arith.addf %1166, %1185 : vector<32x128xf32>
    %c3_694 = arith.constant 3 : index
    %c0_695 = arith.constant 0 : index
    %c0_696 = arith.constant 0 : index
    %c0_697 = arith.constant 0 : index
    %1187 = vector.load %arg5[%c3_694, %c0_695, %c0_696, %c0_697] : memref<9x2x32x1xf32, #tpu.memory_space<vmem>>, vector<1x1x32x1xf32>
    %1188 = vector.shape_cast %1187 : vector<1x1x32x1xf32> to vector<32x1xf32>
    %1189 = vector.broadcast %1188 : vector<32x1xf32> to vector<32x128xf32>
    %1190 = vector.broadcast %1174 : vector<1x128xf32> to vector<32x128xf32>
    %1191 = arith.mulf %1189, %1190 : vector<32x128xf32>
    %1192 = arith.addf %1186, %1191 : vector<32x128xf32>
    %c3_698 = arith.constant 3 : index
    %c1_699 = arith.constant 1 : index
    %c0_700 = arith.constant 0 : index
    %c0_701 = arith.constant 0 : index
    %1193 = vector.load %arg5[%c3_698, %c1_699, %c0_700, %c0_701] : memref<9x2x32x1xf32, #tpu.memory_space<vmem>>, vector<1x1x32x1xf32>
    %1194 = vector.shape_cast %1193 : vector<1x1x32x1xf32> to vector<32x1xf32>
    %1195 = vector.broadcast %1194 : vector<32x1xf32> to vector<32x128xf32>
    %1196 = vector.broadcast %1182 : vector<1x128xf32> to vector<32x128xf32>
    %1197 = arith.mulf %1195, %1196 : vector<32x128xf32>
    %1198 = arith.addf %1192, %1197 : vector<32x128xf32>
    %cst_702 = arith.constant 2.000000e+00 : f32
    %1199 = vector.broadcast %cst_702 : f32 to vector<1x128xf32>
    %1200 = arith.mulf %1199, %0 : vector<1x128xf32>
    %cst_703 = arith.constant 1.000000e+00 : f32
    %1201 = vector.broadcast %cst_703 : f32 to vector<1x128xf32>
    %1202 = arith.addf %1200, %1201 : vector<1x128xf32>
    %cst_704 = arith.constant 0.13333334 : f32
    %1203 = vector.broadcast %cst_704 : f32 to vector<1x128xf32>
    %1204 = arith.mulf %1202, %1203 : vector<1x128xf32>
    %cst_705 = arith.constant 1.000000e+00 : f32
    %1205 = vector.broadcast %cst_705 : f32 to vector<1x128xf32>
    %1206 = arith.subf %1204, %1205 : vector<1x128xf32>
    %cst_706 = arith.constant 2.000000e+00 : f32
    %1207 = vector.broadcast %cst_706 : f32 to vector<1x128xf32>
    %1208 = arith.mulf %1207, %1 : vector<1x128xf32>
    %cst_707 = arith.constant 1.000000e+00 : f32
    %1209 = vector.broadcast %cst_707 : f32 to vector<1x128xf32>
    %1210 = arith.addf %1208, %1209 : vector<1x128xf32>
    %cst_708 = arith.constant 0.13333334 : f32
    %1211 = vector.broadcast %cst_708 : f32 to vector<1x128xf32>
    %1212 = arith.mulf %1210, %1211 : vector<1x128xf32>
    %cst_709 = arith.constant 1.000000e+00 : f32
    %1213 = vector.broadcast %cst_709 : f32 to vector<1x128xf32>
    %1214 = arith.subf %1212, %1213 : vector<1x128xf32>
    %c4_710 = arith.constant 4 : index
    %c0_711 = arith.constant 0 : index
    %c0_712 = arith.constant 0 : index
    %1215 = vector.load %arg4[%c4_710, %c0_711, %c0_712] : memref<9x32x4xf32, #tpu.memory_space<vmem>>, vector<1x32x4xf32>
    %1216 = vector.shape_cast %1215 : vector<1x32x4xf32> to vector<32x4xf32>
    %cst_713 = arith.constant dense<0.000000e+00> : vector<32x128xf32>
    %1217 = tpu.matmul %1216, %9, %cst_713 {dimension_numbers = #tpu.dot_dimension_numbers<[1], [0], [0], [1], [0, 0, 1, 1], [], []>} : vector<32x4xf32>, vector<4x128xf32>, vector<32x128xf32> -> vector<32x128xf32>
    %1218 = arith.addf %1198, %1217 : vector<32x128xf32>
    %c4_714 = arith.constant 4 : index
    %c0_715 = arith.constant 0 : index
    %c0_716 = arith.constant 0 : index
    %c0_717 = arith.constant 0 : index
    %1219 = vector.load %arg5[%c4_714, %c0_715, %c0_716, %c0_717] : memref<9x2x32x1xf32, #tpu.memory_space<vmem>>, vector<1x1x32x1xf32>
    %1220 = vector.shape_cast %1219 : vector<1x1x32x1xf32> to vector<32x1xf32>
    %1221 = vector.broadcast %1220 : vector<32x1xf32> to vector<32x128xf32>
    %1222 = vector.broadcast %1206 : vector<1x128xf32> to vector<32x128xf32>
    %1223 = arith.mulf %1221, %1222 : vector<32x128xf32>
    %1224 = arith.addf %1218, %1223 : vector<32x128xf32>
    %c4_718 = arith.constant 4 : index
    %c1_719 = arith.constant 1 : index
    %c0_720 = arith.constant 0 : index
    %c0_721 = arith.constant 0 : index
    %1225 = vector.load %arg5[%c4_718, %c1_719, %c0_720, %c0_721] : memref<9x2x32x1xf32, #tpu.memory_space<vmem>>, vector<1x1x32x1xf32>
    %1226 = vector.shape_cast %1225 : vector<1x1x32x1xf32> to vector<32x1xf32>
    %1227 = vector.broadcast %1226 : vector<32x1xf32> to vector<32x128xf32>
    %1228 = vector.broadcast %1214 : vector<1x128xf32> to vector<32x128xf32>
    %1229 = arith.mulf %1227, %1228 : vector<32x128xf32>
    %1230 = arith.addf %1224, %1229 : vector<32x128xf32>
    %cst_722 = arith.constant 6.000000e+00 : f32
    %1231 = vector.broadcast %cst_722 : f32 to vector<1x128xf32>
    %1232 = arith.cmpf ole, %1, %1231 : vector<1x128xf32>
    %cst_723 = arith.constant 1.000000e+00 : f32
    %cst_724 = arith.constant 0.000000e+00 : f32
    %1233 = vector.broadcast %cst_723 : f32 to vector<1x128xf32>
    %1234 = vector.broadcast %cst_724 : f32 to vector<1x128xf32>
    %1235 = arith.select %1232, %1233, %1234 : vector<1x128xi1>, vector<1x128xf32>
    %cst_725 = arith.constant 2.000000e+00 : f32
    %1236 = vector.broadcast %cst_725 : f32 to vector<1x128xf32>
    %1237 = arith.mulf %1236, %0 : vector<1x128xf32>
    %cst_726 = arith.constant 1.000000e+00 : f32
    %1238 = vector.broadcast %cst_726 : f32 to vector<1x128xf32>
    %1239 = arith.addf %1237, %1238 : vector<1x128xf32>
    %cst_727 = arith.constant 0.13333334 : f32
    %1240 = vector.broadcast %cst_727 : f32 to vector<1x128xf32>
    %1241 = arith.mulf %1239, %1240 : vector<1x128xf32>
    %cst_728 = arith.constant 1.000000e+00 : f32
    %1242 = vector.broadcast %cst_728 : f32 to vector<1x128xf32>
    %1243 = arith.subf %1241, %1242 : vector<1x128xf32>
    %cst_729 = arith.constant 2.000000e+00 : f32
    %1244 = vector.broadcast %cst_729 : f32 to vector<1x128xf32>
    %1245 = arith.mulf %1244, %1 : vector<1x128xf32>
    %cst_730 = arith.constant 2.000000e+00 : f32
    %1246 = vector.broadcast %cst_730 : f32 to vector<1x128xf32>
    %1247 = arith.addf %1245, %1246 : vector<1x128xf32>
    %cst_731 = arith.constant 0.13333334 : f32
    %1248 = vector.broadcast %cst_731 : f32 to vector<1x128xf32>
    %1249 = arith.mulf %1247, %1248 : vector<1x128xf32>
    %cst_732 = arith.constant 1.000000e+00 : f32
    %1250 = vector.broadcast %cst_732 : f32 to vector<1x128xf32>
    %1251 = arith.subf %1249, %1250 : vector<1x128xf32>
    %1252 = arith.mulf %1243, %1235 : vector<1x128xf32>
    %1253 = arith.mulf %1251, %1235 : vector<1x128xf32>
    %c127_i32_733 = arith.constant 127 : i32
    %1254 = tpu.dynamic_rotate %7 by %c127_i32_733 dim 1 : vector<4x128xf32>, i32 -> vector<4x128xf32>
    %1255 = vector.broadcast %1235 : vector<1x128xf32> to vector<4x128xf32>
    %1256 = arith.mulf %1254, %1255 : vector<4x128xf32>
    %c5_734 = arith.constant 5 : index
    %c0_735 = arith.constant 0 : index
    %c0_736 = arith.constant 0 : index
    %1257 = vector.load %arg4[%c5_734, %c0_735, %c0_736] : memref<9x32x4xf32, #tpu.memory_space<vmem>>, vector<1x32x4xf32>
    %1258 = vector.shape_cast %1257 : vector<1x32x4xf32> to vector<32x4xf32>
    %cst_737 = arith.constant dense<0.000000e+00> : vector<32x128xf32>
    %1259 = tpu.matmul %1258, %1256, %cst_737 {dimension_numbers = #tpu.dot_dimension_numbers<[1], [0], [0], [1], [0, 0, 1, 1], [], []>} : vector<32x4xf32>, vector<4x128xf32>, vector<32x128xf32> -> vector<32x128xf32>
    %1260 = arith.addf %1230, %1259 : vector<32x128xf32>
    %c5_738 = arith.constant 5 : index
    %c0_739 = arith.constant 0 : index
    %c0_740 = arith.constant 0 : index
    %c0_741 = arith.constant 0 : index
    %1261 = vector.load %arg5[%c5_738, %c0_739, %c0_740, %c0_741] : memref<9x2x32x1xf32, #tpu.memory_space<vmem>>, vector<1x1x32x1xf32>
    %1262 = vector.shape_cast %1261 : vector<1x1x32x1xf32> to vector<32x1xf32>
    %1263 = vector.broadcast %1262 : vector<32x1xf32> to vector<32x128xf32>
    %1264 = vector.broadcast %1252 : vector<1x128xf32> to vector<32x128xf32>
    %1265 = arith.mulf %1263, %1264 : vector<32x128xf32>
    %1266 = arith.addf %1260, %1265 : vector<32x128xf32>
    %c5_742 = arith.constant 5 : index
    %c1_743 = arith.constant 1 : index
    %c0_744 = arith.constant 0 : index
    %c0_745 = arith.constant 0 : index
    %1267 = vector.load %arg5[%c5_742, %c1_743, %c0_744, %c0_745] : memref<9x2x32x1xf32, #tpu.memory_space<vmem>>, vector<1x1x32x1xf32>
    %1268 = vector.shape_cast %1267 : vector<1x1x32x1xf32> to vector<32x1xf32>
    %1269 = vector.broadcast %1268 : vector<32x1xf32> to vector<32x128xf32>
    %1270 = vector.broadcast %1253 : vector<1x128xf32> to vector<32x128xf32>
    %1271 = arith.mulf %1269, %1270 : vector<32x128xf32>
    %1272 = arith.addf %1266, %1271 : vector<32x128xf32>
    %cst_746 = arith.constant 6.000000e+00 : f32
    %1273 = vector.broadcast %cst_746 : f32 to vector<1x128xf32>
    %1274 = arith.cmpf ole, %0, %1273 : vector<1x128xf32>
    %cst_747 = arith.constant 1.000000e+00 : f32
    %cst_748 = arith.constant 0.000000e+00 : f32
    %1275 = vector.broadcast %cst_747 : f32 to vector<1x128xf32>
    %1276 = vector.broadcast %cst_748 : f32 to vector<1x128xf32>
    %1277 = arith.select %1274, %1275, %1276 : vector<1x128xi1>, vector<1x128xf32>
    %cst_749 = arith.constant 2.000000e+00 : f32
    %1278 = vector.broadcast %cst_749 : f32 to vector<1x128xf32>
    %1279 = arith.mulf %1278, %0 : vector<1x128xf32>
    %cst_750 = arith.constant 2.000000e+00 : f32
    %1280 = vector.broadcast %cst_750 : f32 to vector<1x128xf32>
    %1281 = arith.addf %1279, %1280 : vector<1x128xf32>
    %cst_751 = arith.constant 0.13333334 : f32
    %1282 = vector.broadcast %cst_751 : f32 to vector<1x128xf32>
    %1283 = arith.mulf %1281, %1282 : vector<1x128xf32>
    %cst_752 = arith.constant 1.000000e+00 : f32
    %1284 = vector.broadcast %cst_752 : f32 to vector<1x128xf32>
    %1285 = arith.subf %1283, %1284 : vector<1x128xf32>
    %cst_753 = arith.constant 2.000000e+00 : f32
    %1286 = vector.broadcast %cst_753 : f32 to vector<1x128xf32>
    %1287 = arith.mulf %1286, %1 : vector<1x128xf32>
    %cst_754 = arith.constant 0.000000e+00 : f32
    %1288 = vector.broadcast %cst_754 : f32 to vector<1x128xf32>
    %1289 = arith.addf %1287, %1288 : vector<1x128xf32>
    %cst_755 = arith.constant 0.13333334 : f32
    %1290 = vector.broadcast %cst_755 : f32 to vector<1x128xf32>
    %1291 = arith.mulf %1289, %1290 : vector<1x128xf32>
    %cst_756 = arith.constant 1.000000e+00 : f32
    %1292 = vector.broadcast %cst_756 : f32 to vector<1x128xf32>
    %1293 = arith.subf %1291, %1292 : vector<1x128xf32>
    %1294 = arith.mulf %1285, %1277 : vector<1x128xf32>
    %1295 = arith.mulf %1293, %1277 : vector<1x128xf32>
    %c120_i32_757 = arith.constant 120 : i32
    %1296 = tpu.dynamic_rotate %3 by %c120_i32_757 dim 1 : vector<4x128xf32>, i32 -> vector<4x128xf32>
    %1297 = vector.broadcast %1277 : vector<1x128xf32> to vector<4x128xf32>
    %1298 = arith.mulf %1296, %1297 : vector<4x128xf32>
    %c6_758 = arith.constant 6 : index
    %c0_759 = arith.constant 0 : index
    %c0_760 = arith.constant 0 : index
    %1299 = vector.load %arg4[%c6_758, %c0_759, %c0_760] : memref<9x32x4xf32, #tpu.memory_space<vmem>>, vector<1x32x4xf32>
    %1300 = vector.shape_cast %1299 : vector<1x32x4xf32> to vector<32x4xf32>
    %cst_761 = arith.constant dense<0.000000e+00> : vector<32x128xf32>
    %1301 = tpu.matmul %1300, %1298, %cst_761 {dimension_numbers = #tpu.dot_dimension_numbers<[1], [0], [0], [1], [0, 0, 1, 1], [], []>} : vector<32x4xf32>, vector<4x128xf32>, vector<32x128xf32> -> vector<32x128xf32>
    %1302 = arith.addf %1272, %1301 : vector<32x128xf32>
    %c6_762 = arith.constant 6 : index
    %c0_763 = arith.constant 0 : index
    %c0_764 = arith.constant 0 : index
    %c0_765 = arith.constant 0 : index
    %1303 = vector.load %arg5[%c6_762, %c0_763, %c0_764, %c0_765] : memref<9x2x32x1xf32, #tpu.memory_space<vmem>>, vector<1x1x32x1xf32>
    %1304 = vector.shape_cast %1303 : vector<1x1x32x1xf32> to vector<32x1xf32>
    %1305 = vector.broadcast %1304 : vector<32x1xf32> to vector<32x128xf32>
    %1306 = vector.broadcast %1294 : vector<1x128xf32> to vector<32x128xf32>
    %1307 = arith.mulf %1305, %1306 : vector<32x128xf32>
    %1308 = arith.addf %1302, %1307 : vector<32x128xf32>
    %c6_766 = arith.constant 6 : index
    %c1_767 = arith.constant 1 : index
    %c0_768 = arith.constant 0 : index
    %c0_769 = arith.constant 0 : index
    %1309 = vector.load %arg5[%c6_766, %c1_767, %c0_768, %c0_769] : memref<9x2x32x1xf32, #tpu.memory_space<vmem>>, vector<1x1x32x1xf32>
    %1310 = vector.shape_cast %1309 : vector<1x1x32x1xf32> to vector<32x1xf32>
    %1311 = vector.broadcast %1310 : vector<32x1xf32> to vector<32x128xf32>
    %1312 = vector.broadcast %1295 : vector<1x128xf32> to vector<32x128xf32>
    %1313 = arith.mulf %1311, %1312 : vector<32x128xf32>
    %1314 = arith.addf %1308, %1313 : vector<32x128xf32>
    %cst_770 = arith.constant 6.000000e+00 : f32
    %1315 = vector.broadcast %cst_770 : f32 to vector<1x128xf32>
    %1316 = arith.cmpf ole, %0, %1315 : vector<1x128xf32>
    %cst_771 = arith.constant 1.000000e+00 : f32
    %cst_772 = arith.constant 0.000000e+00 : f32
    %1317 = vector.broadcast %cst_771 : f32 to vector<1x128xf32>
    %1318 = vector.broadcast %cst_772 : f32 to vector<1x128xf32>
    %1319 = arith.select %1316, %1317, %1318 : vector<1x128xi1>, vector<1x128xf32>
    %cst_773 = arith.constant 2.000000e+00 : f32
    %1320 = vector.broadcast %cst_773 : f32 to vector<1x128xf32>
    %1321 = arith.mulf %1320, %0 : vector<1x128xf32>
    %cst_774 = arith.constant 2.000000e+00 : f32
    %1322 = vector.broadcast %cst_774 : f32 to vector<1x128xf32>
    %1323 = arith.addf %1321, %1322 : vector<1x128xf32>
    %cst_775 = arith.constant 0.13333334 : f32
    %1324 = vector.broadcast %cst_775 : f32 to vector<1x128xf32>
    %1325 = arith.mulf %1323, %1324 : vector<1x128xf32>
    %cst_776 = arith.constant 1.000000e+00 : f32
    %1326 = vector.broadcast %cst_776 : f32 to vector<1x128xf32>
    %1327 = arith.subf %1325, %1326 : vector<1x128xf32>
    %cst_777 = arith.constant 2.000000e+00 : f32
    %1328 = vector.broadcast %cst_777 : f32 to vector<1x128xf32>
    %1329 = arith.mulf %1328, %1 : vector<1x128xf32>
    %cst_778 = arith.constant 1.000000e+00 : f32
    %1330 = vector.broadcast %cst_778 : f32 to vector<1x128xf32>
    %1331 = arith.addf %1329, %1330 : vector<1x128xf32>
    %cst_779 = arith.constant 0.13333334 : f32
    %1332 = vector.broadcast %cst_779 : f32 to vector<1x128xf32>
    %1333 = arith.mulf %1331, %1332 : vector<1x128xf32>
    %cst_780 = arith.constant 1.000000e+00 : f32
    %1334 = vector.broadcast %cst_780 : f32 to vector<1x128xf32>
    %1335 = arith.subf %1333, %1334 : vector<1x128xf32>
    %1336 = arith.mulf %1327, %1319 : vector<1x128xf32>
    %1337 = arith.mulf %1335, %1319 : vector<1x128xf32>
    %c120_i32_781 = arith.constant 120 : i32
    %1338 = tpu.dynamic_rotate %5 by %c120_i32_781 dim 1 : vector<4x128xf32>, i32 -> vector<4x128xf32>
    %1339 = vector.broadcast %1319 : vector<1x128xf32> to vector<4x128xf32>
    %1340 = arith.mulf %1338, %1339 : vector<4x128xf32>
    %c7_782 = arith.constant 7 : index
    %c0_783 = arith.constant 0 : index
    %c0_784 = arith.constant 0 : index
    %1341 = vector.load %arg4[%c7_782, %c0_783, %c0_784] : memref<9x32x4xf32, #tpu.memory_space<vmem>>, vector<1x32x4xf32>
    %1342 = vector.shape_cast %1341 : vector<1x32x4xf32> to vector<32x4xf32>
    %cst_785 = arith.constant dense<0.000000e+00> : vector<32x128xf32>
    %1343 = tpu.matmul %1342, %1340, %cst_785 {dimension_numbers = #tpu.dot_dimension_numbers<[1], [0], [0], [1], [0, 0, 1, 1], [], []>} : vector<32x4xf32>, vector<4x128xf32>, vector<32x128xf32> -> vector<32x128xf32>
    %1344 = arith.addf %1314, %1343 : vector<32x128xf32>
    %c7_786 = arith.constant 7 : index
    %c0_787 = arith.constant 0 : index
    %c0_788 = arith.constant 0 : index
    %c0_789 = arith.constant 0 : index
    %1345 = vector.load %arg5[%c7_786, %c0_787, %c0_788, %c0_789] : memref<9x2x32x1xf32, #tpu.memory_space<vmem>>, vector<1x1x32x1xf32>
    %1346 = vector.shape_cast %1345 : vector<1x1x32x1xf32> to vector<32x1xf32>
    %1347 = vector.broadcast %1346 : vector<32x1xf32> to vector<32x128xf32>
    %1348 = vector.broadcast %1336 : vector<1x128xf32> to vector<32x128xf32>
    %1349 = arith.mulf %1347, %1348 : vector<32x128xf32>
    %1350 = arith.addf %1344, %1349 : vector<32x128xf32>
    %c7_790 = arith.constant 7 : index
    %c1_791 = arith.constant 1 : index
    %c0_792 = arith.constant 0 : index
    %c0_793 = arith.constant 0 : index
    %1351 = vector.load %arg5[%c7_790, %c1_791, %c0_792, %c0_793] : memref<9x2x32x1xf32, #tpu.memory_space<vmem>>, vector<1x1x32x1xf32>
    %1352 = vector.shape_cast %1351 : vector<1x1x32x1xf32> to vector<32x1xf32>
    %1353 = vector.broadcast %1352 : vector<32x1xf32> to vector<32x128xf32>
    %1354 = vector.broadcast %1337 : vector<1x128xf32> to vector<32x128xf32>
    %1355 = arith.mulf %1353, %1354 : vector<32x128xf32>
    %1356 = arith.addf %1350, %1355 : vector<32x128xf32>
    %cst_794 = arith.constant 6.000000e+00 : f32
    %1357 = vector.broadcast %cst_794 : f32 to vector<1x128xf32>
    %1358 = arith.cmpf ole, %0, %1357 : vector<1x128xf32>
    %cst_795 = arith.constant 6.000000e+00 : f32
    %1359 = vector.broadcast %cst_795 : f32 to vector<1x128xf32>
    %1360 = arith.cmpf ole, %1, %1359 : vector<1x128xf32>
    %1361 = arith.andi %1358, %1360 : vector<1x128xi1>
    %cst_796 = arith.constant 1.000000e+00 : f32
    %cst_797 = arith.constant 0.000000e+00 : f32
    %1362 = vector.broadcast %cst_796 : f32 to vector<1x128xf32>
    %1363 = vector.broadcast %cst_797 : f32 to vector<1x128xf32>
    %1364 = arith.select %1361, %1362, %1363 : vector<1x128xi1>, vector<1x128xf32>
    %cst_798 = arith.constant 2.000000e+00 : f32
    %1365 = vector.broadcast %cst_798 : f32 to vector<1x128xf32>
    %1366 = arith.mulf %1365, %0 : vector<1x128xf32>
    %cst_799 = arith.constant 2.000000e+00 : f32
    %1367 = vector.broadcast %cst_799 : f32 to vector<1x128xf32>
    %1368 = arith.addf %1366, %1367 : vector<1x128xf32>
    %cst_800 = arith.constant 0.13333334 : f32
    %1369 = vector.broadcast %cst_800 : f32 to vector<1x128xf32>
    %1370 = arith.mulf %1368, %1369 : vector<1x128xf32>
    %cst_801 = arith.constant 1.000000e+00 : f32
    %1371 = vector.broadcast %cst_801 : f32 to vector<1x128xf32>
    %1372 = arith.subf %1370, %1371 : vector<1x128xf32>
    %cst_802 = arith.constant 2.000000e+00 : f32
    %1373 = vector.broadcast %cst_802 : f32 to vector<1x128xf32>
    %1374 = arith.mulf %1373, %1 : vector<1x128xf32>
    %cst_803 = arith.constant 2.000000e+00 : f32
    %1375 = vector.broadcast %cst_803 : f32 to vector<1x128xf32>
    %1376 = arith.addf %1374, %1375 : vector<1x128xf32>
    %cst_804 = arith.constant 0.13333334 : f32
    %1377 = vector.broadcast %cst_804 : f32 to vector<1x128xf32>
    %1378 = arith.mulf %1376, %1377 : vector<1x128xf32>
    %cst_805 = arith.constant 1.000000e+00 : f32
    %1379 = vector.broadcast %cst_805 : f32 to vector<1x128xf32>
    %1380 = arith.subf %1378, %1379 : vector<1x128xf32>
    %1381 = arith.mulf %1372, %1364 : vector<1x128xf32>
    %1382 = arith.mulf %1380, %1364 : vector<1x128xf32>
    %c119_i32 = arith.constant 119 : i32
    %1383 = tpu.dynamic_rotate %3 by %c119_i32 dim 1 : vector<4x128xf32>, i32 -> vector<4x128xf32>
    %1384 = vector.broadcast %1364 : vector<1x128xf32> to vector<4x128xf32>
    %1385 = arith.mulf %1383, %1384 : vector<4x128xf32>
    %c8_806 = arith.constant 8 : index
    %c0_807 = arith.constant 0 : index
    %c0_808 = arith.constant 0 : index
    %1386 = vector.load %arg4[%c8_806, %c0_807, %c0_808] : memref<9x32x4xf32, #tpu.memory_space<vmem>>, vector<1x32x4xf32>
    %1387 = vector.shape_cast %1386 : vector<1x32x4xf32> to vector<32x4xf32>
    %cst_809 = arith.constant dense<0.000000e+00> : vector<32x128xf32>
    %1388 = tpu.matmul %1387, %1385, %cst_809 {dimension_numbers = #tpu.dot_dimension_numbers<[1], [0], [0], [1], [0, 0, 1, 1], [], []>} : vector<32x4xf32>, vector<4x128xf32>, vector<32x128xf32> -> vector<32x128xf32>
    %1389 = arith.addf %1356, %1388 : vector<32x128xf32>
    %c8_810 = arith.constant 8 : index
    %c0_811 = arith.constant 0 : index
    %c0_812 = arith.constant 0 : index
    %c0_813 = arith.constant 0 : index
    %1390 = vector.load %arg5[%c8_810, %c0_811, %c0_812, %c0_813] : memref<9x2x32x1xf32, #tpu.memory_space<vmem>>, vector<1x1x32x1xf32>
    %1391 = vector.shape_cast %1390 : vector<1x1x32x1xf32> to vector<32x1xf32>
    %1392 = vector.broadcast %1391 : vector<32x1xf32> to vector<32x128xf32>
    %1393 = vector.broadcast %1381 : vector<1x128xf32> to vector<32x128xf32>
    %1394 = arith.mulf %1392, %1393 : vector<32x128xf32>
    %1395 = arith.addf %1389, %1394 : vector<32x128xf32>
    %c8_814 = arith.constant 8 : index
    %c1_815 = arith.constant 1 : index
    %c0_816 = arith.constant 0 : index
    %c0_817 = arith.constant 0 : index
    %1396 = vector.load %arg5[%c8_814, %c1_815, %c0_816, %c0_817] : memref<9x2x32x1xf32, #tpu.memory_space<vmem>>, vector<1x1x32x1xf32>
    %1397 = vector.shape_cast %1396 : vector<1x1x32x1xf32> to vector<32x1xf32>
    %1398 = vector.broadcast %1397 : vector<32x1xf32> to vector<32x128xf32>
    %1399 = vector.broadcast %1382 : vector<1x128xf32> to vector<32x128xf32>
    %1400 = arith.mulf %1398, %1399 : vector<32x128xf32>
    %1401 = arith.addf %1395, %1400 : vector<32x128xf32>
    %cst_818 = arith.constant 0.000000e+00 : f32
    %1402 = vector.broadcast %cst_818 : f32 to vector<32x128xf32>
    %1403 = arith.cmpf ogt, %1401, %1402 : vector<32x128xf32>
    %cst_819 = arith.constant 2.000000e-01 : f32
    %1404 = vector.broadcast %cst_819 : f32 to vector<32x128xf32>
    %1405 = arith.mulf %1404, %1401 : vector<32x128xf32>
    %1406 = arith.select %1403, %1401, %1405 : vector<32x128xi1>, vector<32x128xf32>
    %cst_820 = arith.constant 0.000000e+00 : f32
    %1407 = vector.broadcast %cst_820 : f32 to vector<32x128xf32>
    %c0_821 = arith.constant 0 : index
    %c0_822 = arith.constant 0 : index
    %1408 = vector.load %arg9[%c0_821, %c0_822] : memref<32x1xf32, #tpu.memory_space<vmem>>, vector<32x1xf32>
    %1409 = vector.broadcast %1408 : vector<32x1xf32> to vector<32x128xf32>
    %1410 = arith.addf %1407, %1409 : vector<32x128xf32>
    %cst_823 = arith.constant 1.000000e+00 : f32
    %1411 = vector.broadcast %cst_823 : f32 to vector<1x128xf32>
    %1412 = arith.cmpf oge, %0, %1411 : vector<1x128xf32>
    %cst_824 = arith.constant 1.000000e+00 : f32
    %1413 = vector.broadcast %cst_824 : f32 to vector<1x128xf32>
    %1414 = arith.cmpf oge, %1, %1413 : vector<1x128xf32>
    %1415 = arith.andi %1412, %1414 : vector<1x128xi1>
    %cst_825 = arith.constant 1.000000e+00 : f32
    %cst_826 = arith.constant 0.000000e+00 : f32
    %1416 = vector.broadcast %cst_825 : f32 to vector<1x128xf32>
    %1417 = vector.broadcast %cst_826 : f32 to vector<1x128xf32>
    %1418 = arith.select %1415, %1416, %1417 : vector<1x128xi1>, vector<1x128xf32>
    %cst_827 = arith.constant 2.000000e+00 : f32
    %1419 = vector.broadcast %cst_827 : f32 to vector<1x128xf32>
    %1420 = arith.mulf %1419, %0 : vector<1x128xf32>
    %cst_828 = arith.constant -1.000000e+00 : f32
    %1421 = vector.broadcast %cst_828 : f32 to vector<1x128xf32>
    %1422 = arith.addf %1420, %1421 : vector<1x128xf32>
    %cst_829 = arith.constant 0.13333334 : f32
    %1423 = vector.broadcast %cst_829 : f32 to vector<1x128xf32>
    %1424 = arith.mulf %1422, %1423 : vector<1x128xf32>
    %cst_830 = arith.constant 1.000000e+00 : f32
    %1425 = vector.broadcast %cst_830 : f32 to vector<1x128xf32>
    %1426 = arith.subf %1424, %1425 : vector<1x128xf32>
    %cst_831 = arith.constant 2.000000e+00 : f32
    %1427 = vector.broadcast %cst_831 : f32 to vector<1x128xf32>
    %1428 = arith.mulf %1427, %1 : vector<1x128xf32>
    %cst_832 = arith.constant -1.000000e+00 : f32
    %1429 = vector.broadcast %cst_832 : f32 to vector<1x128xf32>
    %1430 = arith.addf %1428, %1429 : vector<1x128xf32>
    %cst_833 = arith.constant 0.13333334 : f32
    %1431 = vector.broadcast %cst_833 : f32 to vector<1x128xf32>
    %1432 = arith.mulf %1430, %1431 : vector<1x128xf32>
    %cst_834 = arith.constant 1.000000e+00 : f32
    %1433 = vector.broadcast %cst_834 : f32 to vector<1x128xf32>
    %1434 = arith.subf %1432, %1433 : vector<1x128xf32>
    %1435 = arith.mulf %1426, %1418 : vector<1x128xf32>
    %1436 = arith.mulf %1434, %1418 : vector<1x128xf32>
    %c9_i32_835 = arith.constant 9 : i32
    %1437 = tpu.dynamic_rotate %1406 by %c9_i32_835 dim 1 : vector<32x128xf32>, i32 -> vector<32x128xf32>
    %1438 = vector.broadcast %1418 : vector<1x128xf32> to vector<32x128xf32>
    %1439 = arith.mulf %1437, %1438 : vector<32x128xf32>
    %c0_836 = arith.constant 0 : index
    %c0_837 = arith.constant 0 : index
    %c0_838 = arith.constant 0 : index
    %1440 = vector.load %arg7[%c0_836, %c0_837, %c0_838] : memref<9x32x32xf32, #tpu.memory_space<vmem>>, vector<1x32x32xf32>
    %1441 = vector.shape_cast %1440 : vector<1x32x32xf32> to vector<32x32xf32>
    %cst_839 = arith.constant dense<0.000000e+00> : vector<32x128xf32>
    %1442 = tpu.matmul %1441, %1439, %cst_839 {dimension_numbers = #tpu.dot_dimension_numbers<[1], [0], [0], [1], [0, 0, 1, 1], [], []>} : vector<32x32xf32>, vector<32x128xf32>, vector<32x128xf32> -> vector<32x128xf32>
    %1443 = arith.addf %1410, %1442 : vector<32x128xf32>
    %c0_840 = arith.constant 0 : index
    %c0_841 = arith.constant 0 : index
    %c0_842 = arith.constant 0 : index
    %c0_843 = arith.constant 0 : index
    %1444 = vector.load %arg8[%c0_840, %c0_841, %c0_842, %c0_843] : memref<9x2x32x1xf32, #tpu.memory_space<vmem>>, vector<1x1x32x1xf32>
    %1445 = vector.shape_cast %1444 : vector<1x1x32x1xf32> to vector<32x1xf32>
    %1446 = vector.broadcast %1445 : vector<32x1xf32> to vector<32x128xf32>
    %1447 = vector.broadcast %1435 : vector<1x128xf32> to vector<32x128xf32>
    %1448 = arith.mulf %1446, %1447 : vector<32x128xf32>
    %1449 = arith.addf %1443, %1448 : vector<32x128xf32>
    %c0_844 = arith.constant 0 : index
    %c1_845 = arith.constant 1 : index
    %c0_846 = arith.constant 0 : index
    %c0_847 = arith.constant 0 : index
    %1450 = vector.load %arg8[%c0_844, %c1_845, %c0_846, %c0_847] : memref<9x2x32x1xf32, #tpu.memory_space<vmem>>, vector<1x1x32x1xf32>
    %1451 = vector.shape_cast %1450 : vector<1x1x32x1xf32> to vector<32x1xf32>
    %1452 = vector.broadcast %1451 : vector<32x1xf32> to vector<32x128xf32>
    %1453 = vector.broadcast %1436 : vector<1x128xf32> to vector<32x128xf32>
    %1454 = arith.mulf %1452, %1453 : vector<32x128xf32>
    %1455 = arith.addf %1449, %1454 : vector<32x128xf32>
    %cst_848 = arith.constant 1.000000e+00 : f32
    %1456 = vector.broadcast %cst_848 : f32 to vector<1x128xf32>
    %1457 = arith.cmpf oge, %0, %1456 : vector<1x128xf32>
    %cst_849 = arith.constant 1.000000e+00 : f32
    %cst_850 = arith.constant 0.000000e+00 : f32
    %1458 = vector.broadcast %cst_849 : f32 to vector<1x128xf32>
    %1459 = vector.broadcast %cst_850 : f32 to vector<1x128xf32>
    %1460 = arith.select %1457, %1458, %1459 : vector<1x128xi1>, vector<1x128xf32>
    %cst_851 = arith.constant 2.000000e+00 : f32
    %1461 = vector.broadcast %cst_851 : f32 to vector<1x128xf32>
    %1462 = arith.mulf %1461, %0 : vector<1x128xf32>
    %cst_852 = arith.constant -1.000000e+00 : f32
    %1463 = vector.broadcast %cst_852 : f32 to vector<1x128xf32>
    %1464 = arith.addf %1462, %1463 : vector<1x128xf32>
    %cst_853 = arith.constant 0.13333334 : f32
    %1465 = vector.broadcast %cst_853 : f32 to vector<1x128xf32>
    %1466 = arith.mulf %1464, %1465 : vector<1x128xf32>
    %cst_854 = arith.constant 1.000000e+00 : f32
    %1467 = vector.broadcast %cst_854 : f32 to vector<1x128xf32>
    %1468 = arith.subf %1466, %1467 : vector<1x128xf32>
    %cst_855 = arith.constant 2.000000e+00 : f32
    %1469 = vector.broadcast %cst_855 : f32 to vector<1x128xf32>
    %1470 = arith.mulf %1469, %1 : vector<1x128xf32>
    %cst_856 = arith.constant 0.000000e+00 : f32
    %1471 = vector.broadcast %cst_856 : f32 to vector<1x128xf32>
    %1472 = arith.addf %1470, %1471 : vector<1x128xf32>
    %cst_857 = arith.constant 0.13333334 : f32
    %1473 = vector.broadcast %cst_857 : f32 to vector<1x128xf32>
    %1474 = arith.mulf %1472, %1473 : vector<1x128xf32>
    %cst_858 = arith.constant 1.000000e+00 : f32
    %1475 = vector.broadcast %cst_858 : f32 to vector<1x128xf32>
    %1476 = arith.subf %1474, %1475 : vector<1x128xf32>
    %1477 = arith.mulf %1468, %1460 : vector<1x128xf32>
    %1478 = arith.mulf %1476, %1460 : vector<1x128xf32>
    %c8_i32_859 = arith.constant 8 : i32
    %1479 = tpu.dynamic_rotate %1057 by %c8_i32_859 dim 1 : vector<32x128xf32>, i32 -> vector<32x128xf32>
    %1480 = vector.broadcast %1460 : vector<1x128xf32> to vector<32x128xf32>
    %1481 = arith.mulf %1479, %1480 : vector<32x128xf32>
    %c1_860 = arith.constant 1 : index
    %c0_861 = arith.constant 0 : index
    %c0_862 = arith.constant 0 : index
    %1482 = vector.load %arg7[%c1_860, %c0_861, %c0_862] : memref<9x32x32xf32, #tpu.memory_space<vmem>>, vector<1x32x32xf32>
    %1483 = vector.shape_cast %1482 : vector<1x32x32xf32> to vector<32x32xf32>
    %cst_863 = arith.constant dense<0.000000e+00> : vector<32x128xf32>
    %1484 = tpu.matmul %1483, %1481, %cst_863 {dimension_numbers = #tpu.dot_dimension_numbers<[1], [0], [0], [1], [0, 0, 1, 1], [], []>} : vector<32x32xf32>, vector<32x128xf32>, vector<32x128xf32> -> vector<32x128xf32>
    %1485 = arith.addf %1455, %1484 : vector<32x128xf32>
    %c1_864 = arith.constant 1 : index
    %c0_865 = arith.constant 0 : index
    %c0_866 = arith.constant 0 : index
    %c0_867 = arith.constant 0 : index
    %1486 = vector.load %arg8[%c1_864, %c0_865, %c0_866, %c0_867] : memref<9x2x32x1xf32, #tpu.memory_space<vmem>>, vector<1x1x32x1xf32>
    %1487 = vector.shape_cast %1486 : vector<1x1x32x1xf32> to vector<32x1xf32>
    %1488 = vector.broadcast %1487 : vector<32x1xf32> to vector<32x128xf32>
    %1489 = vector.broadcast %1477 : vector<1x128xf32> to vector<32x128xf32>
    %1490 = arith.mulf %1488, %1489 : vector<32x128xf32>
    %1491 = arith.addf %1485, %1490 : vector<32x128xf32>
    %c1_868 = arith.constant 1 : index
    %c1_869 = arith.constant 1 : index
    %c0_870 = arith.constant 0 : index
    %c0_871 = arith.constant 0 : index
    %1492 = vector.load %arg8[%c1_868, %c1_869, %c0_870, %c0_871] : memref<9x2x32x1xf32, #tpu.memory_space<vmem>>, vector<1x1x32x1xf32>
    %1493 = vector.shape_cast %1492 : vector<1x1x32x1xf32> to vector<32x1xf32>
    %1494 = vector.broadcast %1493 : vector<32x1xf32> to vector<32x128xf32>
    %1495 = vector.broadcast %1478 : vector<1x128xf32> to vector<32x128xf32>
    %1496 = arith.mulf %1494, %1495 : vector<32x128xf32>
    %1497 = arith.addf %1491, %1496 : vector<32x128xf32>
    %cst_872 = arith.constant 1.000000e+00 : f32
    %1498 = vector.broadcast %cst_872 : f32 to vector<1x128xf32>
    %1499 = arith.cmpf oge, %0, %1498 : vector<1x128xf32>
    %cst_873 = arith.constant 1.000000e+00 : f32
    %cst_874 = arith.constant 0.000000e+00 : f32
    %1500 = vector.broadcast %cst_873 : f32 to vector<1x128xf32>
    %1501 = vector.broadcast %cst_874 : f32 to vector<1x128xf32>
    %1502 = arith.select %1499, %1500, %1501 : vector<1x128xi1>, vector<1x128xf32>
    %cst_875 = arith.constant 2.000000e+00 : f32
    %1503 = vector.broadcast %cst_875 : f32 to vector<1x128xf32>
    %1504 = arith.mulf %1503, %0 : vector<1x128xf32>
    %cst_876 = arith.constant -1.000000e+00 : f32
    %1505 = vector.broadcast %cst_876 : f32 to vector<1x128xf32>
    %1506 = arith.addf %1504, %1505 : vector<1x128xf32>
    %cst_877 = arith.constant 0.13333334 : f32
    %1507 = vector.broadcast %cst_877 : f32 to vector<1x128xf32>
    %1508 = arith.mulf %1506, %1507 : vector<1x128xf32>
    %cst_878 = arith.constant 1.000000e+00 : f32
    %1509 = vector.broadcast %cst_878 : f32 to vector<1x128xf32>
    %1510 = arith.subf %1508, %1509 : vector<1x128xf32>
    %cst_879 = arith.constant 2.000000e+00 : f32
    %1511 = vector.broadcast %cst_879 : f32 to vector<1x128xf32>
    %1512 = arith.mulf %1511, %1 : vector<1x128xf32>
    %cst_880 = arith.constant 1.000000e+00 : f32
    %1513 = vector.broadcast %cst_880 : f32 to vector<1x128xf32>
    %1514 = arith.addf %1512, %1513 : vector<1x128xf32>
    %cst_881 = arith.constant 0.13333334 : f32
    %1515 = vector.broadcast %cst_881 : f32 to vector<1x128xf32>
    %1516 = arith.mulf %1514, %1515 : vector<1x128xf32>
    %cst_882 = arith.constant 1.000000e+00 : f32
    %1517 = vector.broadcast %cst_882 : f32 to vector<1x128xf32>
    %1518 = arith.subf %1516, %1517 : vector<1x128xf32>
    %1519 = arith.mulf %1510, %1502 : vector<1x128xf32>
    %1520 = arith.mulf %1518, %1502 : vector<1x128xf32>
    %c8_i32_883 = arith.constant 8 : i32
    %1521 = tpu.dynamic_rotate %1406 by %c8_i32_883 dim 1 : vector<32x128xf32>, i32 -> vector<32x128xf32>
    %1522 = vector.broadcast %1502 : vector<1x128xf32> to vector<32x128xf32>
    %1523 = arith.mulf %1521, %1522 : vector<32x128xf32>
    %c2_884 = arith.constant 2 : index
    %c0_885 = arith.constant 0 : index
    %c0_886 = arith.constant 0 : index
    %1524 = vector.load %arg7[%c2_884, %c0_885, %c0_886] : memref<9x32x32xf32, #tpu.memory_space<vmem>>, vector<1x32x32xf32>
    %1525 = vector.shape_cast %1524 : vector<1x32x32xf32> to vector<32x32xf32>
    %cst_887 = arith.constant dense<0.000000e+00> : vector<32x128xf32>
    %1526 = tpu.matmul %1525, %1523, %cst_887 {dimension_numbers = #tpu.dot_dimension_numbers<[1], [0], [0], [1], [0, 0, 1, 1], [], []>} : vector<32x32xf32>, vector<32x128xf32>, vector<32x128xf32> -> vector<32x128xf32>
    %1527 = arith.addf %1497, %1526 : vector<32x128xf32>
    %c2_888 = arith.constant 2 : index
    %c0_889 = arith.constant 0 : index
    %c0_890 = arith.constant 0 : index
    %c0_891 = arith.constant 0 : index
    %1528 = vector.load %arg8[%c2_888, %c0_889, %c0_890, %c0_891] : memref<9x2x32x1xf32, #tpu.memory_space<vmem>>, vector<1x1x32x1xf32>
    %1529 = vector.shape_cast %1528 : vector<1x1x32x1xf32> to vector<32x1xf32>
    %1530 = vector.broadcast %1529 : vector<32x1xf32> to vector<32x128xf32>
    %1531 = vector.broadcast %1519 : vector<1x128xf32> to vector<32x128xf32>
    %1532 = arith.mulf %1530, %1531 : vector<32x128xf32>
    %1533 = arith.addf %1527, %1532 : vector<32x128xf32>
    %c2_892 = arith.constant 2 : index
    %c1_893 = arith.constant 1 : index
    %c0_894 = arith.constant 0 : index
    %c0_895 = arith.constant 0 : index
    %1534 = vector.load %arg8[%c2_892, %c1_893, %c0_894, %c0_895] : memref<9x2x32x1xf32, #tpu.memory_space<vmem>>, vector<1x1x32x1xf32>
    %1535 = vector.shape_cast %1534 : vector<1x1x32x1xf32> to vector<32x1xf32>
    %1536 = vector.broadcast %1535 : vector<32x1xf32> to vector<32x128xf32>
    %1537 = vector.broadcast %1520 : vector<1x128xf32> to vector<32x128xf32>
    %1538 = arith.mulf %1536, %1537 : vector<32x128xf32>
    %1539 = arith.addf %1533, %1538 : vector<32x128xf32>
    %cst_896 = arith.constant 1.000000e+00 : f32
    %1540 = vector.broadcast %cst_896 : f32 to vector<1x128xf32>
    %1541 = arith.cmpf oge, %1, %1540 : vector<1x128xf32>
    %cst_897 = arith.constant 1.000000e+00 : f32
    %cst_898 = arith.constant 0.000000e+00 : f32
    %1542 = vector.broadcast %cst_897 : f32 to vector<1x128xf32>
    %1543 = vector.broadcast %cst_898 : f32 to vector<1x128xf32>
    %1544 = arith.select %1541, %1542, %1543 : vector<1x128xi1>, vector<1x128xf32>
    %cst_899 = arith.constant 2.000000e+00 : f32
    %1545 = vector.broadcast %cst_899 : f32 to vector<1x128xf32>
    %1546 = arith.mulf %1545, %0 : vector<1x128xf32>
    %cst_900 = arith.constant 0.000000e+00 : f32
    %1547 = vector.broadcast %cst_900 : f32 to vector<1x128xf32>
    %1548 = arith.addf %1546, %1547 : vector<1x128xf32>
    %cst_901 = arith.constant 0.13333334 : f32
    %1549 = vector.broadcast %cst_901 : f32 to vector<1x128xf32>
    %1550 = arith.mulf %1548, %1549 : vector<1x128xf32>
    %cst_902 = arith.constant 1.000000e+00 : f32
    %1551 = vector.broadcast %cst_902 : f32 to vector<1x128xf32>
    %1552 = arith.subf %1550, %1551 : vector<1x128xf32>
    %cst_903 = arith.constant 2.000000e+00 : f32
    %1553 = vector.broadcast %cst_903 : f32 to vector<1x128xf32>
    %1554 = arith.mulf %1553, %1 : vector<1x128xf32>
    %cst_904 = arith.constant -1.000000e+00 : f32
    %1555 = vector.broadcast %cst_904 : f32 to vector<1x128xf32>
    %1556 = arith.addf %1554, %1555 : vector<1x128xf32>
    %cst_905 = arith.constant 0.13333334 : f32
    %1557 = vector.broadcast %cst_905 : f32 to vector<1x128xf32>
    %1558 = arith.mulf %1556, %1557 : vector<1x128xf32>
    %cst_906 = arith.constant 1.000000e+00 : f32
    %1559 = vector.broadcast %cst_906 : f32 to vector<1x128xf32>
    %1560 = arith.subf %1558, %1559 : vector<1x128xf32>
    %1561 = arith.mulf %1552, %1544 : vector<1x128xf32>
    %1562 = arith.mulf %1560, %1544 : vector<1x128xf32>
    %c1_i32_907 = arith.constant 1 : i32
    %1563 = tpu.dynamic_rotate %708 by %c1_i32_907 dim 1 : vector<32x128xf32>, i32 -> vector<32x128xf32>
    %1564 = vector.broadcast %1544 : vector<1x128xf32> to vector<32x128xf32>
    %1565 = arith.mulf %1563, %1564 : vector<32x128xf32>
    %c3_908 = arith.constant 3 : index
    %c0_909 = arith.constant 0 : index
    %c0_910 = arith.constant 0 : index
    %1566 = vector.load %arg7[%c3_908, %c0_909, %c0_910] : memref<9x32x32xf32, #tpu.memory_space<vmem>>, vector<1x32x32xf32>
    %1567 = vector.shape_cast %1566 : vector<1x32x32xf32> to vector<32x32xf32>
    %cst_911 = arith.constant dense<0.000000e+00> : vector<32x128xf32>
    %1568 = tpu.matmul %1567, %1565, %cst_911 {dimension_numbers = #tpu.dot_dimension_numbers<[1], [0], [0], [1], [0, 0, 1, 1], [], []>} : vector<32x32xf32>, vector<32x128xf32>, vector<32x128xf32> -> vector<32x128xf32>
    %1569 = arith.addf %1539, %1568 : vector<32x128xf32>
    %c3_912 = arith.constant 3 : index
    %c0_913 = arith.constant 0 : index
    %c0_914 = arith.constant 0 : index
    %c0_915 = arith.constant 0 : index
    %1570 = vector.load %arg8[%c3_912, %c0_913, %c0_914, %c0_915] : memref<9x2x32x1xf32, #tpu.memory_space<vmem>>, vector<1x1x32x1xf32>
    %1571 = vector.shape_cast %1570 : vector<1x1x32x1xf32> to vector<32x1xf32>
    %1572 = vector.broadcast %1571 : vector<32x1xf32> to vector<32x128xf32>
    %1573 = vector.broadcast %1561 : vector<1x128xf32> to vector<32x128xf32>
    %1574 = arith.mulf %1572, %1573 : vector<32x128xf32>
    %1575 = arith.addf %1569, %1574 : vector<32x128xf32>
    %c3_916 = arith.constant 3 : index
    %c1_917 = arith.constant 1 : index
    %c0_918 = arith.constant 0 : index
    %c0_919 = arith.constant 0 : index
    %1576 = vector.load %arg8[%c3_916, %c1_917, %c0_918, %c0_919] : memref<9x2x32x1xf32, #tpu.memory_space<vmem>>, vector<1x1x32x1xf32>
    %1577 = vector.shape_cast %1576 : vector<1x1x32x1xf32> to vector<32x1xf32>
    %1578 = vector.broadcast %1577 : vector<32x1xf32> to vector<32x128xf32>
    %1579 = vector.broadcast %1562 : vector<1x128xf32> to vector<32x128xf32>
    %1580 = arith.mulf %1578, %1579 : vector<32x128xf32>
    %1581 = arith.addf %1575, %1580 : vector<32x128xf32>
    %cst_920 = arith.constant 2.000000e+00 : f32
    %1582 = vector.broadcast %cst_920 : f32 to vector<1x128xf32>
    %1583 = arith.mulf %1582, %0 : vector<1x128xf32>
    %cst_921 = arith.constant 0.000000e+00 : f32
    %1584 = vector.broadcast %cst_921 : f32 to vector<1x128xf32>
    %1585 = arith.addf %1583, %1584 : vector<1x128xf32>
    %cst_922 = arith.constant 0.13333334 : f32
    %1586 = vector.broadcast %cst_922 : f32 to vector<1x128xf32>
    %1587 = arith.mulf %1585, %1586 : vector<1x128xf32>
    %cst_923 = arith.constant 1.000000e+00 : f32
    %1588 = vector.broadcast %cst_923 : f32 to vector<1x128xf32>
    %1589 = arith.subf %1587, %1588 : vector<1x128xf32>
    %cst_924 = arith.constant 2.000000e+00 : f32
    %1590 = vector.broadcast %cst_924 : f32 to vector<1x128xf32>
    %1591 = arith.mulf %1590, %1 : vector<1x128xf32>
    %cst_925 = arith.constant 0.000000e+00 : f32
    %1592 = vector.broadcast %cst_925 : f32 to vector<1x128xf32>
    %1593 = arith.addf %1591, %1592 : vector<1x128xf32>
    %cst_926 = arith.constant 0.13333334 : f32
    %1594 = vector.broadcast %cst_926 : f32 to vector<1x128xf32>
    %1595 = arith.mulf %1593, %1594 : vector<1x128xf32>
    %cst_927 = arith.constant 1.000000e+00 : f32
    %1596 = vector.broadcast %cst_927 : f32 to vector<1x128xf32>
    %1597 = arith.subf %1595, %1596 : vector<1x128xf32>
    %c4_928 = arith.constant 4 : index
    %c0_929 = arith.constant 0 : index
    %c0_930 = arith.constant 0 : index
    %1598 = vector.load %arg7[%c4_928, %c0_929, %c0_930] : memref<9x32x32xf32, #tpu.memory_space<vmem>>, vector<1x32x32xf32>
    %1599 = vector.shape_cast %1598 : vector<1x32x32xf32> to vector<32x32xf32>
    %cst_931 = arith.constant dense<0.000000e+00> : vector<32x128xf32>
    %1600 = tpu.matmul %1599, %359, %cst_931 {dimension_numbers = #tpu.dot_dimension_numbers<[1], [0], [0], [1], [0, 0, 1, 1], [], []>} : vector<32x32xf32>, vector<32x128xf32>, vector<32x128xf32> -> vector<32x128xf32>
    %1601 = arith.addf %1581, %1600 : vector<32x128xf32>
    %c4_932 = arith.constant 4 : index
    %c0_933 = arith.constant 0 : index
    %c0_934 = arith.constant 0 : index
    %c0_935 = arith.constant 0 : index
    %1602 = vector.load %arg8[%c4_932, %c0_933, %c0_934, %c0_935] : memref<9x2x32x1xf32, #tpu.memory_space<vmem>>, vector<1x1x32x1xf32>
    %1603 = vector.shape_cast %1602 : vector<1x1x32x1xf32> to vector<32x1xf32>
    %1604 = vector.broadcast %1603 : vector<32x1xf32> to vector<32x128xf32>
    %1605 = vector.broadcast %1589 : vector<1x128xf32> to vector<32x128xf32>
    %1606 = arith.mulf %1604, %1605 : vector<32x128xf32>
    %1607 = arith.addf %1601, %1606 : vector<32x128xf32>
    %c4_936 = arith.constant 4 : index
    %c1_937 = arith.constant 1 : index
    %c0_938 = arith.constant 0 : index
    %c0_939 = arith.constant 0 : index
    %1608 = vector.load %arg8[%c4_936, %c1_937, %c0_938, %c0_939] : memref<9x2x32x1xf32, #tpu.memory_space<vmem>>, vector<1x1x32x1xf32>
    %1609 = vector.shape_cast %1608 : vector<1x1x32x1xf32> to vector<32x1xf32>
    %1610 = vector.broadcast %1609 : vector<32x1xf32> to vector<32x128xf32>
    %1611 = vector.broadcast %1597 : vector<1x128xf32> to vector<32x128xf32>
    %1612 = arith.mulf %1610, %1611 : vector<32x128xf32>
    %1613 = arith.addf %1607, %1612 : vector<32x128xf32>
    %cst_940 = arith.constant 2.000000e+00 : f32
    %1614 = vector.broadcast %cst_940 : f32 to vector<1x128xf32>
    %1615 = arith.mulf %1614, %0 : vector<1x128xf32>
    %cst_941 = arith.constant 0.000000e+00 : f32
    %1616 = vector.broadcast %cst_941 : f32 to vector<1x128xf32>
    %1617 = arith.addf %1615, %1616 : vector<1x128xf32>
    %cst_942 = arith.constant 0.13333334 : f32
    %1618 = vector.broadcast %cst_942 : f32 to vector<1x128xf32>
    %1619 = arith.mulf %1617, %1618 : vector<1x128xf32>
    %cst_943 = arith.constant 1.000000e+00 : f32
    %1620 = vector.broadcast %cst_943 : f32 to vector<1x128xf32>
    %1621 = arith.subf %1619, %1620 : vector<1x128xf32>
    %cst_944 = arith.constant 2.000000e+00 : f32
    %1622 = vector.broadcast %cst_944 : f32 to vector<1x128xf32>
    %1623 = arith.mulf %1622, %1 : vector<1x128xf32>
    %cst_945 = arith.constant 1.000000e+00 : f32
    %1624 = vector.broadcast %cst_945 : f32 to vector<1x128xf32>
    %1625 = arith.addf %1623, %1624 : vector<1x128xf32>
    %cst_946 = arith.constant 0.13333334 : f32
    %1626 = vector.broadcast %cst_946 : f32 to vector<1x128xf32>
    %1627 = arith.mulf %1625, %1626 : vector<1x128xf32>
    %cst_947 = arith.constant 1.000000e+00 : f32
    %1628 = vector.broadcast %cst_947 : f32 to vector<1x128xf32>
    %1629 = arith.subf %1627, %1628 : vector<1x128xf32>
    %c5_948 = arith.constant 5 : index
    %c0_949 = arith.constant 0 : index
    %c0_950 = arith.constant 0 : index
    %1630 = vector.load %arg7[%c5_948, %c0_949, %c0_950] : memref<9x32x32xf32, #tpu.memory_space<vmem>>, vector<1x32x32xf32>
    %1631 = vector.shape_cast %1630 : vector<1x32x32xf32> to vector<32x32xf32>
    %cst_951 = arith.constant dense<0.000000e+00> : vector<32x128xf32>
    %1632 = tpu.matmul %1631, %708, %cst_951 {dimension_numbers = #tpu.dot_dimension_numbers<[1], [0], [0], [1], [0, 0, 1, 1], [], []>} : vector<32x32xf32>, vector<32x128xf32>, vector<32x128xf32> -> vector<32x128xf32>
    %1633 = arith.addf %1613, %1632 : vector<32x128xf32>
    %c5_952 = arith.constant 5 : index
    %c0_953 = arith.constant 0 : index
    %c0_954 = arith.constant 0 : index
    %c0_955 = arith.constant 0 : index
    %1634 = vector.load %arg8[%c5_952, %c0_953, %c0_954, %c0_955] : memref<9x2x32x1xf32, #tpu.memory_space<vmem>>, vector<1x1x32x1xf32>
    %1635 = vector.shape_cast %1634 : vector<1x1x32x1xf32> to vector<32x1xf32>
    %1636 = vector.broadcast %1635 : vector<32x1xf32> to vector<32x128xf32>
    %1637 = vector.broadcast %1621 : vector<1x128xf32> to vector<32x128xf32>
    %1638 = arith.mulf %1636, %1637 : vector<32x128xf32>
    %1639 = arith.addf %1633, %1638 : vector<32x128xf32>
    %c5_956 = arith.constant 5 : index
    %c1_957 = arith.constant 1 : index
    %c0_958 = arith.constant 0 : index
    %c0_959 = arith.constant 0 : index
    %1640 = vector.load %arg8[%c5_956, %c1_957, %c0_958, %c0_959] : memref<9x2x32x1xf32, #tpu.memory_space<vmem>>, vector<1x1x32x1xf32>
    %1641 = vector.shape_cast %1640 : vector<1x1x32x1xf32> to vector<32x1xf32>
    %1642 = vector.broadcast %1641 : vector<32x1xf32> to vector<32x128xf32>
    %1643 = vector.broadcast %1629 : vector<1x128xf32> to vector<32x128xf32>
    %1644 = arith.mulf %1642, %1643 : vector<32x128xf32>
    %1645 = arith.addf %1639, %1644 : vector<32x128xf32>
    %cst_960 = arith.constant 1.000000e+00 : f32
    %1646 = vector.broadcast %cst_960 : f32 to vector<1x128xf32>
    %1647 = arith.cmpf oge, %1, %1646 : vector<1x128xf32>
    %cst_961 = arith.constant 1.000000e+00 : f32
    %cst_962 = arith.constant 0.000000e+00 : f32
    %1648 = vector.broadcast %cst_961 : f32 to vector<1x128xf32>
    %1649 = vector.broadcast %cst_962 : f32 to vector<1x128xf32>
    %1650 = arith.select %1647, %1648, %1649 : vector<1x128xi1>, vector<1x128xf32>
    %cst_963 = arith.constant 2.000000e+00 : f32
    %1651 = vector.broadcast %cst_963 : f32 to vector<1x128xf32>
    %1652 = arith.mulf %1651, %0 : vector<1x128xf32>
    %cst_964 = arith.constant 1.000000e+00 : f32
    %1653 = vector.broadcast %cst_964 : f32 to vector<1x128xf32>
    %1654 = arith.addf %1652, %1653 : vector<1x128xf32>
    %cst_965 = arith.constant 0.13333334 : f32
    %1655 = vector.broadcast %cst_965 : f32 to vector<1x128xf32>
    %1656 = arith.mulf %1654, %1655 : vector<1x128xf32>
    %cst_966 = arith.constant 1.000000e+00 : f32
    %1657 = vector.broadcast %cst_966 : f32 to vector<1x128xf32>
    %1658 = arith.subf %1656, %1657 : vector<1x128xf32>
    %cst_967 = arith.constant 2.000000e+00 : f32
    %1659 = vector.broadcast %cst_967 : f32 to vector<1x128xf32>
    %1660 = arith.mulf %1659, %1 : vector<1x128xf32>
    %cst_968 = arith.constant -1.000000e+00 : f32
    %1661 = vector.broadcast %cst_968 : f32 to vector<1x128xf32>
    %1662 = arith.addf %1660, %1661 : vector<1x128xf32>
    %cst_969 = arith.constant 0.13333334 : f32
    %1663 = vector.broadcast %cst_969 : f32 to vector<1x128xf32>
    %1664 = arith.mulf %1662, %1663 : vector<1x128xf32>
    %cst_970 = arith.constant 1.000000e+00 : f32
    %1665 = vector.broadcast %cst_970 : f32 to vector<1x128xf32>
    %1666 = arith.subf %1664, %1665 : vector<1x128xf32>
    %1667 = arith.mulf %1658, %1650 : vector<1x128xf32>
    %1668 = arith.mulf %1666, %1650 : vector<1x128xf32>
    %c1_i32_971 = arith.constant 1 : i32
    %1669 = tpu.dynamic_rotate %1406 by %c1_i32_971 dim 1 : vector<32x128xf32>, i32 -> vector<32x128xf32>
    %1670 = vector.broadcast %1650 : vector<1x128xf32> to vector<32x128xf32>
    %1671 = arith.mulf %1669, %1670 : vector<32x128xf32>
    %c6_972 = arith.constant 6 : index
    %c0_973 = arith.constant 0 : index
    %c0_974 = arith.constant 0 : index
    %1672 = vector.load %arg7[%c6_972, %c0_973, %c0_974] : memref<9x32x32xf32, #tpu.memory_space<vmem>>, vector<1x32x32xf32>
    %1673 = vector.shape_cast %1672 : vector<1x32x32xf32> to vector<32x32xf32>
    %cst_975 = arith.constant dense<0.000000e+00> : vector<32x128xf32>
    %1674 = tpu.matmul %1673, %1671, %cst_975 {dimension_numbers = #tpu.dot_dimension_numbers<[1], [0], [0], [1], [0, 0, 1, 1], [], []>} : vector<32x32xf32>, vector<32x128xf32>, vector<32x128xf32> -> vector<32x128xf32>
    %1675 = arith.addf %1645, %1674 : vector<32x128xf32>
    %c6_976 = arith.constant 6 : index
    %c0_977 = arith.constant 0 : index
    %c0_978 = arith.constant 0 : index
    %c0_979 = arith.constant 0 : index
    %1676 = vector.load %arg8[%c6_976, %c0_977, %c0_978, %c0_979] : memref<9x2x32x1xf32, #tpu.memory_space<vmem>>, vector<1x1x32x1xf32>
    %1677 = vector.shape_cast %1676 : vector<1x1x32x1xf32> to vector<32x1xf32>
    %1678 = vector.broadcast %1677 : vector<32x1xf32> to vector<32x128xf32>
    %1679 = vector.broadcast %1667 : vector<1x128xf32> to vector<32x128xf32>
    %1680 = arith.mulf %1678, %1679 : vector<32x128xf32>
    %1681 = arith.addf %1675, %1680 : vector<32x128xf32>
    %c6_980 = arith.constant 6 : index
    %c1_981 = arith.constant 1 : index
    %c0_982 = arith.constant 0 : index
    %c0_983 = arith.constant 0 : index
    %1682 = vector.load %arg8[%c6_980, %c1_981, %c0_982, %c0_983] : memref<9x2x32x1xf32, #tpu.memory_space<vmem>>, vector<1x1x32x1xf32>
    %1683 = vector.shape_cast %1682 : vector<1x1x32x1xf32> to vector<32x1xf32>
    %1684 = vector.broadcast %1683 : vector<32x1xf32> to vector<32x128xf32>
    %1685 = vector.broadcast %1668 : vector<1x128xf32> to vector<32x128xf32>
    %1686 = arith.mulf %1684, %1685 : vector<32x128xf32>
    %1687 = arith.addf %1681, %1686 : vector<32x128xf32>
    %cst_984 = arith.constant 2.000000e+00 : f32
    %1688 = vector.broadcast %cst_984 : f32 to vector<1x128xf32>
    %1689 = arith.mulf %1688, %0 : vector<1x128xf32>
    %cst_985 = arith.constant 1.000000e+00 : f32
    %1690 = vector.broadcast %cst_985 : f32 to vector<1x128xf32>
    %1691 = arith.addf %1689, %1690 : vector<1x128xf32>
    %cst_986 = arith.constant 0.13333334 : f32
    %1692 = vector.broadcast %cst_986 : f32 to vector<1x128xf32>
    %1693 = arith.mulf %1691, %1692 : vector<1x128xf32>
    %cst_987 = arith.constant 1.000000e+00 : f32
    %1694 = vector.broadcast %cst_987 : f32 to vector<1x128xf32>
    %1695 = arith.subf %1693, %1694 : vector<1x128xf32>
    %cst_988 = arith.constant 2.000000e+00 : f32
    %1696 = vector.broadcast %cst_988 : f32 to vector<1x128xf32>
    %1697 = arith.mulf %1696, %1 : vector<1x128xf32>
    %cst_989 = arith.constant 0.000000e+00 : f32
    %1698 = vector.broadcast %cst_989 : f32 to vector<1x128xf32>
    %1699 = arith.addf %1697, %1698 : vector<1x128xf32>
    %cst_990 = arith.constant 0.13333334 : f32
    %1700 = vector.broadcast %cst_990 : f32 to vector<1x128xf32>
    %1701 = arith.mulf %1699, %1700 : vector<1x128xf32>
    %cst_991 = arith.constant 1.000000e+00 : f32
    %1702 = vector.broadcast %cst_991 : f32 to vector<1x128xf32>
    %1703 = arith.subf %1701, %1702 : vector<1x128xf32>
    %c7_992 = arith.constant 7 : index
    %c0_993 = arith.constant 0 : index
    %c0_994 = arith.constant 0 : index
    %1704 = vector.load %arg7[%c7_992, %c0_993, %c0_994] : memref<9x32x32xf32, #tpu.memory_space<vmem>>, vector<1x32x32xf32>
    %1705 = vector.shape_cast %1704 : vector<1x32x32xf32> to vector<32x32xf32>
    %cst_995 = arith.constant dense<0.000000e+00> : vector<32x128xf32>
    %1706 = tpu.matmul %1705, %1057, %cst_995 {dimension_numbers = #tpu.dot_dimension_numbers<[1], [0], [0], [1], [0, 0, 1, 1], [], []>} : vector<32x32xf32>, vector<32x128xf32>, vector<32x128xf32> -> vector<32x128xf32>
    %1707 = arith.addf %1687, %1706 : vector<32x128xf32>
    %c7_996 = arith.constant 7 : index
    %c0_997 = arith.constant 0 : index
    %c0_998 = arith.constant 0 : index
    %c0_999 = arith.constant 0 : index
    %1708 = vector.load %arg8[%c7_996, %c0_997, %c0_998, %c0_999] : memref<9x2x32x1xf32, #tpu.memory_space<vmem>>, vector<1x1x32x1xf32>
    %1709 = vector.shape_cast %1708 : vector<1x1x32x1xf32> to vector<32x1xf32>
    %1710 = vector.broadcast %1709 : vector<32x1xf32> to vector<32x128xf32>
    %1711 = vector.broadcast %1695 : vector<1x128xf32> to vector<32x128xf32>
    %1712 = arith.mulf %1710, %1711 : vector<32x128xf32>
    %1713 = arith.addf %1707, %1712 : vector<32x128xf32>
    %c7_1000 = arith.constant 7 : index
    %c1_1001 = arith.constant 1 : index
    %c0_1002 = arith.constant 0 : index
    %c0_1003 = arith.constant 0 : index
    %1714 = vector.load %arg8[%c7_1000, %c1_1001, %c0_1002, %c0_1003] : memref<9x2x32x1xf32, #tpu.memory_space<vmem>>, vector<1x1x32x1xf32>
    %1715 = vector.shape_cast %1714 : vector<1x1x32x1xf32> to vector<32x1xf32>
    %1716 = vector.broadcast %1715 : vector<32x1xf32> to vector<32x128xf32>
    %1717 = vector.broadcast %1703 : vector<1x128xf32> to vector<32x128xf32>
    %1718 = arith.mulf %1716, %1717 : vector<32x128xf32>
    %1719 = arith.addf %1713, %1718 : vector<32x128xf32>
    %cst_1004 = arith.constant 2.000000e+00 : f32
    %1720 = vector.broadcast %cst_1004 : f32 to vector<1x128xf32>
    %1721 = arith.mulf %1720, %0 : vector<1x128xf32>
    %cst_1005 = arith.constant 1.000000e+00 : f32
    %1722 = vector.broadcast %cst_1005 : f32 to vector<1x128xf32>
    %1723 = arith.addf %1721, %1722 : vector<1x128xf32>
    %cst_1006 = arith.constant 0.13333334 : f32
    %1724 = vector.broadcast %cst_1006 : f32 to vector<1x128xf32>
    %1725 = arith.mulf %1723, %1724 : vector<1x128xf32>
    %cst_1007 = arith.constant 1.000000e+00 : f32
    %1726 = vector.broadcast %cst_1007 : f32 to vector<1x128xf32>
    %1727 = arith.subf %1725, %1726 : vector<1x128xf32>
    %cst_1008 = arith.constant 2.000000e+00 : f32
    %1728 = vector.broadcast %cst_1008 : f32 to vector<1x128xf32>
    %1729 = arith.mulf %1728, %1 : vector<1x128xf32>
    %cst_1009 = arith.constant 1.000000e+00 : f32
    %1730 = vector.broadcast %cst_1009 : f32 to vector<1x128xf32>
    %1731 = arith.addf %1729, %1730 : vector<1x128xf32>
    %cst_1010 = arith.constant 0.13333334 : f32
    %1732 = vector.broadcast %cst_1010 : f32 to vector<1x128xf32>
    %1733 = arith.mulf %1731, %1732 : vector<1x128xf32>
    %cst_1011 = arith.constant 1.000000e+00 : f32
    %1734 = vector.broadcast %cst_1011 : f32 to vector<1x128xf32>
    %1735 = arith.subf %1733, %1734 : vector<1x128xf32>
    %c8_1012 = arith.constant 8 : index
    %c0_1013 = arith.constant 0 : index
    %c0_1014 = arith.constant 0 : index
    %1736 = vector.load %arg7[%c8_1012, %c0_1013, %c0_1014] : memref<9x32x32xf32, #tpu.memory_space<vmem>>, vector<1x32x32xf32>
    %1737 = vector.shape_cast %1736 : vector<1x32x32xf32> to vector<32x32xf32>
    %cst_1015 = arith.constant dense<0.000000e+00> : vector<32x128xf32>
    %1738 = tpu.matmul %1737, %1406, %cst_1015 {dimension_numbers = #tpu.dot_dimension_numbers<[1], [0], [0], [1], [0, 0, 1, 1], [], []>} : vector<32x32xf32>, vector<32x128xf32>, vector<32x128xf32> -> vector<32x128xf32>
    %1739 = arith.addf %1719, %1738 : vector<32x128xf32>
    %c8_1016 = arith.constant 8 : index
    %c0_1017 = arith.constant 0 : index
    %c0_1018 = arith.constant 0 : index
    %c0_1019 = arith.constant 0 : index
    %1740 = vector.load %arg8[%c8_1016, %c0_1017, %c0_1018, %c0_1019] : memref<9x2x32x1xf32, #tpu.memory_space<vmem>>, vector<1x1x32x1xf32>
    %1741 = vector.shape_cast %1740 : vector<1x1x32x1xf32> to vector<32x1xf32>
    %1742 = vector.broadcast %1741 : vector<32x1xf32> to vector<32x128xf32>
    %1743 = vector.broadcast %1727 : vector<1x128xf32> to vector<32x128xf32>
    %1744 = arith.mulf %1742, %1743 : vector<32x128xf32>
    %1745 = arith.addf %1739, %1744 : vector<32x128xf32>
    %c8_1020 = arith.constant 8 : index
    %c1_1021 = arith.constant 1 : index
    %c0_1022 = arith.constant 0 : index
    %c0_1023 = arith.constant 0 : index
    %1746 = vector.load %arg8[%c8_1020, %c1_1021, %c0_1022, %c0_1023] : memref<9x2x32x1xf32, #tpu.memory_space<vmem>>, vector<1x1x32x1xf32>
    %1747 = vector.shape_cast %1746 : vector<1x1x32x1xf32> to vector<32x1xf32>
    %1748 = vector.broadcast %1747 : vector<32x1xf32> to vector<32x128xf32>
    %1749 = vector.broadcast %1735 : vector<1x128xf32> to vector<32x128xf32>
    %1750 = arith.mulf %1748, %1749 : vector<32x128xf32>
    %1751 = arith.addf %1745, %1750 : vector<32x128xf32>
    %cst_1024 = arith.constant 0.000000e+00 : f32
    %1752 = vector.broadcast %cst_1024 : f32 to vector<32x128xf32>
    %1753 = arith.cmpf ogt, %1751, %1752 : vector<32x128xf32>
    %cst_1025 = arith.constant 2.000000e-01 : f32
    %1754 = vector.broadcast %cst_1025 : f32 to vector<32x128xf32>
    %1755 = arith.mulf %1754, %1751 : vector<32x128xf32>
    %1756 = arith.select %1753, %1751, %1755 : vector<32x128xi1>, vector<32x128xf32>
    %cst_1026 = arith.constant 0.000000e+00 : f32
    %1757 = vector.broadcast %cst_1026 : f32 to vector<32x128xf32>
    %c0_1027 = arith.constant 0 : index
    %c0_1028 = arith.constant 0 : index
    %1758 = vector.load %arg11[%c0_1027, %c0_1028] : memref<32x1xf32, #tpu.memory_space<vmem>>, vector<32x1xf32>
    %1759 = vector.broadcast %1758 : vector<32x1xf32> to vector<32x128xf32>
    %1760 = arith.addf %1757, %1759 : vector<32x128xf32>
    %c0_1029 = arith.constant 0 : index
    %c0_1030 = arith.constant 0 : index
    %1761 = vector.load %arg10[%c0_1029, %c0_1030] : memref<32x4xf32, #tpu.memory_space<vmem>>, vector<32x4xf32>
    %1762 = vector.extract_strided_slice %1761 {offsets = [0, 0], sizes = [32, 1], strides = [1, 1]} : vector<32x4xf32> to vector<32x1xf32>
    %1763 = vector.extract_strided_slice %3 {offsets = [0, 0], sizes = [1, 128], strides = [1, 1]} : vector<4x128xf32> to vector<1x128xf32>
    %1764 = vector.broadcast %1762 : vector<32x1xf32> to vector<32x128xf32>
    %1765 = vector.broadcast %1763 : vector<1x128xf32> to vector<32x128xf32>
    %1766 = arith.mulf %1764, %1765 : vector<32x128xf32>
    %1767 = arith.addf %1760, %1766 : vector<32x128xf32>
    %1768 = vector.extract_strided_slice %1761 {offsets = [0, 1], sizes = [32, 1], strides = [1, 1]} : vector<32x4xf32> to vector<32x1xf32>
    %1769 = vector.extract_strided_slice %3 {offsets = [1, 0], sizes = [1, 128], strides = [1, 1]} : vector<4x128xf32> to vector<1x128xf32>
    %1770 = vector.broadcast %1768 : vector<32x1xf32> to vector<32x128xf32>
    %1771 = vector.broadcast %1769 : vector<1x128xf32> to vector<32x128xf32>
    %1772 = arith.mulf %1770, %1771 : vector<32x128xf32>
    %1773 = arith.addf %1767, %1772 : vector<32x128xf32>
    %1774 = vector.extract_strided_slice %1761 {offsets = [0, 2], sizes = [32, 1], strides = [1, 1]} : vector<32x4xf32> to vector<32x1xf32>
    %1775 = vector.extract_strided_slice %3 {offsets = [2, 0], sizes = [1, 128], strides = [1, 1]} : vector<4x128xf32> to vector<1x128xf32>
    %1776 = vector.broadcast %1774 : vector<32x1xf32> to vector<32x128xf32>
    %1777 = vector.broadcast %1775 : vector<1x128xf32> to vector<32x128xf32>
    %1778 = arith.mulf %1776, %1777 : vector<32x128xf32>
    %1779 = arith.addf %1773, %1778 : vector<32x128xf32>
    %1780 = vector.extract_strided_slice %1761 {offsets = [0, 3], sizes = [32, 1], strides = [1, 1]} : vector<32x4xf32> to vector<32x1xf32>
    %1781 = vector.extract_strided_slice %3 {offsets = [3, 0], sizes = [1, 128], strides = [1, 1]} : vector<4x128xf32> to vector<1x128xf32>
    %1782 = vector.broadcast %1780 : vector<32x1xf32> to vector<32x128xf32>
    %1783 = vector.broadcast %1781 : vector<1x128xf32> to vector<32x128xf32>
    %1784 = arith.mulf %1782, %1783 : vector<32x128xf32>
    %1785 = arith.addf %1779, %1784 : vector<32x128xf32>
    %1786 = arith.addf %1756, %1785 : vector<32x128xf32>
    %c0_1031 = arith.constant 0 : index
    %c0_1032 = arith.constant 0 : index
    %c0_1033 = arith.constant 0 : index
    %1787 = vector.load %arg12[%c0_1031, %c0_1032, %c0_1033] : memref<1x32x128xf32, #tpu.memory_space<vmem>>, vector<1x32x128xf32>
    %1788 = vector.shape_cast %1787 : vector<1x32x128xf32> to vector<32x128xf32>
    %1789 = vector.shape_cast %1786 : vector<32x128xf32> to vector<1x32x128xf32>
    tpu.vector_store %arg12[%c0_1031, %c0_1032, %c0_1033], %1789 {strides = array<i32>} : memref<1x32x128xf32, #tpu.memory_space<vmem>>, vector<1x32x128xf32>,
    return
  }
  func.func @transform_0(%arg0: i32) -> (i32, i32, i32, i32) {
    %c0_i32 = arith.constant 0 : i32
    %c0_i32_0 = arith.constant 0 : i32
    %c0_i32_1 = arith.constant 0 : i32
    %c0_i32_2 = arith.constant 0 : i32
    return %arg0, %c0_i32, %c0_i32_0, %c0_i32_1 : i32, i32, i32, i32
  }
  func.func @transform_1(%arg0: i32) -> (i32, i32) {
    %c0_i32 = arith.constant 0 : i32
    %c0_i32_0 = arith.constant 0 : i32
    %c0_i32_1 = arith.constant 0 : i32
    return %c0_i32, %c0_i32_0 : i32, i32
  }
  func.func @transform_2(%arg0: i32) -> (i32, i32) {
    %c0_i32 = arith.constant 0 : i32
    %c0_i32_0 = arith.constant 0 : i32
    %c0_i32_1 = arith.constant 0 : i32
    return %c0_i32, %c0_i32_0 : i32, i32
  }
  func.func @transform_3(%arg0: i32) -> (i32, i32, i32) {
    %c0_i32 = arith.constant 0 : i32
    %c0_i32_0 = arith.constant 0 : i32
    %c0_i32_1 = arith.constant 0 : i32
    %c0_i32_2 = arith.constant 0 : i32
    return %c0_i32, %c0_i32_0, %c0_i32_1 : i32, i32, i32
  }
  func.func @transform_4(%arg0: i32) -> (i32, i32, i32, i32) {
    %c0_i32 = arith.constant 0 : i32
    %c0_i32_0 = arith.constant 0 : i32
    %c0_i32_1 = arith.constant 0 : i32
    %c0_i32_2 = arith.constant 0 : i32
    %c0_i32_3 = arith.constant 0 : i32
    return %c0_i32, %c0_i32_0, %c0_i32_1, %c0_i32_2 : i32, i32, i32, i32
  }
  func.func @transform_5(%arg0: i32) -> (i32, i32) {
    %c0_i32 = arith.constant 0 : i32
    %c0_i32_0 = arith.constant 0 : i32
    %c0_i32_1 = arith.constant 0 : i32
    return %c0_i32, %c0_i32_0 : i32, i32
  }
  func.func @transform_6(%arg0: i32) -> (i32, i32, i32) {
    %c0_i32 = arith.constant 0 : i32
    %c0_i32_0 = arith.constant 0 : i32
    %c0_i32_1 = arith.constant 0 : i32
    %c0_i32_2 = arith.constant 0 : i32
    return %c0_i32, %c0_i32_0, %c0_i32_1 : i32, i32, i32
  }
  func.func @transform_7(%arg0: i32) -> (i32, i32, i32, i32) {
    %c0_i32 = arith.constant 0 : i32
    %c0_i32_0 = arith.constant 0 : i32
    %c0_i32_1 = arith.constant 0 : i32
    %c0_i32_2 = arith.constant 0 : i32
    %c0_i32_3 = arith.constant 0 : i32
    return %c0_i32, %c0_i32_0, %c0_i32_1, %c0_i32_2 : i32, i32, i32, i32
  }
  func.func @transform_8(%arg0: i32) -> (i32, i32) {
    %c0_i32 = arith.constant 0 : i32
    %c0_i32_0 = arith.constant 0 : i32
    %c0_i32_1 = arith.constant 0 : i32
    return %c0_i32, %c0_i32_0 : i32, i32
  }
  func.func @transform_9(%arg0: i32) -> (i32, i32) {
    %c0_i32 = arith.constant 0 : i32
    %c0_i32_0 = arith.constant 0 : i32
    %c0_i32_1 = arith.constant 0 : i32
    return %c0_i32, %c0_i32_0 : i32, i32
  }
  func.func @transform_10(%arg0: i32) -> (i32, i32) {
    %c0_i32 = arith.constant 0 : i32
    %c0_i32_0 = arith.constant 0 : i32
    %c0_i32_1 = arith.constant 0 : i32
    return %c0_i32, %c0_i32_0 : i32, i32
  }
  func.func @transform_11(%arg0: i32) -> (i32, i32, i32) {
    %c0_i32 = arith.constant 0 : i32
    %c0_i32_0 = arith.constant 0 : i32
    %c0_i32_1 = arith.constant 0 : i32
    return %arg0, %c0_i32, %c0_i32_0 : i32, i32, i32
  }
}

</mosaic_0001>

<llo_original>
// kernel: residual_cc_block.1
$region0: #{residual_cc_block.1}
  #allocation0 [shape = 'u32[]', space=smem, size = 0x4, offset = 0x4, fixed_abs, tag = 'smem constant byte address 0x4 - core index']
  #allocation1 [shape = 'u32[144,128]{1,0:T(1,128)}', space=vmem, size = 0x12000, scoped, tag = 'internal scratch']
  %s0 = inlined_call_operand.vmem [shape: f32[2,4,4,128], index: 0, kind: input, shape index: {}]
  %s1 = inlined_call_operand.vmem [shape: f32[1,128], index: 1, kind: input, shape index: {}]
  %s2 = inlined_call_operand.vmem [shape: f32[1,128], index: 2, kind: input, shape index: {}]
  %s3 = inlined_call_operand.vmem [shape: f32[9,32,4], index: 3, kind: input, shape index: {}]
  %s4 = inlined_call_operand.vmem [shape: f32[9,2,32,1], index: 4, kind: input, shape index: {}]
  %s5 = inlined_call_operand.vmem [shape: f32[32,1], index: 5, kind: input, shape index: {}]
  %s6 = inlined_call_operand.vmem [shape: f32[9,32,32], index: 6, kind: input, shape index: {}]
  %s7 = inlined_call_operand.vmem [shape: f32[9,2,32,1], index: 7, kind: input, shape index: {}]
  %s8 = inlined_call_operand.vmem [shape: f32[32,1], index: 8, kind: input, shape index: {}]
  %s9 = inlined_call_operand.vmem [shape: f32[32,4], index: 9, kind: input, shape index: {}]
  %s10 = inlined_call_operand.vmem [shape: f32[32,1], index: 10, kind: input, shape index: {}]
  %s11 = inlined_call_operand.vmem [shape: f32[2,32,128], index: 11, kind: output, shape index: {}]
  %s12 = sld [smem:[#allocation0]]
  $region77: #{residual_cc_block.1} parent=0
    _
  %s14 = ssub.s32 1, %s12
  %s15 = scalar_select 0, %s14, %s12
  loop: start=0, step=1, limit=4
  $region2: #{residual_cc_block.1} parent=0 // loop_pre_header
    _
  $region3: #{residual_cc_block.1} parent=0 // loop_header
    %s17 = sphi 0, %s21
    %p18 = scmp.ge.s32.totalorder %s17, 4
    %s27 = sphi 0, %s29
    %s30 = sphi 0, %s27
    %s31 = sphi 0, %s30
    %s47 = sphi 0, %s31
    %s51 = sphi 0, %s51
    %s53 = sphi 0, %s51
    %s54 = sphi 0, %s53
    %s68 = sphi 0, %s54
    %s72 = sphi 0, %s72
    %s74 = sphi 0, %s72
    %s75 = sphi 0, %s74
    %s89 = sphi 0, %s75
    %s93 = sphi 0, %s93
    %s95 = sphi 0, %s93
    %s96 = sphi 0, %s95
    %s110 = sphi 0, %s96
    %s114 = sphi 0, %s114
    %s116 = sphi 0, %s114
    %s117 = sphi 0, %s116
    %s131 = sphi 0, %s117
    %s135 = sphi 0, %s135
    %s137 = sphi 0, %s135
    %s138 = sphi 0, %s137
    %s152 = sphi 0, %s138
    %s156 = sphi 0, %s156
    %s158 = sphi 0, %s156
    %s159 = sphi 0, %s158
    %s173 = sphi 0, %s159
    %s177 = sphi 0, %s177
    %s179 = sphi 0, %s177
    %s180 = sphi 0, %s179
    %s194 = sphi 0, %s180
    %s198 = sphi 0, %s198
    %s200 = sphi 0, %s198
    %s201 = sphi 0, %s200
    %s215 = sphi 0, %s201
    %s219 = sphi 0, %s219
    %s221 = sphi 0, %s219
    %s222 = sphi 0, %s221
    %s236 = sphi 0, %s222
    %s240 = sphi 0, %s240
    %s242 = sphi 0, %s240
    %s243 = sphi 0, %s242
    %s257 = sphi 0, %s243
    %s263 = sphi 0, %s265
    %s266 = sphi 0, %s263
    %s267 = sphi 0, %s266
    %s283 = sphi 0, %s267
  $region4: #{residual_cc_block.1} parent=0 // loop_header_branch
    %20 = sbr.rel (%p18) target = $region8
  $region5: #{residual_cc_block.1} parent=0 // loop_body
    %s22 = ssub.s32 %s17, 1
    %s23 = ssub.s32 %s17, 2
    %s24 = sadd.s32 %s17, 1
    %s25 = ssub.s32 %s17, %s24
    %p26 = scmp.eq.s32.totalorder %s25, 0
    %s28 = sadd.s32 %s27, 1
    %s29 = scalar_select %p26, %s27, %s28
    %p32 = pneg %p26
    %p33 = scmp.eq.s32.totalorder %s17, 1
    %p34 = por %p32, %p33
    %p35 = scmp.ne.s32.totalorder %s27, %s30
    %p36 = scmp.eq.s32.totalorder %s17, 0
    %p37 = por %p35, %p36
    %p38 = scmp.ne.s32.totalorder %s27, %s30
    %p39 = scmp.eq.s32.totalorder %s22, 1
    %p40 = por %p38, %p39
    %p41 = scmp.ne.s32.totalorder %s30, %s31
    %p42 = scmp.eq.s32.totalorder %s22, 0
    %p43 = por %p41, %p42
    %p44 = scmp.ne.s32.totalorder %s30, %s31
    %p45 = scmp.eq.s32.totalorder %s23, 1
    %p46 = por %p44, %p45
    %p48 = scmp.ne.s32.totalorder %s31, %s47
    %p49 = scmp.eq.s32.totalorder %s23, 0
    %p50 = por %p48, %p49
    %s52 = sadd.s32 %s51, 1
    %p55 = scmp.eq.s32.totalorder %s17, 1
    %p56 = scmp.ne.s32.totalorder %s51, %s53
    %p57 = scmp.eq.s32.totalorder %s17, 0
    %p58 = por %p56, %p57
    %p59 = scmp.ne.s32.totalorder %s51, %s53
    %p60 = scmp.eq.s32.totalorder %s22, 1
    %p61 = por %p59, %p60
    %p62 = scmp.ne.s32.totalorder %s53, %s54
    %p63 = scmp.eq.s32.totalorder %s22, 0
    %p64 = por %p62, %p63
    %p65 = scmp.ne.s32.totalorder %s53, %s54
    %p66 = scmp.eq.s32.totalorder %s23, 1
    %p67 = por %p65, %p66
    %p69 = scmp.ne.s32.totalorder %s54, %s68
    %p70 = scmp.eq.s32.totalorder %s23, 0
    %p71 = por %p69, %p70
    %s73 = sadd.s32 %s72, 1
    %p76 = scmp.eq.s32.totalorder %s17, 1
    %p77 = scmp.ne.s32.totalorder %s72, %s74
    %p78 = scmp.eq.s32.totalorder %s17, 0
    %p79 = por %p77, %p78
    %p80 = scmp.ne.s32.totalorder %s72, %s74
    %p81 = scmp.eq.s32.totalorder %s22, 1
    %p82 = por %p80, %p81
    %p83 = scmp.ne.s32.totalorder %s74, %s75
    %p84 = scmp.eq.s32.totalorder %s22, 0
    %p85 = por %p83, %p84
    %p86 = scmp.ne.s32.totalorder %s74, %s75
    %p87 = scmp.eq.s32.totalorder %s23, 1
    %p88 = por %p86, %p87
    %p90 = scmp.ne.s32.totalorder %s75, %s89
    %p91 = scmp.eq.s32.totalorder %s23, 0
    %p92 = por %p90, %p91
    %s94 = sadd.s32 %s93, 1
    %p97 = scmp.eq.s32.totalorder %s17, 1
    %p98 = scmp.ne.s32.totalorder %s93, %s95
    %p99 = scmp.eq.s32.totalorder %s17, 0
    %p100 = por %p98, %p99
    %p101 = scmp.ne.s32.totalorder %s93, %s95
    %p102 = scmp.eq.s32.totalorder %s22, 1
    %p103 = por %p101, %p102
    %p104 = scmp.ne.s32.totalorder %s95, %s96
    %p105 = scmp.eq.s32.totalorder %s22, 0
    %p106 = por %p104, %p105
    %p107 = scmp.ne.s32.totalorder %s95, %s96
    %p108 = scmp.eq.s32.totalorder %s23, 1
    %p109 = por %p107, %p108
    %p111 = scmp.ne.s32.totalorder %s96, %s110
    %p112 = scmp.eq.s32.totalorder %s23, 0
    %p113 = por %p111, %p112
    %s115 = sadd.s32 %s114, 1
    %p118 = scmp.eq.s32.totalorder %s17, 1
    %p119 = scmp.ne.s32.totalorder %s114, %s116
    %p120 = scmp.eq.s32.totalorder %s17, 0
    %p121 = por %p119, %p120
    %p122 = scmp.ne.s32.totalorder %s114, %s116
    %p123 = scmp.eq.s32.totalorder %s22, 1
    %p124 = por %p122, %p123
    %p125 = scmp.ne.s32.totalorder %s116, %s117
    %p126 = scmp.eq.s32.totalorder %s22, 0
    %p127 = por %p125, %p126
    %p128 = scmp.ne.s32.totalorder %s116, %s117
    %p129 = scmp.eq.s32.totalorder %s23, 1
    %p130 = por %p128, %p129
    %p132 = scmp.ne.s32.totalorder %s117, %s131
    %p133 = scmp.eq.s32.totalorder %s23, 0
    %p134 = por %p132, %p133
    %s136 = sadd.s32 %s135, 1
    %p139 = scmp.eq.s32.totalorder %s17, 1
    %p140 = scmp.ne.s32.totalorder %s135, %s137
    %p141 = scmp.eq.s32.totalorder %s17, 0
    %p142 = por %p140, %p141
    %p143 = scmp.ne.s32.totalorder %s135, %s137
    %p144 = scmp.eq.s32.totalorder %s22, 1
    %p145 = por %p143, %p144
    %p146 = scmp.ne.s32.totalorder %s137, %s138
    %p147 = scmp.eq.s32.totalorder %s22, 0
    %p148 = por %p146, %p147
    %p149 = scmp.ne.s32.totalorder %s137, %s138
    %p150 = scmp.eq.s32.totalorder %s23, 1
    %p151 = por %p149, %p150
    %p153 = scmp.ne.s32.totalorder %s138, %s152
    %p154 = scmp.eq.s32.totalorder %s23, 0
    %p155 = por %p153, %p154
    %s157 = sadd.s32 %s156, 1
    %p160 = scmp.eq.s32.totalorder %s17, 1
    %p161 = scmp.ne.s32.totalorder %s156, %s158
    %p162 = scmp.eq.s32.totalorder %s17, 0
    %p163 = por %p161, %p162
    %p164 = scmp.ne.s32.totalorder %s156, %s158
    %p165 = scmp.eq.s32.totalorder %s22, 1
    %p166 = por %p164, %p165
    %p167 = scmp.ne.s32.totalorder %s158, %s159
    %p168 = scmp.eq.s32.totalorder %s22, 0
    %p169 = por %p167, %p168
    %p170 = scmp.ne.s32.totalorder %s158, %s159
    %p171 = scmp.eq.s32.totalorder %s23, 1
    %p172 = por %p170, %p171
    %p174 = scmp.ne.s32.totalorder %s159, %s173
    %p175 = scmp.eq.s32.totalorder %s23, 0
    %p176 = por %p174, %p175
    %s178 = sadd.s32 %s177, 1
    %p181 = scmp.eq.s32.totalorder %s17, 1
    %p182 = scmp.ne.s32.totalorder %s177, %s179
    %p183 = scmp.eq.s32.totalorder %s17, 0
    %p184 = por %p182, %p183
    %p185 = scmp.ne.s32.totalorder %s177, %s179
    %p186 = scmp.eq.s32.totalorder %s22, 1
    %p187 = por %p185, %p186
    %p188 = scmp.ne.s32.totalorder %s179, %s180
    %p189 = scmp.eq.s32.totalorder %s22, 0
    %p190 = por %p188, %p189
    %p191 = scmp.ne.s32.totalorder %s179, %s180
    %p192 = scmp.eq.s32.totalorder %s23, 1
    %p193 = por %p191, %p192
    %p195 = scmp.ne.s32.totalorder %s180, %s194
    %p196 = scmp.eq.s32.totalorder %s23, 0
    %p197 = por %p195, %p196
    %s199 = sadd.s32 %s198, 1
    %p202 = scmp.eq.s32.totalorder %s17, 1
    %p203 = scmp.ne.s32.totalorder %s198, %s200
    %p204 = scmp.eq.s32.totalorder %s17, 0
    %p205 = por %p203, %p204
    %p206 = scmp.ne.s32.totalorder %s198, %s200
    %p207 = scmp.eq.s32.totalorder %s22, 1
    %p208 = por %p206, %p207
    %p209 = scmp.ne.s32.totalorder %s200, %s201
    %p210 = scmp.eq.s32.totalorder %s22, 0
    %p211 = por %p209, %p210
    %p212 = scmp.ne.s32.totalorder %s200, %s201
    %p213 = scmp.eq.s32.totalorder %s23, 1
    %p214 = por %p212, %p213
    %p216 = scmp.ne.s32.totalorder %s201, %s215
    %p217 = scmp.eq.s32.totalorder %s23, 0
    %p218 = por %p216, %p217
    %s220 = sadd.s32 %s219, 1
    %p223 = scmp.eq.s32.totalorder %s17, 1
    %p224 = scmp.ne.s32.totalorder %s219, %s221
    %p225 = scmp.eq.s32.totalorder %s17, 0
    %p226 = por %p224, %p225
    %p227 = scmp.ne.s32.totalorder %s219, %s221
    %p228 = scmp.eq.s32.totalorder %s22, 1
    %p229 = por %p227, %p228
    %p230 = scmp.ne.s32.totalorder %s221, %s222
    %p231 = scmp.eq.s32.totalorder %s22, 0
    %p232 = por %p230, %p231
    %p233 = scmp.ne.s32.totalorder %s221, %s222
    %p234 = scmp.eq.s32.totalorder %s23, 1
    %p235 = por %p233, %p234
    %p237 = scmp.ne.s32.totalorder %s222, %s236
    %p238 = scmp.eq.s32.totalorder %s23, 0
    %p239 = por %p237, %p238
    %s241 = sadd.s32 %s240, 1
    %p244 = scmp.eq.s32.totalorder %s17, 1
    %p245 = scmp.ne.s32.totalorder %s240, %s242
    %p246 = scmp.eq.s32.totalorder %s17, 0
    %p247 = por %p245, %p246
    %p248 = scmp.ne.s32.totalorder %s240, %s242
    %p249 = scmp.eq.s32.totalorder %s22, 1
    %p250 = por %p248, %p249
    %p251 = scmp.ne.s32.totalorder %s242, %s243
    %p252 = scmp.eq.s32.totalorder %s22, 0
    %p253 = por %p251, %p252
    %p254 = scmp.ne.s32.totalorder %s242, %s243
    %p255 = scmp.eq.s32.totalorder %s23, 1
    %p256 = por %p254, %p255
    %p258 = scmp.ne.s32.totalorder %s243, %s257
    %p259 = scmp.eq.s32.totalorder %s23, 0
    %p260 = por %p258, %p259
    %s261 = ssub.s32 %s17, %s24
    %p262 = scmp.eq.s32.totalorder %s261, 0
    %s264 = sadd.s32 %s263, 1
    %s265 = scalar_select %p262, %s263, %s264
    %p268 = pneg %p262
    %p269 = scmp.eq.s32.totalorder %s17, 1
    %p270 = por %p268, %p269
    %p271 = scmp.ne.s32.totalorder %s263, %s266
    %p272 = scmp.eq.s32.totalorder %s17, 0
    %p273 = por %p271, %p272
    %p274 = scmp.ne.s32.totalorder %s263, %s266
    %p275 = scmp.eq.s32.totalorder %s22, 1
    %p276 = por %p274, %p275
    %p277 = scmp.ne.s32.totalorder %s266, %s267
    %p278 = scmp.eq.s32.totalorder %s22, 0
    %p279 = por %p277, %p278
    %p280 = scmp.ne.s32.totalorder %s266, %s267
    %p281 = scmp.eq.s32.totalorder %s23, 1
    %p282 = por %p280, %p281
    %p284 = scmp.ne.s32.totalorder %s267, %s283
    %p285 = scmp.eq.s32.totalorder %s23, 0
    %p286 = por %p284, %p285
    %p287 = scmp.le.s32.totalorder 1, %s17
    %p288 = scmp.lt.s32.totalorder %s17, 3
    %p289 = pnand %p287, %p288
    %p290 = pneg %p289
    // Predicated region
    $region9: #{residual_cc_block.1} parent=5 // pred_check
      _
    $region10: #{residual_cc_block.1} parent=5 // pred_check_branch
      %292 = sbr.rel (%p289) target = $region12
    $region11: #{residual_cc_block.1} parent=5 // pred_region
      %s293 = ssub.s32 %s17, 1
      // Predicated region
      $region13: #{residual_cc_block.1} parent=11 // pred_check
        %p294 = pneg %p64
      $region14: #{residual_cc_block.1} parent=11 // pred_check_branch
        %296 = sbr.rel (%p294) target = $region16
      $region15: #{residual_cc_block.1} parent=11 // pred_region
        _
      $region16: #{residual_cc_block.1} parent=11 // pred_fallthru
        _
      // Predicated region
      $region17: #{residual_cc_block.1} parent=11 // pred_check
        %p297 = pneg %p85
      $region18: #{residual_cc_block.1} parent=11 // pred_check_branch
        %299 = sbr.rel (%p297) target = $region20
      $region19: #{residual_cc_block.1} parent=11 // pred_region
        _
      $region20: #{residual_cc_block.1} parent=11 // pred_fallthru
        _
      // Predicated region
      $region21: #{residual_cc_block.1} parent=11 // pred_check
        %p300 = pneg %p106
      $region22: #{residual_cc_block.1} parent=11 // pred_check_branch
        %302 = sbr.rel (%p300) target = $region24
      $region23: #{residual_cc_block.1} parent=11 // pred_region
        _
      $region24: #{residual_cc_block.1} parent=11 // pred_fallthru
        _
      // Predicated region
      $region25: #{residual_cc_block.1} parent=11 // pred_check
        %p303 = pneg %p127
      $region26: #{residual_cc_block.1} parent=11 // pred_check_branch
        %305 = sbr.rel (%p303) target = $region28
      $region27: #{residual_cc_block.1} parent=11 // pred_region
        _
      $region28: #{residual_cc_block.1} parent=11 // pred_fallthru
        _
      // Predicated region
      $region29: #{residual_cc_block.1} parent=11 // pred_check
        %p306 = pneg %p148
      $region30: #{residual_cc_block.1} parent=11 // pred_check_branch
        %308 = sbr.rel (%p306) target = $region32
      $region31: #{residual_cc_block.1} parent=11 // pred_region
        _
      $region32: #{residual_cc_block.1} parent=11 // pred_fallthru
        _
      // Predicated region
      $region33: #{residual_cc_block.1} parent=11 // pred_check
        %p309 = pneg %p169
      $region34: #{residual_cc_block.1} parent=11 // pred_check_branch
        %311 = sbr.rel (%p309) target = $region36
      $region35: #{residual_cc_block.1} parent=11 // pred_region
        _
      $region36: #{residual_cc_block.1} parent=11 // pred_fallthru
        _
      // Predicated region
      $region37: #{residual_cc_block.1} parent=11 // pred_check
        %p312 = pneg %p190
      $region38: #{residual_cc_block.1} parent=11 // pred_check_branch
        %314 = sbr.rel (%p312) target = $region40
      $region39: #{residual_cc_block.1} parent=11 // pred_region
        _
      $region40: #{residual_cc_block.1} parent=11 // pred_fallthru
        _
      // Predicated region
      $region41: #{residual_cc_block.1} parent=11 // pred_check
        %p315 = pneg %p211
      $region42: #{residual_cc_block.1} parent=11 // pred_check_branch
        %317 = sbr.rel (%p315) target = $region44
      $region43: #{residual_cc_block.1} parent=11 // pred_region
        _
      $region44: #{residual_cc_block.1} parent=11 // pred_fallthru
        _
      // Predicated region
      $region45: #{residual_cc_block.1} parent=11 // pred_check
        %p318 = pneg %p232
      $region46: #{residual_cc_block.1} parent=11 // pred_check_branch
        %320 = sbr.rel (%p318) target = $region48
      $region47: #{residual_cc_block.1} parent=11 // pred_region
        _
      $region48: #{residual_cc_block.1} parent=11 // pred_fallthru
        _
      // Predicated region
      $region49: #{residual_cc_block.1} parent=11 // pred_check
        %p321 = pneg %p253
      $region50: #{residual_cc_block.1} parent=11 // pred_check_branch
        %323 = sbr.rel (%p321) target = $region52
      $region51: #{residual_cc_block.1} parent=11 // pred_region
        _
      $region52: #{residual_cc_block.1} parent=11 // pred_fallthru
        _
    $region12: #{residual_cc_block.1} parent=5 // pred_fallthru
      _
    %p324 = scmp.lt.s32.totalorder %s17, 2
    // Predicated region
    $region53: #{residual_cc_block.1} parent=5 // pred_check
      %p325 = pneg %p324
    $region54: #{residual_cc_block.1} parent=5 // pred_check_branch
      %327 = sbr.rel (%p325) target = $region56
    $region55: #{residual_cc_block.1} parent=5 // pred_region
      // Predicated region
      $region57: #{residual_cc_block.1} parent=55 // pred_check
        %p328 = pneg %p37
      $region58: #{residual_cc_block.1} parent=55 // pred_check_branch
        %330 = sbr.rel (%p328) target = $region60
      $region59: #{residual_cc_block.1} parent=55 // pred_region
        %p331 = scmp.lt.s32.totalorder %s17, 1
        %s332 = scalar_select %p331, %s17, 1
        %s333 = smul.addr %s332, 4
        %s334 = smul.addr %s333, 4
        %s335 = scalar_lea.vmem %s0, %s334
      $region60: #{residual_cc_block.1} parent=55 // pred_fallthru
        _
    $region56: #{residual_cc_block.1} parent=5 // pred_fallthru
      _
    %p336 = scmp.le.s32.totalorder 1, %s17
    %p337 = scmp.lt.s32.totalorder %s17, 3
    %p338 = pnand %p336, %p337
    %p339 = pneg %p338
    // Predicated region
    $region61: #{residual_cc_block.1} parent=5 // pred_check
      _
    $region62: #{residual_cc_block.1} parent=5 // pred_check_branch
      %341 = sbr.rel (%p338) target = $region64
    $region63: #{residual_cc_block.1} parent=5 // pred_region
      %s342 = ssub.s32 %s17, 1
      %p343 = scmp.lt.s32.totalorder %s22, 1
      %s344 = scalar_select %p343, %s22, 1
      %s345 = smul.addr %s344, 4
      %s346 = smul.addr %s345, 4
      %s347 = scalar_lea.vmem %s0, %s346
      %p348 = pneg %p43
      %p349 = pneg %p40
      %p350 = pneg %p64
      %p351 = pneg %p61
      %p352 = pneg %p85
      %p353 = pneg %p82
      %p354 = pneg %p106
      %p355 = pneg %p103
      %p356 = pneg %p127
      %p357 = pneg %p124
      %p358 = pneg %p148
      %p359 = pneg %p145
      %p360 = pneg %p169
      %p361 = pneg %p166
      %p362 = pneg %p190
      %p363 = pneg %p187
      %p364 = pneg %p211
      %p365 = pneg %p208
      %p366 = pneg %p232
      %p367 = pneg %p229
      %p368 = pneg %p253
      %p369 = pneg %p250
      %p370 = pneg %p279
      %p371 = pneg %p276
      %p372 = scmp.lt.s32.totalorder %s22, 1
      %s373 = scalar_select %p372, %s22, 1
      %s374 = smul.addr %s373, 4
      %s375 = smul.addr %s374, 8
      %s376 = scalar_lea.vmem %s11, %s375
      %p377 = scmp.lt.s32.totalorder %s22, 1
      %s378 = scalar_select %p377, %s22, 1
      %s379 = smul.addr %s378, 4
      %s380 = smul.addr %s379, 4
      %s381 = scalar_lea.vmem %s0, %s380
      %p382 = scmp.lt.s32.totalorder %s22, 1
      %s383 = scalar_select %p382, %s22, 1
      %s384 = smul.addr %s383, 4
      %s385 = smul.addr %s384, 8
      %s386 = scalar_lea.vmem %s11, %s385
      %v387 = vld [vmem:[%s1] sm:$0x1]
      %v388 = vld [vmem:[%s2] sm:$0x1]
      %v389 = vld [vmem:[%s381] sm:$0xf]
      %s390 = scalar_lea.vmem %s381, 4
      %v391 = vld [vmem:[%s390] sm:$0xf]
      %s392 = scalar_lea.vmem %s381, 8
      %v393 = vld [vmem:[%s392] sm:$0xf]
      %s394 = scalar_lea.vmem %s381, 12
      %v395 = vld [vmem:[%s394] sm:$0xf]
      %v396 = vld [vmem:[%s5] sm:$0xff]
      %v397 = vld [vmem:[%s5 + $0x8] sm:$0xff]
      %v398 = vld [vmem:[%s5 + $0x10] sm:$0xff]
      %v399 = vld [vmem:[%s5 + $0x18] sm:$0xff]
      %401 = vset.pattern.permute.xlu0 0
      %402 = vperm.xlu0 %401, %v396
      %v403 = vpop.permute.xlu0 %402
      %406 = vset.pattern.permute.xlu0 0
      %407 = vperm.xlu0 %406, %v397
      %v408 = vpop.permute.xlu0 %407
      %411 = vset.pattern.permute.xlu0 0
      %412 = vperm.xlu0 %411, %v398
      %v413 = vpop.permute.xlu0 %412
      %416 = vset.pattern.permute.xlu0 0
      %417 = vperm.xlu0 %416, %v399
      %v418 = vpop.permute.xlu0 %417
      %v420 = vadd.f32 %v403, 0.0
      %v421 = vadd.f32 %v408, 0.0
      %v422 = vadd.f32 %v413, 0.0
      %v423 = vadd.f32 %v418, 0.0
      %vm424 = vcmp.ge.f32.partialorder %v387, 1.0
      %vm425 = vcmp.ge.f32.partialorder %v388, 1.0
      %vm426 = vmand %vm424, %vm425
      %v427 = vsel %vm426, 1.0, 0.0
      %v428 = vmul.f32 %v387, 2.0
      %v429 = vadd.f32 %v428, -1.0
      %v430 = vmul.f32 %v429, 0.13333334
      %v431 = vsub.f32 %v430, 1.0
      %v432 = vmul.f32 %v388, 2.0
      %v433 = vadd.f32 %v432, -1.0
      %v434 = vmul.f32 %v433, 0.13333334
      %v435 = vsub.f32 %v434, 1.0
      %v436 = vmul.f32 %v431, %v427
      %v437 = vmul.f32 %v435, %v427
      %438 = vrot.lane.b32.xlu0 %v395, 9
      %v439 = vpop.permute.xlu0 %438
      %v441 = vlaneseq
      %v442 = vshrl.u32 %v441, 7
      %v443 = vsub.s32 0, %v442
      %v444 = vrot.slane %v427, %v443
      %v446 = vmul.f32 %v439, %v444
      %v447 = vld [vmem:[%s3] sm:$0xff]
      %v448 = vld [vmem:[%s3 + $0x8] sm:$0xff]
      %v449 = vld [vmem:[%s3 + $0x10] sm:$0xff]
      %v450 = vld [vmem:[%s3 + $0x18] sm:$0xff]
      %vm451 = vcmask 31744
      %v453 = vsel %vm451, %v447, 0
      %v456 = vsel %vm451, %v448, 0
      %v459 = vsel %vm451, %v449, 0
      %v462 = vsel %vm451, %v450, 0
      %vm464 = vcmask 1043456
      %v466 = vsel %vm464, %v446, 0
      %468 = vmatprep.subr.mxu0 0.0
      %469 = vmatpush1.msra.mxu0 0.0
      %470 = vmatprep.subr.mxu0 0.0
      %471 = vmatpush1.msra.mxu0 0.0
      %472 = vmatprep.subr.mxu0 0.0
      %473 = vmatpush1.msra.mxu0 0.0
      %474 = vmatprep.subr.mxu0 0.0
      %475 = vmatpush1.msra.mxu0 0.0
      %476 = vmatprep.subr.mxu0 0.0
      %477 = vmatpush1.msra.mxu0 0.0
      %478 = vmatprep.subr.mxu0 0.0
      %479 = vmatpush1.msra.mxu0 0.0
      %480 = vmatprep.subr.mxu0 0.0
      %481 = vmatpush1.msra.mxu0 0.0
      %482 = vmatprep.subr.mxu0 0.0
      %483 = vmatpush1.msra.mxu0 0.0
      %484 = vmatprep.subr.mxu0 0.0
      %485 = vmatpush1.msra.mxu0 0.0
      %486 = vmatprep.subr.mxu0 0.0
      %487 = vmatpush1.msra.mxu0 0.0
      %488 = vmatprep.subr.mxu0 0.0
      %489 = vmatpush1.msra.mxu0 0.0
      %490 = vmatprep.subr.mxu0 0.0
      %491 = vmatpush1.msra.mxu0 0.0
      %492 = vmatprep.subr.mxu0 0.0
      %493 = vmatpush1.msra.mxu0 0.0
      %494 = vmatprep.subr.mxu0 0.0
      %495 = vmatpush1.msra.mxu0 0.0
      %496 = vmatprep.subr.mxu0 0.0
      %497 = vmatpush1.msra.mxu0 0.0
      %498 = vmatprep.subr.mxu0 0.0
      %499 = vmatpush1.msra.mxu0 %v466
      %500 = vmatprep.subr.mxu0 0.0
      %501 = vmatpush2.msra.mxu0 0.0
      %502 = vmatprep.subr.mxu0 0.0
      %503 = vmatpush2.msra.mxu0 0.0
      %504 = vmatprep.subr.mxu0 0.0
      %505 = vmatpush2.msra.mxu0 0.0
      %506 = vmatprep.subr.mxu0 0.0
      %507 = vmatpush2.msra.mxu0 0.0
      %508 = vmatprep.subr.mxu0 0.0
      %509 = vmatpush2.msra.mxu0 0.0
      %510 = vmatprep.subr.mxu0 0.0
      %511 = vmatpush2.msra.mxu0 0.0
      %512 = vmatprep.subr.mxu0 0.0
      %513 = vmatpush2.msra.mxu0 0.0
      %514 = vmatprep.subr.mxu0 0.0
      %515 = vmatpush2.msra.mxu0 0.0
      %516 = vmatprep.subr.mxu0 0.0
      %517 = vmatpush2.msra.mxu0 0.0
      %518 = vmatprep.subr.mxu0 0.0
      %519 = vmatpush2.msra.mxu0 0.0
      %520 = vmatprep.subr.mxu0 0.0
      %521 = vmatpush2.msra.mxu0 0.0
      %522 = vmatprep.subr.mxu0 0.0
      %523 = vmatpush2.msra.mxu0 0.0
      %524 = vmatprep.subr.mxu0 0.0
      %525 = vmatpush2.msra.mxu0 0.0
      %526 = vmatprep.subr.mxu0 0.0
      %527 = vmatpush2.msra.mxu0 0.0
      %528 = vmatprep.subr.mxu0 0.0
      %529 = vmatpush2.msra.mxu0 0.0
      %530 = vmatprep.subr.mxu0 0.0
      %531 = vmatpush2.msra.mxu0 0.0
      %532 = vmatprep.mubr.f32.mxu0 0.0
      %533 = vmatmul.mubr.f32.gmra.mxu0 %v453
      %v534 = vpop.f32.mrf.mxu0
      %v535 = vadd.f32 0.0, %v534
      %v536 = vpop.f32.mrf.mxu0
      %537 = vmatprep.mubr.f32.mxu0 0.0
      %538 = vmatmul.mubr.f32.gmra.mxu0 %v456
      %v539 = vpop.f32.mrf.mxu0
      %v540 = vadd.f32 0.0, %v539
      %v541 = vpop.f32.mrf.mxu0
      %542 = vmatprep.mubr.f32.mxu0 0.0
      %543 = vmatmul.mubr.f32.gmra.mxu0 %v459
      %v544 = vpop.f32.mrf.mxu0
      %v545 = vadd.f32 0.0, %v544
      %v546 = vpop.f32.mrf.mxu0
      %547 = vmatprep.mubr.f32.mxu0 0.0
      %548 = vmatmul.mubr.f32.gmra.mxu0 %v462
      %v549 = vpop.f32.mrf.mxu0
      %v550 = vadd.f32 0.0, %v549
      %v551 = vpop.f32.mrf.mxu0
      %552 = vdwg.mxu0
      %v553 = vadd.f32 %v420, %v535
      %v554 = vadd.f32 %v421, %v540
      %v555 = vadd.f32 %v422, %v545
      %v556 = vadd.f32 %v423, %v550
      %v557 = vld [vmem:[%s4] sm:$0xff]
      %v558 = vld [vmem:[%s4 + $0x8] sm:$0xff]
      %v559 = vld [vmem:[%s4 + $0x10] sm:$0xff]
      %v560 = vld [vmem:[%s4 + $0x18] sm:$0xff]
      %562 = vset.pattern.permute.xlu0 0
      %563 = vperm.xlu0 %562, %v557
      %v564 = vpop.permute.xlu0 %563
      %567 = vset.pattern.permute.xlu0 0
      %568 = vperm.xlu0 %567, %v558
      %v569 = vpop.permute.xlu0 %568
      %572 = vset.pattern.permute.xlu0 0
      %573 = vperm.xlu0 %572, %v559
      %v574 = vpop.permute.xlu0 %573
      %577 = vset.pattern.permute.xlu0 0
      %578 = vperm.xlu0 %577, %v560
      %v579 = vpop.permute.xlu0 %578
      %v582 = vlaneseq
      %v583 = vshrl.u32 %v582, 7
      %v584 = vsub.s32 0, %v583
      %v585 = vrot.slane %v436, %v584
      %v587 = vmul.f32 %v564, %v585
      %v588 = vmul.f32 %v569, %v585
      %v589 = vmul.f32 %v574, %v585
      %v590 = vmul.f32 %v579, %v585
      %v591 = vadd.f32 %v553, %v587
      %v592 = vadd.f32 %v554, %v588
      %v593 = vadd.f32 %v555, %v589
      %v594 = vadd.f32 %v556, %v590
      %s595 = scalar_lea.vmem %s4, 32
      %v596 = vld [vmem:[%s595] sm:$0xff]
      %v597 = vld [vmem:[%s595 + $0x8] sm:$0xff]
      %v598 = vld [vmem:[%s595 + $0x10] sm:$0xff]
      %v599 = vld [vmem:[%s595 + $0x18] sm:$0xff]
      %601 = vset.pattern.permute.xlu0 0
      %602 = vperm.xlu0 %601, %v596
      %v603 = vpop.permute.xlu0 %602
      %606 = vset.pattern.permute.xlu0 0
      %607 = vperm.xlu0 %606, %v597
      %v608 = vpop.permute.xlu0 %607
      %611 = vset.pattern.permute.xlu0 0
      %612 = vperm.xlu0 %611, %v598
      %v613 = vpop.permute.xlu0 %612
      %616 = vset.pattern.permute.xlu0 0
      %617 = vperm.xlu0 %616, %v599
      %v618 = vpop.permute.xlu0 %617
      %v621 = vlaneseq
      %v622 = vshrl.u32 %v621, 7
      %v623 = vsub.s32 0, %v622
      %v624 = vrot.slane %v437, %v623
      %v626 = vmul.f32 %v603, %v624
      %v627 = vmul.f32 %v608, %v624
      %v628 = vmul.f32 %v613, %v624
      %v629 = vmul.f32 %v618, %v624
      %v630 = vadd.f32 %v591, %v626
      %v631 = vadd.f32 %v592, %v627
      %v632 = vadd.f32 %v593, %v628
      %v633 = vadd.f32 %v594, %v629
      %v634 = vsel %vm424, 1.0, 0.0
      %v635 = vadd.f32 %v432, 0.0
      %v636 = vmul.f32 %v635, 0.13333334
      %v637 = vsub.f32 %v636, 1.0
      %v638 = vmul.f32 %v431, %v634
      %v639 = vmul.f32 %v637, %v634
      %640 = vrot.lane.b32.xlu0 %v393, 8
      %v641 = vpop.permute.xlu0 %640
      %v643 = vlaneseq
      %v644 = vshrl.u32 %v643, 7
      %v645 = vsub.s32 0, %v644
      %v646 = vrot.slane %v634, %v645
      %v648 = vmul.f32 %v641, %v646
      %s649 = scalar_lea.vmem %s3, 32
      %v650 = vld [vmem:[%s649] sm:$0xff]
      %v651 = vld [vmem:[%s649 + $0x8] sm:$0xff]
      %v652 = vld [vmem:[%s649 + $0x10] sm:$0xff]
      %v653 = vld [vmem:[%s649 + $0x18] sm:$0xff]
      %v655 = vsel %vm451, %v650, 0
      %v658 = vsel %vm451, %v651, 0
      %v661 = vsel %vm451, %v652, 0
      %v664 = vsel %vm451, %v653, 0
      %v667 = vsel %vm464, %v648, 0
      %669 = vmatprep.subr.mxu0 0.0
      %670 = vmatpush1.msra.mxu0 0.0
      %671 = vmatprep.subr.mxu0 0.0
      %672 = vmatpush1.msra.mxu0 0.0
      %673 = vmatprep.subr.mxu0 0.0
      %674 = vmatpush1.msra.mxu0 0.0
      %675 = vmatprep.subr.mxu0 0.0
      %676 = vmatpush1.msra.mxu0 0.0
      %677 = vmatprep.subr.mxu0 0.0
      %678 = vmatpush1.msra.mxu0 0.0
      %679 = vmatprep.subr.mxu0 0.0
      %680 = vmatpush1.msra.mxu0 0.0
      %681 = vmatprep.subr.mxu0 0.0
      %682 = vmatpush1.msra.mxu0 0.0
      %683 = vmatprep.subr.mxu0 0.0
      %684 = vmatpush1.msra.mxu0 0.0
      %685 = vmatprep.subr.mxu0 0.0
      %686 = vmatpush1.msra.mxu0 0.0
      %687 = vmatprep.subr.mxu0 0.0
      %688 = vmatpush1.msra.mxu0 0.0
      %689 = vmatprep.subr.mxu0 0.0
      %690 = vmatpush1.msra.mxu0 0.0
      %691 = vmatprep.subr.mxu0 0.0
      %692 = vmatpush1.msra.mxu0 0.0
      %693 = vmatprep.subr.mxu0 0.0
      %694 = vmatpush1.msra.mxu0 0.0
      %695 = vmatprep.subr.mxu0 0.0
      %696 = vmatpush1.msra.mxu0 0.0
      %697 = vmatprep.subr.mxu0 0.0
      %698 = vmatpush1.msra.mxu0 0.0
      %699 = vmatprep.subr.mxu0 0.0
      %700 = vmatpush1.msra.mxu0 %v667
      %701 = vmatprep.subr.mxu0 0.0
      %702 = vmatpush2.msra.mxu0 0.0
      %703 = vmatprep.subr.mxu0 0.0
      %704 = vmatpush2.msra.mxu0 0.0
      %705 = vmatprep.subr.mxu0 0.0
      %706 = vmatpush2.msra.mxu0 0.0
      %707 = vmatprep.subr.mxu0 0.0
      %708 = vmatpush2.msra.mxu0 0.0
      %709 = vmatprep.subr.mxu0 0.0
      %710 = vmatpush2.msra.mxu0 0.0
      %711 = vmatprep.subr.mxu0 0.0
      %712 = vmatpush2.msra.mxu0 0.0
      %713 = vmatprep.subr.mxu0 0.0
      %714 = vmatpush2.msra.mxu0 0.0
      %715 = vmatprep.subr.mxu0 0.0
      %716 = vmatpush2.msra.mxu0 0.0
      %717 = vmatprep.subr.mxu0 0.0
      %718 = vmatpush2.msra.mxu0 0.0
      %719 = vmatprep.subr.mxu0 0.0
      %720 = vmatpush2.msra.mxu0 0.0
      %721 = vmatprep.subr.mxu0 0.0
      %722 = vmatpush2.msra.mxu0 0.0
      %723 = vmatprep.subr.mxu0 0.0
      %724 = vmatpush2.msra.mxu0 0.0
      %725 = vmatprep.subr.mxu0 0.0
      %726 = vmatpush2.msra.mxu0 0.0
      %727 = vmatprep.subr.mxu0 0.0
      %728 = vmatpush2.msra.mxu0 0.0
      %729 = vmatprep.subr.mxu0 0.0
      %730 = vmatpush2.msra.mxu0 0.0
      %731 = vmatprep.subr.mxu0 0.0
      %732 = vmatpush2.msra.mxu0 0.0
      %733 = vmatprep.mubr.f32.mxu0 0.0
      %734 = vmatmul.mubr.f32.gmra.mxu0 %v655
      %v735 = vpop.f32.mrf.mxu0
      %v736 = vadd.f32 0.0, %v735
      %v737 = vpop.f32.mrf.mxu0
      %738 = vmatprep.mubr.f32.mxu0 0.0
      %739 = vmatmul.mubr.f32.gmra.mxu0 %v658
      %v740 = vpop.f32.mrf.mxu0
      %v741 = vadd.f32 0.0, %v740
      %v742 = vpop.f32.mrf.mxu0
      %743 = vmatprep.mubr.f32.mxu0 0.0
      %744 = vmatmul.mubr.f32.gmra.mxu0 %v661
      %v745 = vpop.f32.mrf.mxu0
      %v746 = vadd.f32 0.0, %v745
      %v747 = vpop.f32.mrf.mxu0
      %748 = vmatprep.mubr.f32.mxu0 0.0
      %749 = vmatmul.mubr.f32.gmra.mxu0 %v664
      %v750 = vpop.f32.mrf.mxu0
      %v751 = vadd.f32 0.0, %v750
      %v752 = vpop.f32.mrf.mxu0
      %753 = vdwg.mxu0
      %v754 = vadd.f32 %v630, %v736
      %v755 = vadd.f32 %v631, %v741
      %v756 = vadd.f32 %v632, %v746
      %v757 = vadd.f32 %v633, %v751
      %s758 = scalar_lea.vmem %s4, 64
      %v759 = vld [vmem:[%s758] sm:$0xff]
      %v760 = vld [vmem:[%s758 + $0x8] sm:$0xff]
      %v761 = vld [vmem:[%s758 + $0x10] sm:$0xff]
      %v762 = vld [vmem:[%s758 + $0x18] sm:$0xff]
      %764 = vset.pattern.permute.xlu0 0
      %765 = vperm.xlu0 %764, %v759
      %v766 = vpop.permute.xlu0 %765
      %769 = vset.pattern.permute.xlu0 0
      %770 = vperm.xlu0 %769, %v760
      %v771 = vpop.permute.xlu0 %770
      %774 = vset.pattern.permute.xlu0 0
      %775 = vperm.xlu0 %774, %v761
      %v776 = vpop.permute.xlu0 %775
      %779 = vset.pattern.permute.xlu0 0
      %780 = vperm.xlu0 %779, %v762
      %v781 = vpop.permute.xlu0 %780
      %v784 = vlaneseq
      %v785 = vshrl.u32 %v784, 7
      %v786 = vsub.s32 0, %v785
      %v787 = vrot.slane %v638, %v786
      %v789 = vmul.f32 %v766, %v787
      %v790 = vmul.f32 %v771, %v787
      %v791 = vmul.f32 %v776, %v787
      %v792 = vmul.f32 %v781, %v787
      %v793 = vadd.f32 %v754, %v789
      %v794 = vadd.f32 %v755, %v790
      %v795 = vadd.f32 %v756, %v791
      %v796 = vadd.f32 %v757, %v792
      %s797 = scalar_lea.vmem %s4, 96
      %v798 = vld [vmem:[%s797] sm:$0xff]
      %v799 = vld [vmem:[%s797 + $0x8] sm:$0xff]
      %v800 = vld [vmem:[%s797 + $0x10] sm:$0xff]
      %v801 = vld [vmem:[%s797 + $0x18] sm:$0xff]
      %803 = vset.pattern.permute.xlu0 0
      %804 = vperm.xlu0 %803, %v798
      %v805 = vpop.permute.xlu0 %804
      %808 = vset.pattern.permute.xlu0 0
      %809 = vperm.xlu0 %808, %v799
      %v810 = vpop.permute.xlu0 %809
      %813 = vset.pattern.permute.xlu0 0
      %814 = vperm.xlu0 %813, %v800
      %v815 = vpop.permute.xlu0 %814
      %818 = vset.pattern.permute.xlu0 0
      %819 = vperm.xlu0 %818, %v801
      %v820 = vpop.permute.xlu0 %819
      %v823 = vlaneseq
      %v824 = vshrl.u32 %v823, 7
      %v825 = vsub.s32 0, %v824
      %v826 = vrot.slane %v639, %v825
      %v828 = vmul.f32 %v805, %v826
      %v829 = vmul.f32 %v810, %v826
      %v830 = vmul.f32 %v815, %v826
      %v831 = vmul.f32 %v820, %v826
      %v832 = vadd.f32 %v793, %v828
      %v833 = vadd.f32 %v794, %v829
      %v834 = vadd.f32 %v795, %v830
      %v835 = vadd.f32 %v796, %v831
      %v836 = vadd.f32 %v432, 1.0
      %v837 = vmul.f32 %v836, 0.13333334
      %v838 = vsub.f32 %v837, 1.0
      %v839 = vmul.f32 %v838, %v634
      %840 = vrot.lane.b32.xlu0 %v395, 8
      %v841 = vpop.permute.xlu0 %840
      %v842 = vmul.f32 %v841, %v646
      %s843 = scalar_lea.vmem %s3, 64
      %v844 = vld [vmem:[%s843] sm:$0xff]
      %v845 = vld [vmem:[%s843 + $0x8] sm:$0xff]
      %v846 = vld [vmem:[%s843 + $0x10] sm:$0xff]
      %v847 = vld [vmem:[%s843 + $0x18] sm:$0xff]
      %v849 = vsel %vm451, %v844, 0
      %v852 = vsel %vm451, %v845, 0
      %v855 = vsel %vm451, %v846, 0
      %v858 = vsel %vm451, %v847, 0
      %v861 = vsel %vm464, %v842, 0
      %863 = vmatprep.subr.mxu0 0.0
      %864 = vmatpush1.msra.mxu0 0.0
      %865 = vmatprep.subr.mxu0 0.0
      %866 = vmatpush1.msra.mxu0 0.0
      %867 = vmatprep.subr.mxu0 0.0
      %868 = vmatpush1.msra.mxu0 0.0
      %869 = vmatprep.subr.mxu0 0.0
      %870 = vmatpush1.msra.mxu0 0.0
      %871 = vmatprep.subr.mxu0 0.0
      %872 = vmatpush1.msra.mxu0 0.0
      %873 = vmatprep.subr.mxu0 0.0
      %874 = vmatpush1.msra.mxu0 0.0
      %875 = vmatprep.subr.mxu0 0.0
      %876 = vmatpush1.msra.mxu0 0.0
      %877 = vmatprep.subr.mxu0 0.0
      %878 = vmatpush1.msra.mxu0 0.0
      %879 = vmatprep.subr.mxu0 0.0
      %880 = vmatpush1.msra.mxu0 0.0
      %881 = vmatprep.subr.mxu0 0.0
      %882 = vmatpush1.msra.mxu0 0.0
      %883 = vmatprep.subr.mxu0 0.0
      %884 = vmatpush1.msra.mxu0 0.0
      %885 = vmatprep.subr.mxu0 0.0
      %886 = vmatpush1.msra.mxu0 0.0
      %887 = vmatprep.subr.mxu0 0.0
      %888 = vmatpush1.msra.mxu0 0.0
      %889 = vmatprep.subr.mxu0 0.0
      %890 = vmatpush1.msra.mxu0 0.0
      %891 = vmatprep.subr.mxu0 0.0
      %892 = vmatpush1.msra.mxu0 0.0
      %893 = vmatprep.subr.mxu0 0.0
      %894 = vmatpush1.msra.mxu0 %v861
      %895 = vmatprep.subr.mxu0 0.0
      %896 = vmatpush2.msra.mxu0 0.0
      %897 = vmatprep.subr.mxu0 0.0
      %898 = vmatpush2.msra.mxu0 0.0
      %899 = vmatprep.subr.mxu0 0.0
      %900 = vmatpush2.msra.mxu0 0.0
      %901 = vmatprep.subr.mxu0 0.0
      %902 = vmatpush2.msra.mxu0 0.0
      %903 = vmatprep.subr.mxu0 0.0
      %904 = vmatpush2.msra.mxu0 0.0
      %905 = vmatprep.subr.mxu0 0.0
      %906 = vmatpush2.msra.mxu0 0.0
      %907 = vmatprep.subr.mxu0 0.0
      %908 = vmatpush2.msra.mxu0 0.0
      %909 = vmatprep.subr.mxu0 0.0
      %910 = vmatpush2.msra.mxu0 0.0
      %911 = vmatprep.subr.mxu0 0.0
      %912 = vmatpush2.msra.mxu0 0.0
      %913 = vmatprep.subr.mxu0 0.0
      %914 = vmatpush2.msra.mxu0 0.0
      %915 = vmatprep.subr.mxu0 0.0
      %916 = vmatpush2.msra.mxu0 0.0
      %917 = vmatprep.subr.mxu0 0.0
      %918 = vmatpush2.msra.mxu0 0.0
      %919 = vmatprep.subr.mxu0 0.0
      %920 = vmatpush2.msra.mxu0 0.0
      %921 = vmatprep.subr.mxu0 0.0
      %922 = vmatpush2.msra.mxu0 0.0
      %923 = vmatprep.subr.mxu0 0.0
      %924 = vmatpush2.msra.mxu0 0.0
      %925 = vmatprep.subr.mxu0 0.0
      %926 = vmatpush2.msra.mxu0 0.0
      %927 = vmatprep.mubr.f32.mxu0 0.0
      %928 = vmatmul.mubr.f32.gmra.mxu0 %v849
      %v929 = vpop.f32.mrf.mxu0
      %v930 = vadd.f32 0.0, %v929
      %v931 = vpop.f32.mrf.mxu0
      %932 = vmatprep.mubr.f32.mxu0 0.0
      %933 = vmatmul.mubr.f32.gmra.mxu0 %v852
      %v934 = vpop.f32.mrf.mxu0
      %v935 = vadd.f32 0.0, %v934
      %v936 = vpop.f32.mrf.mxu0
      %937 = vmatprep.mubr.f32.mxu0 0.0
      %938 = vmatmul.mubr.f32.gmra.mxu0 %v855
      %v939 = vpop.f32.mrf.mxu0
      %v940 = vadd.f32 0.0, %v939
      %v941 = vpop.f32.mrf.mxu0
      %942 = vmatprep.mubr.f32.mxu0 0.0
      %943 = vmatmul.mubr.f32.gmra.mxu0 %v858
      %v944 = vpop.f32.mrf.mxu0
      %v945 = vadd.f32 0.0, %v944
      %v946 = vpop.f32.mrf.mxu0
      %947 = vdwg.mxu0
      %v948 = vadd.f32 %v832, %v930
      %v949 = vadd.f32 %v833, %v935
      %v950 = vadd.f32 %v834, %v940
      %v951 = vadd.f32 %v835, %v945
      %s952 = scalar_lea.vmem %s4, 128
      %v953 = vld [vmem:[%s952] sm:$0xff]
      %v954 = vld [vmem:[%s952 + $0x8] sm:$0xff]
      %v955 = vld [vmem:[%s952 + $0x10] sm:$0xff]
      %v956 = vld [vmem:[%s952 + $0x18] sm:$0xff]
      %958 = vset.pattern.permute.xlu0 0
      %959 = vperm.xlu0 %958, %v953
      %v960 = vpop.permute.xlu0 %959
      %963 = vset.pattern.permute.xlu0 0
      %964 = vperm.xlu0 %963, %v954
      %v965 = vpop.permute.xlu0 %964
      %968 = vset.pattern.permute.xlu0 0
      %969 = vperm.xlu0 %968, %v955
      %v970 = vpop.permute.xlu0 %969
      %973 = vset.pattern.permute.xlu0 0
      %974 = vperm.xlu0 %973, %v956
      %v975 = vpop.permute.xlu0 %974
      %v977 = vmul.f32 %v960, %v787
      %v978 = vmul.f32 %v965, %v787
      %v979 = vmul.f32 %v970, %v787
      %v980 = vmul.f32 %v975, %v787
      %v981 = vadd.f32 %v948, %v977
      %v982 = vadd.f32 %v949, %v978
      %v983 = vadd.f32 %v950, %v979
      %v984 = vadd.f32 %v951, %v980
      %s985 = scalar_lea.vmem %s4, 160
      %v986 = vld [vmem:[%s985] sm:$0xff]
      %v987 = vld [vmem:[%s985 + $0x8] sm:$0xff]
      %v988 = vld [vmem:[%s985 + $0x10] sm:$0xff]
      %v989 = vld [vmem:[%s985 + $0x18] sm:$0xff]
      %991 = vset.pattern.permute.xlu0 0
      %992 = vperm.xlu0 %991, %v986
      %v993 = vpop.permute.xlu0 %992
      %996 = vset.pattern.permute.xlu0 0
      %997 = vperm.xlu0 %996, %v987
      %v998 = vpop.permute.xlu0 %997
      %1001 = vset.pattern.permute.xlu0 0
      %1002 = vperm.xlu0 %1001, %v988
      %v1003 = vpop.permute.xlu0 %1002
      %1006 = vset.pattern.permute.xlu0 0
      %1007 = vperm.xlu0 %1006, %v989
      %v1008 = vpop.permute.xlu0 %1007
      %v1011 = vlaneseq
      %v1012 = vshrl.u32 %v1011, 7
      %v1013 = vsub.s32 0, %v1012
      %v1014 = vrot.slane %v839, %v1013
      %v1016 = vmul.f32 %v993, %v1014
      %v1017 = vmul.f32 %v998, %v1014
      %v1018 = vmul.f32 %v1003, %v1014
      %v1019 = vmul.f32 %v1008, %v1014
      %v1020 = vadd.f32 %v981, %v1016
      %v1021 = vadd.f32 %v982, %v1017
      %v1022 = vadd.f32 %v983, %v1018
      %v1023 = vadd.f32 %v984, %v1019
      %v1024 = vsel %vm425, 1.0, 0.0
      %v1025 = vadd.f32 %v428, 0.0
      %v1026 = vmul.f32 %v1025, 0.13333334
      %v1027 = vsub.f32 %v1026, 1.0
      %v1028 = vmul.f32 %v1027, %v1024
      %v1029 = vmul.f32 %v435, %v1024
      %1030 = vrot.lane.b32.xlu0 %v391, 1
      %v1031 = vpop.permute.xlu0 %1030
      %v1033 = vlaneseq
      %v1034 = vshrl.u32 %v1033, 7
      %v1035 = vsub.s32 0, %v1034
      %v1036 = vrot.slane %v1024, %v1035
      %v1038 = vmul.f32 %v1031, %v1036
      %s1039 = scalar_lea.vmem %s3, 96
      %v1040 = vld [vmem:[%s1039] sm:$0xff]
      %v1041 = vld [vmem:[%s1039 + $0x8] sm:$0xff]
      %v1042 = vld [vmem:[%s1039 + $0x10] sm:$0xff]
      %v1043 = vld [vmem:[%s1039 + $0x18] sm:$0xff]
      %v1045 = vsel %vm451, %v1040, 0
      %v1048 = vsel %vm451, %v1041, 0
      %v1051 = vsel %vm451, %v1042, 0
      %v1054 = vsel %vm451, %v1043, 0
      %v1057 = vsel %vm464, %v1038, 0
      %1059 = vmatprep.subr.mxu0 0.0
      %1060 = vmatpush1.msra.mxu0 0.0
      %1061 = vmatprep.subr.mxu0 0.0
      %1062 = vmatpush1.msra.mxu0 0.0
      %1063 = vmatprep.subr.mxu0 0.0
      %1064 = vmatpush1.msra.mxu0 0.0
      %1065 = vmatprep.subr.mxu0 0.0
      %1066 = vmatpush1.msra.mxu0 0.0
      %1067 = vmatprep.subr.mxu0 0.0
      %1068 = vmatpush1.msra.mxu0 0.0
      %1069 = vmatprep.subr.mxu0 0.0
      %1070 = vmatpush1.msra.mxu0 0.0
      %1071 = vmatprep.subr.mxu0 0.0
      %1072 = vmatpush1.msra.mxu0 0.0
      %1073 = vmatprep.subr.mxu0 0.0
      %1074 = vmatpush1.msra.mxu0 0.0
      %1075 = vmatprep.subr.mxu0 0.0
      %1076 = vmatpush1.msra.mxu0 0.0
      %1077 = vmatprep.subr.mxu0 0.0
      %1078 = vmatpush1.msra.mxu0 0.0
      %1079 = vmatprep.subr.mxu0 0.0
      %1080 = vmatpush1.msra.mxu0 0.0
      %1081 = vmatprep.subr.mxu0 0.0
      %1082 = vmatpush1.msra.mxu0 0.0
      %1083 = vmatprep.subr.mxu0 0.0
      %1084 = vmatpush1.msra.mxu0 0.0
      %1085 = vmatprep.subr.mxu0 0.0
      %1086 = vmatpush1.msra.mxu0 0.0
      %1087 = vmatprep.subr.mxu0 0.0
      %1088 = vmatpush1.msra.mxu0 0.0
      %1089 = vmatprep.subr.mxu0 0.0
      %1090 = vmatpush1.msra.mxu0 %v1057
      %1091 = vmatprep.subr.mxu0 0.0
      %1092 = vmatpush2.msra.mxu0 0.0
      %1093 = vmatprep.subr.mxu0 0.0
      %1094 = vmatpush2.msra.mxu0 0.0
      %1095 = vmatprep.subr.mxu0 0.0
      %1096 = vmatpush2.msra.mxu0 0.0
      %1097 = vmatprep.subr.mxu0 0.0
      %1098 = vmatpush2.msra.mxu0 0.0
      %1099 = vmatprep.subr.mxu0 0.0
      %1100 = vmatpush2.msra.mxu0 0.0
      %1101 = vmatprep.subr.mxu0 0.0
      %1102 = vmatpush2.msra.mxu0 0.0
      %1103 = vmatprep.subr.mxu0 0.0
      %1104 = vmatpush2.msra.mxu0 0.0
      %1105 = vmatprep.subr.mxu0 0.0
      %1106 = vmatpush2.msra.mxu0 0.0
      %1107 = vmatprep.subr.mxu0 0.0
      %1108 = vmatpush2.msra.mxu0 0.0
      %1109 = vmatprep.subr.mxu0 0.0
      %1110 = vmatpush2.msra.mxu0 0.0
      %1111 = vmatprep.subr.mxu0 0.0
      %1112 = vmatpush2.msra.mxu0 0.0
      %1113 = vmatprep.subr.mxu0 0.0
      %1114 = vmatpush2.msra.mxu0 0.0
      %1115 = vmatprep.subr.mxu0 0.0
      %1116 = vmatpush2.msra.mxu0 0.0
      %1117 = vmatprep.subr.mxu0 0.0
      %1118 = vmatpush2.msra.mxu0 0.0
      %1119 = vmatprep.subr.mxu0 0.0
      %1120 = vmatpush2.msra.mxu0 0.0
      %1121 = vmatprep.subr.mxu0 0.0
      %1122 = vmatpush2.msra.mxu0 0.0
      %1123 = vmatprep.mubr.f32.mxu0 0.0
      %1124 = vmatmul.mubr.f32.gmra.mxu0 %v1045
      %v1125 = vpop.f32.mrf.mxu0
      %v1126 = vadd.f32 0.0, %v1125
      %v1127 = vpop.f32.mrf.mxu0
      %1128 = vmatprep.mubr.f32.mxu0 0.0
      %1129 = vmatmul.mubr.f32.gmra.mxu0 %v1048
      %v1130 = vpop.f32.mrf.mxu0
      %v1131 = vadd.f32 0.0, %v1130
      %v1132 = vpop.f32.mrf.mxu0
      %1133 = vmatprep.mubr.f32.mxu0 0.0
      %1134 = vmatmul.mubr.f32.gmra.mxu0 %v1051
      %v1135 = vpop.f32.mrf.mxu0
      %v1136 = vadd.f32 0.0, %v1135
      %v1137 = vpop.f32.mrf.mxu0
      %1138 = vmatprep.mubr.f32.mxu0 0.0
      %1139 = vmatmul.mubr.f32.gmra.mxu0 %v1054
      %v1140 = vpop.f32.mrf.mxu0
      %v1141 = vadd.f32 0.0, %v1140
      %v1142 = vpop.f32.mrf.mxu0
      %1143 = vdwg.mxu0
      %v1144 = vadd.f32 %v1020, %v1126
      %v1145 = vadd.f32 %v1021, %v1131
      %v1146 = vadd.f32 %v1022, %v1136
      %v1147 = vadd.f32 %v1023, %v1141
      %s1148 = scalar_lea.vmem %s4, 192
      %v1149 = vld [vmem:[%s1148] sm:$0xff]
      %v1150 = vld [vmem:[%s1148 + $0x8] sm:$0xff]
      %v1151 = vld [vmem:[%s1148 + $0x10] sm:$0xff]
      %v1152 = vld [vmem:[%s1148 + $0x18] sm:$0xff]
      %1154 = vset.pattern.permute.xlu0 0
      %1155 = vperm.xlu0 %1154, %v1149
      %v1156 = vpop.permute.xlu0 %1155
      %1159 = vset.pattern.permute.xlu0 0
      %1160 = vperm.xlu0 %1159, %v1150
      %v1161 = vpop.permute.xlu0 %1160
      %1164 = vset.pattern.permute.xlu0 0
      %1165 = vperm.xlu0 %1164, %v1151
      %v1166 = vpop.permute.xlu0 %1165
      %1169 = vset.pattern.permute.xlu0 0
      %1170 = vperm.xlu0 %1169, %v1152
      %v1171 = vpop.permute.xlu0 %1170
      %v1174 = vlaneseq
      %v1175 = vshrl.u32 %v1174, 7
      %v1176 = vsub.s32 0, %v1175
      %v1177 = vrot.slane %v1028, %v1176
      %v1179 = vmul.f32 %v1156, %v1177
      %v1180 = vmul.f32 %v1161, %v1177
      %v1181 = vmul.f32 %v1166, %v1177
      %v1182 = vmul.f32 %v1171, %v1177
      %v1183 = vadd.f32 %v1144, %v1179
      %v1184 = vadd.f32 %v1145, %v1180
      %v1185 = vadd.f32 %v1146, %v1181
      %v1186 = vadd.f32 %v1147, %v1182
      %s1187 = scalar_lea.vmem %s4, 224
      %v1188 = vld [vmem:[%s1187] sm:$0xff]
      %v1189 = vld [vmem:[%s1187 + $0x8] sm:$0xff]
      %v1190 = vld [vmem:[%s1187 + $0x10] sm:$0xff]
      %v1191 = vld [vmem:[%s1187 + $0x18] sm:$0xff]
      %1193 = vset.pattern.permute.xlu0 0
      %1194 = vperm.xlu0 %1193, %v1188
      %v1195 = vpop.permute.xlu0 %1194
      %1198 = vset.pattern.permute.xlu0 0
      %1199 = vperm.xlu0 %1198, %v1189
      %v1200 = vpop.permute.xlu0 %1199
      %1203 = vset.pattern.permute.xlu0 0
      %1204 = vperm.xlu0 %1203, %v1190
      %v1205 = vpop.permute.xlu0 %1204
      %1208 = vset.pattern.permute.xlu0 0
      %1209 = vperm.xlu0 %1208, %v1191
      %v1210 = vpop.permute.xlu0 %1209
      %v1213 = vlaneseq
      %v1214 = vshrl.u32 %v1213, 7
      %v1215 = vsub.s32 0, %v1214
      %v1216 = vrot.slane %v1029, %v1215
      %v1218 = vmul.f32 %v1195, %v1216
      %v1219 = vmul.f32 %v1200, %v1216
      %v1220 = vmul.f32 %v1205, %v1216
      %v1221 = vmul.f32 %v1210, %v1216
      %v1222 = vadd.f32 %v1183, %v1218
      %v1223 = vadd.f32 %v1184, %v1219
      %v1224 = vadd.f32 %v1185, %v1220
      %v1225 = vadd.f32 %v1186, %v1221
      %s1226 = scalar_lea.vmem %s3, 128
      %v1227 = vld [vmem:[%s1226] sm:$0xff]
      %v1228 = vld [vmem:[%s1226 + $0x8] sm:$0xff]
      %v1229 = vld [vmem:[%s1226 + $0x10] sm:$0xff]
      %v1230 = vld [vmem:[%s1226 + $0x18] sm:$0xff]
      %v1232 = vsel %vm451, %v1227, 0
      %v1235 = vsel %vm451, %v1228, 0
      %v1238 = vsel %vm451, %v1229, 0
      %v1241 = vsel %vm451, %v1230, 0
      %v1244 = vsel %vm464, %v389, 0
      %1246 = vmatprep.subr.mxu0 0.0
      %1247 = vmatpush1.msra.mxu0 0.0
      %1248 = vmatprep.subr.mxu0 0.0
      %1249 = vmatpush1.msra.mxu0 0.0
      %1250 = vmatprep.subr.mxu0 0.0
      %1251 = vmatpush1.msra.mxu0 0.0
      %1252 = vmatprep.subr.mxu0 0.0
      %1253 = vmatpush1.msra.mxu0 0.0
      %1254 = vmatprep.subr.mxu0 0.0
      %1255 = vmatpush1.msra.mxu0 0.0
      %1256 = vmatprep.subr.mxu0 0.0
      %1257 = vmatpush1.msra.mxu0 0.0
      %1258 = vmatprep.subr.mxu0 0.0
      %1259 = vmatpush1.msra.mxu0 0.0
      %1260 = vmatprep.subr.mxu0 0.0
      %1261 = vmatpush1.msra.mxu0 0.0
      %1262 = vmatprep.subr.mxu0 0.0
      %1263 = vmatpush1.msra.mxu0 0.0
      %1264 = vmatprep.subr.mxu0 0.0
      %1265 = vmatpush1.msra.mxu0 0.0
      %1266 = vmatprep.subr.mxu0 0.0
      %1267 = vmatpush1.msra.mxu0 0.0
      %1268 = vmatprep.subr.mxu0 0.0
      %1269 = vmatpush1.msra.mxu0 0.0
      %1270 = vmatprep.subr.mxu0 0.0
      %1271 = vmatpush1.msra.mxu0 0.0
      %1272 = vmatprep.subr.mxu0 0.0
      %1273 = vmatpush1.msra.mxu0 0.0
      %1274 = vmatprep.subr.mxu0 0.0
      %1275 = vmatpush1.msra.mxu0 0.0
      %1276 = vmatprep.subr.mxu0 0.0
      %1277 = vmatpush1.msra.mxu0 %v1244
      %1278 = vmatprep.subr.mxu0 0.0
      %1279 = vmatpush2.msra.mxu0 0.0
      %1280 = vmatprep.subr.mxu0 0.0
      %1281 = vmatpush2.msra.mxu0 0.0
      %1282 = vmatprep.subr.mxu0 0.0
      %1283 = vmatpush2.msra.mxu0 0.0
      %1284 = vmatprep.subr.mxu0 0.0
      %1285 = vmatpush2.msra.mxu0 0.0
      %1286 = vmatprep.subr.mxu0 0.0
      %1287 = vmatpush2.msra.mxu0 0.0
      %1288 = vmatprep.subr.mxu0 0.0
      %1289 = vmatpush2.msra.mxu0 0.0
      %1290 = vmatprep.subr.mxu0 0.0
      %1291 = vmatpush2.msra.mxu0 0.0
      %1292 = vmatprep.subr.mxu0 0.0
      %1293 = vmatpush2.msra.mxu0 0.0
      %1294 = vmatprep.subr.mxu0 0.0
      %1295 = vmatpush2.msra.mxu0 0.0
      %1296 = vmatprep.subr.mxu0 0.0
      %1297 = vmatpush2.msra.mxu0 0.0
      %1298 = vmatprep.subr.mxu0 0.0
      %1299 = vmatpush2.msra.mxu0 0.0
      %1300 = vmatprep.subr.mxu0 0.0
      %1301 = vmatpush2.msra.mxu0 0.0
      %1302 = vmatprep.subr.mxu0 0.0
      %1303 = vmatpush2.msra.mxu0 0.0
      %1304 = vmatprep.subr.mxu0 0.0
      %1305 = vmatpush2.msra.mxu0 0.0
      %1306 = vmatprep.subr.mxu0 0.0
      %1307 = vmatpush2.msra.mxu0 0.0
      %1308 = vmatprep.subr.mxu0 0.0
      %1309 = vmatpush2.msra.mxu0 0.0
      %1310 = vmatprep.mubr.f32.mxu0 0.0
      %1311 = vmatmul.mubr.f32.gmra.mxu0 %v1232
      %v1312 = vpop.f32.mrf.mxu0
      %v1313 = vadd.f32 0.0, %v1312
      %v1314 = vpop.f32.mrf.mxu0
      %1315 = vmatprep.mubr.f32.mxu0 0.0
      %1316 = vmatmul.mubr.f32.gmra.mxu0 %v1235
      %v1317 = vpop.f32.mrf.mxu0
      %v1318 = vadd.f32 0.0, %v1317
      %v1319 = vpop.f32.mrf.mxu0
      %1320 = vmatprep.mubr.f32.mxu0 0.0
      %1321 = vmatmul.mubr.f32.gmra.mxu0 %v1238
      %v1322 = vpop.f32.mrf.mxu0
      %v1323 = vadd.f32 0.0, %v1322
      %v1324 = vpop.f32.mrf.mxu0
      %1325 = vmatprep.mubr.f32.mxu0 0.0
      %1326 = vmatmul.mubr.f32.gmra.mxu0 %v1241
      %v1327 = vpop.f32.mrf.mxu0
      %v1328 = vadd.f32 0.0, %v1327
      %v1329 = vpop.f32.mrf.mxu0
      %1330 = vdwg.mxu0
      %v1331 = vadd.f32 %v1222, %v1313
      %v1332 = vadd.f32 %v1223, %v1318
      %v1333 = vadd.f32 %v1224, %v1323
      %v1334 = vadd.f32 %v1225, %v1328
      %s1335 = scalar_lea.vmem %s4, 256
      %v1336 = vld [vmem:[%s1335] sm:$0xff]
      %v1337 = vld [vmem:[%s1335 + $0x8] sm:$0xff]
      %v1338 = vld [vmem:[%s1335 + $0x10] sm:$0xff]
      %v1339 = vld [vmem:[%s1335 + $0x18] sm:$0xff]
      %1341 = vset.pattern.permute.xlu0 0
      %1342 = vperm.xlu0 %1341, %v1336
      %v1343 = vpop.permute.xlu0 %1342
      %1346 = vset.pattern.permute.xlu0 0
      %1347 = vperm.xlu0 %1346, %v1337
      %v1348 = vpop.permute.xlu0 %1347
      %1351 = vset.pattern.permute.xlu0 0
      %1352 = vperm.xlu0 %1351, %v1338
      %v1353 = vpop.permute.xlu0 %1352
      %1356 = vset.pattern.permute.xlu0 0
      %1357 = vperm.xlu0 %1356, %v1339
      %v1358 = vpop.permute.xlu0 %1357
      %v1361 = vlaneseq
      %v1362 = vshrl.u32 %v1361, 7
      %v1363 = vsub.s32 0, %v1362
      %v1364 = vrot.slane %v1027, %v1363
      %v1366 = vmul.f32 %v1343, %v1364
      %v1367 = vmul.f32 %v1348, %v1364
      %v1368 = vmul.f32 %v1353, %v1364
      %v1369 = vmul.f32 %v1358, %v1364
      %v1370 = vadd.f32 %v1331, %v1366
      %v1371 = vadd.f32 %v1332, %v1367
      %v1372 = vadd.f32 %v1333, %v1368
      %v1373 = vadd.f32 %v1334, %v1369
      %s1374 = scalar_lea.vmem %s4, 288
      %v1375 = vld [vmem:[%s1374] sm:$0xff]
      %v1376 = vld [vmem:[%s1374 + $0x8] sm:$0xff]
      %v1377 = vld [vmem:[%s1374 + $0x10] sm:$0xff]
      %v1378 = vld [vmem:[%s1374 + $0x18] sm:$0xff]
      %1380 = vset.pattern.permute.xlu0 0
      %1381 = vperm.xlu0 %1380, %v1375
      %v1382 = vpop.permute.xlu0 %1381
      %1385 = vset.pattern.permute.xlu0 0
      %1386 = vperm.xlu0 %1385, %v1376
      %v1387 = vpop.permute.xlu0 %1386
      %1390 = vset.pattern.permute.xlu0 0
      %1391 = vperm.xlu0 %1390, %v1377
      %v1392 = vpop.permute.xlu0 %1391
      %1395 = vset.pattern.permute.xlu0 0
      %1396 = vperm.xlu0 %1395, %v1378
      %v1397 = vpop.permute.xlu0 %1396
      %v1400 = vlaneseq
      %v1401 = vshrl.u32 %v1400, 7
      %v1402 = vsub.s32 0, %v1401
      %v1403 = vrot.slane %v637, %v1402
      %v1405 = vmul.f32 %v1382, %v1403
      %v1406 = vmul.f32 %v1387, %v1403
      %v1407 = vmul.f32 %v1392, %v1403
      %v1408 = vmul.f32 %v1397, %v1403
      %v1409 = vadd.f32 %v1370, %v1405
      %v1410 = vadd.f32 %v1371, %v1406
      %v1411 = vadd.f32 %v1372, %v1407
      %v1412 = vadd.f32 %v1373, %v1408
      %s1413 = scalar_lea.vmem %s3, 160
      %v1414 = vld [vmem:[%s1413] sm:$0xff]
      %v1415 = vld [vmem:[%s1413 + $0x8] sm:$0xff]
      %v1416 = vld [vmem:[%s1413 + $0x10] sm:$0xff]
      %v1417 = vld [vmem:[%s1413 + $0x18] sm:$0xff]
      %v1419 = vsel %vm451, %v1414, 0
      %v1422 = vsel %vm451, %v1415, 0
      %v1425 = vsel %vm451, %v1416, 0
      %v1428 = vsel %vm451, %v1417, 0
      %v1431 = vsel %vm464, %v391, 0
      %1433 = vmatprep.subr.mxu0 0.0
      %1434 = vmatpush1.msra.mxu0 0.0
      %1435 = vmatprep.subr.mxu0 0.0
      %1436 = vmatpush1.msra.mxu0 0.0
      %1437 = vmatprep.subr.mxu0 0.0
      %1438 = vmatpush1.msra.mxu0 0.0
      %1439 = vmatprep.subr.mxu0 0.0
      %1440 = vmatpush1.msra.mxu0 0.0
      %1441 = vmatprep.subr.mxu0 0.0
      %1442 = vmatpush1.msra.mxu0 0.0
      %1443 = vmatprep.subr.mxu0 0.0
      %1444 = vmatpush1.msra.mxu0 0.0
      %1445 = vmatprep.subr.mxu0 0.0
      %1446 = vmatpush1.msra.mxu0 0.0
      %1447 = vmatprep.subr.mxu0 0.0
      %1448 = vmatpush1.msra.mxu0 0.0
      %1449 = vmatprep.subr.mxu0 0.0
      %1450 = vmatpush1.msra.mxu0 0.0
      %1451 = vmatprep.subr.mxu0 0.0
      %1452 = vmatpush1.msra.mxu0 0.0
      %1453 = vmatprep.subr.mxu0 0.0
      %1454 = vmatpush1.msra.mxu0 0.0
      %1455 = vmatprep.subr.mxu0 0.0
      %1456 = vmatpush1.msra.mxu0 0.0
      %1457 = vmatprep.subr.mxu0 0.0
      %1458 = vmatpush1.msra.mxu0 0.0
      %1459 = vmatprep.subr.mxu0 0.0
      %1460 = vmatpush1.msra.mxu0 0.0
      %1461 = vmatprep.subr.mxu0 0.0
      %1462 = vmatpush1.msra.mxu0 0.0
      %1463 = vmatprep.subr.mxu0 0.0
      %1464 = vmatpush1.msra.mxu0 %v1431
      %1465 = vmatprep.subr.mxu0 0.0
      %1466 = vmatpush2.msra.mxu0 0.0
      %1467 = vmatprep.subr.mxu0 0.0
      %1468 = vmatpush2.msra.mxu0 0.0
      %1469 = vmatprep.subr.mxu0 0.0
      %1470 = vmatpush2.msra.mxu0 0.0
      %1471 = vmatprep.subr.mxu0 0.0
      %1472 = vmatpush2.msra.mxu0 0.0
      %1473 = vmatprep.subr.mxu0 0.0
      %1474 = vmatpush2.msra.mxu0 0.0
      %1475 = vmatprep.subr.mxu0 0.0
      %1476 = vmatpush2.msra.mxu0 0.0
      %1477 = vmatprep.subr.mxu0 0.0
      %1478 = vmatpush2.msra.mxu0 0.0
      %1479 = vmatprep.subr.mxu0 0.0
      %1480 = vmatpush2.msra.mxu0 0.0
      %1481 = vmatprep.subr.mxu0 0.0
      %1482 = vmatpush2.msra.mxu0 0.0
      %1483 = vmatprep.subr.mxu0 0.0
      %1484 = vmatpush2.msra.mxu0 0.0
      %1485 = vmatprep.subr.mxu0 0.0
      %1486 = vmatpush2.msra.mxu0 0.0
      %1487 = vmatprep.subr.mxu0 0.0
      %1488 = vmatpush2.msra.mxu0 0.0
      %1489 = vmatprep.subr.mxu0 0.0
      %1490 = vmatpush2.msra.mxu0 0.0
      %1491 = vmatprep.subr.mxu0 0.0
      %1492 = vmatpush2.msra.mxu0 0.0
      %1493 = vmatprep.subr.mxu0 0.0
      %1494 = vmatpush2.msra.mxu0 0.0
      %1495 = vmatprep.subr.mxu0 0.0
      %1496 = vmatpush2.msra.mxu0 0.0
      %1497 = vmatprep.mubr.f32.mxu0 0.0
      %1498 = vmatmul.mubr.f32.gmra.mxu0 %v1419
      %v1499 = vpop.f32.mrf.mxu0
      %v1500 = vadd.f32 0.0, %v1499
      %v1501 = vpop.f32.mrf.mxu0
      %1502 = vmatprep.mubr.f32.mxu0 0.0
      %1503 = vmatmul.mubr.f32.gmra.mxu0 %v1422
      %v1504 = vpop.f32.mrf.mxu0
      %v1505 = vadd.f32 0.0, %v1504
      %v1506 = vpop.f32.mrf.mxu0
      %1507 = vmatprep.mubr.f32.mxu0 0.0
      %1508 = vmatmul.mubr.f32.gmra.mxu0 %v1425
      %v1509 = vpop.f32.mrf.mxu0
      %v1510 = vadd.f32 0.0, %v1509
      %v1511 = vpop.f32.mrf.mxu0
      %1512 = vmatprep.mubr.f32.mxu0 0.0
      %1513 = vmatmul.mubr.f32.gmra.mxu0 %v1428
      %v1514 = vpop.f32.mrf.mxu0
      %v1515 = vadd.f32 0.0, %v1514
      %v1516 = vpop.f32.mrf.mxu0
      %1517 = vdwg.mxu0
      %v1518 = vadd.f32 %v1409, %v1500
      %v1519 = vadd.f32 %v1410, %v1505
      %v1520 = vadd.f32 %v1411, %v1510
      %v1521 = vadd.f32 %v1412, %v1515
      %s1522 = scalar_lea.vmem %s4, 320
      %v1523 = vld [vmem:[%s1522] sm:$0xff]
      %v1524 = vld [vmem:[%s1522 + $0x8] sm:$0xff]
      %v1525 = vld [vmem:[%s1522 + $0x10] sm:$0xff]
      %v1526 = vld [vmem:[%s1522 + $0x18] sm:$0xff]
      %1528 = vset.pattern.permute.xlu0 0
      %1529 = vperm.xlu0 %1528, %v1523
      %v1530 = vpop.permute.xlu0 %1529
      %1533 = vset.pattern.permute.xlu0 0
      %1534 = vperm.xlu0 %1533, %v1524
      %v1535 = vpop.permute.xlu0 %1534
      %1538 = vset.pattern.permute.xlu0 0
      %1539 = vperm.xlu0 %1538, %v1525
      %v1540 = vpop.permute.xlu0 %1539
      %1543 = vset.pattern.permute.xlu0 0
      %1544 = vperm.xlu0 %1543, %v1526
      %v1545 = vpop.permute.xlu0 %1544
      %v1547 = vmul.f32 %v1530, %v1364
      %v1548 = vmul.f32 %v1535, %v1364
      %v1549 = vmul.f32 %v1540, %v1364
      %v1550 = vmul.f32 %v1545, %v1364
      %v1551 = vadd.f32 %v1518, %v1547
      %v1552 = vadd.f32 %v1519, %v1548
      %v1553 = vadd.f32 %v1520, %v1549
      %v1554 = vadd.f32 %v1521, %v1550
      %s1555 = scalar_lea.vmem %s4, 352
      %v1556 = vld [vmem:[%s1555] sm:$0xff]
      %v1557 = vld [vmem:[%s1555 + $0x8] sm:$0xff]
      %v1558 = vld [vmem:[%s1555 + $0x10] sm:$0xff]
      %v1559 = vld [vmem:[%s1555 + $0x18] sm:$0xff]
      %1561 = vset.pattern.permute.xlu0 0
      %1562 = vperm.xlu0 %1561, %v1556
      %v1563 = vpop.permute.xlu0 %1562
      %1566 = vset.pattern.permute.xlu0 0
      %1567 = vperm.xlu0 %1566, %v1557
      %v1568 = vpop.permute.xlu0 %1567
      %1571 = vset.pattern.permute.xlu0 0
      %1572 = vperm.xlu0 %1571, %v1558
      %v1573 = vpop.permute.xlu0 %1572
      %1576 = vset.pattern.permute.xlu0 0
      %1577 = vperm.xlu0 %1576, %v1559
      %v1578 = vpop.permute.xlu0 %1577
      %v1581 = vlaneseq
      %v1582 = vshrl.u32 %v1581, 7
      %v1583 = vsub.s32 0, %v1582
      %v1584 = vrot.slane %v838, %v1583
      %v1586 = vmul.f32 %v1563, %v1584
      %v1587 = vmul.f32 %v1568, %v1584
      %v1588 = vmul.f32 %v1573, %v1584
      %v1589 = vmul.f32 %v1578, %v1584
      %v1590 = vadd.f32 %v1551, %v1586
      %v1591 = vadd.f32 %v1552, %v1587
      %v1592 = vadd.f32 %v1553, %v1588
      %v1593 = vadd.f32 %v1554, %v1589
      %v1594 = vadd.f32 %v428, 1.0
      %v1595 = vmul.f32 %v1594, 0.13333334
      %v1596 = vsub.f32 %v1595, 1.0
      %v1597 = vmul.f32 %v1596, %v1024
      %1598 = vrot.lane.b32.xlu0 %v395, 1
      %v1599 = vpop.permute.xlu0 %1598
      %v1600 = vmul.f32 %v1599, %v1036
      %s1601 = scalar_lea.vmem %s3, 192
      %v1602 = vld [vmem:[%s1601] sm:$0xff]
      %v1603 = vld [vmem:[%s1601 + $0x8] sm:$0xff]
      %v1604 = vld [vmem:[%s1601 + $0x10] sm:$0xff]
      %v1605 = vld [vmem:[%s1601 + $0x18] sm:$0xff]
      %v1607 = vsel %vm451, %v1602, 0
      %v1610 = vsel %vm451, %v1603, 0
      %v1613 = vsel %vm451, %v1604, 0
      %v1616 = vsel %vm451, %v1605, 0
      %v1619 = vsel %vm464, %v1600, 0
      %1621 = vmatprep.subr.mxu0 0.0
      %1622 = vmatpush1.msra.mxu0 0.0
      %1623 = vmatprep.subr.mxu0 0.0
      %1624 = vmatpush1.msra.mxu0 0.0
      %1625 = vmatprep.subr.mxu0 0.0
      %1626 = vmatpush1.msra.mxu0 0.0
      %1627 = vmatprep.subr.mxu0 0.0
      %1628 = vmatpush1.msra.mxu0 0.0
      %1629 = vmatprep.subr.mxu0 0.0
      %1630 = vmatpush1.msra.mxu0 0.0
      %1631 = vmatprep.subr.mxu0 0.0
      %1632 = vmatpush1.msra.mxu0 0.0
      %1633 = vmatprep.subr.mxu0 0.0
      %1634 = vmatpush1.msra.mxu0 0.0
      %1635 = vmatprep.subr.mxu0 0.0
      %1636 = vmatpush1.msra.mxu0 0.0
      %1637 = vmatprep.subr.mxu0 0.0
      %1638 = vmatpush1.msra.mxu0 0.0
      %1639 = vmatprep.subr.mxu0 0.0
      %1640 = vmatpush1.msra.mxu0 0.0
      %1641 = vmatprep.subr.mxu0 0.0
      %1642 = vmatpush1.msra.mxu0 0.0
      %1643 = vmatprep.subr.mxu0 0.0
      %1644 = vmatpush1.msra.mxu0 0.0
      %1645 = vmatprep.subr.mxu0 0.0
      %1646 = vmatpush1.msra.mxu0 0.0
      %1647 = vmatprep.subr.mxu0 0.0
      %1648 = vmatpush1.msra.mxu0 0.0
      %1649 = vmatprep.subr.mxu0 0.0
      %1650 = vmatpush1.msra.mxu0 0.0
      %1651 = vmatprep.subr.mxu0 0.0
      %1652 = vmatpush1.msra.mxu0 %v1619
      %1653 = vmatprep.subr.mxu0 0.0
      %1654 = vmatpush2.msra.mxu0 0.0
      %1655 = vmatprep.subr.mxu0 0.0
      %1656 = vmatpush2.msra.mxu0 0.0
      %1657 = vmatprep.subr.mxu0 0.0
      %1658 = vmatpush2.msra.mxu0 0.0
      %1659 = vmatprep.subr.mxu0 0.0
      %1660 = vmatpush2.msra.mxu0 0.0
      %1661 = vmatprep.subr.mxu0 0.0
      %1662 = vmatpush2.msra.mxu0 0.0
      %1663 = vmatprep.subr.mxu0 0.0
      %1664 = vmatpush2.msra.mxu0 0.0
      %1665 = vmatprep.subr.mxu0 0.0
      %1666 = vmatpush2.msra.mxu0 0.0
      %1667 = vmatprep.subr.mxu0 0.0
      %1668 = vmatpush2.msra.mxu0 0.0
      %1669 = vmatprep.subr.mxu0 0.0
      %1670 = vmatpush2.msra.mxu0 0.0
      %1671 = vmatprep.subr.mxu0 0.0
      %1672 = vmatpush2.msra.mxu0 0.0
      %1673 = vmatprep.subr.mxu0 0.0
      %1674 = vmatpush2.msra.mxu0 0.0
      %1675 = vmatprep.subr.mxu0 0.0
      %1676 = vmatpush2.msra.mxu0 0.0
      %1677 = vmatprep.subr.mxu0 0.0
      %1678 = vmatpush2.msra.mxu0 0.0
      %1679 = vmatprep.subr.mxu0 0.0
      %1680 = vmatpush2.msra.mxu0 0.0
      %1681 = vmatprep.subr.mxu0 0.0
      %1682 = vmatpush2.msra.mxu0 0.0
      %1683 = vmatprep.subr.mxu0 0.0
      %1684 = vmatpush2.msra.mxu0 0.0
      %1685 = vmatprep.mubr.f32.mxu0 0.0
      %1686 = vmatmul.mubr.f32.gmra.mxu0 %v1607
      %v1687 = vpop.f32.mrf.mxu0
      %v1688 = vadd.f32 0.0, %v1687
      %v1689 = vpop.f32.mrf.mxu0
      %1690 = vmatprep.mubr.f32.mxu0 0.0
      %1691 = vmatmul.mubr.f32.gmra.mxu0 %v1610
      %v1692 = vpop.f32.mrf.mxu0
      %v1693 = vadd.f32 0.0, %v1692
      %v1694 = vpop.f32.mrf.mxu0
      %1695 = vmatprep.mubr.f32.mxu0 0.0
      %1696 = vmatmul.mubr.f32.gmra.mxu0 %v1613
      %v1697 = vpop.f32.mrf.mxu0
      %v1698 = vadd.f32 0.0, %v1697
      %v1699 = vpop.f32.mrf.mxu0
      %1700 = vmatprep.mubr.f32.mxu0 0.0
      %1701 = vmatmul.mubr.f32.gmra.mxu0 %v1616
      %v1702 = vpop.f32.mrf.mxu0
      %v1703 = vadd.f32 0.0, %v1702
      %v1704 = vpop.f32.mrf.mxu0
      %1705 = vdwg.mxu0
      %v1706 = vadd.f32 %v1590, %v1688
      %v1707 = vadd.f32 %v1591, %v1693
      %v1708 = vadd.f32 %v1592, %v1698
      %v1709 = vadd.f32 %v1593, %v1703
      %s1710 = scalar_lea.vmem %s4, 384
      %v1711 = vld [vmem:[%s1710] sm:$0xff]
      %v1712 = vld [vmem:[%s1710 + $0x8] sm:$0xff]
      %v1713 = vld [vmem:[%s1710 + $0x10] sm:$0xff]
      %v1714 = vld [vmem:[%s1710 + $0x18] sm:$0xff]
      %1716 = vset.pattern.permute.xlu0 0
      %1717 = vperm.xlu0 %1716, %v1711
      %v1718 = vpop.permute.xlu0 %1717
      %1721 = vset.pattern.permute.xlu0 0
      %1722 = vperm.xlu0 %1721, %v1712
      %v1723 = vpop.permute.xlu0 %1722
      %1726 = vset.pattern.permute.xlu0 0
      %1727 = vperm.xlu0 %1726, %v1713
      %v1728 = vpop.permute.xlu0 %1727
      %1731 = vset.pattern.permute.xlu0 0
      %1732 = vperm.xlu0 %1731, %v1714
      %v1733 = vpop.permute.xlu0 %1732
      %v1736 = vlaneseq
      %v1737 = vshrl.u32 %v1736, 7
      %v1738 = vsub.s32 0, %v1737
      %v1739 = vrot.slane %v1597, %v1738
      %v1741 = vmul.f32 %v1718, %v1739
      %v1742 = vmul.f32 %v1723, %v1739
      %v1743 = vmul.f32 %v1728, %v1739
      %v1744 = vmul.f32 %v1733, %v1739
      %v1745 = vadd.f32 %v1706, %v1741
      %v1746 = vadd.f32 %v1707, %v1742
      %v1747 = vadd.f32 %v1708, %v1743
      %v1748 = vadd.f32 %v1709, %v1744
      %s1749 = scalar_lea.vmem %s4, 416
      %v1750 = vld [vmem:[%s1749] sm:$0xff]
      %v1751 = vld [vmem:[%s1749 + $0x8] sm:$0xff]
      %v1752 = vld [vmem:[%s1749 + $0x10] sm:$0xff]
      %v1753 = vld [vmem:[%s1749 + $0x18] sm:$0xff]
      %1755 = vset.pattern.permute.xlu0 0
      %1756 = vperm.xlu0 %1755, %v1750
      %v1757 = vpop.permute.xlu0 %1756
      %1760 = vset.pattern.permute.xlu0 0
      %1761 = vperm.xlu0 %1760, %v1751
      %v1762 = vpop.permute.xlu0 %1761
      %1765 = vset.pattern.permute.xlu0 0
      %1766 = vperm.xlu0 %1765, %v1752
      %v1767 = vpop.permute.xlu0 %1766
      %1770 = vset.pattern.permute.xlu0 0
      %1771 = vperm.xlu0 %1770, %v1753
      %v1772 = vpop.permute.xlu0 %1771
      %v1774 = vmul.f32 %v1757, %v1216
      %v1775 = vmul.f32 %v1762, %v1216
      %v1776 = vmul.f32 %v1767, %v1216
      %v1777 = vmul.f32 %v1772, %v1216
      %v1778 = vadd.f32 %v1745, %v1774
      %v1779 = vadd.f32 %v1746, %v1775
      %v1780 = vadd.f32 %v1747, %v1776
      %v1781 = vadd.f32 %v1748, %v1777
      %s1782 = scalar_lea.vmem %s3, 224
      %v1783 = vld [vmem:[%s1782] sm:$0xff]
      %v1784 = vld [vmem:[%s1782 + $0x8] sm:$0xff]
      %v1785 = vld [vmem:[%s1782 + $0x10] sm:$0xff]
      %v1786 = vld [vmem:[%s1782 + $0x18] sm:$0xff]
      %v1788 = vsel %vm451, %v1783, 0
      %v1791 = vsel %vm451, %v1784, 0
      %v1794 = vsel %vm451, %v1785, 0
      %v1797 = vsel %vm451, %v1786, 0
      %v1800 = vsel %vm464, %v393, 0
      %1802 = vmatprep.subr.mxu0 0.0
      %1803 = vmatpush1.msra.mxu0 0.0
      %1804 = vmatprep.subr.mxu0 0.0
      %1805 = vmatpush1.msra.mxu0 0.0
      %1806 = vmatprep.subr.mxu0 0.0
      %1807 = vmatpush1.msra.mxu0 0.0
      %1808 = vmatprep.subr.mxu0 0.0
      %1809 = vmatpush1.msra.mxu0 0.0
      %1810 = vmatprep.subr.mxu0 0.0
      %1811 = vmatpush1.msra.mxu0 0.0
      %1812 = vmatprep.subr.mxu0 0.0
      %1813 = vmatpush1.msra.mxu0 0.0
      %1814 = vmatprep.subr.mxu0 0.0
      %1815 = vmatpush1.msra.mxu0 0.0
      %1816 = vmatprep.subr.mxu0 0.0
      %1817 = vmatpush1.msra.mxu0 0.0
      %1818 = vmatprep.subr.mxu0 0.0
      %1819 = vmatpush1.msra.mxu0 0.0
      %1820 = vmatprep.subr.mxu0 0.0
      %1821 = vmatpush1.msra.mxu0 0.0
      %1822 = vmatprep.subr.mxu0 0.0
      %1823 = vmatpush1.msra.mxu0 0.0
      %1824 = vmatprep.subr.mxu0 0.0
      %1825 = vmatpush1.msra.mxu0 0.0
      %1826 = vmatprep.subr.mxu0 0.0
      %1827 = vmatpush1.msra.mxu0 0.0
      %1828 = vmatprep.subr.mxu0 0.0
      %1829 = vmatpush1.msra.mxu0 0.0
      %1830 = vmatprep.subr.mxu0 0.0
      %1831 = vmatpush1.msra.mxu0 0.0
      %1832 = vmatprep.subr.mxu0 0.0
      %1833 = vmatpush1.msra.mxu0 %v1800
      %1834 = vmatprep.subr.mxu0 0.0
      %1835 = vmatpush2.msra.mxu0 0.0
      %1836 = vmatprep.subr.mxu0 0.0
      %1837 = vmatpush2.msra.mxu0 0.0
      %1838 = vmatprep.subr.mxu0 0.0
      %1839 = vmatpush2.msra.mxu0 0.0
      %1840 = vmatprep.subr.mxu0 0.0
      %1841 = vmatpush2.msra.mxu0 0.0
      %1842 = vmatprep.subr.mxu0 0.0
      %1843 = vmatpush2.msra.mxu0 0.0
      %1844 = vmatprep.subr.mxu0 0.0
      %1845 = vmatpush2.msra.mxu0 0.0
      %1846 = vmatprep.subr.mxu0 0.0
      %1847 = vmatpush2.msra.mxu0 0.0
      %1848 = vmatprep.subr.mxu0 0.0
      %1849 = vmatpush2.msra.mxu0 0.0
      %1850 = vmatprep.subr.mxu0 0.0
      %1851 = vmatpush2.msra.mxu0 0.0
      %1852 = vmatprep.subr.mxu0 0.0
      %1853 = vmatpush2.msra.mxu0 0.0
      %1854 = vmatprep.subr.mxu0 0.0
      %1855 = vmatpush2.msra.mxu0 0.0
      %1856 = vmatprep.subr.mxu0 0.0
      %1857 = vmatpush2.msra.mxu0 0.0
      %1858 = vmatprep.subr.mxu0 0.0
      %1859 = vmatpush2.msra.mxu0 0.0
      %1860 = vmatprep.subr.mxu0 0.0
      %1861 = vmatpush2.msra.mxu0 0.0
      %1862 = vmatprep.subr.mxu0 0.0
      %1863 = vmatpush2.msra.mxu0 0.0
      %1864 = vmatprep.subr.mxu0 0.0
      %1865 = vmatpush2.msra.mxu0 0.0
      %1866 = vmatprep.mubr.f32.mxu0 0.0
      %1867 = vmatmul.mubr.f32.gmra.mxu0 %v1788
      %v1868 = vpop.f32.mrf.mxu0
      %v1869 = vadd.f32 0.0, %v1868
      %v1870 = vpop.f32.mrf.mxu0
      %1871 = vmatprep.mubr.f32.mxu0 0.0
      %1872 = vmatmul.mubr.f32.gmra.mxu0 %v1791
      %v1873 = vpop.f32.mrf.mxu0
      %v1874 = vadd.f32 0.0, %v1873
      %v1875 = vpop.f32.mrf.mxu0
      %1876 = vmatprep.mubr.f32.mxu0 0.0
      %1877 = vmatmul.mubr.f32.gmra.mxu0 %v1794
      %v1878 = vpop.f32.mrf.mxu0
      %v1879 = vadd.f32 0.0, %v1878
      %v1880 = vpop.f32.mrf.mxu0
      %1881 = vmatprep.mubr.f32.mxu0 0.0
      %1882 = vmatmul.mubr.f32.gmra.mxu0 %v1797
      %v1883 = vpop.f32.mrf.mxu0
      %v1884 = vadd.f32 0.0, %v1883
      %v1885 = vpop.f32.mrf.mxu0
      %1886 = vdwg.mxu0
      %v1887 = vadd.f32 %v1778, %v1869
      %v1888 = vadd.f32 %v1779, %v1874
      %v1889 = vadd.f32 %v1780, %v1879
      %v1890 = vadd.f32 %v1781, %v1884
      %s1891 = scalar_lea.vmem %s4, 448
      %v1892 = vld [vmem:[%s1891] sm:$0xff]
      %v1893 = vld [vmem:[%s1891 + $0x8] sm:$0xff]
      %v1894 = vld [vmem:[%s1891 + $0x10] sm:$0xff]
      %v1895 = vld [vmem:[%s1891 + $0x18] sm:$0xff]
      %1897 = vset.pattern.permute.xlu0 0
      %1898 = vperm.xlu0 %1897, %v1892
      %v1899 = vpop.permute.xlu0 %1898
      %1902 = vset.pattern.permute.xlu0 0
      %1903 = vperm.xlu0 %1902, %v1893
      %v1904 = vpop.permute.xlu0 %1903
      %1907 = vset.pattern.permute.xlu0 0
      %1908 = vperm.xlu0 %1907, %v1894
      %v1909 = vpop.permute.xlu0 %1908
      %1912 = vset.pattern.permute.xlu0 0
      %1913 = vperm.xlu0 %1912, %v1895
      %v1914 = vpop.permute.xlu0 %1913
      %v1917 = vlaneseq
      %v1918 = vshrl.u32 %v1917, 7
      %v1919 = vsub.s32 0, %v1918
      %v1920 = vrot.slane %v1596, %v1919
      %v1922 = vmul.f32 %v1899, %v1920
      %v1923 = vmul.f32 %v1904, %v1920
      %v1924 = vmul.f32 %v1909, %v1920
      %v1925 = vmul.f32 %v1914, %v1920
      %v1926 = vadd.f32 %v1887, %v1922
      %v1927 = vadd.f32 %v1888, %v1923
      %v1928 = vadd.f32 %v1889, %v1924
      %v1929 = vadd.f32 %v1890, %v1925
      %s1930 = scalar_lea.vmem %s4, 480
      %v1931 = vld [vmem:[%s1930] sm:$0xff]
      %v1932 = vld [vmem:[%s1930 + $0x8] sm:$0xff]
      %v1933 = vld [vmem:[%s1930 + $0x10] sm:$0xff]
      %v1934 = vld [vmem:[%s1930 + $0x18] sm:$0xff]
      %1936 = vset.pattern.permute.xlu0 0
      %1937 = vperm.xlu0 %1936, %v1931
      %v1938 = vpop.permute.xlu0 %1937
      %1941 = vset.pattern.permute.xlu0 0
      %1942 = vperm.xlu0 %1941, %v1932
      %v1943 = vpop.permute.xlu0 %1942
      %1946 = vset.pattern.permute.xlu0 0
      %1947 = vperm.xlu0 %1946, %v1933
      %v1948 = vpop.permute.xlu0 %1947
      %1951 = vset.pattern.permute.xlu0 0
      %1952 = vperm.xlu0 %1951, %v1934
      %v1953 = vpop.permute.xlu0 %1952
      %v1955 = vmul.f32 %v1938, %v1403
      %v1956 = vmul.f32 %v1943, %v1403
      %v1957 = vmul.f32 %v1948, %v1403
      %v1958 = vmul.f32 %v1953, %v1403
      %v1959 = vadd.f32 %v1926, %v1955
      %v1960 = vadd.f32 %v1927, %v1956
      %v1961 = vadd.f32 %v1928, %v1957
      %v1962 = vadd.f32 %v1929, %v1958
      %s1963 = scalar_lea.vmem %s3, 256
      %v1964 = vld [vmem:[%s1963] sm:$0xff]
      %v1965 = vld [vmem:[%s1963 + $0x8] sm:$0xff]
      %v1966 = vld [vmem:[%s1963 + $0x10] sm:$0xff]
      %v1967 = vld [vmem:[%s1963 + $0x18] sm:$0xff]
      %v1969 = vsel %vm451, %v1964, 0
      %v1972 = vsel %vm451, %v1965, 0
      %v1975 = vsel %vm451, %v1966, 0
      %v1978 = vsel %vm451, %v1967, 0
      %v1981 = vsel %vm464, %v395, 0
      %1983 = vmatprep.subr.mxu0 0.0
      %1984 = vmatpush1.msra.mxu0 0.0
      %1985 = vmatprep.subr.mxu0 0.0
      %1986 = vmatpush1.msra.mxu0 0.0
      %1987 = vmatprep.subr.mxu0 0.0
      %1988 = vmatpush1.msra.mxu0 0.0
      %1989 = vmatprep.subr.mxu0 0.0
      %1990 = vmatpush1.msra.mxu0 0.0
      %1991 = vmatprep.subr.mxu0 0.0
      %1992 = vmatpush1.msra.mxu0 0.0
      %1993 = vmatprep.subr.mxu0 0.0
      %1994 = vmatpush1.msra.mxu0 0.0
      %1995 = vmatprep.subr.mxu0 0.0
      %1996 = vmatpush1.msra.mxu0 0.0
      %1997 = vmatprep.subr.mxu0 0.0
      %1998 = vmatpush1.msra.mxu0 0.0
      %1999 = vmatprep.subr.mxu0 0.0
      %2000 = vmatpush1.msra.mxu0 0.0
      %2001 = vmatprep.subr.mxu0 0.0
      %2002 = vmatpush1.msra.mxu0 0.0
      %2003 = vmatprep.subr.mxu0 0.0
      %2004 = vmatpush1.msra.mxu0 0.0
      %2005 = vmatprep.subr.mxu0 0.0
      %2006 = vmatpush1.msra.mxu0 0.0
      %2007 = vmatprep.subr.mxu0 0.0
      %2008 = vmatpush1.msra.mxu0 0.0
      %2009 = vmatprep.subr.mxu0 0.0
      %2010 = vmatpush1.msra.mxu0 0.0
      %2011 = vmatprep.subr.mxu0 0.0
      %2012 = vmatpush1.msra.mxu0 0.0
      %2013 = vmatprep.subr.mxu0 0.0
      %2014 = vmatpush1.msra.mxu0 %v1981
      %2015 = vmatprep.subr.mxu0 0.0
      %2016 = vmatpush2.msra.mxu0 0.0
      %2017 = vmatprep.subr.mxu0 0.0
      %2018 = vmatpush2.msra.mxu0 0.0
      %2019 = vmatprep.subr.mxu0 0.0
      %2020 = vmatpush2.msra.mxu0 0.0
      %2021 = vmatprep.subr.mxu0 0.0
      %2022 = vmatpush2.msra.mxu0 0.0
      %2023 = vmatprep.subr.mxu0 0.0
      %2024 = vmatpush2.msra.mxu0 0.0
      %2025 = vmatprep.subr.mxu0 0.0
      %2026 = vmatpush2.msra.mxu0 0.0
      %2027 = vmatprep.subr.mxu0 0.0
      %2028 = vmatpush2.msra.mxu0 0.0
      %2029 = vmatprep.subr.mxu0 0.0
      %2030 = vmatpush2.msra.mxu0 0.0
      %2031 = vmatprep.subr.mxu0 0.0
      %2032 = vmatpush2.msra.mxu0 0.0
      %2033 = vmatprep.subr.mxu0 0.0
      %2034 = vmatpush2.msra.mxu0 0.0
      %2035 = vmatprep.subr.mxu0 0.0
      %2036 = vmatpush2.msra.mxu0 0.0
      %2037 = vmatprep.subr.mxu0 0.0
      %2038 = vmatpush2.msra.mxu0 0.0
      %2039 = vmatprep.subr.mxu0 0.0
      %2040 = vmatpush2.msra.mxu0 0.0
      %2041 = vmatprep.subr.mxu0 0.0
      %2042 = vmatpush2.msra.mxu0 0.0
      %2043 = vmatprep.subr.mxu0 0.0
      %2044 = vmatpush2.msra.mxu0 0.0
      %2045 = vmatprep.subr.mxu0 0.0
      %2046 = vmatpush2.msra.mxu0 0.0
      %2047 = vmatprep.mubr.f32.mxu0 0.0
      %2048 = vmatmul.mubr.f32.gmra.mxu0 %v1969
      %v2049 = vpop.f32.mrf.mxu0
      %v2050 = vadd.f32 0.0, %v2049
      %v2051 = vpop.f32.mrf.mxu0
      %2052 = vmatprep.mubr.f32.mxu0 0.0
      %2053 = vmatmul.mubr.f32.gmra.mxu0 %v1972
      %v2054 = vpop.f32.mrf.mxu0
      %v2055 = vadd.f32 0.0, %v2054
      %v2056 = vpop.f32.mrf.mxu0
      %2057 = vmatprep.mubr.f32.mxu0 0.0
      %2058 = vmatmul.mubr.f32.gmra.mxu0 %v1975
      %v2059 = vpop.f32.mrf.mxu0
      %v2060 = vadd.f32 0.0, %v2059
      %v2061 = vpop.f32.mrf.mxu0
      %2062 = vmatprep.mubr.f32.mxu0 0.0
      %2063 = vmatmul.mubr.f32.gmra.mxu0 %v1978
      %v2064 = vpop.f32.mrf.mxu0
      %v2065 = vadd.f32 0.0, %v2064
      %v2066 = vpop.f32.mrf.mxu0
      %2067 = vdwg.mxu0
      %v2068 = vadd.f32 %v1959, %v2050
      %v2069 = vadd.f32 %v1960, %v2055
      %v2070 = vadd.f32 %v1961, %v2060
      %v2071 = vadd.f32 %v1962, %v2065
      %s2072 = scalar_lea.vmem %s4, 512
      %v2073 = vld [vmem:[%s2072] sm:$0xff]
      %v2074 = vld [vmem:[%s2072 + $0x8] sm:$0xff]
      %v2075 = vld [vmem:[%s2072 + $0x10] sm:$0xff]
      %v2076 = vld [vmem:[%s2072 + $0x18] sm:$0xff]
      %2078 = vset.pattern.permute.xlu0 0
      %2079 = vperm.xlu0 %2078, %v2073
      %v2080 = vpop.permute.xlu0 %2079
      %2083 = vset.pattern.permute.xlu0 0
      %2084 = vperm.xlu0 %2083, %v2074
      %v2085 = vpop.permute.xlu0 %2084
      %2088 = vset.pattern.permute.xlu0 0
      %2089 = vperm.xlu0 %2088, %v2075
      %v2090 = vpop.permute.xlu0 %2089
      %2093 = vset.pattern.permute.xlu0 0
      %2094 = vperm.xlu0 %2093, %v2076
      %v2095 = vpop.permute.xlu0 %2094
      %v2097 = vmul.f32 %v2080, %v1920
      %v2098 = vmul.f32 %v2085, %v1920
      %v2099 = vmul.f32 %v2090, %v1920
      %v2100 = vmul.f32 %v2095, %v1920
      %v2101 = vadd.f32 %v2068, %v2097
      %v2102 = vadd.f32 %v2069, %v2098
      %v2103 = vadd.f32 %v2070, %v2099
      %v2104 = vadd.f32 %v2071, %v2100
      %s2105 = scalar_lea.vmem %s4, 544
      %v2106 = vld [vmem:[%s2105] sm:$0xff]
      %v2107 = vld [vmem:[%s2105 + $0x8] sm:$0xff]
      %v2108 = vld [vmem:[%s2105 + $0x10] sm:$0xff]
      %v2109 = vld [vmem:[%s2105 + $0x18] sm:$0xff]
      %2111 = vset.pattern.permute.xlu0 0
      %2112 = vperm.xlu0 %2111, %v2106
      %v2113 = vpop.permute.xlu0 %2112
      %2116 = vset.pattern.permute.xlu0 0
      %2117 = vperm.xlu0 %2116, %v2107
      %v2118 = vpop.permute.xlu0 %2117
      %2121 = vset.pattern.permute.xlu0 0
      %2122 = vperm.xlu0 %2121, %v2108
      %v2123 = vpop.permute.xlu0 %2122
      %2126 = vset.pattern.permute.xlu0 0
      %2127 = vperm.xlu0 %2126, %v2109
      %v2128 = vpop.permute.xlu0 %2127
      %v2130 = vmul.f32 %v2113, %v1584
      %v2131 = vmul.f32 %v2118, %v1584
      %v2132 = vmul.f32 %v2123, %v1584
      %v2133 = vmul.f32 %v2128, %v1584
      %v2134 = vadd.f32 %v2101, %v2130
      %v2135 = vadd.f32 %v2102, %v2131
      %v2136 = vadd.f32 %v2103, %v2132
      %v2137 = vadd.f32 %v2104, %v2133
      %vm2138 = vcmp.gt.f32.partialorder %v2134, 0.0
      %vm2139 = vcmp.gt.f32.partialorder %v2135, 0.0
      %vm2140 = vcmp.gt.f32.partialorder %v2136, 0.0
      %vm2141 = vcmp.gt.f32.partialorder %v2137, 0.0
      %v2142 = vmul.f32 %v2134, 0.2
      %v2143 = vmul.f32 %v2135, 0.2
      %v2144 = vmul.f32 %v2136, 0.2
      %v2145 = vmul.f32 %v2137, 0.2
      %v2146 = vsel %vm2138, %v2134, %v2142
      %v2147 = vsel %vm2139, %v2135, %v2143
      %v2148 = vsel %vm2140, %v2136, %v2144
      %v2149 = vsel %vm2141, %v2137, %v2145
      %2150 = vmatprep.subr.mxu0 0.0
      %2151 = vmatpush1.msra.mxu0 0.0
      %2152 = vmatprep.subr.mxu0 0.0
      %2153 = vmatpush1.msra.mxu0 0.0
      %2154 = vmatprep.subr.mxu0 0.0
      %2155 = vmatpush1.msra.mxu0 0.0
      %2156 = vmatprep.subr.mxu0 0.0
      %2157 = vmatpush1.msra.mxu0 0.0
      %2158 = vmatprep.subr.mxu0 0.0
      %2159 = vmatpush1.msra.mxu0 0.0
      %2160 = vmatprep.subr.mxu0 0.0
      %2161 = vmatpush1.msra.mxu0 0.0
      %2162 = vmatprep.subr.mxu0 0.0
      %2163 = vmatpush1.msra.mxu0 0.0
      %2164 = vmatprep.subr.mxu0 0.0
      %2165 = vmatpush1.msra.mxu0 0.0
      %2166 = vmatprep.subr.mxu0 0.0
      %2167 = vmatpush1.msra.mxu0 0.0
      %2168 = vmatprep.subr.mxu0 0.0
      %2169 = vmatpush1.msra.mxu0 0.0
      %2170 = vmatprep.subr.mxu0 0.0
      %2171 = vmatpush1.msra.mxu0 0.0
      %2172 = vmatprep.subr.mxu0 0.0
      %2173 = vmatpush1.msra.mxu0 0.0
      %2174 = vmatprep.subr.mxu0 0.0
      %2175 = vmatpush1.msra.mxu0 0.0
      %2176 = vmatprep.subr.mxu0 0.0
      %2177 = vmatpush1.msra.mxu0 0.0
      %2178 = vmatprep.subr.mxu0 0.0
      %2179 = vmatpush1.msra.mxu0 0.0
      %2180 = vmatprep.subr.mxu0 0.0
      %2181 = vmatpush1.msra.mxu0 %v667
      %2182 = vmatprep.subr.mxu0 0.0
      %2183 = vmatpush2.msra.mxu0 0.0
      %2184 = vmatprep.subr.mxu0 0.0
      %2185 = vmatpush2.msra.mxu0 0.0
      %2186 = vmatprep.subr.mxu0 0.0
      %2187 = vmatpush2.msra.mxu0 0.0
      %2188 = vmatprep.subr.mxu0 0.0
      %2189 = vmatpush2.msra.mxu0 0.0
      %2190 = vmatprep.subr.mxu0 0.0
      %2191 = vmatpush2.msra.mxu0 0.0
      %2192 = vmatprep.subr.mxu0 0.0
      %2193 = vmatpush2.msra.mxu0 0.0
      %2194 = vmatprep.subr.mxu0 0.0
      %2195 = vmatpush2.msra.mxu0 0.0
      %2196 = vmatprep.subr.mxu0 0.0
      %2197 = vmatpush2.msra.mxu0 0.0
      %2198 = vmatprep.subr.mxu0 0.0
      %2199 = vmatpush2.msra.mxu0 0.0
      %2200 = vmatprep.subr.mxu0 0.0
      %2201 = vmatpush2.msra.mxu0 0.0
      %2202 = vmatprep.subr.mxu0 0.0
      %2203 = vmatpush2.msra.mxu0 0.0
      %2204 = vmatprep.subr.mxu0 0.0
      %2205 = vmatpush2.msra.mxu0 0.0
      %2206 = vmatprep.subr.mxu0 0.0
      %2207 = vmatpush2.msra.mxu0 0.0
      %2208 = vmatprep.subr.mxu0 0.0
      %2209 = vmatpush2.msra.mxu0 0.0
      %2210 = vmatprep.subr.mxu0 0.0
      %2211 = vmatpush2.msra.mxu0 0.0
      %2212 = vmatprep.subr.mxu0 0.0
      %2213 = vmatpush2.msra.mxu0 0.0
      %2214 = vmatprep.mubr.f32.mxu0 0.0
      %2215 = vmatmul.mubr.f32.gmra.mxu0 %v453
      %v2216 = vpop.f32.mrf.mxu0
      %v2217 = vadd.f32 0.0, %v2216
      %v2218 = vpop.f32.mrf.mxu0
      %2219 = vmatprep.mubr.f32.mxu0 0.0
      %2220 = vmatmul.mubr.f32.gmra.mxu0 %v456
      %v2221 = vpop.f32.mrf.mxu0
      %v2222 = vadd.f32 0.0, %v2221
      %v2223 = vpop.f32.mrf.mxu0
      %2224 = vmatprep.mubr.f32.mxu0 0.0
      %2225 = vmatmul.mubr.f32.gmra.mxu0 %v459
      %v2226 = vpop.f32.mrf.mxu0
      %v2227 = vadd.f32 0.0, %v2226
      %v2228 = vpop.f32.mrf.mxu0
      %2229 = vmatprep.mubr.f32.mxu0 0.0
      %2230 = vmatmul.mubr.f32.gmra.mxu0 %v462
      %v2231 = vpop.f32.mrf.mxu0
      %v2232 = vadd.f32 0.0, %v2231
      %v2233 = vpop.f32.mrf.mxu0
      %2234 = vdwg.mxu0
      %v2235 = vadd.f32 %v420, %v2217
      %v2236 = vadd.f32 %v421, %v2222
      %v2237 = vadd.f32 %v422, %v2227
      %v2238 = vadd.f32 %v423, %v2232
      %v2239 = vmul.f32 %v564, %v787
      %v2240 = vmul.f32 %v569, %v787
      %v2241 = vmul.f32 %v574, %v787
      %v2242 = vmul.f32 %v579, %v787
      %v2243 = vadd.f32 %v2235, %v2239
      %v2244 = vadd.f32 %v2236, %v2240
      %v2245 = vadd.f32 %v2237, %v2241
      %v2246 = vadd.f32 %v2238, %v2242
      %v2247 = vmul.f32 %v603, %v826
      %v2248 = vmul.f32 %v608, %v826
      %v2249 = vmul.f32 %v613, %v826
      %v2250 = vmul.f32 %v618, %v826
      %v2251 = vadd.f32 %v2243, %v2247
      %v2252 = vadd.f32 %v2244, %v2248
      %v2253 = vadd.f32 %v2245, %v2249
      %v2254 = vadd.f32 %v2246, %v2250
      %2255 = vmatprep.subr.mxu0 0.0
      %2256 = vmatpush1.msra.mxu0 0.0
      %2257 = vmatprep.subr.mxu0 0.0
      %2258 = vmatpush1.msra.mxu0 0.0
      %2259 = vmatprep.subr.mxu0 0.0
      %2260 = vmatpush1.msra.mxu0 0.0
      %2261 = vmatprep.subr.mxu0 0.0
      %2262 = vmatpush1.msra.mxu0 0.0
      %2263 = vmatprep.subr.mxu0 0.0
      %2264 = vmatpush1.msra.mxu0 0.0
      %2265 = vmatprep.subr.mxu0 0.0
      %2266 = vmatpush1.msra.mxu0 0.0
      %2267 = vmatprep.subr.mxu0 0.0
      %2268 = vmatpush1.msra.mxu0 0.0
      %2269 = vmatprep.subr.mxu0 0.0
      %2270 = vmatpush1.msra.mxu0 0.0
      %2271 = vmatprep.subr.mxu0 0.0
      %2272 = vmatpush1.msra.mxu0 0.0
      %2273 = vmatprep.subr.mxu0 0.0
      %2274 = vmatpush1.msra.mxu0 0.0
      %2275 = vmatprep.subr.mxu0 0.0
      %2276 = vmatpush1.msra.mxu0 0.0
      %2277 = vmatprep.subr.mxu0 0.0
      %2278 = vmatpush1.msra.mxu0 0.0
      %2279 = vmatprep.subr.mxu0 0.0
      %2280 = vmatpush1.msra.mxu0 0.0
      %2281 = vmatprep.subr.mxu0 0.0
      %2282 = vmatpush1.msra.mxu0 0.0
      %2283 = vmatprep.subr.mxu0 0.0
      %2284 = vmatpush1.msra.mxu0 0.0
      %2285 = vmatprep.subr.mxu0 0.0
      %2286 = vmatpush1.msra.mxu0 %v861
      %2287 = vmatprep.subr.mxu0 0.0
      %2288 = vmatpush2.msra.mxu0 0.0
      %2289 = vmatprep.subr.mxu0 0.0
      %2290 = vmatpush2.msra.mxu0 0.0
      %2291 = vmatprep.subr.mxu0 0.0
      %2292 = vmatpush2.msra.mxu0 0.0
      %2293 = vmatprep.subr.mxu0 0.0
      %2294 = vmatpush2.msra.mxu0 0.0
      %2295 = vmatprep.subr.mxu0 0.0
      %2296 = vmatpush2.msra.mxu0 0.0
      %2297 = vmatprep.subr.mxu0 0.0
      %2298 = vmatpush2.msra.mxu0 0.0
      %2299 = vmatprep.subr.mxu0 0.0
      %2300 = vmatpush2.msra.mxu0 0.0
      %2301 = vmatprep.subr.mxu0 0.0
      %2302 = vmatpush2.msra.mxu0 0.0
      %2303 = vmatprep.subr.mxu0 0.0
      %2304 = vmatpush2.msra.mxu0 0.0
      %2305 = vmatprep.subr.mxu0 0.0
      %2306 = vmatpush2.msra.mxu0 0.0
      %2307 = vmatprep.subr.mxu0 0.0
      %2308 = vmatpush2.msra.mxu0 0.0
      %2309 = vmatprep.subr.mxu0 0.0
      %2310 = vmatpush2.msra.mxu0 0.0
      %2311 = vmatprep.subr.mxu0 0.0
      %2312 = vmatpush2.msra.mxu0 0.0
      %2313 = vmatprep.subr.mxu0 0.0
      %2314 = vmatpush2.msra.mxu0 0.0
      %2315 = vmatprep.subr.mxu0 0.0
      %2316 = vmatpush2.msra.mxu0 0.0
      %2317 = vmatprep.subr.mxu0 0.0
      %2318 = vmatpush2.msra.mxu0 0.0
      %2319 = vmatprep.mubr.f32.mxu0 0.0
      %2320 = vmatmul.mubr.f32.gmra.mxu0 %v655
      %v2321 = vpop.f32.mrf.mxu0
      %v2322 = vadd.f32 0.0, %v2321
      %v2323 = vpop.f32.mrf.mxu0
      %2324 = vmatprep.mubr.f32.mxu0 0.0
      %2325 = vmatmul.mubr.f32.gmra.mxu0 %v658
      %v2326 = vpop.f32.mrf.mxu0
      %v2327 = vadd.f32 0.0, %v2326
      %v2328 = vpop.f32.mrf.mxu0
      %2329 = vmatprep.mubr.f32.mxu0 0.0
      %2330 = vmatmul.mubr.f32.gmra.mxu0 %v661
      %v2331 = vpop.f32.mrf.mxu0
      %v2332 = vadd.f32 0.0, %v2331
      %v2333 = vpop.f32.mrf.mxu0
      %2334 = vmatprep.mubr.f32.mxu0 0.0
      %2335 = vmatmul.mubr.f32.gmra.mxu0 %v664
      %v2336 = vpop.f32.mrf.mxu0
      %v2337 = vadd.f32 0.0, %v2336
      %v2338 = vpop.f32.mrf.mxu0
      %2339 = vdwg.mxu0
      %v2340 = vadd.f32 %v2251, %v2322
      %v2341 = vadd.f32 %v2252, %v2327
      %v2342 = vadd.f32 %v2253, %v2332
      %v2343 = vadd.f32 %v2254, %v2337
      %v2344 = vadd.f32 %v2340, %v789
      %v2345 = vadd.f32 %v2341, %v790
      %v2346 = vadd.f32 %v2342, %v791
      %v2347 = vadd.f32 %v2343, %v792
      %v2348 = vmul.f32 %v805, %v1014
      %v2349 = vmul.f32 %v810, %v1014
      %v2350 = vmul.f32 %v815, %v1014
      %v2351 = vmul.f32 %v820, %v1014
      %v2352 = vadd.f32 %v2344, %v2348
      %v2353 = vadd.f32 %v2345, %v2349
      %v2354 = vadd.f32 %v2346, %v2350
      %v2355 = vadd.f32 %v2347, %v2351
      %vm2356 = vcmp.le.f32.partialorder %v388, 6.0
      %vm2357 = vmand %vm424, %vm2356
      %v2358 = vsel %vm2357, 1.0, 0.0
      %v2359 = vadd.f32 %v432, 2.0
      %v2360 = vmul.f32 %v2359, 0.13333334
      %v2361 = vsub.f32 %v2360, 1.0
      %v2362 = vmul.f32 %v431, %v2358
      %v2363 = vmul.f32 %v2361, %v2358
      %2364 = vrot.lane.b32.xlu0 %v393, 7
      %v2365 = vpop.permute.xlu0 %2364
      %v2367 = vlaneseq
      %v2368 = vshrl.u32 %v2367, 7
      %v2369 = vsub.s32 0, %v2368
      %v2370 = vrot.slane %v2358, %v2369
      %v2372 = vmul.f32 %v2365, %v2370
      %v2374 = vsel %vm464, %v2372, 0
      %2376 = vmatprep.subr.mxu0 0.0
      %2377 = vmatpush1.msra.mxu0 0.0
      %2378 = vmatprep.subr.mxu0 0.0
      %2379 = vmatpush1.msra.mxu0 0.0
      %2380 = vmatprep.subr.mxu0 0.0
      %2381 = vmatpush1.msra.mxu0 0.0
      %2382 = vmatprep.subr.mxu0 0.0
      %2383 = vmatpush1.msra.mxu0 0.0
      %2384 = vmatprep.subr.mxu0 0.0
      %2385 = vmatpush1.msra.mxu0 0.0
      %2386 = vmatprep.subr.mxu0 0.0
      %2387 = vmatpush1.msra.mxu0 0.0
      %2388 = vmatprep.subr.mxu0 0.0
      %2389 = vmatpush1.msra.mxu0 0.0
      %2390 = vmatprep.subr.mxu0 0.0
      %2391 = vmatpush1.msra.mxu0 0.0
      %2392 = vmatprep.subr.mxu0 0.0
      %2393 = vmatpush1.msra.mxu0 0.0
      %2394 = vmatprep.subr.mxu0 0.0
      %2395 = vmatpush1.msra.mxu0 0.0
      %2396 = vmatprep.subr.mxu0 0.0
      %2397 = vmatpush1.msra.mxu0 0.0
      %2398 = vmatprep.subr.mxu0 0.0
      %2399 = vmatpush1.msra.mxu0 0.0
      %2400 = vmatprep.subr.mxu0 0.0
      %2401 = vmatpush1.msra.mxu0 0.0
      %2402 = vmatprep.subr.mxu0 0.0
      %2403 = vmatpush1.msra.mxu0 0.0
      %2404 = vmatprep.subr.mxu0 0.0
      %2405 = vmatpush1.msra.mxu0 0.0
      %2406 = vmatprep.subr.mxu0 0.0
      %2407 = vmatpush1.msra.mxu0 %v2374
      %2408 = vmatprep.subr.mxu0 0.0
      %2409 = vmatpush2.msra.mxu0 0.0
      %2410 = vmatprep.subr.mxu0 0.0
      %2411 = vmatpush2.msra.mxu0 0.0
      %2412 = vmatprep.subr.mxu0 0.0
      %2413 = vmatpush2.msra.mxu0 0.0
      %2414 = vmatprep.subr.mxu0 0.0
      %2415 = vmatpush2.msra.mxu0 0.0
      %2416 = vmatprep.subr.mxu0 0.0
      %2417 = vmatpush2.msra.mxu0 0.0
      %2418 = vmatprep.subr.mxu0 0.0
      %2419 = vmatpush2.msra.mxu0 0.0
      %2420 = vmatprep.subr.mxu0 0.0
      %2421 = vmatpush2.msra.mxu0 0.0
      %2422 = vmatprep.subr.mxu0 0.0
      %2423 = vmatpush2.msra.mxu0 0.0
      %2424 = vmatprep.subr.mxu0 0.0
      %2425 = vmatpush2.msra.mxu0 0.0
      %2426 = vmatprep.subr.mxu0 0.0
      %2427 = vmatpush2.msra.mxu0 0.0
      %2428 = vmatprep.subr.mxu0 0.0
      %2429 = vmatpush2.msra.mxu0 0.0
      %2430 = vmatprep.subr.mxu0 0.0
      %2431 = vmatpush2.msra.mxu0 0.0
      %2432 = vmatprep.subr.mxu0 0.0
      %2433 = vmatpush2.msra.mxu0 0.0
      %2434 = vmatprep.subr.mxu0 0.0
      %2435 = vmatpush2.msra.mxu0 0.0
      %2436 = vmatprep.subr.mxu0 0.0
      %2437 = vmatpush2.msra.mxu0 0.0
      %2438 = vmatprep.subr.mxu0 0.0
      %2439 = vmatpush2.msra.mxu0 0.0
      %2440 = vmatprep.mubr.f32.mxu0 0.0
      %2441 = vmatmul.mubr.f32.gmra.mxu0 %v849
      %v2442 = vpop.f32.mrf.mxu0
      %v2443 = vadd.f32 0.0, %v2442
      %v2444 = vpop.f32.mrf.mxu0
      %2445 = vmatprep.mubr.f32.mxu0 0.0
      %2446 = vmatmul.mubr.f32.gmra.mxu0 %v852
      %v2447 = vpop.f32.mrf.mxu0
      %v2448 = vadd.f32 0.0, %v2447
      %v2449 = vpop.f32.mrf.mxu0
      %2450 = vmatprep.mubr.f32.mxu0 0.0
      %2451 = vmatmul.mubr.f32.gmra.mxu0 %v855
      %v2452 = vpop.f32.mrf.mxu0
      %v2453 = vadd.f32 0.0, %v2452
      %v2454 = vpop.f32.mrf.mxu0
      %2455 = vmatprep.mubr.f32.mxu0 0.0
      %2456 = vmatmul.mubr.f32.gmra.mxu0 %v858
      %v2457 = vpop.f32.mrf.mxu0
      %v2458 = vadd.f32 0.0, %v2457
      %v2459 = vpop.f32.mrf.mxu0
      %2460 = vdwg.mxu0
      %v2461 = vadd.f32 %v2352, %v2443
      %v2462 = vadd.f32 %v2353, %v2448
      %v2463 = vadd.f32 %v2354, %v2453
      %v2464 = vadd.f32 %v2355, %v2458
      %v2466 = vlaneseq
      %v2467 = vshrl.u32 %v2466, 7
      %v2468 = vsub.s32 0, %v2467
      %v2469 = vrot.slane %v2362, %v2468
      %v2471 = vmul.f32 %v960, %v2469
      %v2472 = vmul.f32 %v965, %v2469
      %v2473 = vmul.f32 %v970, %v2469
      %v2474 = vmul.f32 %v975, %v2469
      %v2475 = vadd.f32 %v2461, %v2471
      %v2476 = vadd.f32 %v2462, %v2472
      %v2477 = vadd.f32 %v2463, %v2473
      %v2478 = vadd.f32 %v2464, %v2474
      %v2480 = vlaneseq
      %v2481 = vshrl.u32 %v2480, 7
      %v2482 = vsub.s32 0, %v2481
      %v2483 = vrot.slane %v2363, %v2482
      %v2485 = vmul.f32 %v993, %v2483
      %v2486 = vmul.f32 %v998, %v2483
      %v2487 = vmul.f32 %v1003, %v2483
      %v2488 = vmul.f32 %v1008, %v2483
      %v2489 = vadd.f32 %v2475, %v2485
      %v2490 = vadd.f32 %v2476, %v2486
      %v2491 = vadd.f32 %v2477, %v2487
      %v2492 = vadd.f32 %v2478, %v2488
      %2493 = vmatprep.subr.mxu0 0.0
      %2494 = vmatpush1.msra.mxu0 0.0
      %2495 = vmatprep.subr.mxu0 0.0
      %2496 = vmatpush1.msra.mxu0 0.0
      %2497 = vmatprep.subr.mxu0 0.0
      %2498 = vmatpush1.msra.mxu0 0.0
      %2499 = vmatprep.subr.mxu0 0.0
      %2500 = vmatpush1.msra.mxu0 0.0
      %2501 = vmatprep.subr.mxu0 0.0
      %2502 = vmatpush1.msra.mxu0 0.0
      %2503 = vmatprep.subr.mxu0 0.0
      %2504 = vmatpush1.msra.mxu0 0.0
      %2505 = vmatprep.subr.mxu0 0.0
      %2506 = vmatpush1.msra.mxu0 0.0
      %2507 = vmatprep.subr.mxu0 0.0
      %2508 = vmatpush1.msra.mxu0 0.0
      %2509 = vmatprep.subr.mxu0 0.0
      %2510 = vmatpush1.msra.mxu0 0.0
      %2511 = vmatprep.subr.mxu0 0.0
      %2512 = vmatpush1.msra.mxu0 0.0
      %2513 = vmatprep.subr.mxu0 0.0
      %2514 = vmatpush1.msra.mxu0 0.0
      %2515 = vmatprep.subr.mxu0 0.0
      %2516 = vmatpush1.msra.mxu0 0.0
      %2517 = vmatprep.subr.mxu0 0.0
      %2518 = vmatpush1.msra.mxu0 0.0
      %2519 = vmatprep.subr.mxu0 0.0
      %2520 = vmatpush1.msra.mxu0 0.0
      %2521 = vmatprep.subr.mxu0 0.0
      %2522 = vmatpush1.msra.mxu0 0.0
      %2523 = vmatprep.subr.mxu0 0.0
      %2524 = vmatpush1.msra.mxu0 %v1244
      %2525 = vmatprep.subr.mxu0 0.0
      %2526 = vmatpush2.msra.mxu0 0.0
      %2527 = vmatprep.subr.mxu0 0.0
      %2528 = vmatpush2.msra.mxu0 0.0
      %2529 = vmatprep.subr.mxu0 0.0
      %2530 = vmatpush2.msra.mxu0 0.0
      %2531 = vmatprep.subr.mxu0 0.0
      %2532 = vmatpush2.msra.mxu0 0.0
      %2533 = vmatprep.subr.mxu0 0.0
      %2534 = vmatpush2.msra.mxu0 0.0
      %2535 = vmatprep.subr.mxu0 0.0
      %2536 = vmatpush2.msra.mxu0 0.0
      %2537 = vmatprep.subr.mxu0 0.0
      %2538 = vmatpush2.msra.mxu0 0.0
      %2539 = vmatprep.subr.mxu0 0.0
      %2540 = vmatpush2.msra.mxu0 0.0
      %2541 = vmatprep.subr.mxu0 0.0
      %2542 = vmatpush2.msra.mxu0 0.0
      %2543 = vmatprep.subr.mxu0 0.0
      %2544 = vmatpush2.msra.mxu0 0.0
      %2545 = vmatprep.subr.mxu0 0.0
      %2546 = vmatpush2.msra.mxu0 0.0
      %2547 = vmatprep.subr.mxu0 0.0
      %2548 = vmatpush2.msra.mxu0 0.0
      %2549 = vmatprep.subr.mxu0 0.0
      %2550 = vmatpush2.msra.mxu0 0.0
      %2551 = vmatprep.subr.mxu0 0.0
      %2552 = vmatpush2.msra.mxu0 0.0
      %2553 = vmatprep.subr.mxu0 0.0
      %2554 = vmatpush2.msra.mxu0 0.0
      %2555 = vmatprep.subr.mxu0 0.0
      %2556 = vmatpush2.msra.mxu0 0.0
      %2557 = vmatprep.mubr.f32.mxu0 0.0
      %2558 = vmatmul.mubr.f32.gmra.mxu0 %v1045
      %v2559 = vpop.f32.mrf.mxu0
      %v2560 = vadd.f32 0.0, %v2559
      %v2561 = vpop.f32.mrf.mxu0
      %2562 = vmatprep.mubr.f32.mxu0 0.0
      %2563 = vmatmul.mubr.f32.gmra.mxu0 %v1048
      %v2564 = vpop.f32.mrf.mxu0
      %v2565 = vadd.f32 0.0, %v2564
      %v2566 = vpop.f32.mrf.mxu0
      %2567 = vmatprep.mubr.f32.mxu0 0.0
      %2568 = vmatmul.mubr.f32.gmra.mxu0 %v1051
      %v2569 = vpop.f32.mrf.mxu0
      %v2570 = vadd.f32 0.0, %v2569
      %v2571 = vpop.f32.mrf.mxu0
      %2572 = vmatprep.mubr.f32.mxu0 0.0
      %2573 = vmatmul.mubr.f32.gmra.mxu0 %v1054
      %v2574 = vpop.f32.mrf.mxu0
      %v2575 = vadd.f32 0.0, %v2574
      %v2576 = vpop.f32.mrf.mxu0
      %2577 = vdwg.mxu0
      %v2578 = vadd.f32 %v2489, %v2560
      %v2579 = vadd.f32 %v2490, %v2565
      %v2580 = vadd.f32 %v2491, %v2570
      %v2581 = vadd.f32 %v2492, %v2575
      %v2582 = vmul.f32 %v1156, %v1364
      %v2583 = vmul.f32 %v1161, %v1364
      %v2584 = vmul.f32 %v1166, %v1364
      %v2585 = vmul.f32 %v1171, %v1364
      %v2586 = vadd.f32 %v2578, %v2582
      %v2587 = vadd.f32 %v2579, %v2583
      %v2588 = vadd.f32 %v2580, %v2584
      %v2589 = vadd.f32 %v2581, %v2585
      %v2590 = vmul.f32 %v1195, %v1403
      %v2591 = vmul.f32 %v1200, %v1403
      %v2592 = vmul.f32 %v1205, %v1403
      %v2593 = vmul.f32 %v1210, %v1403
      %v2594 = vadd.f32 %v2586, %v2590
      %v2595 = vadd.f32 %v2587, %v2591
      %v2596 = vadd.f32 %v2588, %v2592
      %v2597 = vadd.f32 %v2589, %v2593
      %2598 = vmatprep.subr.mxu0 0.0
      %2599 = vmatpush1.msra.mxu0 0.0
      %2600 = vmatprep.subr.mxu0 0.0
      %2601 = vmatpush1.msra.mxu0 0.0
      %2602 = vmatprep.subr.mxu0 0.0
      %2603 = vmatpush1.msra.mxu0 0.0
      %2604 = vmatprep.subr.mxu0 0.0
      %2605 = vmatpush1.msra.mxu0 0.0
      %2606 = vmatprep.subr.mxu0 0.0
      %2607 = vmatpush1.msra.mxu0 0.0
      %2608 = vmatprep.subr.mxu0 0.0
      %2609 = vmatpush1.msra.mxu0 0.0
      %2610 = vmatprep.subr.mxu0 0.0
      %2611 = vmatpush1.msra.mxu0 0.0
      %2612 = vmatprep.subr.mxu0 0.0
      %2613 = vmatpush1.msra.mxu0 0.0
      %2614 = vmatprep.subr.mxu0 0.0
      %2615 = vmatpush1.msra.mxu0 0.0
      %2616 = vmatprep.subr.mxu0 0.0
      %2617 = vmatpush1.msra.mxu0 0.0
      %2618 = vmatprep.subr.mxu0 0.0
      %2619 = vmatpush1.msra.mxu0 0.0
      %2620 = vmatprep.subr.mxu0 0.0
      %2621 = vmatpush1.msra.mxu0 0.0
      %2622 = vmatprep.subr.mxu0 0.0
      %2623 = vmatpush1.msra.mxu0 0.0
      %2624 = vmatprep.subr.mxu0 0.0
      %2625 = vmatpush1.msra.mxu0 0.0
      %2626 = vmatprep.subr.mxu0 0.0
      %2627 = vmatpush1.msra.mxu0 0.0
      %2628 = vmatprep.subr.mxu0 0.0
      %2629 = vmatpush1.msra.mxu0 %v1431
      %2630 = vmatprep.subr.mxu0 0.0
      %2631 = vmatpush2.msra.mxu0 0.0
      %2632 = vmatprep.subr.mxu0 0.0
      %2633 = vmatpush2.msra.mxu0 0.0
      %2634 = vmatprep.subr.mxu0 0.0
      %2635 = vmatpush2.msra.mxu0 0.0
      %2636 = vmatprep.subr.mxu0 0.0
      %2637 = vmatpush2.msra.mxu0 0.0
      %2638 = vmatprep.subr.mxu0 0.0
      %2639 = vmatpush2.msra.mxu0 0.0
      %2640 = vmatprep.subr.mxu0 0.0
      %2641 = vmatpush2.msra.mxu0 0.0
      %2642 = vmatprep.subr.mxu0 0.0
      %2643 = vmatpush2.msra.mxu0 0.0
      %2644 = vmatprep.subr.mxu0 0.0
      %2645 = vmatpush2.msra.mxu0 0.0
      %2646 = vmatprep.subr.mxu0 0.0
      %2647 = vmatpush2.msra.mxu0 0.0
      %2648 = vmatprep.subr.mxu0 0.0
      %2649 = vmatpush2.msra.mxu0 0.0
      %2650 = vmatprep.subr.mxu0 0.0
      %2651 = vmatpush2.msra.mxu0 0.0
      %2652 = vmatprep.subr.mxu0 0.0
      %2653 = vmatpush2.msra.mxu0 0.0
      %2654 = vmatprep.subr.mxu0 0.0
      %2655 = vmatpush2.msra.mxu0 0.0
      %2656 = vmatprep.subr.mxu0 0.0
      %2657 = vmatpush2.msra.mxu0 0.0
      %2658 = vmatprep.subr.mxu0 0.0
      %2659 = vmatpush2.msra.mxu0 0.0
      %2660 = vmatprep.subr.mxu0 0.0
      %2661 = vmatpush2.msra.mxu0 0.0
      %2662 = vmatprep.mubr.f32.mxu0 0.0
      %2663 = vmatmul.mubr.f32.gmra.mxu0 %v1232
      %v2664 = vpop.f32.mrf.mxu0
      %v2665 = vadd.f32 0.0, %v2664
      %v2666 = vpop.f32.mrf.mxu0
      %2667 = vmatprep.mubr.f32.mxu0 0.0
      %2668 = vmatmul.mubr.f32.gmra.mxu0 %v1235
      %v2669 = vpop.f32.mrf.mxu0
      %v2670 = vadd.f32 0.0, %v2669
      %v2671 = vpop.f32.mrf.mxu0
      %2672 = vmatprep.mubr.f32.mxu0 0.0
      %2673 = vmatmul.mubr.f32.gmra.mxu0 %v1238
      %v2674 = vpop.f32.mrf.mxu0
      %v2675 = vadd.f32 0.0, %v2674
      %v2676 = vpop.f32.mrf.mxu0
      %2677 = vmatprep.mubr.f32.mxu0 0.0
      %2678 = vmatmul.mubr.f32.gmra.mxu0 %v1241
      %v2679 = vpop.f32.mrf.mxu0
      %v2680 = vadd.f32 0.0, %v2679
      %v2681 = vpop.f32.mrf.mxu0
      %2682 = vdwg.mxu0
      %v2683 = vadd.f32 %v2594, %v2665
      %v2684 = vadd.f32 %v2595, %v2670
      %v2685 = vadd.f32 %v2596, %v2675
      %v2686 = vadd.f32 %v2597, %v2680
      %v2687 = vadd.f32 %v2683, %v1366
      %v2688 = vadd.f32 %v2684, %v1367
      %v2689 = vadd.f32 %v2685, %v1368
      %v2690 = vadd.f32 %v2686, %v1369
      %v2691 = vmul.f32 %v1382, %v1584
      %v2692 = vmul.f32 %v1387, %v1584
      %v2693 = vmul.f32 %v1392, %v1584
      %v2694 = vmul.f32 %v1397, %v1584
      %v2695 = vadd.f32 %v2687, %v2691
      %v2696 = vadd.f32 %v2688, %v2692
      %v2697 = vadd.f32 %v2689, %v2693
      %v2698 = vadd.f32 %v2690, %v2694
      %v2699 = vsel %vm2356, 1.0, 0.0
      %v2700 = vmul.f32 %v1027, %v2699
      %v2701 = vmul.f32 %v2361, %v2699
      %2702 = vrot.lane.b32.xlu0 %v389, 127
      %v2703 = vpop.permute.xlu0 %2702
      %v2705 = vlaneseq
      %v2706 = vshrl.u32 %v2705, 7
      %v2707 = vsub.s32 0, %v2706
      %v2708 = vrot.slane %v2699, %v2707
      %v2710 = vmul.f32 %v2703, %v2708
      %v2712 = vsel %vm464, %v2710, 0
      %2714 = vmatprep.subr.mxu0 0.0
      %2715 = vmatpush1.msra.mxu0 0.0
      %2716 = vmatprep.subr.mxu0 0.0
      %2717 = vmatpush1.msra.mxu0 0.0
      %2718 = vmatprep.subr.mxu0 0.0
      %2719 = vmatpush1.msra.mxu0 0.0
      %2720 = vmatprep.subr.mxu0 0.0
      %2721 = vmatpush1.msra.mxu0 0.0
      %2722 = vmatprep.subr.mxu0 0.0
      %2723 = vmatpush1.msra.mxu0 0.0
      %2724 = vmatprep.subr.mxu0 0.0
      %2725 = vmatpush1.msra.mxu0 0.0
      %2726 = vmatprep.subr.mxu0 0.0
      %2727 = vmatpush1.msra.mxu0 0.0
      %2728 = vmatprep.subr.mxu0 0.0
      %2729 = vmatpush1.msra.mxu0 0.0
      %2730 = vmatprep.subr.mxu0 0.0
      %2731 = vmatpush1.msra.mxu0 0.0
      %2732 = vmatprep.subr.mxu0 0.0
      %2733 = vmatpush1.msra.mxu0 0.0
      %2734 = vmatprep.subr.mxu0 0.0
      %2735 = vmatpush1.msra.mxu0 0.0
      %2736 = vmatprep.subr.mxu0 0.0
      %2737 = vmatpush1.msra.mxu0 0.0
      %2738 = vmatprep.subr.mxu0 0.0
      %2739 = vmatpush1.msra.mxu0 0.0
      %2740 = vmatprep.subr.mxu0 0.0
      %2741 = vmatpush1.msra.mxu0 0.0
      %2742 = vmatprep.subr.mxu0 0.0
      %2743 = vmatpush1.msra.mxu0 0.0
      %2744 = vmatprep.subr.mxu0 0.0
      %2745 = vmatpush1.msra.mxu0 %v2712
      %2746 = vmatprep.subr.mxu0 0.0
      %2747 = vmatpush2.msra.mxu0 0.0
      %2748 = vmatprep.subr.mxu0 0.0
      %2749 = vmatpush2.msra.mxu0 0.0
      %2750 = vmatprep.subr.mxu0 0.0
      %2751 = vmatpush2.msra.mxu0 0.0
      %2752 = vmatprep.subr.mxu0 0.0
      %2753 = vmatpush2.msra.mxu0 0.0
      %2754 = vmatprep.subr.mxu0 0.0
      %2755 = vmatpush2.msra.mxu0 0.0
      %2756 = vmatprep.subr.mxu0 0.0
      %2757 = vmatpush2.msra.mxu0 0.0
      %2758 = vmatprep.subr.mxu0 0.0
      %2759 = vmatpush2.msra.mxu0 0.0
      %2760 = vmatprep.subr.mxu0 0.0
      %2761 = vmatpush2.msra.mxu0 0.0
      %2762 = vmatprep.subr.mxu0 0.0
      %2763 = vmatpush2.msra.mxu0 0.0
      %2764 = vmatprep.subr.mxu0 0.0
      %2765 = vmatpush2.msra.mxu0 0.0
      %2766 = vmatprep.subr.mxu0 0.0
      %2767 = vmatpush2.msra.mxu0 0.0
      %2768 = vmatprep.subr.mxu0 0.0
      %2769 = vmatpush2.msra.mxu0 0.0
      %2770 = vmatprep.subr.mxu0 0.0
      %2771 = vmatpush2.msra.mxu0 0.0
      %2772 = vmatprep.subr.mxu0 0.0
      %2773 = vmatpush2.msra.mxu0 0.0
      %2774 = vmatprep.subr.mxu0 0.0
      %2775 = vmatpush2.msra.mxu0 0.0
      %2776 = vmatprep.subr.mxu0 0.0
      %2777 = vmatpush2.msra.mxu0 0.0
      %2778 = vmatprep.mubr.f32.mxu0 0.0
      %2779 = vmatmul.mubr.f32.gmra.mxu0 %v1419
      %v2780 = vpop.f32.mrf.mxu0
      %v2781 = vadd.f32 0.0, %v2780
      %v2782 = vpop.f32.mrf.mxu0
      %2783 = vmatprep.mubr.f32.mxu0 0.0
      %2784 = vmatmul.mubr.f32.gmra.mxu0 %v1422
      %v2785 = vpop.f32.mrf.mxu0
      %v2786 = vadd.f32 0.0, %v2785
      %v2787 = vpop.f32.mrf.mxu0
      %2788 = vmatprep.mubr.f32.mxu0 0.0
      %2789 = vmatmul.mubr.f32.gmra.mxu0 %v1425
      %v2790 = vpop.f32.mrf.mxu0
      %v2791 = vadd.f32 0.0, %v2790
      %v2792 = vpop.f32.mrf.mxu0
      %2793 = vmatprep.mubr.f32.mxu0 0.0
      %2794 = vmatmul.mubr.f32.gmra.mxu0 %v1428
      %v2795 = vpop.f32.mrf.mxu0
      %v2796 = vadd.f32 0.0, %v2795
      %v2797 = vpop.f32.mrf.mxu0
      %2798 = vdwg.mxu0
      %v2799 = vadd.f32 %v2695, %v2781
      %v2800 = vadd.f32 %v2696, %v2786
      %v2801 = vadd.f32 %v2697, %v2791
      %v2802 = vadd.f32 %v2698, %v2796
      %v2804 = vlaneseq
      %v2805 = vshrl.u32 %v2804, 7
      %v2806 = vsub.s32 0, %v2805
      %v2807 = vrot.slane %v2700, %v2806
      %v2809 = vmul.f32 %v1530, %v2807
      %v2810 = vmul.f32 %v1535, %v2807
      %v2811 = vmul.f32 %v1540, %v2807
      %v2812 = vmul.f32 %v1545, %v2807
      %v2813 = vadd.f32 %v2799, %v2809
      %v2814 = vadd.f32 %v2800, %v2810
      %v2815 = vadd.f32 %v2801, %v2811
      %v2816 = vadd.f32 %v2802, %v2812
      %v2818 = vlaneseq
      %v2819 = vshrl.u32 %v2818, 7
      %v2820 = vsub.s32 0, %v2819
      %v2821 = vrot.slane %v2701, %v2820
      %v2823 = vmul.f32 %v1563, %v2821
      %v2824 = vmul.f32 %v1568, %v2821
      %v2825 = vmul.f32 %v1573, %v2821
      %v2826 = vmul.f32 %v1578, %v2821
      %v2827 = vadd.f32 %v2813, %v2823
      %v2828 = vadd.f32 %v2814, %v2824
      %v2829 = vadd.f32 %v2815, %v2825
      %v2830 = vadd.f32 %v2816, %v2826
      %2831 = vmatprep.subr.mxu0 0.0
      %2832 = vmatpush1.msra.mxu0 0.0
      %2833 = vmatprep.subr.mxu0 0.0
      %2834 = vmatpush1.msra.mxu0 0.0
      %2835 = vmatprep.subr.mxu0 0.0
      %2836 = vmatpush1.msra.mxu0 0.0
      %2837 = vmatprep.subr.mxu0 0.0
      %2838 = vmatpush1.msra.mxu0 0.0
      %2839 = vmatprep.subr.mxu0 0.0
      %2840 = vmatpush1.msra.mxu0 0.0
      %2841 = vmatprep.subr.mxu0 0.0
      %2842 = vmatpush1.msra.mxu0 0.0
      %2843 = vmatprep.subr.mxu0 0.0
      %2844 = vmatpush1.msra.mxu0 0.0
      %2845 = vmatprep.subr.mxu0 0.0
      %2846 = vmatpush1.msra.mxu0 0.0
      %2847 = vmatprep.subr.mxu0 0.0
      %2848 = vmatpush1.msra.mxu0 0.0
      %2849 = vmatprep.subr.mxu0 0.0
      %2850 = vmatpush1.msra.mxu0 0.0
      %2851 = vmatprep.subr.mxu0 0.0
      %2852 = vmatpush1.msra.mxu0 0.0
      %2853 = vmatprep.subr.mxu0 0.0
      %2854 = vmatpush1.msra.mxu0 0.0
      %2855 = vmatprep.subr.mxu0 0.0
      %2856 = vmatpush1.msra.mxu0 0.0
      %2857 = vmatprep.subr.mxu0 0.0
      %2858 = vmatpush1.msra.mxu0 0.0
      %2859 = vmatprep.subr.mxu0 0.0
      %2860 = vmatpush1.msra.mxu0 0.0
      %2861 = vmatprep.subr.mxu0 0.0
      %2862 = vmatpush1.msra.mxu0 %v1800
      %2863 = vmatprep.subr.mxu0 0.0
      %2864 = vmatpush2.msra.mxu0 0.0
      %2865 = vmatprep.subr.mxu0 0.0
      %2866 = vmatpush2.msra.mxu0 0.0
      %2867 = vmatprep.subr.mxu0 0.0
      %2868 = vmatpush2.msra.mxu0 0.0
      %2869 = vmatprep.subr.mxu0 0.0
      %2870 = vmatpush2.msra.mxu0 0.0
      %2871 = vmatprep.subr.mxu0 0.0
      %2872 = vmatpush2.msra.mxu0 0.0
      %2873 = vmatprep.subr.mxu0 0.0
      %2874 = vmatpush2.msra.mxu0 0.0
      %2875 = vmatprep.subr.mxu0 0.0
      %2876 = vmatpush2.msra.mxu0 0.0
      %2877 = vmatprep.subr.mxu0 0.0
      %2878 = vmatpush2.msra.mxu0 0.0
      %2879 = vmatprep.subr.mxu0 0.0
      %2880 = vmatpush2.msra.mxu0 0.0
      %2881 = vmatprep.subr.mxu0 0.0
      %2882 = vmatpush2.msra.mxu0 0.0
      %2883 = vmatprep.subr.mxu0 0.0
      %2884 = vmatpush2.msra.mxu0 0.0
      %2885 = vmatprep.subr.mxu0 0.0
      %2886 = vmatpush2.msra.mxu0 0.0
      %2887 = vmatprep.subr.mxu0 0.0
      %2888 = vmatpush2.msra.mxu0 0.0
      %2889 = vmatprep.subr.mxu0 0.0
      %2890 = vmatpush2.msra.mxu0 0.0
      %2891 = vmatprep.subr.mxu0 0.0
      %2892 = vmatpush2.msra.mxu0 0.0
      %2893 = vmatprep.subr.mxu0 0.0
      %2894 = vmatpush2.msra.mxu0 0.0
      %2895 = vmatprep.mubr.f32.mxu0 0.0
      %2896 = vmatmul.mubr.f32.gmra.mxu0 %v1607
      %v2897 = vpop.f32.mrf.mxu0
      %v2898 = vadd.f32 0.0, %v2897
      %v2899 = vpop.f32.mrf.mxu0
      %2900 = vmatprep.mubr.f32.mxu0 0.0
      %2901 = vmatmul.mubr.f32.gmra.mxu0 %v1610
      %v2902 = vpop.f32.mrf.mxu0
      %v2903 = vadd.f32 0.0, %v2902
      %v2904 = vpop.f32.mrf.mxu0
      %2905 = vmatprep.mubr.f32.mxu0 0.0
      %2906 = vmatmul.mubr.f32.gmra.mxu0 %v1613
      %v2907 = vpop.f32.mrf.mxu0
      %v2908 = vadd.f32 0.0, %v2907
      %v2909 = vpop.f32.mrf.mxu0
      %2910 = vmatprep.mubr.f32.mxu0 0.0
      %2911 = vmatmul.mubr.f32.gmra.mxu0 %v1616
      %v2912 = vpop.f32.mrf.mxu0
      %v2913 = vadd.f32 0.0, %v2912
      %v2914 = vpop.f32.mrf.mxu0
      %2915 = vdwg.mxu0
      %v2916 = vadd.f32 %v2827, %v2898
      %v2917 = vadd.f32 %v2828, %v2903
      %v2918 = vadd.f32 %v2829, %v2908
      %v2919 = vadd.f32 %v2830, %v2913
      %v2920 = vmul.f32 %v1718, %v1920
      %v2921 = vmul.f32 %v1723, %v1920
      %v2922 = vmul.f32 %v1728, %v1920
      %v2923 = vmul.f32 %v1733, %v1920
      %v2924 = vadd.f32 %v2916, %v2920
      %v2925 = vadd.f32 %v2917, %v2921
      %v2926 = vadd.f32 %v2918, %v2922
      %v2927 = vadd.f32 %v2919, %v2923
      %v2928 = vmul.f32 %v1757, %v1403
      %v2929 = vmul.f32 %v1762, %v1403
      %v2930 = vmul.f32 %v1767, %v1403
      %v2931 = vmul.f32 %v1772, %v1403
      %v2932 = vadd.f32 %v2924, %v2928
      %v2933 = vadd.f32 %v2925, %v2929
      %v2934 = vadd.f32 %v2926, %v2930
      %v2935 = vadd.f32 %v2927, %v2931
      %2936 = vmatprep.subr.mxu0 0.0
      %2937 = vmatpush1.msra.mxu0 0.0
      %2938 = vmatprep.subr.mxu0 0.0
      %2939 = vmatpush1.msra.mxu0 0.0
      %2940 = vmatprep.subr.mxu0 0.0
      %2941 = vmatpush1.msra.mxu0 0.0
      %2942 = vmatprep.subr.mxu0 0.0
      %2943 = vmatpush1.msra.mxu0 0.0
      %2944 = vmatprep.subr.mxu0 0.0
      %2945 = vmatpush1.msra.mxu0 0.0
      %2946 = vmatprep.subr.mxu0 0.0
      %2947 = vmatpush1.msra.mxu0 0.0
      %2948 = vmatprep.subr.mxu0 0.0
      %2949 = vmatpush1.msra.mxu0 0.0
      %2950 = vmatprep.subr.mxu0 0.0
      %2951 = vmatpush1.msra.mxu0 0.0
      %2952 = vmatprep.subr.mxu0 0.0
      %2953 = vmatpush1.msra.mxu0 0.0
      %2954 = vmatprep.subr.mxu0 0.0
      %2955 = vmatpush1.msra.mxu0 0.0
      %2956 = vmatprep.subr.mxu0 0.0
      %2957 = vmatpush1.msra.mxu0 0.0
      %2958 = vmatprep.subr.mxu0 0.0
      %2959 = vmatpush1.msra.mxu0 0.0
      %2960 = vmatprep.subr.mxu0 0.0
      %2961 = vmatpush1.msra.mxu0 0.0
      %2962 = vmatprep.subr.mxu0 0.0
      %2963 = vmatpush1.msra.mxu0 0.0
      %2964 = vmatprep.subr.mxu0 0.0
      %2965 = vmatpush1.msra.mxu0 0.0
      %2966 = vmatprep.subr.mxu0 0.0
      %2967 = vmatpush1.msra.mxu0 %v1981
      %2968 = vmatprep.subr.mxu0 0.0
      %2969 = vmatpush2.msra.mxu0 0.0
      %2970 = vmatprep.subr.mxu0 0.0
      %2971 = vmatpush2.msra.mxu0 0.0
      %2972 = vmatprep.subr.mxu0 0.0
      %2973 = vmatpush2.msra.mxu0 0.0
      %2974 = vmatprep.subr.mxu0 0.0
      %2975 = vmatpush2.msra.mxu0 0.0
      %2976 = vmatprep.subr.mxu0 0.0
      %2977 = vmatpush2.msra.mxu0 0.0
      %2978 = vmatprep.subr.mxu0 0.0
      %2979 = vmatpush2.msra.mxu0 0.0
      %2980 = vmatprep.subr.mxu0 0.0
      %2981 = vmatpush2.msra.mxu0 0.0
      %2982 = vmatprep.subr.mxu0 0.0
      %2983 = vmatpush2.msra.mxu0 0.0
      %2984 = vmatprep.subr.mxu0 0.0
      %2985 = vmatpush2.msra.mxu0 0.0
      %2986 = vmatprep.subr.mxu0 0.0
      %2987 = vmatpush2.msra.mxu0 0.0
      %2988 = vmatprep.subr.mxu0 0.0
      %2989 = vmatpush2.msra.mxu0 0.0
      %2990 = vmatprep.subr.mxu0 0.0
      %2991 = vmatpush2.msra.mxu0 0.0
      %2992 = vmatprep.subr.mxu0 0.0
      %2993 = vmatpush2.msra.mxu0 0.0
      %2994 = vmatprep.subr.mxu0 0.0
      %2995 = vmatpush2.msra.mxu0 0.0
      %2996 = vmatprep.subr.mxu0 0.0
      %2997 = vmatpush2.msra.mxu0 0.0
      %2998 = vmatprep.subr.mxu0 0.0
      %2999 = vmatpush2.msra.mxu0 0.0
      %3000 = vmatprep.mubr.f32.mxu0 0.0
      %3001 = vmatmul.mubr.f32.gmra.mxu0 %v1788
      %v3002 = vpop.f32.mrf.mxu0
      %v3003 = vadd.f32 0.0, %v3002
      %v3004 = vpop.f32.mrf.mxu0
      %3005 = vmatprep.mubr.f32.mxu0 0.0
      %3006 = vmatmul.mubr.f32.gmra.mxu0 %v1791
      %v3007 = vpop.f32.mrf.mxu0
      %v3008 = vadd.f32 0.0, %v3007
      %v3009 = vpop.f32.mrf.mxu0
      %3010 = vmatprep.mubr.f32.mxu0 0.0
      %3011 = vmatmul.mubr.f32.gmra.mxu0 %v1794
      %v3012 = vpop.f32.mrf.mxu0
      %v3013 = vadd.f32 0.0, %v3012
      %v3014 = vpop.f32.mrf.mxu0
      %3015 = vmatprep.mubr.f32.mxu0 0.0
      %3016 = vmatmul.mubr.f32.gmra.mxu0 %v1797
      %v3017 = vpop.f32.mrf.mxu0
      %v3018 = vadd.f32 0.0, %v3017
      %v3019 = vpop.f32.mrf.mxu0
      %3020 = vdwg.mxu0
      %v3021 = vadd.f32 %v2932, %v3003
      %v3022 = vadd.f32 %v2933, %v3008
      %v3023 = vadd.f32 %v2934, %v3013
      %v3024 = vadd.f32 %v2935, %v3018
      %v3025 = vadd.f32 %v3021, %v1922
      %v3026 = vadd.f32 %v3022, %v1923
      %v3027 = vadd.f32 %v3023, %v1924
      %v3028 = vadd.f32 %v3024, %v1925
      %v3029 = vmul.f32 %v1938, %v1584
      %v3030 = vmul.f32 %v1943, %v1584
      %v3031 = vmul.f32 %v1948, %v1584
      %v3032 = vmul.f32 %v1953, %v1584
      %v3033 = vadd.f32 %v3025, %v3029
      %v3034 = vadd.f32 %v3026, %v3030
      %v3035 = vadd.f32 %v3027, %v3031
      %v3036 = vadd.f32 %v3028, %v3032
      %v3037 = vmul.f32 %v1596, %v2699
      %3038 = vrot.lane.b32.xlu0 %v393, 127
      %v3039 = vpop.permute.xlu0 %3038
      %v3040 = vmul.f32 %v3039, %v2708
      %v3042 = vsel %vm464, %v3040, 0
      %3044 = vmatprep.subr.mxu0 0.0
      %3045 = vmatpush1.msra.mxu0 0.0
      %3046 = vmatprep.subr.mxu0 0.0
      %3047 = vmatpush1.msra.mxu0 0.0
      %3048 = vmatprep.subr.mxu0 0.0
      %3049 = vmatpush1.msra.mxu0 0.0
      %3050 = vmatprep.subr.mxu0 0.0
      %3051 = vmatpush1.msra.mxu0 0.0
      %3052 = vmatprep.subr.mxu0 0.0
      %3053 = vmatpush1.msra.mxu0 0.0
      %3054 = vmatprep.subr.mxu0 0.0
      %3055 = vmatpush1.msra.mxu0 0.0
      %3056 = vmatprep.subr.mxu0 0.0
      %3057 = vmatpush1.msra.mxu0 0.0
      %3058 = vmatprep.subr.mxu0 0.0
      %3059 = vmatpush1.msra.mxu0 0.0
      %3060 = vmatprep.subr.mxu0 0.0
      %3061 = vmatpush1.msra.mxu0 0.0
      %3062 = vmatprep.subr.mxu0 0.0
      %3063 = vmatpush1.msra.mxu0 0.0
      %3064 = vmatprep.subr.mxu0 0.0
      %3065 = vmatpush1.msra.mxu0 0.0
      %3066 = vmatprep.subr.mxu0 0.0
      %3067 = vmatpush1.msra.mxu0 0.0
      %3068 = vmatprep.subr.mxu0 0.0
      %3069 = vmatpush1.msra.mxu0 0.0
      %3070 = vmatprep.subr.mxu0 0.0
      %3071 = vmatpush1.msra.mxu0 0.0
      %3072 = vmatprep.subr.mxu0 0.0
      %3073 = vmatpush1.msra.mxu0 0.0
      %3074 = vmatprep.subr.mxu0 0.0
      %3075 = vmatpush1.msra.mxu0 %v3042
      %3076 = vmatprep.subr.mxu0 0.0
      %3077 = vmatpush2.msra.mxu0 0.0
      %3078 = vmatprep.subr.mxu0 0.0
      %3079 = vmatpush2.msra.mxu0 0.0
      %3080 = vmatprep.subr.mxu0 0.0
      %3081 = vmatpush2.msra.mxu0 0.0
      %3082 = vmatprep.subr.mxu0 0.0
      %3083 = vmatpush2.msra.mxu0 0.0
      %3084 = vmatprep.subr.mxu0 0.0
      %3085 = vmatpush2.msra.mxu0 0.0
      %3086 = vmatprep.subr.mxu0 0.0
      %3087 = vmatpush2.msra.mxu0 0.0
      %3088 = vmatprep.subr.mxu0 0.0
      %3089 = vmatpush2.msra.mxu0 0.0
      %3090 = vmatprep.subr.mxu0 0.0
      %3091 = vmatpush2.msra.mxu0 0.0
      %3092 = vmatprep.subr.mxu0 0.0
      %3093 = vmatpush2.msra.mxu0 0.0
      %3094 = vmatprep.subr.mxu0 0.0
      %3095 = vmatpush2.msra.mxu0 0.0
      %3096 = vmatprep.subr.mxu0 0.0
      %3097 = vmatpush2.msra.mxu0 0.0
      %3098 = vmatprep.subr.mxu0 0.0
      %3099 = vmatpush2.msra.mxu0 0.0
      %3100 = vmatprep.subr.mxu0 0.0
      %3101 = vmatpush2.msra.mxu0 0.0
      %3102 = vmatprep.subr.mxu0 0.0
      %3103 = vmatpush2.msra.mxu0 0.0
      %3104 = vmatprep.subr.mxu0 0.0
      %3105 = vmatpush2.msra.mxu0 0.0
      %3106 = vmatprep.subr.mxu0 0.0
      %3107 = vmatpush2.msra.mxu0 0.0
      %3108 = vmatprep.mubr.f32.mxu0 0.0
      %3109 = vmatmul.mubr.f32.gmra.mxu0 %v1969
      %v3110 = vpop.f32.mrf.mxu0
      %v3111 = vadd.f32 0.0, %v3110
      %v3112 = vpop.f32.mrf.mxu0
      %3113 = vmatprep.mubr.f32.mxu0 0.0
      %3114 = vmatmul.mubr.f32.gmra.mxu0 %v1972
      %v3115 = vpop.f32.mrf.mxu0
      %v3116 = vadd.f32 0.0, %v3115
      %v3117 = vpop.f32.mrf.mxu0
      %3118 = vmatprep.mubr.f32.mxu0 0.0
      %3119 = vmatmul.mubr.f32.gmra.mxu0 %v1975
      %v3120 = vpop.f32.mrf.mxu0
      %v3121 = vadd.f32 0.0, %v3120
      %v3122 = vpop.f32.mrf.mxu0
      %3123 = vmatprep.mubr.f32.mxu0 0.0
      %3124 = vmatmul.mubr.f32.gmra.mxu0 %v1978
      %v3125 = vpop.f32.mrf.mxu0
      %v3126 = vadd.f32 0.0, %v3125
      %v3127 = vpop.f32.mrf.mxu0
      %3128 = vdwg.mxu0
      %v3129 = vadd.f32 %v3033, %v3111
      %v3130 = vadd.f32 %v3034, %v3116
      %v3131 = vadd.f32 %v3035, %v3121
      %v3132 = vadd.f32 %v3036, %v3126
      %v3134 = vlaneseq
      %v3135 = vshrl.u32 %v3134, 7
      %v3136 = vsub.s32 0, %v3135
      %v3137 = vrot.slane %v3037, %v3136
      %v3139 = vmul.f32 %v2080, %v3137
      %v3140 = vmul.f32 %v2085, %v3137
      %v3141 = vmul.f32 %v2090, %v3137
      %v3142 = vmul.f32 %v2095, %v3137
      %v3143 = vadd.f32 %v3129, %v3139
      %v3144 = vadd.f32 %v3130, %v3140
      %v3145 = vadd.f32 %v3131, %v3141
      %v3146 = vadd.f32 %v3132, %v3142
      %v3147 = vmul.f32 %v2113, %v2821
      %v3148 = vmul.f32 %v2118, %v2821
      %v3149 = vmul.f32 %v2123, %v2821
      %v3150 = vmul.f32 %v2128, %v2821
      %v3151 = vadd.f32 %v3143, %v3147
      %v3152 = vadd.f32 %v3144, %v3148
      %v3153 = vadd.f32 %v3145, %v3149
      %v3154 = vadd.f32 %v3146, %v3150
      %vm3155 = vcmp.gt.f32.partialorder %v3151, 0.0
      %vm3156 = vcmp.gt.f32.partialorder %v3152, 0.0
      %vm3157 = vcmp.gt.f32.partialorder %v3153, 0.0
      %vm3158 = vcmp.gt.f32.partialorder %v3154, 0.0
      %v3159 = vmul.f32 %v3151, 0.2
      %v3160 = vmul.f32 %v3152, 0.2
      %v3161 = vmul.f32 %v3153, 0.2
      %v3162 = vmul.f32 %v3154, 0.2
      %v3163 = vsel %vm3155, %v3151, %v3159
      %v3164 = vsel %vm3156, %v3152, %v3160
      %v3165 = vsel %vm3157, %v3153, %v3161
      %v3166 = vsel %vm3158, %v3154, %v3162
      %3167 = vmatprep.subr.mxu0 0.0
      %3168 = vmatpush1.msra.mxu0 0.0
      %3169 = vmatprep.subr.mxu0 0.0
      %3170 = vmatpush1.msra.mxu0 0.0
      %3171 = vmatprep.subr.mxu0 0.0
      %3172 = vmatpush1.msra.mxu0 0.0
      %3173 = vmatprep.subr.mxu0 0.0
      %3174 = vmatpush1.msra.mxu0 0.0
      %3175 = vmatprep.subr.mxu0 0.0
      %3176 = vmatpush1.msra.mxu0 0.0
      %3177 = vmatprep.subr.mxu0 0.0
      %3178 = vmatpush1.msra.mxu0 0.0
      %3179 = vmatprep.subr.mxu0 0.0
      %3180 = vmatpush1.msra.mxu0 0.0
      %3181 = vmatprep.subr.mxu0 0.0
      %3182 = vmatpush1.msra.mxu0 0.0
      %3183 = vmatprep.subr.mxu0 0.0
      %3184 = vmatpush1.msra.mxu0 0.0
      %3185 = vmatprep.subr.mxu0 0.0
      %3186 = vmatpush1.msra.mxu0 0.0
      %3187 = vmatprep.subr.mxu0 0.0
      %3188 = vmatpush1.msra.mxu0 0.0
      %3189 = vmatprep.subr.mxu0 0.0
      %3190 = vmatpush1.msra.mxu0 0.0
      %3191 = vmatprep.subr.mxu0 0.0
      %3192 = vmatpush1.msra.mxu0 0.0
      %3193 = vmatprep.subr.mxu0 0.0
      %3194 = vmatpush1.msra.mxu0 0.0
      %3195 = vmatprep.subr.mxu0 0.0
      %3196 = vmatpush1.msra.mxu0 0.0
      %3197 = vmatprep.subr.mxu0 0.0
      %3198 = vmatpush1.msra.mxu0 %v1057
      %3199 = vmatprep.subr.mxu0 0.0
      %3200 = vmatpush2.msra.mxu0 0.0
      %3201 = vmatprep.subr.mxu0 0.0
      %3202 = vmatpush2.msra.mxu0 0.0
      %3203 = vmatprep.subr.mxu0 0.0
      %3204 = vmatpush2.msra.mxu0 0.0
      %3205 = vmatprep.subr.mxu0 0.0
      %3206 = vmatpush2.msra.mxu0 0.0
      %3207 = vmatprep.subr.mxu0 0.0
      %3208 = vmatpush2.msra.mxu0 0.0
      %3209 = vmatprep.subr.mxu0 0.0
      %3210 = vmatpush2.msra.mxu0 0.0
      %3211 = vmatprep.subr.mxu0 0.0
      %3212 = vmatpush2.msra.mxu0 0.0
      %3213 = vmatprep.subr.mxu0 0.0
      %3214 = vmatpush2.msra.mxu0 0.0
      %3215 = vmatprep.subr.mxu0 0.0
      %3216 = vmatpush2.msra.mxu0 0.0
      %3217 = vmatprep.subr.mxu0 0.0
      %3218 = vmatpush2.msra.mxu0 0.0
      %3219 = vmatprep.subr.mxu0 0.0
      %3220 = vmatpush2.msra.mxu0 0.0
      %3221 = vmatprep.subr.mxu0 0.0
      %3222 = vmatpush2.msra.mxu0 0.0
      %3223 = vmatprep.subr.mxu0 0.0
      %3224 = vmatpush2.msra.mxu0 0.0
      %3225 = vmatprep.subr.mxu0 0.0
      %3226 = vmatpush2.msra.mxu0 0.0
      %3227 = vmatprep.subr.mxu0 0.0
      %3228 = vmatpush2.msra.mxu0 0.0
      %3229 = vmatprep.subr.mxu0 0.0
      %3230 = vmatpush2.msra.mxu0 0.0
      %3231 = vmatprep.mubr.f32.mxu0 0.0
      %3232 = vmatmul.mubr.f32.gmra.mxu0 %v453
      %v3233 = vpop.f32.mrf.mxu0
      %v3234 = vadd.f32 0.0, %v3233
      %v3235 = vpop.f32.mrf.mxu0
      %3236 = vmatprep.mubr.f32.mxu0 0.0
      %3237 = vmatmul.mubr.f32.gmra.mxu0 %v456
      %v3238 = vpop.f32.mrf.mxu0
      %v3239 = vadd.f32 0.0, %v3238
      %v3240 = vpop.f32.mrf.mxu0
      %3241 = vmatprep.mubr.f32.mxu0 0.0
      %3242 = vmatmul.mubr.f32.gmra.mxu0 %v459
      %v3243 = vpop.f32.mrf.mxu0
      %v3244 = vadd.f32 0.0, %v3243
      %v3245 = vpop.f32.mrf.mxu0
      %3246 = vmatprep.mubr.f32.mxu0 0.0
      %3247 = vmatmul.mubr.f32.gmra.mxu0 %v462
      %v3248 = vpop.f32.mrf.mxu0
      %v3249 = vadd.f32 0.0, %v3248
      %v3250 = vpop.f32.mrf.mxu0
      %3251 = vdwg.mxu0
      %v3252 = vadd.f32 %v420, %v3234
      %v3253 = vadd.f32 %v421, %v3239
      %v3254 = vadd.f32 %v422, %v3244
      %v3255 = vadd.f32 %v423, %v3249
      %v3256 = vmul.f32 %v564, %v1177
      %v3257 = vmul.f32 %v569, %v1177
      %v3258 = vmul.f32 %v574, %v1177
      %v3259 = vmul.f32 %v579, %v1177
      %v3260 = vadd.f32 %v3252, %v3256
      %v3261 = vadd.f32 %v3253, %v3257
      %v3262 = vadd.f32 %v3254, %v3258
      %v3263 = vadd.f32 %v3255, %v3259
      %v3264 = vmul.f32 %v603, %v1216
      %v3265 = vmul.f32 %v608, %v1216
      %v3266 = vmul.f32 %v613, %v1216
      %v3267 = vmul.f32 %v618, %v1216
      %v3268 = vadd.f32 %v3260, %v3264
      %v3269 = vadd.f32 %v3261, %v3265
      %v3270 = vadd.f32 %v3262, %v3266
      %v3271 = vadd.f32 %v3263, %v3267
      %3272 = vmatprep.subr.mxu0 0.0
      %3273 = vmatpush1.msra.mxu0 0.0
      %3274 = vmatprep.subr.mxu0 0.0
      %3275 = vmatpush1.msra.mxu0 0.0
      %3276 = vmatprep.subr.mxu0 0.0
      %3277 = vmatpush1.msra.mxu0 0.0
      %3278 = vmatprep.subr.mxu0 0.0
      %3279 = vmatpush1.msra.mxu0 0.0
      %3280 = vmatprep.subr.mxu0 0.0
      %3281 = vmatpush1.msra.mxu0 0.0
      %3282 = vmatprep.subr.mxu0 0.0
      %3283 = vmatpush1.msra.mxu0 0.0
      %3284 = vmatprep.subr.mxu0 0.0
      %3285 = vmatpush1.msra.mxu0 0.0
      %3286 = vmatprep.subr.mxu0 0.0
      %3287 = vmatpush1.msra.mxu0 0.0
      %3288 = vmatprep.subr.mxu0 0.0
      %3289 = vmatpush1.msra.mxu0 0.0
      %3290 = vmatprep.subr.mxu0 0.0
      %3291 = vmatpush1.msra.mxu0 0.0
      %3292 = vmatprep.subr.mxu0 0.0
      %3293 = vmatpush1.msra.mxu0 0.0
      %3294 = vmatprep.subr.mxu0 0.0
      %3295 = vmatpush1.msra.mxu0 0.0
      %3296 = vmatprep.subr.mxu0 0.0
      %3297 = vmatpush1.msra.mxu0 0.0
      %3298 = vmatprep.subr.mxu0 0.0
      %3299 = vmatpush1.msra.mxu0 0.0
      %3300 = vmatprep.subr.mxu0 0.0
      %3301 = vmatpush1.msra.mxu0 0.0
      %3302 = vmatprep.subr.mxu0 0.0
      %3303 = vmatpush1.msra.mxu0 %v1244
      %3304 = vmatprep.subr.mxu0 0.0
      %3305 = vmatpush2.msra.mxu0 0.0
      %3306 = vmatprep.subr.mxu0 0.0
      %3307 = vmatpush2.msra.mxu0 0.0
      %3308 = vmatprep.subr.mxu0 0.0
      %3309 = vmatpush2.msra.mxu0 0.0
      %3310 = vmatprep.subr.mxu0 0.0
      %3311 = vmatpush2.msra.mxu0 0.0
      %3312 = vmatprep.subr.mxu0 0.0
      %3313 = vmatpush2.msra.mxu0 0.0
      %3314 = vmatprep.subr.mxu0 0.0
      %3315 = vmatpush2.msra.mxu0 0.0
      %3316 = vmatprep.subr.mxu0 0.0
      %3317 = vmatpush2.msra.mxu0 0.0
      %3318 = vmatprep.subr.mxu0 0.0
      %3319 = vmatpush2.msra.mxu0 0.0
      %3320 = vmatprep.subr.mxu0 0.0
      %3321 = vmatpush2.msra.mxu0 0.0
      %3322 = vmatprep.subr.mxu0 0.0
      %3323 = vmatpush2.msra.mxu0 0.0
      %3324 = vmatprep.subr.mxu0 0.0
      %3325 = vmatpush2.msra.mxu0 0.0
      %3326 = vmatprep.subr.mxu0 0.0
      %3327 = vmatpush2.msra.mxu0 0.0
      %3328 = vmatprep.subr.mxu0 0.0
      %3329 = vmatpush2.msra.mxu0 0.0
      %3330 = vmatprep.subr.mxu0 0.0
      %3331 = vmatpush2.msra.mxu0 0.0
      %3332 = vmatprep.subr.mxu0 0.0
      %3333 = vmatpush2.msra.mxu0 0.0
      %3334 = vmatprep.subr.mxu0 0.0
      %3335 = vmatpush2.msra.mxu0 0.0
      %3336 = vmatprep.mubr.f32.mxu0 0.0
      %3337 = vmatmul.mubr.f32.gmra.mxu0 %v655
      %v3338 = vpop.f32.mrf.mxu0
      %v3339 = vadd.f32 0.0, %v3338
      %v3340 = vpop.f32.mrf.mxu0
      %3341 = vmatprep.mubr.f32.mxu0 0.0
      %3342 = vmatmul.mubr.f32.gmra.mxu0 %v658
      %v3343 = vpop.f32.mrf.mxu0
      %v3344 = vadd.f32 0.0, %v3343
      %v3345 = vpop.f32.mrf.mxu0
      %3346 = vmatprep.mubr.f32.mxu0 0.0
      %3347 = vmatmul.mubr.f32.gmra.mxu0 %v661
      %v3348 = vpop.f32.mrf.mxu0
      %v3349 = vadd.f32 0.0, %v3348
      %v3350 = vpop.f32.mrf.mxu0
      %3351 = vmatprep.mubr.f32.mxu0 0.0
      %3352 = vmatmul.mubr.f32.gmra.mxu0 %v664
      %v3353 = vpop.f32.mrf.mxu0
      %v3354 = vadd.f32 0.0, %v3353
      %v3355 = vpop.f32.mrf.mxu0
      %3356 = vdwg.mxu0
      %v3357 = vadd.f32 %v3268, %v3339
      %v3358 = vadd.f32 %v3269, %v3344
      %v3359 = vadd.f32 %v3270, %v3349
      %v3360 = vadd.f32 %v3271, %v3354
      %v3361 = vmul.f32 %v766, %v1364
      %v3362 = vmul.f32 %v771, %v1364
      %v3363 = vmul.f32 %v776, %v1364
      %v3364 = vmul.f32 %v781, %v1364
      %v3365 = vadd.f32 %v3357, %v3361
      %v3366 = vadd.f32 %v3358, %v3362
      %v3367 = vadd.f32 %v3359, %v3363
      %v3368 = vadd.f32 %v3360, %v3364
      %v3369 = vmul.f32 %v805, %v1403
      %v3370 = vmul.f32 %v810, %v1403
      %v3371 = vmul.f32 %v815, %v1403
      %v3372 = vmul.f32 %v820, %v1403
      %v3373 = vadd.f32 %v3365, %v3369
      %v3374 = vadd.f32 %v3366, %v3370
      %v3375 = vadd.f32 %v3367, %v3371
      %v3376 = vadd.f32 %v3368, %v3372
      %3377 = vmatprep.subr.mxu0 0.0
      %3378 = vmatpush1.msra.mxu0 0.0
      %3379 = vmatprep.subr.mxu0 0.0
      %3380 = vmatpush1.msra.mxu0 0.0
      %3381 = vmatprep.subr.mxu0 0.0
      %3382 = vmatpush1.msra.mxu0 0.0
      %3383 = vmatprep.subr.mxu0 0.0
      %3384 = vmatpush1.msra.mxu0 0.0
      %3385 = vmatprep.subr.mxu0 0.0
      %3386 = vmatpush1.msra.mxu0 0.0
      %3387 = vmatprep.subr.mxu0 0.0
      %3388 = vmatpush1.msra.mxu0 0.0
      %3389 = vmatprep.subr.mxu0 0.0
      %3390 = vmatpush1.msra.mxu0 0.0
      %3391 = vmatprep.subr.mxu0 0.0
      %3392 = vmatpush1.msra.mxu0 0.0
      %3393 = vmatprep.subr.mxu0 0.0
      %3394 = vmatpush1.msra.mxu0 0.0
      %3395 = vmatprep.subr.mxu0 0.0
      %3396 = vmatpush1.msra.mxu0 0.0
      %3397 = vmatprep.subr.mxu0 0.0
      %3398 = vmatpush1.msra.mxu0 0.0
      %3399 = vmatprep.subr.mxu0 0.0
      %3400 = vmatpush1.msra.mxu0 0.0
      %3401 = vmatprep.subr.mxu0 0.0
      %3402 = vmatpush1.msra.mxu0 0.0
      %3403 = vmatprep.subr.mxu0 0.0
      %3404 = vmatpush1.msra.mxu0 0.0
      %3405 = vmatprep.subr.mxu0 0.0
      %3406 = vmatpush1.msra.mxu0 0.0
      %3407 = vmatprep.subr.mxu0 0.0
      %3408 = vmatpush1.msra.mxu0 %v1431
      %3409 = vmatprep.subr.mxu0 0.0
      %3410 = vmatpush2.msra.mxu0 0.0
      %3411 = vmatprep.subr.mxu0 0.0
      %3412 = vmatpush2.msra.mxu0 0.0
      %3413 = vmatprep.subr.mxu0 0.0
      %3414 = vmatpush2.msra.mxu0 0.0
      %3415 = vmatprep.subr.mxu0 0.0
      %3416 = vmatpush2.msra.mxu0 0.0
      %3417 = vmatprep.subr.mxu0 0.0
      %3418 = vmatpush2.msra.mxu0 0.0
      %3419 = vmatprep.subr.mxu0 0.0
      %3420 = vmatpush2.msra.mxu0 0.0
      %3421 = vmatprep.subr.mxu0 0.0
      %3422 = vmatpush2.msra.mxu0 0.0
      %3423 = vmatprep.subr.mxu0 0.0
      %3424 = vmatpush2.msra.mxu0 0.0
      %3425 = vmatprep.subr.mxu0 0.0
      %3426 = vmatpush2.msra.mxu0 0.0
      %3427 = vmatprep.subr.mxu0 0.0
      %3428 = vmatpush2.msra.mxu0 0.0
      %3429 = vmatprep.subr.mxu0 0.0
      %3430 = vmatpush2.msra.mxu0 0.0
      %3431 = vmatprep.subr.mxu0 0.0
      %3432 = vmatpush2.msra.mxu0 0.0
      %3433 = vmatprep.subr.mxu0 0.0
      %3434 = vmatpush2.msra.mxu0 0.0
      %3435 = vmatprep.subr.mxu0 0.0
      %3436 = vmatpush2.msra.mxu0 0.0
      %3437 = vmatprep.subr.mxu0 0.0
      %3438 = vmatpush2.msra.mxu0 0.0
      %3439 = vmatprep.subr.mxu0 0.0
      %3440 = vmatpush2.msra.mxu0 0.0
      %3441 = vmatprep.mubr.f32.mxu0 0.0
      %3442 = vmatmul.mubr.f32.gmra.mxu0 %v849
      %v3443 = vpop.f32.mrf.mxu0
      %v3444 = vadd.f32 0.0, %v3443
      %v3445 = vpop.f32.mrf.mxu0
      %3446 = vmatprep.mubr.f32.mxu0 0.0
      %3447 = vmatmul.mubr.f32.gmra.mxu0 %v852
      %v3448 = vpop.f32.mrf.mxu0
      %v3449 = vadd.f32 0.0, %v3448
      %v3450 = vpop.f32.mrf.mxu0
      %3451 = vmatprep.mubr.f32.mxu0 0.0
      %3452 = vmatmul.mubr.f32.gmra.mxu0 %v855
      %v3453 = vpop.f32.mrf.mxu0
      %v3454 = vadd.f32 0.0, %v3453
      %v3455 = vpop.f32.mrf.mxu0
      %3456 = vmatprep.mubr.f32.mxu0 0.0
      %3457 = vmatmul.mubr.f32.gmra.mxu0 %v858
      %v3458 = vpop.f32.mrf.mxu0
      %v3459 = vadd.f32 0.0, %v3458
      %v3460 = vpop.f32.mrf.mxu0
      %3461 = vdwg.mxu0
      %v3462 = vadd.f32 %v3373, %v3444
      %v3463 = vadd.f32 %v3374, %v3449
      %v3464 = vadd.f32 %v3375, %v3454
      %v3465 = vadd.f32 %v3376, %v3459
      %v3466 = vmul.f32 %v960, %v1364
      %v3467 = vmul.f32 %v965, %v1364
      %v3468 = vmul.f32 %v970, %v1364
      %v3469 = vmul.f32 %v975, %v1364
      %v3470 = vadd.f32 %v3462, %v3466
      %v3471 = vadd.f32 %v3463, %v3467
      %v3472 = vadd.f32 %v3464, %v3468
      %v3473 = vadd.f32 %v3465, %v3469
      %v3474 = vmul.f32 %v993, %v1584
      %v3475 = vmul.f32 %v998, %v1584
      %v3476 = vmul.f32 %v1003, %v1584
      %v3477 = vmul.f32 %v1008, %v1584
      %v3478 = vadd.f32 %v3470, %v3474
      %v3479 = vadd.f32 %v3471, %v3475
      %v3480 = vadd.f32 %v3472, %v3476
      %v3481 = vadd.f32 %v3473, %v3477
      %3482 = vmatprep.subr.mxu0 0.0
      %3483 = vmatpush1.msra.mxu0 0.0
      %3484 = vmatprep.subr.mxu0 0.0
      %3485 = vmatpush1.msra.mxu0 0.0
      %3486 = vmatprep.subr.mxu0 0.0
      %3487 = vmatpush1.msra.mxu0 0.0
      %3488 = vmatprep.subr.mxu0 0.0
      %3489 = vmatpush1.msra.mxu0 0.0
      %3490 = vmatprep.subr.mxu0 0.0
      %3491 = vmatpush1.msra.mxu0 0.0
      %3492 = vmatprep.subr.mxu0 0.0
      %3493 = vmatpush1.msra.mxu0 0.0
      %3494 = vmatprep.subr.mxu0 0.0
      %3495 = vmatpush1.msra.mxu0 0.0
      %3496 = vmatprep.subr.mxu0 0.0
      %3497 = vmatpush1.msra.mxu0 0.0
      %3498 = vmatprep.subr.mxu0 0.0
      %3499 = vmatpush1.msra.mxu0 0.0
      %3500 = vmatprep.subr.mxu0 0.0
      %3501 = vmatpush1.msra.mxu0 0.0
      %3502 = vmatprep.subr.mxu0 0.0
      %3503 = vmatpush1.msra.mxu0 0.0
      %3504 = vmatprep.subr.mxu0 0.0
      %3505 = vmatpush1.msra.mxu0 0.0
      %3506 = vmatprep.subr.mxu0 0.0
      %3507 = vmatpush1.msra.mxu0 0.0
      %3508 = vmatprep.subr.mxu0 0.0
      %3509 = vmatpush1.msra.mxu0 0.0
      %3510 = vmatprep.subr.mxu0 0.0
      %3511 = vmatpush1.msra.mxu0 0.0
      %3512 = vmatprep.subr.mxu0 0.0
      %3513 = vmatpush1.msra.mxu0 %v1619
      %3514 = vmatprep.subr.mxu0 0.0
      %3515 = vmatpush2.msra.mxu0 0.0
      %3516 = vmatprep.subr.mxu0 0.0
      %3517 = vmatpush2.msra.mxu0 0.0
      %3518 = vmatprep.subr.mxu0 0.0
      %3519 = vmatpush2.msra.mxu0 0.0
      %3520 = vmatprep.subr.mxu0 0.0
      %3521 = vmatpush2.msra.mxu0 0.0
      %3522 = vmatprep.subr.mxu0 0.0
      %3523 = vmatpush2.msra.mxu0 0.0
      %3524 = vmatprep.subr.mxu0 0.0
      %3525 = vmatpush2.msra.mxu0 0.0
      %3526 = vmatprep.subr.mxu0 0.0
      %3527 = vmatpush2.msra.mxu0 0.0
      %3528 = vmatprep.subr.mxu0 0.0
      %3529 = vmatpush2.msra.mxu0 0.0
      %3530 = vmatprep.subr.mxu0 0.0
      %3531 = vmatpush2.msra.mxu0 0.0
      %3532 = vmatprep.subr.mxu0 0.0
      %3533 = vmatpush2.msra.mxu0 0.0
      %3534 = vmatprep.subr.mxu0 0.0
      %3535 = vmatpush2.msra.mxu0 0.0
      %3536 = vmatprep.subr.mxu0 0.0
      %3537 = vmatpush2.msra.mxu0 0.0
      %3538 = vmatprep.subr.mxu0 0.0
      %3539 = vmatpush2.msra.mxu0 0.0
      %3540 = vmatprep.subr.mxu0 0.0
      %3541 = vmatpush2.msra.mxu0 0.0
      %3542 = vmatprep.subr.mxu0 0.0
      %3543 = vmatpush2.msra.mxu0 0.0
      %3544 = vmatprep.subr.mxu0 0.0
      %3545 = vmatpush2.msra.mxu0 0.0
      %3546 = vmatprep.mubr.f32.mxu0 0.0
      %3547 = vmatmul.mubr.f32.gmra.mxu0 %v1045
      %v3548 = vpop.f32.mrf.mxu0
      %v3549 = vadd.f32 0.0, %v3548
      %v3550 = vpop.f32.mrf.mxu0
      %3551 = vmatprep.mubr.f32.mxu0 0.0
      %3552 = vmatmul.mubr.f32.gmra.mxu0 %v1048
      %v3553 = vpop.f32.mrf.mxu0
      %v3554 = vadd.f32 0.0, %v3553
      %v3555 = vpop.f32.mrf.mxu0
      %3556 = vmatprep.mubr.f32.mxu0 0.0
      %3557 = vmatmul.mubr.f32.gmra.mxu0 %v1051
      %v3558 = vpop.f32.mrf.mxu0
      %v3559 = vadd.f32 0.0, %v3558
      %v3560 = vpop.f32.mrf.mxu0
      %3561 = vmatprep.mubr.f32.mxu0 0.0
      %3562 = vmatmul.mubr.f32.gmra.mxu0 %v1054
      %v3563 = vpop.f32.mrf.mxu0
      %v3564 = vadd.f32 0.0, %v3563
      %v3565 = vpop.f32.mrf.mxu0
      %3566 = vdwg.mxu0
      %v3567 = vadd.f32 %v3478, %v3549
      %v3568 = vadd.f32 %v3479, %v3554
      %v3569 = vadd.f32 %v3480, %v3559
      %v3570 = vadd.f32 %v3481, %v3564
      %v3571 = vmul.f32 %v1156, %v1739
      %v3572 = vmul.f32 %v1161, %v1739
      %v3573 = vmul.f32 %v1166, %v1739
      %v3574 = vmul.f32 %v1171, %v1739
      %v3575 = vadd.f32 %v3567, %v3571
      %v3576 = vadd.f32 %v3568, %v3572
      %v3577 = vadd.f32 %v3569, %v3573
      %v3578 = vadd.f32 %v3570, %v3574
      %v3579 = vadd.f32 %v3575, %v1218
      %v3580 = vadd.f32 %v3576, %v1219
      %v3581 = vadd.f32 %v3577, %v1220
      %v3582 = vadd.f32 %v3578, %v1221
      %3583 = vmatprep.subr.mxu0 0.0
      %3584 = vmatpush1.msra.mxu0 0.0
      %3585 = vmatprep.subr.mxu0 0.0
      %3586 = vmatpush1.msra.mxu0 0.0
      %3587 = vmatprep.subr.mxu0 0.0
      %3588 = vmatpush1.msra.mxu0 0.0
      %3589 = vmatprep.subr.mxu0 0.0
      %3590 = vmatpush1.msra.mxu0 0.0
      %3591 = vmatprep.subr.mxu0 0.0
      %3592 = vmatpush1.msra.mxu0 0.0
      %3593 = vmatprep.subr.mxu0 0.0
      %3594 = vmatpush1.msra.mxu0 0.0
      %3595 = vmatprep.subr.mxu0 0.0
      %3596 = vmatpush1.msra.mxu0 0.0
      %3597 = vmatprep.subr.mxu0 0.0
      %3598 = vmatpush1.msra.mxu0 0.0
      %3599 = vmatprep.subr.mxu0 0.0
      %3600 = vmatpush1.msra.mxu0 0.0
      %3601 = vmatprep.subr.mxu0 0.0
      %3602 = vmatpush1.msra.mxu0 0.0
      %3603 = vmatprep.subr.mxu0 0.0
      %3604 = vmatpush1.msra.mxu0 0.0
      %3605 = vmatprep.subr.mxu0 0.0
      %3606 = vmatpush1.msra.mxu0 0.0
      %3607 = vmatprep.subr.mxu0 0.0
      %3608 = vmatpush1.msra.mxu0 0.0
      %3609 = vmatprep.subr.mxu0 0.0
      %3610 = vmatpush1.msra.mxu0 0.0
      %3611 = vmatprep.subr.mxu0 0.0
      %3612 = vmatpush1.msra.mxu0 0.0
      %3613 = vmatprep.subr.mxu0 0.0
      %3614 = vmatpush1.msra.mxu0 %v1800
      %3615 = vmatprep.subr.mxu0 0.0
      %3616 = vmatpush2.msra.mxu0 0.0
      %3617 = vmatprep.subr.mxu0 0.0
      %3618 = vmatpush2.msra.mxu0 0.0
      %3619 = vmatprep.subr.mxu0 0.0
      %3620 = vmatpush2.msra.mxu0 0.0
      %3621 = vmatprep.subr.mxu0 0.0
      %3622 = vmatpush2.msra.mxu0 0.0
      %3623 = vmatprep.subr.mxu0 0.0
      %3624 = vmatpush2.msra.mxu0 0.0
      %3625 = vmatprep.subr.mxu0 0.0
      %3626 = vmatpush2.msra.mxu0 0.0
      %3627 = vmatprep.subr.mxu0 0.0
      %3628 = vmatpush2.msra.mxu0 0.0
      %3629 = vmatprep.subr.mxu0 0.0
      %3630 = vmatpush2.msra.mxu0 0.0
      %3631 = vmatprep.subr.mxu0 0.0
      %3632 = vmatpush2.msra.mxu0 0.0
      %3633 = vmatprep.subr.mxu0 0.0
      %3634 = vmatpush2.msra.mxu0 0.0
      %3635 = vmatprep.subr.mxu0 0.0
      %3636 = vmatpush2.msra.mxu0 0.0
      %3637 = vmatprep.subr.mxu0 0.0
      %3638 = vmatpush2.msra.mxu0 0.0
      %3639 = vmatprep.subr.mxu0 0.0
      %3640 = vmatpush2.msra.mxu0 0.0
      %3641 = vmatprep.subr.mxu0 0.0
      %3642 = vmatpush2.msra.mxu0 0.0
      %3643 = vmatprep.subr.mxu0 0.0
      %3644 = vmatpush2.msra.mxu0 0.0
      %3645 = vmatprep.subr.mxu0 0.0
      %3646 = vmatpush2.msra.mxu0 0.0
      %3647 = vmatprep.mubr.f32.mxu0 0.0
      %3648 = vmatmul.mubr.f32.gmra.mxu0 %v1232
      %v3649 = vpop.f32.mrf.mxu0
      %v3650 = vadd.f32 0.0, %v3649
      %v3651 = vpop.f32.mrf.mxu0
      %3652 = vmatprep.mubr.f32.mxu0 0.0
      %3653 = vmatmul.mubr.f32.gmra.mxu0 %v1235
      %v3654 = vpop.f32.mrf.mxu0
      %v3655 = vadd.f32 0.0, %v3654
      %v3656 = vpop.f32.mrf.mxu0
      %3657 = vmatprep.mubr.f32.mxu0 0.0
      %3658 = vmatmul.mubr.f32.gmra.mxu0 %v1238
      %v3659 = vpop.f32.mrf.mxu0
      %v3660 = vadd.f32 0.0, %v3659
      %v3661 = vpop.f32.mrf.mxu0
      %3662 = vmatprep.mubr.f32.mxu0 0.0
      %3663 = vmatmul.mubr.f32.gmra.mxu0 %v1241
      %v3664 = vpop.f32.mrf.mxu0
      %v3665 = vadd.f32 0.0, %v3664
      %v3666 = vpop.f32.mrf.mxu0
      %3667 = vdwg.mxu0
      %v3668 = vadd.f32 %v3579, %v3650
      %v3669 = vadd.f32 %v3580, %v3655
      %v3670 = vadd.f32 %v3581, %v3660
      %v3671 = vadd.f32 %v3582, %v3665
      %v3672 = vmul.f32 %v1343, %v1920
      %v3673 = vmul.f32 %v1348, %v1920
      %v3674 = vmul.f32 %v1353, %v1920
      %v3675 = vmul.f32 %v1358, %v1920
      %v3676 = vadd.f32 %v3668, %v3672
      %v3677 = vadd.f32 %v3669, %v3673
      %v3678 = vadd.f32 %v3670, %v3674
      %v3679 = vadd.f32 %v3671, %v3675
      %v3680 = vadd.f32 %v3676, %v1405
      %v3681 = vadd.f32 %v3677, %v1406
      %v3682 = vadd.f32 %v3678, %v1407
      %v3683 = vadd.f32 %v3679, %v1408
      %3684 = vmatprep.subr.mxu0 0.0
      %3685 = vmatpush1.msra.mxu0 0.0
      %3686 = vmatprep.subr.mxu0 0.0
      %3687 = vmatpush1.msra.mxu0 0.0
      %3688 = vmatprep.subr.mxu0 0.0
      %3689 = vmatpush1.msra.mxu0 0.0
      %3690 = vmatprep.subr.mxu0 0.0
      %3691 = vmatpush1.msra.mxu0 0.0
      %3692 = vmatprep.subr.mxu0 0.0
      %3693 = vmatpush1.msra.mxu0 0.0
      %3694 = vmatprep.subr.mxu0 0.0
      %3695 = vmatpush1.msra.mxu0 0.0
      %3696 = vmatprep.subr.mxu0 0.0
      %3697 = vmatpush1.msra.mxu0 0.0
      %3698 = vmatprep.subr.mxu0 0.0
      %3699 = vmatpush1.msra.mxu0 0.0
      %3700 = vmatprep.subr.mxu0 0.0
      %3701 = vmatpush1.msra.mxu0 0.0
      %3702 = vmatprep.subr.mxu0 0.0
      %3703 = vmatpush1.msra.mxu0 0.0
      %3704 = vmatprep.subr.mxu0 0.0
      %3705 = vmatpush1.msra.mxu0 0.0
      %3706 = vmatprep.subr.mxu0 0.0
      %3707 = vmatpush1.msra.mxu0 0.0
      %3708 = vmatprep.subr.mxu0 0.0
      %3709 = vmatpush1.msra.mxu0 0.0
      %3710 = vmatprep.subr.mxu0 0.0
      %3711 = vmatpush1.msra.mxu0 0.0
      %3712 = vmatprep.subr.mxu0 0.0
      %3713 = vmatpush1.msra.mxu0 0.0
      %3714 = vmatprep.subr.mxu0 0.0
      %3715 = vmatpush1.msra.mxu0 %v1981
      %3716 = vmatprep.subr.mxu0 0.0
      %3717 = vmatpush2.msra.mxu0 0.0
      %3718 = vmatprep.subr.mxu0 0.0
      %3719 = vmatpush2.msra.mxu0 0.0
      %3720 = vmatprep.subr.mxu0 0.0
      %3721 = vmatpush2.msra.mxu0 0.0
      %3722 = vmatprep.subr.mxu0 0.0
      %3723 = vmatpush2.msra.mxu0 0.0
      %3724 = vmatprep.subr.mxu0 0.0
      %3725 = vmatpush2.msra.mxu0 0.0
      %3726 = vmatprep.subr.mxu0 0.0
      %3727 = vmatpush2.msra.mxu0 0.0
      %3728 = vmatprep.subr.mxu0 0.0
      %3729 = vmatpush2.msra.mxu0 0.0
      %3730 = vmatprep.subr.mxu0 0.0
      %3731 = vmatpush2.msra.mxu0 0.0
      %3732 = vmatprep.subr.mxu0 0.0
      %3733 = vmatpush2.msra.mxu0 0.0
      %3734 = vmatprep.subr.mxu0 0.0
      %3735 = vmatpush2.msra.mxu0 0.0
      %3736 = vmatprep.subr.mxu0 0.0
      %3737 = vmatpush2.msra.mxu0 0.0
      %3738 = vmatprep.subr.mxu0 0.0
      %3739 = vmatpush2.msra.mxu0 0.0
      %3740 = vmatprep.subr.mxu0 0.0
      %3741 = vmatpush2.msra.mxu0 0.0
      %3742 = vmatprep.subr.mxu0 0.0
      %3743 = vmatpush2.msra.mxu0 0.0
      %3744 = vmatprep.subr.mxu0 0.0
      %3745 = vmatpush2.msra.mxu0 0.0
      %3746 = vmatprep.subr.mxu0 0.0
      %3747 = vmatpush2.msra.mxu0 0.0
      %3748 = vmatprep.mubr.f32.mxu0 0.0
      %3749 = vmatmul.mubr.f32.gmra.mxu0 %v1419
      %v3750 = vpop.f32.mrf.mxu0
      %v3751 = vadd.f32 0.0, %v3750
      %v3752 = vpop.f32.mrf.mxu0
      %3753 = vmatprep.mubr.f32.mxu0 0.0
      %3754 = vmatmul.mubr.f32.gmra.mxu0 %v1422
      %v3755 = vpop.f32.mrf.mxu0
      %v3756 = vadd.f32 0.0, %v3755
      %v3757 = vpop.f32.mrf.mxu0
      %3758 = vmatprep.mubr.f32.mxu0 0.0
      %3759 = vmatmul.mubr.f32.gmra.mxu0 %v1425
      %v3760 = vpop.f32.mrf.mxu0
      %v3761 = vadd.f32 0.0, %v3760
      %v3762 = vpop.f32.mrf.mxu0
      %3763 = vmatprep.mubr.f32.mxu0 0.0
      %3764 = vmatmul.mubr.f32.gmra.mxu0 %v1428
      %v3765 = vpop.f32.mrf.mxu0
      %v3766 = vadd.f32 0.0, %v3765
      %v3767 = vpop.f32.mrf.mxu0
      %3768 = vdwg.mxu0
      %v3769 = vadd.f32 %v3680, %v3751
      %v3770 = vadd.f32 %v3681, %v3756
      %v3771 = vadd.f32 %v3682, %v3761
      %v3772 = vadd.f32 %v3683, %v3766
      %v3773 = vmul.f32 %v1530, %v1920
      %v3774 = vmul.f32 %v1535, %v1920
      %v3775 = vmul.f32 %v1540, %v1920
      %v3776 = vmul.f32 %v1545, %v1920
      %v3777 = vadd.f32 %v3769, %v3773
      %v3778 = vadd.f32 %v3770, %v3774
      %v3779 = vadd.f32 %v3771, %v3775
      %v3780 = vadd.f32 %v3772, %v3776
      %v3781 = vadd.f32 %v3777, %v1586
      %v3782 = vadd.f32 %v3778, %v1587
      %v3783 = vadd.f32 %v3779, %v1588
      %v3784 = vadd.f32 %v3780, %v1589
      %vm3785 = vcmp.le.f32.partialorder %v387, 6.0
      %vm3786 = vmand %vm3785, %vm425
      %v3787 = vsel %vm3786, 1.0, 0.0
      %v3788 = vadd.f32 %v428, 2.0
      %v3789 = vmul.f32 %v3788, 0.13333334
      %v3790 = vsub.f32 %v3789, 1.0
      %v3791 = vmul.f32 %v3790, %v3787
      %v3792 = vmul.f32 %v435, %v3787
      %3793 = vrot.lane.b32.xlu0 %v391, 121
      %v3794 = vpop.permute.xlu0 %3793
      %v3796 = vlaneseq
      %v3797 = vshrl.u32 %v3796, 7
      %v3798 = vsub.s32 0, %v3797
      %v3799 = vrot.slane %v3787, %v3798
      %v3801 = vmul.f32 %v3794, %v3799
      %v3803 = vsel %vm464, %v3801, 0
      %3805 = vmatprep.subr.mxu0 0.0
      %3806 = vmatpush1.msra.mxu0 0.0
      %3807 = vmatprep.subr.mxu0 0.0
      %3808 = vmatpush1.msra.mxu0 0.0
      %3809 = vmatprep.subr.mxu0 0.0
      %3810 = vmatpush1.msra.mxu0 0.0
      %3811 = vmatprep.subr.mxu0 0.0
      %3812 = vmatpush1.msra.mxu0 0.0
      %3813 = vmatprep.subr.mxu0 0.0
      %3814 = vmatpush1.msra.mxu0 0.0
      %3815 = vmatprep.subr.mxu0 0.0
      %3816 = vmatpush1.msra.mxu0 0.0
      %3817 = vmatprep.subr.mxu0 0.0
      %3818 = vmatpush1.msra.mxu0 0.0
      %3819 = vmatprep.subr.mxu0 0.0
      %3820 = vmatpush1.msra.mxu0 0.0
      %3821 = vmatprep.subr.mxu0 0.0
      %3822 = vmatpush1.msra.mxu0 0.0
      %3823 = vmatprep.subr.mxu0 0.0
      %3824 = vmatpush1.msra.mxu0 0.0
      %3825 = vmatprep.subr.mxu0 0.0
      %3826 = vmatpush1.msra.mxu0 0.0
      %3827 = vmatprep.subr.mxu0 0.0
      %3828 = vmatpush1.msra.mxu0 0.0
      %3829 = vmatprep.subr.mxu0 0.0
      %3830 = vmatpush1.msra.mxu0 0.0
      %3831 = vmatprep.subr.mxu0 0.0
      %3832 = vmatpush1.msra.mxu0 0.0
      %3833 = vmatprep.subr.mxu0 0.0
      %3834 = vmatpush1.msra.mxu0 0.0
      %3835 = vmatprep.subr.mxu0 0.0
      %3836 = vmatpush1.msra.mxu0 %v3803
      %3837 = vmatprep.subr.mxu0 0.0
      %3838 = vmatpush2.msra.mxu0 0.0
      %3839 = vmatprep.subr.mxu0 0.0
      %3840 = vmatpush2.msra.mxu0 0.0
      %3841 = vmatprep.subr.mxu0 0.0
      %3842 = vmatpush2.msra.mxu0 0.0
      %3843 = vmatprep.subr.mxu0 0.0
      %3844 = vmatpush2.msra.mxu0 0.0
      %3845 = vmatprep.subr.mxu0 0.0
      %3846 = vmatpush2.msra.mxu0 0.0
      %3847 = vmatprep.subr.mxu0 0.0
      %3848 = vmatpush2.msra.mxu0 0.0
      %3849 = vmatprep.subr.mxu0 0.0
      %3850 = vmatpush2.msra.mxu0 0.0
      %3851 = vmatprep.subr.mxu0 0.0
      %3852 = vmatpush2.msra.mxu0 0.0
      %3853 = vmatprep.subr.mxu0 0.0
      %3854 = vmatpush2.msra.mxu0 0.0
      %3855 = vmatprep.subr.mxu0 0.0
      %3856 = vmatpush2.msra.mxu0 0.0
      %3857 = vmatprep.subr.mxu0 0.0
      %3858 = vmatpush2.msra.mxu0 0.0
      %3859 = vmatprep.subr.mxu0 0.0
      %3860 = vmatpush2.msra.mxu0 0.0
      %3861 = vmatprep.subr.mxu0 0.0
      %3862 = vmatpush2.msra.mxu0 0.0
      %3863 = vmatprep.subr.mxu0 0.0
      %3864 = vmatpush2.msra.mxu0 0.0
      %3865 = vmatprep.subr.mxu0 0.0
      %3866 = vmatpush2.msra.mxu0 0.0
      %3867 = vmatprep.subr.mxu0 0.0
      %3868 = vmatpush2.msra.mxu0 0.0
      %3869 = vmatprep.mubr.f32.mxu0 0.0
      %3870 = vmatmul.mubr.f32.gmra.mxu0 %v1607
      %v3871 = vpop.f32.mrf.mxu0
      %v3872 = vadd.f32 0.0, %v3871
      %v3873 = vpop.f32.mrf.mxu0
      %3874 = vmatprep.mubr.f32.mxu0 0.0
      %3875 = vmatmul.mubr.f32.gmra.mxu0 %v1610
      %v3876 = vpop.f32.mrf.mxu0
      %v3877 = vadd.f32 0.0, %v3876
      %v3878 = vpop.f32.mrf.mxu0
      %3879 = vmatprep.mubr.f32.mxu0 0.0
      %3880 = vmatmul.mubr.f32.gmra.mxu0 %v1613
      %v3881 = vpop.f32.mrf.mxu0
      %v3882 = vadd.f32 0.0, %v3881
      %v3883 = vpop.f32.mrf.mxu0
      %3884 = vmatprep.mubr.f32.mxu0 0.0
      %3885 = vmatmul.mubr.f32.gmra.mxu0 %v1616
      %v3886 = vpop.f32.mrf.mxu0
      %v3887 = vadd.f32 0.0, %v3886
      %v3888 = vpop.f32.mrf.mxu0
      %3889 = vdwg.mxu0
      %v3890 = vadd.f32 %v3781, %v3872
      %v3891 = vadd.f32 %v3782, %v3877
      %v3892 = vadd.f32 %v3783, %v3882
      %v3893 = vadd.f32 %v3784, %v3887
      %v3895 = vlaneseq
      %v3896 = vshrl.u32 %v3895, 7
      %v3897 = vsub.s32 0, %v3896
      %v3898 = vrot.slane %v3791, %v3897
      %v3900 = vmul.f32 %v1718, %v3898
      %v3901 = vmul.f32 %v1723, %v3898
      %v3902 = vmul.f32 %v1728, %v3898
      %v3903 = vmul.f32 %v1733, %v3898
      %v3904 = vadd.f32 %v3890, %v3900
      %v3905 = vadd.f32 %v3891, %v3901
      %v3906 = vadd.f32 %v3892, %v3902
      %v3907 = vadd.f32 %v3893, %v3903
      %v3909 = vlaneseq
      %v3910 = vshrl.u32 %v3909, 7
      %v3911 = vsub.s32 0, %v3910
      %v3912 = vrot.slane %v3792, %v3911
      %v3914 = vmul.f32 %v1757, %v3912
      %v3915 = vmul.f32 %v1762, %v3912
      %v3916 = vmul.f32 %v1767, %v3912
      %v3917 = vmul.f32 %v1772, %v3912
      %v3918 = vadd.f32 %v3904, %v3914
      %v3919 = vadd.f32 %v3905, %v3915
      %v3920 = vadd.f32 %v3906, %v3916
      %v3921 = vadd.f32 %v3907, %v3917
      %v3922 = vsel %vm3785, 1.0, 0.0
      %v3923 = vmul.f32 %v3790, %v3922
      %v3924 = vmul.f32 %v637, %v3922
      %3925 = vrot.lane.b32.xlu0 %v389, 120
      %v3926 = vpop.permute.xlu0 %3925
      %v3928 = vlaneseq
      %v3929 = vshrl.u32 %v3928, 7
      %v3930 = vsub.s32 0, %v3929
      %v3931 = vrot.slane %v3922, %v3930
      %v3933 = vmul.f32 %v3926, %v3931
      %v3935 = vsel %vm464, %v3933, 0
      %3937 = vmatprep.subr.mxu0 0.0
      %3938 = vmatpush1.msra.mxu0 0.0
      %3939 = vmatprep.subr.mxu0 0.0
      %3940 = vmatpush1.msra.mxu0 0.0
      %3941 = vmatprep.subr.mxu0 0.0
      %3942 = vmatpush1.msra.mxu0 0.0
      %3943 = vmatprep.subr.mxu0 0.0
      %3944 = vmatpush1.msra.mxu0 0.0
      %3945 = vmatprep.subr.mxu0 0.0
      %3946 = vmatpush1.msra.mxu0 0.0
      %3947 = vmatprep.subr.mxu0 0.0
      %3948 = vmatpush1.msra.mxu0 0.0
      %3949 = vmatprep.subr.mxu0 0.0
      %3950 = vmatpush1.msra.mxu0 0.0
      %3951 = vmatprep.subr.mxu0 0.0
      %3952 = vmatpush1.msra.mxu0 0.0
      %3953 = vmatprep.subr.mxu0 0.0
      %3954 = vmatpush1.msra.mxu0 0.0
      %3955 = vmatprep.subr.mxu0 0.0
      %3956 = vmatpush1.msra.mxu0 0.0
      %3957 = vmatprep.subr.mxu0 0.0
      %3958 = vmatpush1.msra.mxu0 0.0
      %3959 = vmatprep.subr.mxu0 0.0
      %3960 = vmatpush1.msra.mxu0 0.0
      %3961 = vmatprep.subr.mxu0 0.0
      %3962 = vmatpush1.msra.mxu0 0.0
      %3963 = vmatprep.subr.mxu0 0.0
      %3964 = vmatpush1.msra.mxu0 0.0
      %3965 = vmatprep.subr.mxu0 0.0
      %3966 = vmatpush1.msra.mxu0 0.0
      %3967 = vmatprep.subr.mxu0 0.0
      %3968 = vmatpush1.msra.mxu0 %v3935
      %3969 = vmatprep.subr.mxu0 0.0
      %3970 = vmatpush2.msra.mxu0 0.0
      %3971 = vmatprep.subr.mxu0 0.0
      %3972 = vmatpush2.msra.mxu0 0.0
      %3973 = vmatprep.subr.mxu0 0.0
      %3974 = vmatpush2.msra.mxu0 0.0
      %3975 = vmatprep.subr.mxu0 0.0
      %3976 = vmatpush2.msra.mxu0 0.0
      %3977 = vmatprep.subr.mxu0 0.0
      %3978 = vmatpush2.msra.mxu0 0.0
      %3979 = vmatprep.subr.mxu0 0.0
      %3980 = vmatpush2.msra.mxu0 0.0
      %3981 = vmatprep.subr.mxu0 0.0
      %3982 = vmatpush2.msra.mxu0 0.0
      %3983 = vmatprep.subr.mxu0 0.0
      %3984 = vmatpush2.msra.mxu0 0.0
      %3985 = vmatprep.subr.mxu0 0.0
      %3986 = vmatpush2.msra.mxu0 0.0
      %3987 = vmatprep.subr.mxu0 0.0
      %3988 = vmatpush2.msra.mxu0 0.0
      %3989 = vmatprep.subr.mxu0 0.0
      %3990 = vmatpush2.msra.mxu0 0.0
      %3991 = vmatprep.subr.mxu0 0.0
      %3992 = vmatpush2.msra.mxu0 0.0
      %3993 = vmatprep.subr.mxu0 0.0
      %3994 = vmatpush2.msra.mxu0 0.0
      %3995 = vmatprep.subr.mxu0 0.0
      %3996 = vmatpush2.msra.mxu0 0.0
      %3997 = vmatprep.subr.mxu0 0.0
      %3998 = vmatpush2.msra.mxu0 0.0
      %3999 = vmatprep.subr.mxu0 0.0
      %4000 = vmatpush2.msra.mxu0 0.0
      %4001 = vmatprep.mubr.f32.mxu0 0.0
      %4002 = vmatmul.mubr.f32.gmra.mxu0 %v1788
      %v4003 = vpop.f32.mrf.mxu0
      %v4004 = vadd.f32 0.0, %v4003
      %v4005 = vpop.f32.mrf.mxu0
      %4006 = vmatprep.mubr.f32.mxu0 0.0
      %4007 = vmatmul.mubr.f32.gmra.mxu0 %v1791
      %v4008 = vpop.f32.mrf.mxu0
      %v4009 = vadd.f32 0.0, %v4008
      %v4010 = vpop.f32.mrf.mxu0
      %4011 = vmatprep.mubr.f32.mxu0 0.0
      %4012 = vmatmul.mubr.f32.gmra.mxu0 %v1794
      %v4013 = vpop.f32.mrf.mxu0
      %v4014 = vadd.f32 0.0, %v4013
      %v4015 = vpop.f32.mrf.mxu0
      %4016 = vmatprep.mubr.f32.mxu0 0.0
      %4017 = vmatmul.mubr.f32.gmra.mxu0 %v1797
      %v4018 = vpop.f32.mrf.mxu0
      %v4019 = vadd.f32 0.0, %v4018
      %v4020 = vpop.f32.mrf.mxu0
      %4021 = vdwg.mxu0
      %v4022 = vadd.f32 %v3918, %v4004
      %v4023 = vadd.f32 %v3919, %v4009
      %v4024 = vadd.f32 %v3920, %v4014
      %v4025 = vadd.f32 %v3921, %v4019
      %v4027 = vlaneseq
      %v4028 = vshrl.u32 %v4027, 7
      %v4029 = vsub.s32 0, %v4028
      %v4030 = vrot.slane %v3923, %v4029
      %v4032 = vmul.f32 %v1899, %v4030
      %v4033 = vmul.f32 %v1904, %v4030
      %v4034 = vmul.f32 %v1909, %v4030
      %v4035 = vmul.f32 %v1914, %v4030
      %v4036 = vadd.f32 %v4022, %v4032
      %v4037 = vadd.f32 %v4023, %v4033
      %v4038 = vadd.f32 %v4024, %v4034
      %v4039 = vadd.f32 %v4025, %v4035
      %v4041 = vlaneseq
      %v4042 = vshrl.u32 %v4041, 7
      %v4043 = vsub.s32 0, %v4042
      %v4044 = vrot.slane %v3924, %v4043
      %v4046 = vmul.f32 %v1938, %v4044
      %v4047 = vmul.f32 %v1943, %v4044
      %v4048 = vmul.f32 %v1948, %v4044
      %v4049 = vmul.f32 %v1953, %v4044
      %v4050 = vadd.f32 %v4036, %v4046
      %v4051 = vadd.f32 %v4037, %v4047
      %v4052 = vadd.f32 %v4038, %v4048
      %v4053 = vadd.f32 %v4039, %v4049
      %v4054 = vmul.f32 %v838, %v3922
      %4055 = vrot.lane.b32.xlu0 %v391, 120
      %v4056 = vpop.permute.xlu0 %4055
      %v4057 = vmul.f32 %v4056, %v3931
      %v4059 = vsel %vm464, %v4057, 0
      %4061 = vmatprep.subr.mxu0 0.0
      %4062 = vmatpush1.msra.mxu0 0.0
      %4063 = vmatprep.subr.mxu0 0.0
      %4064 = vmatpush1.msra.mxu0 0.0
      %4065 = vmatprep.subr.mxu0 0.0
      %4066 = vmatpush1.msra.mxu0 0.0
      %4067 = vmatprep.subr.mxu0 0.0
      %4068 = vmatpush1.msra.mxu0 0.0
      %4069 = vmatprep.subr.mxu0 0.0
      %4070 = vmatpush1.msra.mxu0 0.0
      %4071 = vmatprep.subr.mxu0 0.0
      %4072 = vmatpush1.msra.mxu0 0.0
      %4073 = vmatprep.subr.mxu0 0.0
      %4074 = vmatpush1.msra.mxu0 0.0
      %4075 = vmatprep.subr.mxu0 0.0
      %4076 = vmatpush1.msra.mxu0 0.0
      %4077 = vmatprep.subr.mxu0 0.0
      %4078 = vmatpush1.msra.mxu0 0.0
      %4079 = vmatprep.subr.mxu0 0.0
      %4080 = vmatpush1.msra.mxu0 0.0
      %4081 = vmatprep.subr.mxu0 0.0
      %4082 = vmatpush1.msra.mxu0 0.0
      %4083 = vmatprep.subr.mxu0 0.0
      %4084 = vmatpush1.msra.mxu0 0.0
      %4085 = vmatprep.subr.mxu0 0.0
      %4086 = vmatpush1.msra.mxu0 0.0
      %4087 = vmatprep.subr.mxu0 0.0
      %4088 = vmatpush1.msra.mxu0 0.0
      %4089 = vmatprep.subr.mxu0 0.0
      %4090 = vmatpush1.msra.mxu0 0.0
      %4091 = vmatprep.subr.mxu0 0.0
      %4092 = vmatpush1.msra.mxu0 %v4059
      %4093 = vmatprep.subr.mxu0 0.0
      %4094 = vmatpush2.msra.mxu0 0.0
      %4095 = vmatprep.subr.mxu0 0.0
      %4096 = vmatpush2.msra.mxu0 0.0
      %4097 = vmatprep.subr.mxu0 0.0
      %4098 = vmatpush2.msra.mxu0 0.0
      %4099 = vmatprep.subr.mxu0 0.0
      %4100 = vmatpush2.msra.mxu0 0.0
      %4101 = vmatprep.subr.mxu0 0.0
      %4102 = vmatpush2.msra.mxu0 0.0
      %4103 = vmatprep.subr.mxu0 0.0
      %4104 = vmatpush2.msra.mxu0 0.0
      %4105 = vmatprep.subr.mxu0 0.0
      %4106 = vmatpush2.msra.mxu0 0.0
      %4107 = vmatprep.subr.mxu0 0.0
      %4108 = vmatpush2.msra.mxu0 0.0
      %4109 = vmatprep.subr.mxu0 0.0
      %4110 = vmatpush2.msra.mxu0 0.0
      %4111 = vmatprep.subr.mxu0 0.0
      %4112 = vmatpush2.msra.mxu0 0.0
      %4113 = vmatprep.subr.mxu0 0.0
      %4114 = vmatpush2.msra.mxu0 0.0
      %4115 = vmatprep.subr.mxu0 0.0
      %4116 = vmatpush2.msra.mxu0 0.0
      %4117 = vmatprep.subr.mxu0 0.0
      %4118 = vmatpush2.msra.mxu0 0.0
      %4119 = vmatprep.subr.mxu0 0.0
      %4120 = vmatpush2.msra.mxu0 0.0
      %4121 = vmatprep.subr.mxu0 0.0
      %4122 = vmatpush2.msra.mxu0 0.0
      %4123 = vmatprep.subr.mxu0 0.0
      %4124 = vmatpush2.msra.mxu0 0.0
      %4125 = vmatprep.mubr.f32.mxu0 0.0
      %4126 = vmatmul.mubr.f32.gmra.mxu0 %v1969
      %v4127 = vpop.f32.mrf.mxu0
      %v4128 = vadd.f32 0.0, %v4127
      %v4129 = vpop.f32.mrf.mxu0
      %4130 = vmatprep.mubr.f32.mxu0 0.0
      %4131 = vmatmul.mubr.f32.gmra.mxu0 %v1972
      %v4132 = vpop.f32.mrf.mxu0
      %v4133 = vadd.f32 0.0, %v4132
      %v4134 = vpop.f32.mrf.mxu0
      %4135 = vmatprep.mubr.f32.mxu0 0.0
      %4136 = vmatmul.mubr.f32.gmra.mxu0 %v1975
      %v4137 = vpop.f32.mrf.mxu0
      %v4138 = vadd.f32 0.0, %v4137
      %v4139 = vpop.f32.mrf.mxu0
      %4140 = vmatprep.mubr.f32.mxu0 0.0
      %4141 = vmatmul.mubr.f32.gmra.mxu0 %v1978
      %v4142 = vpop.f32.mrf.mxu0
      %v4143 = vadd.f32 0.0, %v4142
      %v4144 = vpop.f32.mrf.mxu0
      %4145 = vdwg.mxu0
      %v4146 = vadd.f32 %v4050, %v4128
      %v4147 = vadd.f32 %v4051, %v4133
      %v4148 = vadd.f32 %v4052, %v4138
      %v4149 = vadd.f32 %v4053, %v4143
      %v4150 = vmul.f32 %v2080, %v4030
      %v4151 = vmul.f32 %v2085, %v4030
      %v4152 = vmul.f32 %v2090, %v4030
      %v4153 = vmul.f32 %v2095, %v4030
      %v4154 = vadd.f32 %v4146, %v4150
      %v4155 = vadd.f32 %v4147, %v4151
      %v4156 = vadd.f32 %v4148, %v4152
      %v4157 = vadd.f32 %v4149, %v4153
      %v4159 = vlaneseq
      %v4160 = vshrl.u32 %v4159, 7
      %v4161 = vsub.s32 0, %v4160
      %v4162 = vrot.slane %v4054, %v4161
      %v4164 = vmul.f32 %v2113, %v4162
      %v4165 = vmul.f32 %v2118, %v4162
      %v4166 = vmul.f32 %v2123, %v4162
      %v4167 = vmul.f32 %v2128, %v4162
      %v4168 = vadd.f32 %v4154, %v4164
      %v4169 = vadd.f32 %v4155, %v4165
      %v4170 = vadd.f32 %v4156, %v4166
      %v4171 = vadd.f32 %v4157, %v4167
      %vm4172 = vcmp.gt.f32.partialorder %v4168, 0.0
      %vm4173 = vcmp.gt.f32.partialorder %v4169, 0.0
      %vm4174 = vcmp.gt.f32.partialorder %v4170, 0.0
      %vm4175 = vcmp.gt.f32.partialorder %v4171, 0.0
      %v4176 = vmul.f32 %v4168, 0.2
      %v4177 = vmul.f32 %v4169, 0.2
      %v4178 = vmul.f32 %v4170, 0.2
      %v4179 = vmul.f32 %v4171, 0.2
      %v4180 = vsel %vm4172, %v4168, %v4176
      %v4181 = vsel %vm4173, %v4169, %v4177
      %v4182 = vsel %vm4174, %v4170, %v4178
      %v4183 = vsel %vm4175, %v4171, %v4179
      %4184 = vmatprep.subr.mxu0 0.0
      %4185 = vmatpush1.msra.mxu0 0.0
      %4186 = vmatprep.subr.mxu0 0.0
      %4187 = vmatpush1.msra.mxu0 0.0
      %4188 = vmatprep.subr.mxu0 0.0
      %4189 = vmatpush1.msra.mxu0 0.0
      %4190 = vmatprep.subr.mxu0 0.0
      %4191 = vmatpush1.msra.mxu0 0.0
      %4192 = vmatprep.subr.mxu0 0.0
      %4193 = vmatpush1.msra.mxu0 0.0
      %4194 = vmatprep.subr.mxu0 0.0
      %4195 = vmatpush1.msra.mxu0 0.0
      %4196 = vmatprep.subr.mxu0 0.0
      %4197 = vmatpush1.msra.mxu0 0.0
      %4198 = vmatprep.subr.mxu0 0.0
      %4199 = vmatpush1.msra.mxu0 0.0
      %4200 = vmatprep.subr.mxu0 0.0
      %4201 = vmatpush1.msra.mxu0 0.0
      %4202 = vmatprep.subr.mxu0 0.0
      %4203 = vmatpush1.msra.mxu0 0.0
      %4204 = vmatprep.subr.mxu0 0.0
      %4205 = vmatpush1.msra.mxu0 0.0
      %4206 = vmatprep.subr.mxu0 0.0
      %4207 = vmatpush1.msra.mxu0 0.0
      %4208 = vmatprep.subr.mxu0 0.0
      %4209 = vmatpush1.msra.mxu0 0.0
      %4210 = vmatprep.subr.mxu0 0.0
      %4211 = vmatpush1.msra.mxu0 0.0
      %4212 = vmatprep.subr.mxu0 0.0
      %4213 = vmatpush1.msra.mxu0 0.0
      %4214 = vmatprep.subr.mxu0 0.0
      %4215 = vmatpush1.msra.mxu0 %v1244
      %4216 = vmatprep.subr.mxu0 0.0
      %4217 = vmatpush2.msra.mxu0 0.0
      %4218 = vmatprep.subr.mxu0 0.0
      %4219 = vmatpush2.msra.mxu0 0.0
      %4220 = vmatprep.subr.mxu0 0.0
      %4221 = vmatpush2.msra.mxu0 0.0
      %4222 = vmatprep.subr.mxu0 0.0
      %4223 = vmatpush2.msra.mxu0 0.0
      %4224 = vmatprep.subr.mxu0 0.0
      %4225 = vmatpush2.msra.mxu0 0.0
      %4226 = vmatprep.subr.mxu0 0.0
      %4227 = vmatpush2.msra.mxu0 0.0
      %4228 = vmatprep.subr.mxu0 0.0
      %4229 = vmatpush2.msra.mxu0 0.0
      %4230 = vmatprep.subr.mxu0 0.0
      %4231 = vmatpush2.msra.mxu0 0.0
      %4232 = vmatprep.subr.mxu0 0.0
      %4233 = vmatpush2.msra.mxu0 0.0
      %4234 = vmatprep.subr.mxu0 0.0
      %4235 = vmatpush2.msra.mxu0 0.0
      %4236 = vmatprep.subr.mxu0 0.0
      %4237 = vmatpush2.msra.mxu0 0.0
      %4238 = vmatprep.subr.mxu0 0.0
      %4239 = vmatpush2.msra.mxu0 0.0
      %4240 = vmatprep.subr.mxu0 0.0
      %4241 = vmatpush2.msra.mxu0 0.0
      %4242 = vmatprep.subr.mxu0 0.0
      %4243 = vmatpush2.msra.mxu0 0.0
      %4244 = vmatprep.subr.mxu0 0.0
      %4245 = vmatpush2.msra.mxu0 0.0
      %4246 = vmatprep.subr.mxu0 0.0
      %4247 = vmatpush2.msra.mxu0 0.0
      %4248 = vmatprep.mubr.f32.mxu0 0.0
      %4249 = vmatmul.mubr.f32.gmra.mxu0 %v453
      %v4250 = vpop.f32.mrf.mxu0
      %v4251 = vadd.f32 0.0, %v4250
      %v4252 = vpop.f32.mrf.mxu0
      %4253 = vmatprep.mubr.f32.mxu0 0.0
      %4254 = vmatmul.mubr.f32.gmra.mxu0 %v456
      %v4255 = vpop.f32.mrf.mxu0
      %v4256 = vadd.f32 0.0, %v4255
      %v4257 = vpop.f32.mrf.mxu0
      %4258 = vmatprep.mubr.f32.mxu0 0.0
      %4259 = vmatmul.mubr.f32.gmra.mxu0 %v459
      %v4260 = vpop.f32.mrf.mxu0
      %v4261 = vadd.f32 0.0, %v4260
      %v4262 = vpop.f32.mrf.mxu0
      %4263 = vmatprep.mubr.f32.mxu0 0.0
      %4264 = vmatmul.mubr.f32.gmra.mxu0 %v462
      %v4265 = vpop.f32.mrf.mxu0
      %v4266 = vadd.f32 0.0, %v4265
      %v4267 = vpop.f32.mrf.mxu0
      %4268 = vdwg.mxu0
      %v4269 = vadd.f32 %v420, %v4251
      %v4270 = vadd.f32 %v421, %v4256
      %v4271 = vadd.f32 %v422, %v4261
      %v4272 = vadd.f32 %v423, %v4266
      %v4273 = vmul.f32 %v564, %v1364
      %v4274 = vmul.f32 %v569, %v1364
      %v4275 = vmul.f32 %v574, %v1364
      %v4276 = vmul.f32 %v579, %v1364
      %v4277 = vadd.f32 %v4269, %v4273
      %v4278 = vadd.f32 %v4270, %v4274
      %v4279 = vadd.f32 %v4271, %v4275
      %v4280 = vadd.f32 %v4272, %v4276
      %v4281 = vmul.f32 %v603, %v1403
      %v4282 = vmul.f32 %v608, %v1403
      %v4283 = vmul.f32 %v613, %v1403
      %v4284 = vmul.f32 %v618, %v1403
      %v4285 = vadd.f32 %v4277, %v4281
      %v4286 = vadd.f32 %v4278, %v4282
      %v4287 = vadd.f32 %v4279, %v4283
      %v4288 = vadd.f32 %v4280, %v4284
      %4289 = vmatprep.subr.mxu0 0.0
      %4290 = vmatpush1.msra.mxu0 0.0
      %4291 = vmatprep.subr.mxu0 0.0
      %4292 = vmatpush1.msra.mxu0 0.0
      %4293 = vmatprep.subr.mxu0 0.0
      %4294 = vmatpush1.msra.mxu0 0.0
      %4295 = vmatprep.subr.mxu0 0.0
      %4296 = vmatpush1.msra.mxu0 0.0
      %4297 = vmatprep.subr.mxu0 0.0
      %4298 = vmatpush1.msra.mxu0 0.0
      %4299 = vmatprep.subr.mxu0 0.0
      %4300 = vmatpush1.msra.mxu0 0.0
      %4301 = vmatprep.subr.mxu0 0.0
      %4302 = vmatpush1.msra.mxu0 0.0
      %4303 = vmatprep.subr.mxu0 0.0
      %4304 = vmatpush1.msra.mxu0 0.0
      %4305 = vmatprep.subr.mxu0 0.0
      %4306 = vmatpush1.msra.mxu0 0.0
      %4307 = vmatprep.subr.mxu0 0.0
      %4308 = vmatpush1.msra.mxu0 0.0
      %4309 = vmatprep.subr.mxu0 0.0
      %4310 = vmatpush1.msra.mxu0 0.0
      %4311 = vmatprep.subr.mxu0 0.0
      %4312 = vmatpush1.msra.mxu0 0.0
      %4313 = vmatprep.subr.mxu0 0.0
      %4314 = vmatpush1.msra.mxu0 0.0
      %4315 = vmatprep.subr.mxu0 0.0
      %4316 = vmatpush1.msra.mxu0 0.0
      %4317 = vmatprep.subr.mxu0 0.0
      %4318 = vmatpush1.msra.mxu0 0.0
      %4319 = vmatprep.subr.mxu0 0.0
      %4320 = vmatpush1.msra.mxu0 %v1431
      %4321 = vmatprep.subr.mxu0 0.0
      %4322 = vmatpush2.msra.mxu0 0.0
      %4323 = vmatprep.subr.mxu0 0.0
      %4324 = vmatpush2.msra.mxu0 0.0
      %4325 = vmatprep.subr.mxu0 0.0
      %4326 = vmatpush2.msra.mxu0 0.0
      %4327 = vmatprep.subr.mxu0 0.0
      %4328 = vmatpush2.msra.mxu0 0.0
      %4329 = vmatprep.subr.mxu0 0.0
      %4330 = vmatpush2.msra.mxu0 0.0
      %4331 = vmatprep.subr.mxu0 0.0
      %4332 = vmatpush2.msra.mxu0 0.0
      %4333 = vmatprep.subr.mxu0 0.0
      %4334 = vmatpush2.msra.mxu0 0.0
      %4335 = vmatprep.subr.mxu0 0.0
      %4336 = vmatpush2.msra.mxu0 0.0
      %4337 = vmatprep.subr.mxu0 0.0
      %4338 = vmatpush2.msra.mxu0 0.0
      %4339 = vmatprep.subr.mxu0 0.0
      %4340 = vmatpush2.msra.mxu0 0.0
      %4341 = vmatprep.subr.mxu0 0.0
      %4342 = vmatpush2.msra.mxu0 0.0
      %4343 = vmatprep.subr.mxu0 0.0
      %4344 = vmatpush2.msra.mxu0 0.0
      %4345 = vmatprep.subr.mxu0 0.0
      %4346 = vmatpush2.msra.mxu0 0.0
      %4347 = vmatprep.subr.mxu0 0.0
      %4348 = vmatpush2.msra.mxu0 0.0
      %4349 = vmatprep.subr.mxu0 0.0
      %4350 = vmatpush2.msra.mxu0 0.0
      %4351 = vmatprep.subr.mxu0 0.0
      %4352 = vmatpush2.msra.mxu0 0.0
      %4353 = vmatprep.mubr.f32.mxu0 0.0
      %4354 = vmatmul.mubr.f32.gmra.mxu0 %v655
      %v4355 = vpop.f32.mrf.mxu0
      %v4356 = vadd.f32 0.0, %v4355
      %v4357 = vpop.f32.mrf.mxu0
      %4358 = vmatprep.mubr.f32.mxu0 0.0
      %4359 = vmatmul.mubr.f32.gmra.mxu0 %v658
      %v4360 = vpop.f32.mrf.mxu0
      %v4361 = vadd.f32 0.0, %v4360
      %v4362 = vpop.f32.mrf.mxu0
      %4363 = vmatprep.mubr.f32.mxu0 0.0
      %4364 = vmatmul.mubr.f32.gmra.mxu0 %v661
      %v4365 = vpop.f32.mrf.mxu0
      %v4366 = vadd.f32 0.0, %v4365
      %v4367 = vpop.f32.mrf.mxu0
      %4368 = vmatprep.mubr.f32.mxu0 0.0
      %4369 = vmatmul.mubr.f32.gmra.mxu0 %v664
      %v4370 = vpop.f32.mrf.mxu0
      %v4371 = vadd.f32 0.0, %v4370
      %v4372 = vpop.f32.mrf.mxu0
      %4373 = vdwg.mxu0
      %v4374 = vadd.f32 %v4285, %v4356
      %v4375 = vadd.f32 %v4286, %v4361
      %v4376 = vadd.f32 %v4287, %v4366
      %v4377 = vadd.f32 %v4288, %v4371
      %v4378 = vadd.f32 %v4374, %v3361
      %v4379 = vadd.f32 %v4375, %v3362
      %v4380 = vadd.f32 %v4376, %v3363
      %v4381 = vadd.f32 %v4377, %v3364
      %v4382 = vmul.f32 %v805, %v1584
      %v4383 = vmul.f32 %v810, %v1584
      %v4384 = vmul.f32 %v815, %v1584
      %v4385 = vmul.f32 %v820, %v1584
      %v4386 = vadd.f32 %v4378, %v4382
      %v4387 = vadd.f32 %v4379, %v4383
      %v4388 = vadd.f32 %v4380, %v4384
      %v4389 = vadd.f32 %v4381, %v4385
      %4390 = vmatprep.subr.mxu0 0.0
      %4391 = vmatpush1.msra.mxu0 0.0
      %4392 = vmatprep.subr.mxu0 0.0
      %4393 = vmatpush1.msra.mxu0 0.0
      %4394 = vmatprep.subr.mxu0 0.0
      %4395 = vmatpush1.msra.mxu0 0.0
      %4396 = vmatprep.subr.mxu0 0.0
      %4397 = vmatpush1.msra.mxu0 0.0
      %4398 = vmatprep.subr.mxu0 0.0
      %4399 = vmatpush1.msra.mxu0 0.0
      %4400 = vmatprep.subr.mxu0 0.0
      %4401 = vmatpush1.msra.mxu0 0.0
      %4402 = vmatprep.subr.mxu0 0.0
      %4403 = vmatpush1.msra.mxu0 0.0
      %4404 = vmatprep.subr.mxu0 0.0
      %4405 = vmatpush1.msra.mxu0 0.0
      %4406 = vmatprep.subr.mxu0 0.0
      %4407 = vmatpush1.msra.mxu0 0.0
      %4408 = vmatprep.subr.mxu0 0.0
      %4409 = vmatpush1.msra.mxu0 0.0
      %4410 = vmatprep.subr.mxu0 0.0
      %4411 = vmatpush1.msra.mxu0 0.0
      %4412 = vmatprep.subr.mxu0 0.0
      %4413 = vmatpush1.msra.mxu0 0.0
      %4414 = vmatprep.subr.mxu0 0.0
      %4415 = vmatpush1.msra.mxu0 0.0
      %4416 = vmatprep.subr.mxu0 0.0
      %4417 = vmatpush1.msra.mxu0 0.0
      %4418 = vmatprep.subr.mxu0 0.0
      %4419 = vmatpush1.msra.mxu0 0.0
      %4420 = vmatprep.subr.mxu0 0.0
      %4421 = vmatpush1.msra.mxu0 %v2712
      %4422 = vmatprep.subr.mxu0 0.0
      %4423 = vmatpush2.msra.mxu0 0.0
      %4424 = vmatprep.subr.mxu0 0.0
      %4425 = vmatpush2.msra.mxu0 0.0
      %4426 = vmatprep.subr.mxu0 0.0
      %4427 = vmatpush2.msra.mxu0 0.0
      %4428 = vmatprep.subr.mxu0 0.0
      %4429 = vmatpush2.msra.mxu0 0.0
      %4430 = vmatprep.subr.mxu0 0.0
      %4431 = vmatpush2.msra.mxu0 0.0
      %4432 = vmatprep.subr.mxu0 0.0
      %4433 = vmatpush2.msra.mxu0 0.0
      %4434 = vmatprep.subr.mxu0 0.0
      %4435 = vmatpush2.msra.mxu0 0.0
      %4436 = vmatprep.subr.mxu0 0.0
      %4437 = vmatpush2.msra.mxu0 0.0
      %4438 = vmatprep.subr.mxu0 0.0
      %4439 = vmatpush2.msra.mxu0 0.0
      %4440 = vmatprep.subr.mxu0 0.0
      %4441 = vmatpush2.msra.mxu0 0.0
      %4442 = vmatprep.subr.mxu0 0.0
      %4443 = vmatpush2.msra.mxu0 0.0
      %4444 = vmatprep.subr.mxu0 0.0
      %4445 = vmatpush2.msra.mxu0 0.0
      %4446 = vmatprep.subr.mxu0 0.0
      %4447 = vmatpush2.msra.mxu0 0.0
      %4448 = vmatprep.subr.mxu0 0.0
      %4449 = vmatpush2.msra.mxu0 0.0
      %4450 = vmatprep.subr.mxu0 0.0
      %4451 = vmatpush2.msra.mxu0 0.0
      %4452 = vmatprep.subr.mxu0 0.0
      %4453 = vmatpush2.msra.mxu0 0.0
      %4454 = vmatprep.mubr.f32.mxu0 0.0
      %4455 = vmatmul.mubr.f32.gmra.mxu0 %v849
      %v4456 = vpop.f32.mrf.mxu0
      %v4457 = vadd.f32 0.0, %v4456
      %v4458 = vpop.f32.mrf.mxu0
      %4459 = vmatprep.mubr.f32.mxu0 0.0
      %4460 = vmatmul.mubr.f32.gmra.mxu0 %v852
      %v4461 = vpop.f32.mrf.mxu0
      %v4462 = vadd.f32 0.0, %v4461
      %v4463 = vpop.f32.mrf.mxu0
      %4464 = vmatprep.mubr.f32.mxu0 0.0
      %4465 = vmatmul.mubr.f32.gmra.mxu0 %v855
      %v4466 = vpop.f32.mrf.mxu0
      %v4467 = vadd.f32 0.0, %v4466
      %v4468 = vpop.f32.mrf.mxu0
      %4469 = vmatprep.mubr.f32.mxu0 0.0
      %4470 = vmatmul.mubr.f32.gmra.mxu0 %v858
      %v4471 = vpop.f32.mrf.mxu0
      %v4472 = vadd.f32 0.0, %v4471
      %v4473 = vpop.f32.mrf.mxu0
      %4474 = vdwg.mxu0
      %v4475 = vadd.f32 %v4386, %v4457
      %v4476 = vadd.f32 %v4387, %v4462
      %v4477 = vadd.f32 %v4388, %v4467
      %v4478 = vadd.f32 %v4389, %v4472
      %v4479 = vmul.f32 %v960, %v2807
      %v4480 = vmul.f32 %v965, %v2807
      %v4481 = vmul.f32 %v970, %v2807
      %v4482 = vmul.f32 %v975, %v2807
      %v4483 = vadd.f32 %v4475, %v4479
      %v4484 = vadd.f32 %v4476, %v4480
      %v4485 = vadd.f32 %v4477, %v4481
      %v4486 = vadd.f32 %v4478, %v4482
      %v4487 = vmul.f32 %v993, %v2821
      %v4488 = vmul.f32 %v998, %v2821
      %v4489 = vmul.f32 %v1003, %v2821
      %v4490 = vmul.f32 %v1008, %v2821
      %v4491 = vadd.f32 %v4483, %v4487
      %v4492 = vadd.f32 %v4484, %v4488
      %v4493 = vadd.f32 %v4485, %v4489
      %v4494 = vadd.f32 %v4486, %v4490
      %4495 = vmatprep.subr.mxu0 0.0
      %4496 = vmatpush1.msra.mxu0 0.0
      %4497 = vmatprep.subr.mxu0 0.0
      %4498 = vmatpush1.msra.mxu0 0.0
      %4499 = vmatprep.subr.mxu0 0.0
      %4500 = vmatpush1.msra.mxu0 0.0
      %4501 = vmatprep.subr.mxu0 0.0
      %4502 = vmatpush1.msra.mxu0 0.0
      %4503 = vmatprep.subr.mxu0 0.0
      %4504 = vmatpush1.msra.mxu0 0.0
      %4505 = vmatprep.subr.mxu0 0.0
      %4506 = vmatpush1.msra.mxu0 0.0
      %4507 = vmatprep.subr.mxu0 0.0
      %4508 = vmatpush1.msra.mxu0 0.0
      %4509 = vmatprep.subr.mxu0 0.0
      %4510 = vmatpush1.msra.mxu0 0.0
      %4511 = vmatprep.subr.mxu0 0.0
      %4512 = vmatpush1.msra.mxu0 0.0
      %4513 = vmatprep.subr.mxu0 0.0
      %4514 = vmatpush1.msra.mxu0 0.0
      %4515 = vmatprep.subr.mxu0 0.0
      %4516 = vmatpush1.msra.mxu0 0.0
      %4517 = vmatprep.subr.mxu0 0.0
      %4518 = vmatpush1.msra.mxu0 0.0
      %4519 = vmatprep.subr.mxu0 0.0
      %4520 = vmatpush1.msra.mxu0 0.0
      %4521 = vmatprep.subr.mxu0 0.0
      %4522 = vmatpush1.msra.mxu0 0.0
      %4523 = vmatprep.subr.mxu0 0.0
      %4524 = vmatpush1.msra.mxu0 0.0
      %4525 = vmatprep.subr.mxu0 0.0
      %4526 = vmatpush1.msra.mxu0 %v1800
      %4527 = vmatprep.subr.mxu0 0.0
      %4528 = vmatpush2.msra.mxu0 0.0
      %4529 = vmatprep.subr.mxu0 0.0
      %4530 = vmatpush2.msra.mxu0 0.0
      %4531 = vmatprep.subr.mxu0 0.0
      %4532 = vmatpush2.msra.mxu0 0.0
      %4533 = vmatprep.subr.mxu0 0.0
      %4534 = vmatpush2.msra.mxu0 0.0
      %4535 = vmatprep.subr.mxu0 0.0
      %4536 = vmatpush2.msra.mxu0 0.0
      %4537 = vmatprep.subr.mxu0 0.0
      %4538 = vmatpush2.msra.mxu0 0.0
      %4539 = vmatprep.subr.mxu0 0.0
      %4540 = vmatpush2.msra.mxu0 0.0
      %4541 = vmatprep.subr.mxu0 0.0
      %4542 = vmatpush2.msra.mxu0 0.0
      %4543 = vmatprep.subr.mxu0 0.0
      %4544 = vmatpush2.msra.mxu0 0.0
      %4545 = vmatprep.subr.mxu0 0.0
      %4546 = vmatpush2.msra.mxu0 0.0
      %4547 = vmatprep.subr.mxu0 0.0
      %4548 = vmatpush2.msra.mxu0 0.0
      %4549 = vmatprep.subr.mxu0 0.0
      %4550 = vmatpush2.msra.mxu0 0.0
      %4551 = vmatprep.subr.mxu0 0.0
      %4552 = vmatpush2.msra.mxu0 0.0
      %4553 = vmatprep.subr.mxu0 0.0
      %4554 = vmatpush2.msra.mxu0 0.0
      %4555 = vmatprep.subr.mxu0 0.0
      %4556 = vmatpush2.msra.mxu0 0.0
      %4557 = vmatprep.subr.mxu0 0.0
      %4558 = vmatpush2.msra.mxu0 0.0
      %4559 = vmatprep.mubr.f32.mxu0 0.0
      %4560 = vmatmul.mubr.f32.gmra.mxu0 %v1045
      %v4561 = vpop.f32.mrf.mxu0
      %v4562 = vadd.f32 0.0, %v4561
      %v4563 = vpop.f32.mrf.mxu0
      %4564 = vmatprep.mubr.f32.mxu0 0.0
      %4565 = vmatmul.mubr.f32.gmra.mxu0 %v1048
      %v4566 = vpop.f32.mrf.mxu0
      %v4567 = vadd.f32 0.0, %v4566
      %v4568 = vpop.f32.mrf.mxu0
      %4569 = vmatprep.mubr.f32.mxu0 0.0
      %4570 = vmatmul.mubr.f32.gmra.mxu0 %v1051
      %v4571 = vpop.f32.mrf.mxu0
      %v4572 = vadd.f32 0.0, %v4571
      %v4573 = vpop.f32.mrf.mxu0
      %4574 = vmatprep.mubr.f32.mxu0 0.0
      %4575 = vmatmul.mubr.f32.gmra.mxu0 %v1054
      %v4576 = vpop.f32.mrf.mxu0
      %v4577 = vadd.f32 0.0, %v4576
      %v4578 = vpop.f32.mrf.mxu0
      %4579 = vdwg.mxu0
      %v4580 = vadd.f32 %v4491, %v4562
      %v4581 = vadd.f32 %v4492, %v4567
      %v4582 = vadd.f32 %v4493, %v4572
      %v4583 = vadd.f32 %v4494, %v4577
      %v4584 = vmul.f32 %v1156, %v1920
      %v4585 = vmul.f32 %v1161, %v1920
      %v4586 = vmul.f32 %v1166, %v1920
      %v4587 = vmul.f32 %v1171, %v1920
      %v4588 = vadd.f32 %v4580, %v4584
      %v4589 = vadd.f32 %v4581, %v4585
      %v4590 = vadd.f32 %v4582, %v4586
      %v4591 = vadd.f32 %v4583, %v4587
      %v4592 = vadd.f32 %v4588, %v2590
      %v4593 = vadd.f32 %v4589, %v2591
      %v4594 = vadd.f32 %v4590, %v2592
      %v4595 = vadd.f32 %v4591, %v2593
      %4596 = vmatprep.subr.mxu0 0.0
      %4597 = vmatpush1.msra.mxu0 0.0
      %4598 = vmatprep.subr.mxu0 0.0
      %4599 = vmatpush1.msra.mxu0 0.0
      %4600 = vmatprep.subr.mxu0 0.0
      %4601 = vmatpush1.msra.mxu0 0.0
      %4602 = vmatprep.subr.mxu0 0.0
      %4603 = vmatpush1.msra.mxu0 0.0
      %4604 = vmatprep.subr.mxu0 0.0
      %4605 = vmatpush1.msra.mxu0 0.0
      %4606 = vmatprep.subr.mxu0 0.0
      %4607 = vmatpush1.msra.mxu0 0.0
      %4608 = vmatprep.subr.mxu0 0.0
      %4609 = vmatpush1.msra.mxu0 0.0
      %4610 = vmatprep.subr.mxu0 0.0
      %4611 = vmatpush1.msra.mxu0 0.0
      %4612 = vmatprep.subr.mxu0 0.0
      %4613 = vmatpush1.msra.mxu0 0.0
      %4614 = vmatprep.subr.mxu0 0.0
      %4615 = vmatpush1.msra.mxu0 0.0
      %4616 = vmatprep.subr.mxu0 0.0
      %4617 = vmatpush1.msra.mxu0 0.0
      %4618 = vmatprep.subr.mxu0 0.0
      %4619 = vmatpush1.msra.mxu0 0.0
      %4620 = vmatprep.subr.mxu0 0.0
      %4621 = vmatpush1.msra.mxu0 0.0
      %4622 = vmatprep.subr.mxu0 0.0
      %4623 = vmatpush1.msra.mxu0 0.0
      %4624 = vmatprep.subr.mxu0 0.0
      %4625 = vmatpush1.msra.mxu0 0.0
      %4626 = vmatprep.subr.mxu0 0.0
      %4627 = vmatpush1.msra.mxu0 %v1981
      %4628 = vmatprep.subr.mxu0 0.0
      %4629 = vmatpush2.msra.mxu0 0.0
      %4630 = vmatprep.subr.mxu0 0.0
      %4631 = vmatpush2.msra.mxu0 0.0
      %4632 = vmatprep.subr.mxu0 0.0
      %4633 = vmatpush2.msra.mxu0 0.0
      %4634 = vmatprep.subr.mxu0 0.0
      %4635 = vmatpush2.msra.mxu0 0.0
      %4636 = vmatprep.subr.mxu0 0.0
      %4637 = vmatpush2.msra.mxu0 0.0
      %4638 = vmatprep.subr.mxu0 0.0
      %4639 = vmatpush2.msra.mxu0 0.0
      %4640 = vmatprep.subr.mxu0 0.0
      %4641 = vmatpush2.msra.mxu0 0.0
      %4642 = vmatprep.subr.mxu0 0.0
      %4643 = vmatpush2.msra.mxu0 0.0
      %4644 = vmatprep.subr.mxu0 0.0
      %4645 = vmatpush2.msra.mxu0 0.0
      %4646 = vmatprep.subr.mxu0 0.0
      %4647 = vmatpush2.msra.mxu0 0.0
      %4648 = vmatprep.subr.mxu0 0.0
      %4649 = vmatpush2.msra.mxu0 0.0
      %4650 = vmatprep.subr.mxu0 0.0
      %4651 = vmatpush2.msra.mxu0 0.0
      %4652 = vmatprep.subr.mxu0 0.0
      %4653 = vmatpush2.msra.mxu0 0.0
      %4654 = vmatprep.subr.mxu0 0.0
      %4655 = vmatpush2.msra.mxu0 0.0
      %4656 = vmatprep.subr.mxu0 0.0
      %4657 = vmatpush2.msra.mxu0 0.0
      %4658 = vmatprep.subr.mxu0 0.0
      %4659 = vmatpush2.msra.mxu0 0.0
      %4660 = vmatprep.mubr.f32.mxu0 0.0
      %4661 = vmatmul.mubr.f32.gmra.mxu0 %v1232
      %v4662 = vpop.f32.mrf.mxu0
      %v4663 = vadd.f32 0.0, %v4662
      %v4664 = vpop.f32.mrf.mxu0
      %4665 = vmatprep.mubr.f32.mxu0 0.0
      %4666 = vmatmul.mubr.f32.gmra.mxu0 %v1235
      %v4667 = vpop.f32.mrf.mxu0
      %v4668 = vadd.f32 0.0, %v4667
      %v4669 = vpop.f32.mrf.mxu0
      %4670 = vmatprep.mubr.f32.mxu0 0.0
      %4671 = vmatmul.mubr.f32.gmra.mxu0 %v1238
      %v4672 = vpop.f32.mrf.mxu0
      %v4673 = vadd.f32 0.0, %v4672
      %v4674 = vpop.f32.mrf.mxu0
      %4675 = vmatprep.mubr.f32.mxu0 0.0
      %4676 = vmatmul.mubr.f32.gmra.mxu0 %v1241
      %v4677 = vpop.f32.mrf.mxu0
      %v4678 = vadd.f32 0.0, %v4677
      %v4679 = vpop.f32.mrf.mxu0
      %4680 = vdwg.mxu0
      %v4681 = vadd.f32 %v4592, %v4663
      %v4682 = vadd.f32 %v4593, %v4668
      %v4683 = vadd.f32 %v4594, %v4673
      %v4684 = vadd.f32 %v4595, %v4678
      %v4685 = vadd.f32 %v4681, %v3672
      %v4686 = vadd.f32 %v4682, %v3673
      %v4687 = vadd.f32 %v4683, %v3674
      %v4688 = vadd.f32 %v4684, %v3675
      %v4689 = vadd.f32 %v4685, %v2691
      %v4690 = vadd.f32 %v4686, %v2692
      %v4691 = vadd.f32 %v4687, %v2693
      %v4692 = vadd.f32 %v4688, %v2694
      %4693 = vmatprep.subr.mxu0 0.0
      %4694 = vmatpush1.msra.mxu0 0.0
      %4695 = vmatprep.subr.mxu0 0.0
      %4696 = vmatpush1.msra.mxu0 0.0
      %4697 = vmatprep.subr.mxu0 0.0
      %4698 = vmatpush1.msra.mxu0 0.0
      %4699 = vmatprep.subr.mxu0 0.0
      %4700 = vmatpush1.msra.mxu0 0.0
      %4701 = vmatprep.subr.mxu0 0.0
      %4702 = vmatpush1.msra.mxu0 0.0
      %4703 = vmatprep.subr.mxu0 0.0
      %4704 = vmatpush1.msra.mxu0 0.0
      %4705 = vmatprep.subr.mxu0 0.0
      %4706 = vmatpush1.msra.mxu0 0.0
      %4707 = vmatprep.subr.mxu0 0.0
      %4708 = vmatpush1.msra.mxu0 0.0
      %4709 = vmatprep.subr.mxu0 0.0
      %4710 = vmatpush1.msra.mxu0 0.0
      %4711 = vmatprep.subr.mxu0 0.0
      %4712 = vmatpush1.msra.mxu0 0.0
      %4713 = vmatprep.subr.mxu0 0.0
      %4714 = vmatpush1.msra.mxu0 0.0
      %4715 = vmatprep.subr.mxu0 0.0
      %4716 = vmatpush1.msra.mxu0 0.0
      %4717 = vmatprep.subr.mxu0 0.0
      %4718 = vmatpush1.msra.mxu0 0.0
      %4719 = vmatprep.subr.mxu0 0.0
      %4720 = vmatpush1.msra.mxu0 0.0
      %4721 = vmatprep.subr.mxu0 0.0
      %4722 = vmatpush1.msra.mxu0 0.0
      %4723 = vmatprep.subr.mxu0 0.0
      %4724 = vmatpush1.msra.mxu0 %v3042
      %4725 = vmatprep.subr.mxu0 0.0
      %4726 = vmatpush2.msra.mxu0 0.0
      %4727 = vmatprep.subr.mxu0 0.0
      %4728 = vmatpush2.msra.mxu0 0.0
      %4729 = vmatprep.subr.mxu0 0.0
      %4730 = vmatpush2.msra.mxu0 0.0
      %4731 = vmatprep.subr.mxu0 0.0
      %4732 = vmatpush2.msra.mxu0 0.0
      %4733 = vmatprep.subr.mxu0 0.0
      %4734 = vmatpush2.msra.mxu0 0.0
      %4735 = vmatprep.subr.mxu0 0.0
      %4736 = vmatpush2.msra.mxu0 0.0
      %4737 = vmatprep.subr.mxu0 0.0
      %4738 = vmatpush2.msra.mxu0 0.0
      %4739 = vmatprep.subr.mxu0 0.0
      %4740 = vmatpush2.msra.mxu0 0.0
      %4741 = vmatprep.subr.mxu0 0.0
      %4742 = vmatpush2.msra.mxu0 0.0
      %4743 = vmatprep.subr.mxu0 0.0
      %4744 = vmatpush2.msra.mxu0 0.0
      %4745 = vmatprep.subr.mxu0 0.0
      %4746 = vmatpush2.msra.mxu0 0.0
      %4747 = vmatprep.subr.mxu0 0.0
      %4748 = vmatpush2.msra.mxu0 0.0
      %4749 = vmatprep.subr.mxu0 0.0
      %4750 = vmatpush2.msra.mxu0 0.0
      %4751 = vmatprep.subr.mxu0 0.0
      %4752 = vmatpush2.msra.mxu0 0.0
      %4753 = vmatprep.subr.mxu0 0.0
      %4754 = vmatpush2.msra.mxu0 0.0
      %4755 = vmatprep.subr.mxu0 0.0
      %4756 = vmatpush2.msra.mxu0 0.0
      %4757 = vmatprep.mubr.f32.mxu0 0.0
      %4758 = vmatmul.mubr.f32.gmra.mxu0 %v1419
      %v4759 = vpop.f32.mrf.mxu0
      %v4760 = vadd.f32 0.0, %v4759
      %v4761 = vpop.f32.mrf.mxu0
      %4762 = vmatprep.mubr.f32.mxu0 0.0
      %4763 = vmatmul.mubr.f32.gmra.mxu0 %v1422
      %v4764 = vpop.f32.mrf.mxu0
      %v4765 = vadd.f32 0.0, %v4764
      %v4766 = vpop.f32.mrf.mxu0
      %4767 = vmatprep.mubr.f32.mxu0 0.0
      %4768 = vmatmul.mubr.f32.gmra.mxu0 %v1425
      %v4769 = vpop.f32.mrf.mxu0
      %v4770 = vadd.f32 0.0, %v4769
      %v4771 = vpop.f32.mrf.mxu0
      %4772 = vmatprep.mubr.f32.mxu0 0.0
      %4773 = vmatmul.mubr.f32.gmra.mxu0 %v1428
      %v4774 = vpop.f32.mrf.mxu0
      %v4775 = vadd.f32 0.0, %v4774
      %v4776 = vpop.f32.mrf.mxu0
      %4777 = vdwg.mxu0
      %v4778 = vadd.f32 %v4689, %v4760
      %v4779 = vadd.f32 %v4690, %v4765
      %v4780 = vadd.f32 %v4691, %v4770
      %v4781 = vadd.f32 %v4692, %v4775
      %v4782 = vmul.f32 %v1530, %v3137
      %v4783 = vmul.f32 %v1535, %v3137
      %v4784 = vmul.f32 %v1540, %v3137
      %v4785 = vmul.f32 %v1545, %v3137
      %v4786 = vadd.f32 %v4778, %v4782
      %v4787 = vadd.f32 %v4779, %v4783
      %v4788 = vadd.f32 %v4780, %v4784
      %v4789 = vadd.f32 %v4781, %v4785
      %v4790 = vadd.f32 %v4786, %v2823
      %v4791 = vadd.f32 %v4787, %v2824
      %v4792 = vadd.f32 %v4788, %v2825
      %v4793 = vadd.f32 %v4789, %v2826
      %4794 = vmatprep.subr.mxu0 0.0
      %4795 = vmatpush1.msra.mxu0 0.0
      %4796 = vmatprep.subr.mxu0 0.0
      %4797 = vmatpush1.msra.mxu0 0.0
      %4798 = vmatprep.subr.mxu0 0.0
      %4799 = vmatpush1.msra.mxu0 0.0
      %4800 = vmatprep.subr.mxu0 0.0
      %4801 = vmatpush1.msra.mxu0 0.0
      %4802 = vmatprep.subr.mxu0 0.0
      %4803 = vmatpush1.msra.mxu0 0.0
      %4804 = vmatprep.subr.mxu0 0.0
      %4805 = vmatpush1.msra.mxu0 0.0
      %4806 = vmatprep.subr.mxu0 0.0
      %4807 = vmatpush1.msra.mxu0 0.0
      %4808 = vmatprep.subr.mxu0 0.0
      %4809 = vmatpush1.msra.mxu0 0.0
      %4810 = vmatprep.subr.mxu0 0.0
      %4811 = vmatpush1.msra.mxu0 0.0
      %4812 = vmatprep.subr.mxu0 0.0
      %4813 = vmatpush1.msra.mxu0 0.0
      %4814 = vmatprep.subr.mxu0 0.0
      %4815 = vmatpush1.msra.mxu0 0.0
      %4816 = vmatprep.subr.mxu0 0.0
      %4817 = vmatpush1.msra.mxu0 0.0
      %4818 = vmatprep.subr.mxu0 0.0
      %4819 = vmatpush1.msra.mxu0 0.0
      %4820 = vmatprep.subr.mxu0 0.0
      %4821 = vmatpush1.msra.mxu0 0.0
      %4822 = vmatprep.subr.mxu0 0.0
      %4823 = vmatpush1.msra.mxu0 0.0
      %4824 = vmatprep.subr.mxu0 0.0
      %4825 = vmatpush1.msra.mxu0 %v3935
      %4826 = vmatprep.subr.mxu0 0.0
      %4827 = vmatpush2.msra.mxu0 0.0
      %4828 = vmatprep.subr.mxu0 0.0
      %4829 = vmatpush2.msra.mxu0 0.0
      %4830 = vmatprep.subr.mxu0 0.0
      %4831 = vmatpush2.msra.mxu0 0.0
      %4832 = vmatprep.subr.mxu0 0.0
      %4833 = vmatpush2.msra.mxu0 0.0
      %4834 = vmatprep.subr.mxu0 0.0
      %4835 = vmatpush2.msra.mxu0 0.0
      %4836 = vmatprep.subr.mxu0 0.0
      %4837 = vmatpush2.msra.mxu0 0.0
      %4838 = vmatprep.subr.mxu0 0.0
      %4839 = vmatpush2.msra.mxu0 0.0
      %4840 = vmatprep.subr.mxu0 0.0
      %4841 = vmatpush2.msra.mxu0 0.0
      %4842 = vmatprep.subr.mxu0 0.0
      %4843 = vmatpush2.msra.mxu0 0.0
      %4844 = vmatprep.subr.mxu0 0.0
      %4845 = vmatpush2.msra.mxu0 0.0
      %4846 = vmatprep.subr.mxu0 0.0
      %4847 = vmatpush2.msra.mxu0 0.0
      %4848 = vmatprep.subr.mxu0 0.0
      %4849 = vmatpush2.msra.mxu0 0.0
      %4850 = vmatprep.subr.mxu0 0.0
      %4851 = vmatpush2.msra.mxu0 0.0
      %4852 = vmatprep.subr.mxu0 0.0
      %4853 = vmatpush2.msra.mxu0 0.0
      %4854 = vmatprep.subr.mxu0 0.0
      %4855 = vmatpush2.msra.mxu0 0.0
      %4856 = vmatprep.subr.mxu0 0.0
      %4857 = vmatpush2.msra.mxu0 0.0
      %4858 = vmatprep.mubr.f32.mxu0 0.0
      %4859 = vmatmul.mubr.f32.gmra.mxu0 %v1607
      %v4860 = vpop.f32.mrf.mxu0
      %v4861 = vadd.f32 0.0, %v4860
      %v4862 = vpop.f32.mrf.mxu0
      %4863 = vmatprep.mubr.f32.mxu0 0.0
      %4864 = vmatmul.mubr.f32.gmra.mxu0 %v1610
      %v4865 = vpop.f32.mrf.mxu0
      %v4866 = vadd.f32 0.0, %v4865
      %v4867 = vpop.f32.mrf.mxu0
      %4868 = vmatprep.mubr.f32.mxu0 0.0
      %4869 = vmatmul.mubr.f32.gmra.mxu0 %v1613
      %v4870 = vpop.f32.mrf.mxu0
      %v4871 = vadd.f32 0.0, %v4870
      %v4872 = vpop.f32.mrf.mxu0
      %4873 = vmatprep.mubr.f32.mxu0 0.0
      %4874 = vmatmul.mubr.f32.gmra.mxu0 %v1616
      %v4875 = vpop.f32.mrf.mxu0
      %v4876 = vadd.f32 0.0, %v4875
      %v4877 = vpop.f32.mrf.mxu0
      %4878 = vdwg.mxu0
      %v4879 = vadd.f32 %v4790, %v4861
      %v4880 = vadd.f32 %v4791, %v4866
      %v4881 = vadd.f32 %v4792, %v4871
      %v4882 = vadd.f32 %v4793, %v4876
      %v4883 = vmul.f32 %v1718, %v4030
      %v4884 = vmul.f32 %v1723, %v4030
      %v4885 = vmul.f32 %v1728, %v4030
      %v4886 = vmul.f32 %v1733, %v4030
      %v4887 = vadd.f32 %v4879, %v4883
      %v4888 = vadd.f32 %v4880, %v4884
      %v4889 = vadd.f32 %v4881, %v4885
      %v4890 = vadd.f32 %v4882, %v4886
      %v4891 = vmul.f32 %v1757, %v4044
      %v4892 = vmul.f32 %v1762, %v4044
      %v4893 = vmul.f32 %v1767, %v4044
      %v4894 = vmul.f32 %v1772, %v4044
      %v4895 = vadd.f32 %v4887, %v4891
      %v4896 = vadd.f32 %v4888, %v4892
      %v4897 = vadd.f32 %v4889, %v4893
      %v4898 = vadd.f32 %v4890, %v4894
      %4899 = vmatprep.subr.mxu0 0.0
      %4900 = vmatpush1.msra.mxu0 0.0
      %4901 = vmatprep.subr.mxu0 0.0
      %4902 = vmatpush1.msra.mxu0 0.0
      %4903 = vmatprep.subr.mxu0 0.0
      %4904 = vmatpush1.msra.mxu0 0.0
      %4905 = vmatprep.subr.mxu0 0.0
      %4906 = vmatpush1.msra.mxu0 0.0
      %4907 = vmatprep.subr.mxu0 0.0
      %4908 = vmatpush1.msra.mxu0 0.0
      %4909 = vmatprep.subr.mxu0 0.0
      %4910 = vmatpush1.msra.mxu0 0.0
      %4911 = vmatprep.subr.mxu0 0.0
      %4912 = vmatpush1.msra.mxu0 0.0
      %4913 = vmatprep.subr.mxu0 0.0
      %4914 = vmatpush1.msra.mxu0 0.0
      %4915 = vmatprep.subr.mxu0 0.0
      %4916 = vmatpush1.msra.mxu0 0.0
      %4917 = vmatprep.subr.mxu0 0.0
      %4918 = vmatpush1.msra.mxu0 0.0
      %4919 = vmatprep.subr.mxu0 0.0
      %4920 = vmatpush1.msra.mxu0 0.0
      %4921 = vmatprep.subr.mxu0 0.0
      %4922 = vmatpush1.msra.mxu0 0.0
      %4923 = vmatprep.subr.mxu0 0.0
      %4924 = vmatpush1.msra.mxu0 0.0
      %4925 = vmatprep.subr.mxu0 0.0
      %4926 = vmatpush1.msra.mxu0 0.0
      %4927 = vmatprep.subr.mxu0 0.0
      %4928 = vmatpush1.msra.mxu0 0.0
      %4929 = vmatprep.subr.mxu0 0.0
      %4930 = vmatpush1.msra.mxu0 %v4059
      %4931 = vmatprep.subr.mxu0 0.0
      %4932 = vmatpush2.msra.mxu0 0.0
      %4933 = vmatprep.subr.mxu0 0.0
      %4934 = vmatpush2.msra.mxu0 0.0
      %4935 = vmatprep.subr.mxu0 0.0
      %4936 = vmatpush2.msra.mxu0 0.0
      %4937 = vmatprep.subr.mxu0 0.0
      %4938 = vmatpush2.msra.mxu0 0.0
      %4939 = vmatprep.subr.mxu0 0.0
      %4940 = vmatpush2.msra.mxu0 0.0
      %4941 = vmatprep.subr.mxu0 0.0
      %4942 = vmatpush2.msra.mxu0 0.0
      %4943 = vmatprep.subr.mxu0 0.0
      %4944 = vmatpush2.msra.mxu0 0.0
      %4945 = vmatprep.subr.mxu0 0.0
      %4946 = vmatpush2.msra.mxu0 0.0
      %4947 = vmatprep.subr.mxu0 0.0
      %4948 = vmatpush2.msra.mxu0 0.0
      %4949 = vmatprep.subr.mxu0 0.0
      %4950 = vmatpush2.msra.mxu0 0.0
      %4951 = vmatprep.subr.mxu0 0.0
      %4952 = vmatpush2.msra.mxu0 0.0
      %4953 = vmatprep.subr.mxu0 0.0
      %4954 = vmatpush2.msra.mxu0 0.0
      %4955 = vmatprep.subr.mxu0 0.0
      %4956 = vmatpush2.msra.mxu0 0.0
      %4957 = vmatprep.subr.mxu0 0.0
      %4958 = vmatpush2.msra.mxu0 0.0
      %4959 = vmatprep.subr.mxu0 0.0
      %4960 = vmatpush2.msra.mxu0 0.0
      %4961 = vmatprep.subr.mxu0 0.0
      %4962 = vmatpush2.msra.mxu0 0.0
      %4963 = vmatprep.mubr.f32.mxu0 0.0
      %4964 = vmatmul.mubr.f32.gmra.mxu0 %v1788
      %v4965 = vpop.f32.mrf.mxu0
      %v4966 = vadd.f32 0.0, %v4965
      %v4967 = vpop.f32.mrf.mxu0
      %4968 = vmatprep.mubr.f32.mxu0 0.0
      %4969 = vmatmul.mubr.f32.gmra.mxu0 %v1791
      %v4970 = vpop.f32.mrf.mxu0
      %v4971 = vadd.f32 0.0, %v4970
      %v4972 = vpop.f32.mrf.mxu0
      %4973 = vmatprep.mubr.f32.mxu0 0.0
      %4974 = vmatmul.mubr.f32.gmra.mxu0 %v1794
      %v4975 = vpop.f32.mrf.mxu0
      %v4976 = vadd.f32 0.0, %v4975
      %v4977 = vpop.f32.mrf.mxu0
      %4978 = vmatprep.mubr.f32.mxu0 0.0
      %4979 = vmatmul.mubr.f32.gmra.mxu0 %v1797
      %v4980 = vpop.f32.mrf.mxu0
      %v4981 = vadd.f32 0.0, %v4980
      %v4982 = vpop.f32.mrf.mxu0
      %4983 = vdwg.mxu0
      %v4984 = vadd.f32 %v4895, %v4966
      %v4985 = vadd.f32 %v4896, %v4971
      %v4986 = vadd.f32 %v4897, %v4976
      %v4987 = vadd.f32 %v4898, %v4981
      %v4988 = vadd.f32 %v4984, %v4032
      %v4989 = vadd.f32 %v4985, %v4033
      %v4990 = vadd.f32 %v4986, %v4034
      %v4991 = vadd.f32 %v4987, %v4035
      %v4992 = vmul.f32 %v1938, %v4162
      %v4993 = vmul.f32 %v1943, %v4162
      %v4994 = vmul.f32 %v1948, %v4162
      %v4995 = vmul.f32 %v1953, %v4162
      %v4996 = vadd.f32 %v4988, %v4992
      %v4997 = vadd.f32 %v4989, %v4993
      %v4998 = vadd.f32 %v4990, %v4994
      %v4999 = vadd.f32 %v4991, %v4995
      %vm5000 = vmand %vm3785, %vm2356
      %v5001 = vsel %vm5000, 1.0, 0.0
      %v5002 = vmul.f32 %v3790, %v5001
      %v5003 = vmul.f32 %v2361, %v5001
      %5004 = vrot.lane.b32.xlu0 %v389, 119
      %v5005 = vpop.permute.xlu0 %5004
      %v5007 = vlaneseq
      %v5008 = vshrl.u32 %v5007, 7
      %v5009 = vsub.s32 0, %v5008
      %v5010 = vrot.slane %v5001, %v5009
      %v5012 = vmul.f32 %v5005, %v5010
      %v5014 = vsel %vm464, %v5012, 0
      %5016 = vmatprep.subr.mxu0 0.0
      %5017 = vmatpush1.msra.mxu0 0.0
      %5018 = vmatprep.subr.mxu0 0.0
      %5019 = vmatpush1.msra.mxu0 0.0
      %5020 = vmatprep.subr.mxu0 0.0
      %5021 = vmatpush1.msra.mxu0 0.0
      %5022 = vmatprep.subr.mxu0 0.0
      %5023 = vmatpush1.msra.mxu0 0.0
      %5024 = vmatprep.subr.mxu0 0.0
      %5025 = vmatpush1.msra.mxu0 0.0
      %5026 = vmatprep.subr.mxu0 0.0
      %5027 = vmatpush1.msra.mxu0 0.0
      %5028 = vmatprep.subr.mxu0 0.0
      %5029 = vmatpush1.msra.mxu0 0.0
      %5030 = vmatprep.subr.mxu0 0.0
      %5031 = vmatpush1.msra.mxu0 0.0
      %5032 = vmatprep.subr.mxu0 0.0
      %5033 = vmatpush1.msra.mxu0 0.0
      %5034 = vmatprep.subr.mxu0 0.0
      %5035 = vmatpush1.msra.mxu0 0.0
      %5036 = vmatprep.subr.mxu0 0.0
      %5037 = vmatpush1.msra.mxu0 0.0
      %5038 = vmatprep.subr.mxu0 0.0
      %5039 = vmatpush1.msra.mxu0 0.0
      %5040 = vmatprep.subr.mxu0 0.0
      %5041 = vmatpush1.msra.mxu0 0.0
      %5042 = vmatprep.subr.mxu0 0.0
      %5043 = vmatpush1.msra.mxu0 0.0
      %5044 = vmatprep.subr.mxu0 0.0
      %5045 = vmatpush1.msra.mxu0 0.0
      %5046 = vmatprep.subr.mxu0 0.0
      %5047 = vmatpush1.msra.mxu0 %v5014
      %5048 = vmatprep.subr.mxu0 0.0
      %5049 = vmatpush2.msra.mxu0 0.0
      %5050 = vmatprep.subr.mxu0 0.0
      %5051 = vmatpush2.msra.mxu0 0.0
      %5052 = vmatprep.subr.mxu0 0.0
      %5053 = vmatpush2.msra.mxu0 0.0
      %5054 = vmatprep.subr.mxu0 0.0
      %5055 = vmatpush2.msra.mxu0 0.0
      %5056 = vmatprep.subr.mxu0 0.0
      %5057 = vmatpush2.msra.mxu0 0.0
      %5058 = vmatprep.subr.mxu0 0.0
      %5059 = vmatpush2.msra.mxu0 0.0
      %5060 = vmatprep.subr.mxu0 0.0
      %5061 = vmatpush2.msra.mxu0 0.0
      %5062 = vmatprep.subr.mxu0 0.0
      %5063 = vmatpush2.msra.mxu0 0.0
      %5064 = vmatprep.subr.mxu0 0.0
      %5065 = vmatpush2.msra.mxu0 0.0
      %5066 = vmatprep.subr.mxu0 0.0
      %5067 = vmatpush2.msra.mxu0 0.0
      %5068 = vmatprep.subr.mxu0 0.0
      %5069 = vmatpush2.msra.mxu0 0.0
      %5070 = vmatprep.subr.mxu0 0.0
      %5071 = vmatpush2.msra.mxu0 0.0
      %5072 = vmatprep.subr.mxu0 0.0
      %5073 = vmatpush2.msra.mxu0 0.0
      %5074 = vmatprep.subr.mxu0 0.0
      %5075 = vmatpush2.msra.mxu0 0.0
      %5076 = vmatprep.subr.mxu0 0.0
      %5077 = vmatpush2.msra.mxu0 0.0
      %5078 = vmatprep.subr.mxu0 0.0
      %5079 = vmatpush2.msra.mxu0 0.0
      %5080 = vmatprep.mubr.f32.mxu0 0.0
      %5081 = vmatmul.mubr.f32.gmra.mxu0 %v1969
      %v5082 = vpop.f32.mrf.mxu0
      %v5083 = vadd.f32 0.0, %v5082
      %v5084 = vpop.f32.mrf.mxu0
      %5085 = vmatprep.mubr.f32.mxu0 0.0
      %5086 = vmatmul.mubr.f32.gmra.mxu0 %v1972
      %v5087 = vpop.f32.mrf.mxu0
      %v5088 = vadd.f32 0.0, %v5087
      %v5089 = vpop.f32.mrf.mxu0
      %5090 = vmatprep.mubr.f32.mxu0 0.0
      %5091 = vmatmul.mubr.f32.gmra.mxu0 %v1975
      %v5092 = vpop.f32.mrf.mxu0
      %v5093 = vadd.f32 0.0, %v5092
      %v5094 = vpop.f32.mrf.mxu0
      %5095 = vmatprep.mubr.f32.mxu0 0.0
      %5096 = vmatmul.mubr.f32.gmra.mxu0 %v1978
      %v5097 = vpop.f32.mrf.mxu0
      %v5098 = vadd.f32 0.0, %v5097
      %v5099 = vpop.f32.mrf.mxu0
      %5100 = vdwg.mxu0
      %v5101 = vadd.f32 %v4996, %v5083
      %v5102 = vadd.f32 %v4997, %v5088
      %v5103 = vadd.f32 %v4998, %v5093
      %v5104 = vadd.f32 %v4999, %v5098
      %v5106 = vlaneseq
      %v5107 = vshrl.u32 %v5106, 7
      %v5108 = vsub.s32 0, %v5107
      %v5109 = vrot.slane %v5002, %v5108
      %v5111 = vmul.f32 %v2080, %v5109
      %v5112 = vmul.f32 %v2085, %v5109
      %v5113 = vmul.f32 %v2090, %v5109
      %v5114 = vmul.f32 %v2095, %v5109
      %v5115 = vadd.f32 %v5101, %v5111
      %v5116 = vadd.f32 %v5102, %v5112
      %v5117 = vadd.f32 %v5103, %v5113
      %v5118 = vadd.f32 %v5104, %v5114
      %v5120 = vlaneseq
      %v5121 = vshrl.u32 %v5120, 7
      %v5122 = vsub.s32 0, %v5121
      %v5123 = vrot.slane %v5003, %v5122
      %v5125 = vmul.f32 %v2113, %v5123
      %v5126 = vmul.f32 %v2118, %v5123
      %v5127 = vmul.f32 %v2123, %v5123
      %v5128 = vmul.f32 %v2128, %v5123
      %v5129 = vadd.f32 %v5115, %v5125
      %v5130 = vadd.f32 %v5116, %v5126
      %v5131 = vadd.f32 %v5117, %v5127
      %v5132 = vadd.f32 %v5118, %v5128
      %vm5133 = vcmp.gt.f32.partialorder %v5129, 0.0
      %vm5134 = vcmp.gt.f32.partialorder %v5130, 0.0
      %vm5135 = vcmp.gt.f32.partialorder %v5131, 0.0
      %vm5136 = vcmp.gt.f32.partialorder %v5132, 0.0
      %v5137 = vmul.f32 %v5129, 0.2
      %v5138 = vmul.f32 %v5130, 0.2
      %v5139 = vmul.f32 %v5131, 0.2
      %v5140 = vmul.f32 %v5132, 0.2
      %v5141 = vsel %vm5133, %v5129, %v5137
      %v5142 = vsel %vm5134, %v5130, %v5138
      %v5143 = vsel %vm5135, %v5131, %v5139
      %v5144 = vsel %vm5136, %v5132, %v5140
      %v5145 = vld [vmem:[%s8] sm:$0xff]
      %v5146 = vld [vmem:[%s8 + $0x8] sm:$0xff]
      %v5147 = vld [vmem:[%s8 + $0x10] sm:$0xff]
      %v5148 = vld [vmem:[%s8 + $0x18] sm:$0xff]
      %5150 = vset.pattern.permute.xlu0 0
      %5151 = vperm.xlu0 %5150, %v5145
      %v5152 = vpop.permute.xlu0 %5151
      %5155 = vset.pattern.permute.xlu0 0
      %5156 = vperm.xlu0 %5155, %v5146
      %v5157 = vpop.permute.xlu0 %5156
      %5160 = vset.pattern.permute.xlu0 0
      %5161 = vperm.xlu0 %5160, %v5147
      %v5162 = vpop.permute.xlu0 %5161
      %5165 = vset.pattern.permute.xlu0 0
      %5166 = vperm.xlu0 %5165, %v5148
      %v5167 = vpop.permute.xlu0 %5166
      %v5169 = vadd.f32 %v5152, 0.0
      %v5170 = vadd.f32 %v5157, 0.0
      %v5171 = vadd.f32 %v5162, 0.0
      %v5172 = vadd.f32 %v5167, 0.0
      %5173 = vrot.lane.b32.xlu0 %v5141, 9
      %v5174 = vpop.permute.xlu0 %5173
      %5175 = vrot.lane.b32.xlu0 %v5142, 9
      %v5176 = vpop.permute.xlu0 %5175
      %5177 = vrot.lane.b32.xlu0 %v5143, 9
      %v5178 = vpop.permute.xlu0 %5177
      %5179 = vrot.lane.b32.xlu0 %v5144, 9
      %v5180 = vpop.permute.xlu0 %5179
      %v5181 = vmul.f32 %v5174, %v444
      %v5182 = vmul.f32 %v5176, %v444
      %v5183 = vmul.f32 %v5178, %v444
      %v5184 = vmul.f32 %v5180, %v444
      %v5185 = vld [vmem:[%s6] sm:$0xff]
      %v5186 = vld [vmem:[%s6 + $0x8] sm:$0xff]
      %v5187 = vld [vmem:[%s6 + $0x10] sm:$0xff]
      %v5188 = vld [vmem:[%s6 + $0x18] sm:$0xff]
      %vm5189 = vcmask 261120
      %v5191 = vsel %vm5189, %v5185, 0
      %v5194 = vsel %vm5189, %v5186, 0
      %v5197 = vsel %vm5189, %v5187, 0
      %v5200 = vsel %vm5189, %v5188, 0
      %5202 = vmatprep.subr.mxu0 0.0
      %5203 = vmatpush1.msra.mxu0 0.0
      %5204 = vmatprep.subr.mxu0 0.0
      %5205 = vmatpush1.msra.mxu0 0.0
      %5206 = vmatprep.subr.mxu0 0.0
      %5207 = vmatpush1.msra.mxu0 0.0
      %5208 = vmatprep.subr.mxu0 0.0
      %5209 = vmatpush1.msra.mxu0 0.0
      %5210 = vmatprep.subr.mxu0 0.0
      %5211 = vmatpush1.msra.mxu0 0.0
      %5212 = vmatprep.subr.mxu0 0.0
      %5213 = vmatpush1.msra.mxu0 0.0
      %5214 = vmatprep.subr.mxu0 0.0
      %5215 = vmatpush1.msra.mxu0 0.0
      %5216 = vmatprep.subr.mxu0 0.0
      %5217 = vmatpush1.msra.mxu0 0.0
      %5218 = vmatprep.subr.mxu0 0.0
      %5219 = vmatpush1.msra.mxu0 0.0
      %5220 = vmatprep.subr.mxu0 0.0
      %5221 = vmatpush1.msra.mxu0 0.0
      %5222 = vmatprep.subr.mxu0 0.0
      %5223 = vmatpush1.msra.mxu0 0.0
      %5224 = vmatprep.subr.mxu0 0.0
      %5225 = vmatpush1.msra.mxu0 0.0
      %5226 = vmatprep.subr.mxu0 0.0
      %5227 = vmatpush1.msra.mxu0 %v5184
      %5228 = vmatprep.subr.mxu0 0.0
      %5229 = vmatpush1.msra.mxu0 %v5183
      %5230 = vmatprep.subr.mxu0 0.0
      %5231 = vmatpush1.msra.mxu0 %v5182
      %5232 = vmatprep.subr.mxu0 0.0
      %5233 = vmatpush1.msra.mxu0 %v5181
      %5234 = vmatprep.subr.mxu0 0.0
      %5235 = vmatpush2.msra.mxu0 0.0
      %5236 = vmatprep.subr.mxu0 0.0
      %5237 = vmatpush2.msra.mxu0 0.0
      %5238 = vmatprep.subr.mxu0 0.0
      %5239 = vmatpush2.msra.mxu0 0.0
      %5240 = vmatprep.subr.mxu0 0.0
      %5241 = vmatpush2.msra.mxu0 0.0
      %5242 = vmatprep.subr.mxu0 0.0
      %5243 = vmatpush2.msra.mxu0 0.0
      %5244 = vmatprep.subr.mxu0 0.0
      %5245 = vmatpush2.msra.mxu0 0.0
      %5246 = vmatprep.subr.mxu0 0.0
      %5247 = vmatpush2.msra.mxu0 0.0
      %5248 = vmatprep.subr.mxu0 0.0
      %5249 = vmatpush2.msra.mxu0 0.0
      %5250 = vmatprep.subr.mxu0 0.0
      %5251 = vmatpush2.msra.mxu0 0.0
      %5252 = vmatprep.subr.mxu0 0.0
      %5253 = vmatpush2.msra.mxu0 0.0
      %5254 = vmatprep.subr.mxu0 0.0
      %5255 = vmatpush2.msra.mxu0 0.0
      %5256 = vmatprep.subr.mxu0 0.0
      %5257 = vmatpush2.msra.mxu0 0.0
      %5258 = vmatprep.subr.mxu0 0.0
      %5259 = vmatpush2.msra.mxu0 0.0
      %5260 = vmatprep.subr.mxu0 0.0
      %5261 = vmatpush2.msra.mxu0 0.0
      %5262 = vmatprep.subr.mxu0 0.0
      %5263 = vmatpush2.msra.mxu0 0.0
      %5264 = vmatprep.subr.mxu0 0.0
      %5265 = vmatpush2.msra.mxu0 0.0
      %5266 = vmatprep.mubr.f32.mxu0 0.0
      %5267 = vmatmul.mubr.f32.gmra.mxu0 %v5191
      %v5268 = vpop.f32.mrf.mxu0
      %v5269 = vadd.f32 0.0, %v5268
      %v5270 = vpop.f32.mrf.mxu0
      %5271 = vmatprep.mubr.f32.mxu0 0.0
      %5272 = vmatmul.mubr.f32.gmra.mxu0 %v5194
      %v5273 = vpop.f32.mrf.mxu0
      %v5274 = vadd.f32 0.0, %v5273
      %v5275 = vpop.f32.mrf.mxu0
      %5276 = vmatprep.mubr.f32.mxu0 0.0
      %5277 = vmatmul.mubr.f32.gmra.mxu0 %v5197
      %v5278 = vpop.f32.mrf.mxu0
      %v5279 = vadd.f32 0.0, %v5278
      %v5280 = vpop.f32.mrf.mxu0
      %5281 = vmatprep.mubr.f32.mxu0 0.0
      %5282 = vmatmul.mubr.f32.gmra.mxu0 %v5200
      %v5283 = vpop.f32.mrf.mxu0
      %v5284 = vadd.f32 0.0, %v5283
      %v5285 = vpop.f32.mrf.mxu0
      %5286 = vdwg.mxu0
      %v5287 = vadd.f32 %v5169, %v5269
      %v5288 = vadd.f32 %v5170, %v5274
      %v5289 = vadd.f32 %v5171, %v5279
      %v5290 = vadd.f32 %v5172, %v5284
      %v5291 = vld [vmem:[%s7] sm:$0xff]
      %v5292 = vld [vmem:[%s7 + $0x8] sm:$0xff]
      %v5293 = vld [vmem:[%s7 + $0x10] sm:$0xff]
      %v5294 = vld [vmem:[%s7 + $0x18] sm:$0xff]
      %5296 = vset.pattern.permute.xlu0 0
      %5297 = vperm.xlu0 %5296, %v5291
      %v5298 = vpop.permute.xlu0 %5297
      %5301 = vset.pattern.permute.xlu0 0
      %5302 = vperm.xlu0 %5301, %v5292
      %v5303 = vpop.permute.xlu0 %5302
      %5306 = vset.pattern.permute.xlu0 0
      %5307 = vperm.xlu0 %5306, %v5293
      %v5308 = vpop.permute.xlu0 %5307
      %5311 = vset.pattern.permute.xlu0 0
      %5312 = vperm.xlu0 %5311, %v5294
      %v5313 = vpop.permute.xlu0 %5312
      %v5315 = vmul.f32 %v5298, %v585
      %v5316 = vmul.f32 %v5303, %v585
      %v5317 = vmul.f32 %v5308, %v585
      %v5318 = vmul.f32 %v5313, %v585
      %v5319 = vadd.f32 %v5287, %v5315
      %v5320 = vadd.f32 %v5288, %v5316
      %v5321 = vadd.f32 %v5289, %v5317
      %v5322 = vadd.f32 %v5290, %v5318
      %s5323 = scalar_lea.vmem %s7, 32
      %v5324 = vld [vmem:[%s5323] sm:$0xff]
      %v5325 = vld [vmem:[%s5323 + $0x8] sm:$0xff]
      %v5326 = vld [vmem:[%s5323 + $0x10] sm:$0xff]
      %v5327 = vld [vmem:[%s5323 + $0x18] sm:$0xff]
      %5329 = vset.pattern.permute.xlu0 0
      %5330 = vperm.xlu0 %5329, %v5324
      %v5331 = vpop.permute.xlu0 %5330
      %5334 = vset.pattern.permute.xlu0 0
      %5335 = vperm.xlu0 %5334, %v5325
      %v5336 = vpop.permute.xlu0 %5335
      %5339 = vset.pattern.permute.xlu0 0
      %5340 = vperm.xlu0 %5339, %v5326
      %v5341 = vpop.permute.xlu0 %5340
      %5344 = vset.pattern.permute.xlu0 0
      %5345 = vperm.xlu0 %5344, %v5327
      %v5346 = vpop.permute.xlu0 %5345
      %v5348 = vmul.f32 %v5331, %v624
      %v5349 = vmul.f32 %v5336, %v624
      %v5350 = vmul.f32 %v5341, %v624
      %v5351 = vmul.f32 %v5346, %v624
      %v5352 = vadd.f32 %v5319, %v5348
      %v5353 = vadd.f32 %v5320, %v5349
      %v5354 = vadd.f32 %v5321, %v5350
      %v5355 = vadd.f32 %v5322, %v5351
      %5356 = vrot.lane.b32.xlu0 %v4180, 8
      %v5357 = vpop.permute.xlu0 %5356
      %5358 = vrot.lane.b32.xlu0 %v4181, 8
      %v5359 = vpop.permute.xlu0 %5358
      %5360 = vrot.lane.b32.xlu0 %v4182, 8
      %v5361 = vpop.permute.xlu0 %5360
      %5362 = vrot.lane.b32.xlu0 %v4183, 8
      %v5363 = vpop.permute.xlu0 %5362
      %v5364 = vmul.f32 %v5357, %v646
      %v5365 = vmul.f32 %v5359, %v646
      %v5366 = vmul.f32 %v5361, %v646
      %v5367 = vmul.f32 %v5363, %v646
      %s5368 = scalar_lea.vmem %s6, 32
      %v5369 = vld [vmem:[%s5368] sm:$0xff]
      %v5370 = vld [vmem:[%s5368 + $0x8] sm:$0xff]
      %v5371 = vld [vmem:[%s5368 + $0x10] sm:$0xff]
      %v5372 = vld [vmem:[%s5368 + $0x18] sm:$0xff]
      %v5374 = vsel %vm5189, %v5369, 0
      %v5377 = vsel %vm5189, %v5370, 0
      %v5380 = vsel %vm5189, %v5371, 0
      %v5383 = vsel %vm5189, %v5372, 0
      %5385 = vmatprep.subr.mxu0 0.0
      %5386 = vmatpush1.msra.mxu0 0.0
      %5387 = vmatprep.subr.mxu0 0.0
      %5388 = vmatpush1.msra.mxu0 0.0
      %5389 = vmatprep.subr.mxu0 0.0
      %5390 = vmatpush1.msra.mxu0 0.0
      %5391 = vmatprep.subr.mxu0 0.0
      %5392 = vmatpush1.msra.mxu0 0.0
      %5393 = vmatprep.subr.mxu0 0.0
      %5394 = vmatpush1.msra.mxu0 0.0
      %5395 = vmatprep.subr.mxu0 0.0
      %5396 = vmatpush1.msra.mxu0 0.0
      %5397 = vmatprep.subr.mxu0 0.0
      %5398 = vmatpush1.msra.mxu0 0.0
      %5399 = vmatprep.subr.mxu0 0.0
      %5400 = vmatpush1.msra.mxu0 0.0
      %5401 = vmatprep.subr.mxu0 0.0
      %5402 = vmatpush1.msra.mxu0 0.0
      %5403 = vmatprep.subr.mxu0 0.0
      %5404 = vmatpush1.msra.mxu0 0.0
      %5405 = vmatprep.subr.mxu0 0.0
      %5406 = vmatpush1.msra.mxu0 0.0
      %5407 = vmatprep.subr.mxu0 0.0
      %5408 = vmatpush1.msra.mxu0 0.0
      %5409 = vmatprep.subr.mxu0 0.0
      %5410 = vmatpush1.msra.mxu0 %v5367
      %5411 = vmatprep.subr.mxu0 0.0
      %5412 = vmatpush1.msra.mxu0 %v5366
      %5413 = vmatprep.subr.mxu0 0.0
      %5414 = vmatpush1.msra.mxu0 %v5365
      %5415 = vmatprep.subr.mxu0 0.0
      %5416 = vmatpush1.msra.mxu0 %v5364
      %5417 = vmatprep.subr.mxu0 0.0
      %5418 = vmatpush2.msra.mxu0 0.0
      %5419 = vmatprep.subr.mxu0 0.0
      %5420 = vmatpush2.msra.mxu0 0.0
      %5421 = vmatprep.subr.mxu0 0.0
      %5422 = vmatpush2.msra.mxu0 0.0
      %5423 = vmatprep.subr.mxu0 0.0
      %5424 = vmatpush2.msra.mxu0 0.0
      %5425 = vmatprep.subr.mxu0 0.0
      %5426 = vmatpush2.msra.mxu0 0.0
      %5427 = vmatprep.subr.mxu0 0.0
      %5428 = vmatpush2.msra.mxu0 0.0
      %5429 = vmatprep.subr.mxu0 0.0
      %5430 = vmatpush2.msra.mxu0 0.0
      %5431 = vmatprep.subr.mxu0 0.0
      %5432 = vmatpush2.msra.mxu0 0.0
      %5433 = vmatprep.subr.mxu0 0.0
      %5434 = vmatpush2.msra.mxu0 0.0
      %5435 = vmatprep.subr.mxu0 0.0
      %5436 = vmatpush2.msra.mxu0 0.0
      %5437 = vmatprep.subr.mxu0 0.0
      %5438 = vmatpush2.msra.mxu0 0.0
      %5439 = vmatprep.subr.mxu0 0.0
      %5440 = vmatpush2.msra.mxu0 0.0
      %5441 = vmatprep.subr.mxu0 0.0
      %5442 = vmatpush2.msra.mxu0 0.0
      %5443 = vmatprep.subr.mxu0 0.0
      %5444 = vmatpush2.msra.mxu0 0.0
      %5445 = vmatprep.subr.mxu0 0.0
      %5446 = vmatpush2.msra.mxu0 0.0
      %5447 = vmatprep.subr.mxu0 0.0
      %5448 = vmatpush2.msra.mxu0 0.0
      %5449 = vmatprep.mubr.f32.mxu0 0.0
      %5450 = vmatmul.mubr.f32.gmra.mxu0 %v5374
      %v5451 = vpop.f32.mrf.mxu0
      %v5452 = vadd.f32 0.0, %v5451
      %v5453 = vpop.f32.mrf.mxu0
      %5454 = vmatprep.mubr.f32.mxu0 0.0
      %5455 = vmatmul.mubr.f32.gmra.mxu0 %v5377
      %v5456 = vpop.f32.mrf.mxu0
      %v5457 = vadd.f32 0.0, %v5456
      %v5458 = vpop.f32.mrf.mxu0
      %5459 = vmatprep.mubr.f32.mxu0 0.0
      %5460 = vmatmul.mubr.f32.gmra.mxu0 %v5380
      %v5461 = vpop.f32.mrf.mxu0
      %v5462 = vadd.f32 0.0, %v5461
      %v5463 = vpop.f32.mrf.mxu0
      %5464 = vmatprep.mubr.f32.mxu0 0.0
      %5465 = vmatmul.mubr.f32.gmra.mxu0 %v5383
      %v5466 = vpop.f32.mrf.mxu0
      %v5467 = vadd.f32 0.0, %v5466
      %v5468 = vpop.f32.mrf.mxu0
      %5469 = vdwg.mxu0
      %v5470 = vadd.f32 %v5352, %v5452
      %v5471 = vadd.f32 %v5353, %v5457
      %v5472 = vadd.f32 %v5354, %v5462
      %v5473 = vadd.f32 %v5355, %v5467
      %s5474 = scalar_lea.vmem %s7, 64
      %v5475 = vld [vmem:[%s5474] sm:$0xff]
      %v5476 = vld [vmem:[%s5474 + $0x8] sm:$0xff]
      %v5477 = vld [vmem:[%s5474 + $0x10] sm:$0xff]
      %v5478 = vld [vmem:[%s5474 + $0x18] sm:$0xff]
      %5480 = vset.pattern.permute.xlu0 0
      %5481 = vperm.xlu0 %5480, %v5475
      %v5482 = vpop.permute.xlu0 %5481
      %5485 = vset.pattern.permute.xlu0 0
      %5486 = vperm.xlu0 %5485, %v5476
      %v5487 = vpop.permute.xlu0 %5486
      %5490 = vset.pattern.permute.xlu0 0
      %5491 = vperm.xlu0 %5490, %v5477
      %v5492 = vpop.permute.xlu0 %5491
      %5495 = vset.pattern.permute.xlu0 0
      %5496 = vperm.xlu0 %5495, %v5478
      %v5497 = vpop.permute.xlu0 %5496
      %v5499 = vmul.f32 %v5482, %v787
      %v5500 = vmul.f32 %v5487, %v787
      %v5501 = vmul.f32 %v5492, %v787
      %v5502 = vmul.f32 %v5497, %v787
      %v5503 = vadd.f32 %v5470, %v5499
      %v5504 = vadd.f32 %v5471, %v5500
      %v5505 = vadd.f32 %v5472, %v5501
      %v5506 = vadd.f32 %v5473, %v5502
      %s5507 = scalar_lea.vmem %s7, 96
      %v5508 = vld [vmem:[%s5507] sm:$0xff]
      %v5509 = vld [vmem:[%s5507 + $0x8] sm:$0xff]
      %v5510 = vld [vmem:[%s5507 + $0x10] sm:$0xff]
      %v5511 = vld [vmem:[%s5507 + $0x18] sm:$0xff]
      %5513 = vset.pattern.permute.xlu0 0
      %5514 = vperm.xlu0 %5513, %v5508
      %v5515 = vpop.permute.xlu0 %5514
      %5518 = vset.pattern.permute.xlu0 0
      %5519 = vperm.xlu0 %5518, %v5509
      %v5520 = vpop.permute.xlu0 %5519
      %5523 = vset.pattern.permute.xlu0 0
      %5524 = vperm.xlu0 %5523, %v5510
      %v5525 = vpop.permute.xlu0 %5524
      %5528 = vset.pattern.permute.xlu0 0
      %5529 = vperm.xlu0 %5528, %v5511
      %v5530 = vpop.permute.xlu0 %5529
      %v5532 = vmul.f32 %v5515, %v826
      %v5533 = vmul.f32 %v5520, %v826
      %v5534 = vmul.f32 %v5525, %v826
      %v5535 = vmul.f32 %v5530, %v826
      %v5536 = vadd.f32 %v5503, %v5532
      %v5537 = vadd.f32 %v5504, %v5533
      %v5538 = vadd.f32 %v5505, %v5534
      %v5539 = vadd.f32 %v5506, %v5535
      %5540 = vrot.lane.b32.xlu0 %v5141, 8
      %v5541 = vpop.permute.xlu0 %5540
      %5542 = vrot.lane.b32.xlu0 %v5142, 8
      %v5543 = vpop.permute.xlu0 %5542
      %5544 = vrot.lane.b32.xlu0 %v5143, 8
      %v5545 = vpop.permute.xlu0 %5544
      %5546 = vrot.lane.b32.xlu0 %v5144, 8
      %v5547 = vpop.permute.xlu0 %5546
      %v5548 = vmul.f32 %v5541, %v646
      %v5549 = vmul.f32 %v5543, %v646
      %v5550 = vmul.f32 %v5545, %v646
      %v5551 = vmul.f32 %v5547, %v646
      %s5552 = scalar_lea.vmem %s6, 64
      %v5553 = vld [vmem:[%s5552] sm:$0xff]
      %v5554 = vld [vmem:[%s5552 + $0x8] sm:$0xff]
      %v5555 = vld [vmem:[%s5552 + $0x10] sm:$0xff]
      %v5556 = vld [vmem:[%s5552 + $0x18] sm:$0xff]
      %v5558 = vsel %vm5189, %v5553, 0
      %v5561 = vsel %vm5189, %v5554, 0
      %v5564 = vsel %vm5189, %v5555, 0
      %v5567 = vsel %vm5189, %v5556, 0
      %5569 = vmatprep.subr.mxu0 0.0
      %5570 = vmatpush1.msra.mxu0 0.0
      %5571 = vmatprep.subr.mxu0 0.0
      %5572 = vmatpush1.msra.mxu0 0.0
      %5573 = vmatprep.subr.mxu0 0.0
      %5574 = vmatpush1.msra.mxu0 0.0
      %5575 = vmatprep.subr.mxu0 0.0
      %5576 = vmatpush1.msra.mxu0 0.0
      %5577 = vmatprep.subr.mxu0 0.0
      %5578 = vmatpush1.msra.mxu0 0.0
      %5579 = vmatprep.subr.mxu0 0.0
      %5580 = vmatpush1.msra.mxu0 0.0
      %5581 = vmatprep.subr.mxu0 0.0
      %5582 = vmatpush1.msra.mxu0 0.0
      %5583 = vmatprep.subr.mxu0 0.0
      %5584 = vmatpush1.msra.mxu0 0.0
      %5585 = vmatprep.subr.mxu0 0.0
      %5586 = vmatpush1.msra.mxu0 0.0
      %5587 = vmatprep.subr.mxu0 0.0
      %5588 = vmatpush1.msra.mxu0 0.0
      %5589 = vmatprep.subr.mxu0 0.0
      %5590 = vmatpush1.msra.mxu0 0.0
      %5591 = vmatprep.subr.mxu0 0.0
      %5592 = vmatpush1.msra.mxu0 0.0
      %5593 = vmatprep.subr.mxu0 0.0
      %5594 = vmatpush1.msra.mxu0 %v5551
      %5595 = vmatprep.subr.mxu0 0.0
      %5596 = vmatpush1.msra.mxu0 %v5550
      %5597 = vmatprep.subr.mxu0 0.0
      %5598 = vmatpush1.msra.mxu0 %v5549
      %5599 = vmatprep.subr.mxu0 0.0
      %5600 = vmatpush1.msra.mxu0 %v5548
      %5601 = vmatprep.subr.mxu0 0.0
      %5602 = vmatpush2.msra.mxu0 0.0
      %5603 = vmatprep.subr.mxu0 0.0
      %5604 = vmatpush2.msra.mxu0 0.0
      %5605 = vmatprep.subr.mxu0 0.0
      %5606 = vmatpush2.msra.mxu0 0.0
      %5607 = vmatprep.subr.mxu0 0.0
      %5608 = vmatpush2.msra.mxu0 0.0
      %5609 = vmatprep.subr.mxu0 0.0
      %5610 = vmatpush2.msra.mxu0 0.0
      %5611 = vmatprep.subr.mxu0 0.0
      %5612 = vmatpush2.msra.mxu0 0.0
      %5613 = vmatprep.subr.mxu0 0.0
      %5614 = vmatpush2.msra.mxu0 0.0
      %5615 = vmatprep.subr.mxu0 0.0
      %5616 = vmatpush2.msra.mxu0 0.0
      %5617 = vmatprep.subr.mxu0 0.0
      %5618 = vmatpush2.msra.mxu0 0.0
      %5619 = vmatprep.subr.mxu0 0.0
      %5620 = vmatpush2.msra.mxu0 0.0
      %5621 = vmatprep.subr.mxu0 0.0
      %5622 = vmatpush2.msra.mxu0 0.0
      %5623 = vmatprep.subr.mxu0 0.0
      %5624 = vmatpush2.msra.mxu0 0.0
      %5625 = vmatprep.subr.mxu0 0.0
      %5626 = vmatpush2.msra.mxu0 0.0
      %5627 = vmatprep.subr.mxu0 0.0
      %5628 = vmatpush2.msra.mxu0 0.0
      %5629 = vmatprep.subr.mxu0 0.0
      %5630 = vmatpush2.msra.mxu0 0.0
      %5631 = vmatprep.subr.mxu0 0.0
      %5632 = vmatpush2.msra.mxu0 0.0
      %5633 = vmatprep.mubr.f32.mxu0 0.0
      %5634 = vmatmul.mubr.f32.gmra.mxu0 %v5558
      %v5635 = vpop.f32.mrf.mxu0
      %v5636 = vadd.f32 0.0, %v5635
      %v5637 = vpop.f32.mrf.mxu0
      %5638 = vmatprep.mubr.f32.mxu0 0.0
      %5639 = vmatmul.mubr.f32.gmra.mxu0 %v5561
      %v5640 = vpop.f32.mrf.mxu0
      %v5641 = vadd.f32 0.0, %v5640
      %v5642 = vpop.f32.mrf.mxu0
      %5643 = vmatprep.mubr.f32.mxu0 0.0
      %5644 = vmatmul.mubr.f32.gmra.mxu0 %v5564
      %v5645 = vpop.f32.mrf.mxu0
      %v5646 = vadd.f32 0.0, %v5645
      %v5647 = vpop.f32.mrf.mxu0
      %5648 = vmatprep.mubr.f32.mxu0 0.0
      %5649 = vmatmul.mubr.f32.gmra.mxu0 %v5567
      %v5650 = vpop.f32.mrf.mxu0
      %v5651 = vadd.f32 0.0, %v5650
      %v5652 = vpop.f32.mrf.mxu0
      %5653 = vdwg.mxu0
      %v5654 = vadd.f32 %v5536, %v5636
      %v5655 = vadd.f32 %v5537, %v5641
      %v5656 = vadd.f32 %v5538, %v5646
      %v5657 = vadd.f32 %v5539, %v5651
      %s5658 = scalar_lea.vmem %s7, 128
      %v5659 = vld [vmem:[%s5658] sm:$0xff]
      %v5660 = vld [vmem:[%s5658 + $0x8] sm:$0xff]
      %v5661 = vld [vmem:[%s5658 + $0x10] sm:$0xff]
      %v5662 = vld [vmem:[%s5658 + $0x18] sm:$0xff]
      %5664 = vset.pattern.permute.xlu0 0
      %5665 = vperm.xlu0 %5664, %v5659
      %v5666 = vpop.permute.xlu0 %5665
      %5669 = vset.pattern.permute.xlu0 0
      %5670 = vperm.xlu0 %5669, %v5660
      %v5671 = vpop.permute.xlu0 %5670
      %5674 = vset.pattern.permute.xlu0 0
      %5675 = vperm.xlu0 %5674, %v5661
      %v5676 = vpop.permute.xlu0 %5675
      %5679 = vset.pattern.permute.xlu0 0
      %5680 = vperm.xlu0 %5679, %v5662
      %v5681 = vpop.permute.xlu0 %5680
      %v5683 = vmul.f32 %v5666, %v787
      %v5684 = vmul.f32 %v5671, %v787
      %v5685 = vmul.f32 %v5676, %v787
      %v5686 = vmul.f32 %v5681, %v787
      %v5687 = vadd.f32 %v5654, %v5683
      %v5688 = vadd.f32 %v5655, %v5684
      %v5689 = vadd.f32 %v5656, %v5685
      %v5690 = vadd.f32 %v5657, %v5686
      %s5691 = scalar_lea.vmem %s7, 160
      %v5692 = vld [vmem:[%s5691] sm:$0xff]
      %v5693 = vld [vmem:[%s5691 + $0x8] sm:$0xff]
      %v5694 = vld [vmem:[%s5691 + $0x10] sm:$0xff]
      %v5695 = vld [vmem:[%s5691 + $0x18] sm:$0xff]
      %5697 = vset.pattern.permute.xlu0 0
      %5698 = vperm.xlu0 %5697, %v5692
      %v5699 = vpop.permute.xlu0 %5698
      %5702 = vset.pattern.permute.xlu0 0
      %5703 = vperm.xlu0 %5702, %v5693
      %v5704 = vpop.permute.xlu0 %5703
      %5707 = vset.pattern.permute.xlu0 0
      %5708 = vperm.xlu0 %5707, %v5694
      %v5709 = vpop.permute.xlu0 %5708
      %5712 = vset.pattern.permute.xlu0 0
      %5713 = vperm.xlu0 %5712, %v5695
      %v5714 = vpop.permute.xlu0 %5713
      %v5716 = vmul.f32 %v5699, %v1014
      %v5717 = vmul.f32 %v5704, %v1014
      %v5718 = vmul.f32 %v5709, %v1014
      %v5719 = vmul.f32 %v5714, %v1014
      %v5720 = vadd.f32 %v5687, %v5716
      %v5721 = vadd.f32 %v5688, %v5717
      %v5722 = vadd.f32 %v5689, %v5718
      %v5723 = vadd.f32 %v5690, %v5719
      %5724 = vrot.lane.b32.xlu0 %v3163, 1
      %v5725 = vpop.permute.xlu0 %5724
      %5726 = vrot.lane.b32.xlu0 %v3164, 1
      %v5727 = vpop.permute.xlu0 %5726
      %5728 = vrot.lane.b32.xlu0 %v3165, 1
      %v5729 = vpop.permute.xlu0 %5728
      %5730 = vrot.lane.b32.xlu0 %v3166, 1
      %v5731 = vpop.permute.xlu0 %5730
      %v5732 = vmul.f32 %v5725, %v1036
      %v5733 = vmul.f32 %v5727, %v1036
      %v5734 = vmul.f32 %v5729, %v1036
      %v5735 = vmul.f32 %v5731, %v1036
      %s5736 = scalar_lea.vmem %s6, 96
      %v5737 = vld [vmem:[%s5736] sm:$0xff]
      %v5738 = vld [vmem:[%s5736 + $0x8] sm:$0xff]
      %v5739 = vld [vmem:[%s5736 + $0x10] sm:$0xff]
      %v5740 = vld [vmem:[%s5736 + $0x18] sm:$0xff]
      %v5742 = vsel %vm5189, %v5737, 0
      %v5745 = vsel %vm5189, %v5738, 0
      %v5748 = vsel %vm5189, %v5739, 0
      %v5751 = vsel %vm5189, %v5740, 0
      %5753 = vmatprep.subr.mxu0 0.0
      %5754 = vmatpush1.msra.mxu0 0.0
      %5755 = vmatprep.subr.mxu0 0.0
      %5756 = vmatpush1.msra.mxu0 0.0
      %5757 = vmatprep.subr.mxu0 0.0
      %5758 = vmatpush1.msra.mxu0 0.0
      %5759 = vmatprep.subr.mxu0 0.0
      %5760 = vmatpush1.msra.mxu0 0.0
      %5761 = vmatprep.subr.mxu0 0.0
      %5762 = vmatpush1.msra.mxu0 0.0
      %5763 = vmatprep.subr.mxu0 0.0
      %5764 = vmatpush1.msra.mxu0 0.0
      %5765 = vmatprep.subr.mxu0 0.0
      %5766 = vmatpush1.msra.mxu0 0.0
      %5767 = vmatprep.subr.mxu0 0.0
      %5768 = vmatpush1.msra.mxu0 0.0
      %5769 = vmatprep.subr.mxu0 0.0
      %5770 = vmatpush1.msra.mxu0 0.0
      %5771 = vmatprep.subr.mxu0 0.0
      %5772 = vmatpush1.msra.mxu0 0.0
      %5773 = vmatprep.subr.mxu0 0.0
      %5774 = vmatpush1.msra.mxu0 0.0
      %5775 = vmatprep.subr.mxu0 0.0
      %5776 = vmatpush1.msra.mxu0 0.0
      %5777 = vmatprep.subr.mxu0 0.0
      %5778 = vmatpush1.msra.mxu0 %v5735
      %5779 = vmatprep.subr.mxu0 0.0
      %5780 = vmatpush1.msra.mxu0 %v5734
      %5781 = vmatprep.subr.mxu0 0.0
      %5782 = vmatpush1.msra.mxu0 %v5733
      %5783 = vmatprep.subr.mxu0 0.0
      %5784 = vmatpush1.msra.mxu0 %v5732
      %5785 = vmatprep.subr.mxu0 0.0
      %5786 = vmatpush2.msra.mxu0 0.0
      %5787 = vmatprep.subr.mxu0 0.0
      %5788 = vmatpush2.msra.mxu0 0.0
      %5789 = vmatprep.subr.mxu0 0.0
      %5790 = vmatpush2.msra.mxu0 0.0
      %5791 = vmatprep.subr.mxu0 0.0
      %5792 = vmatpush2.msra.mxu0 0.0
      %5793 = vmatprep.subr.mxu0 0.0
      %5794 = vmatpush2.msra.mxu0 0.0
      %5795 = vmatprep.subr.mxu0 0.0
      %5796 = vmatpush2.msra.mxu0 0.0
      %5797 = vmatprep.subr.mxu0 0.0
      %5798 = vmatpush2.msra.mxu0 0.0
      %5799 = vmatprep.subr.mxu0 0.0
      %5800 = vmatpush2.msra.mxu0 0.0
      %5801 = vmatprep.subr.mxu0 0.0
      %5802 = vmatpush2.msra.mxu0 0.0
      %5803 = vmatprep.subr.mxu0 0.0
      %5804 = vmatpush2.msra.mxu0 0.0
      %5805 = vmatprep.subr.mxu0 0.0
      %5806 = vmatpush2.msra.mxu0 0.0
      %5807 = vmatprep.subr.mxu0 0.0
      %5808 = vmatpush2.msra.mxu0 0.0
      %5809 = vmatprep.subr.mxu0 0.0
      %5810 = vmatpush2.msra.mxu0 0.0
      %5811 = vmatprep.subr.mxu0 0.0
      %5812 = vmatpush2.msra.mxu0 0.0
      %5813 = vmatprep.subr.mxu0 0.0
      %5814 = vmatpush2.msra.mxu0 0.0
      %5815 = vmatprep.subr.mxu0 0.0
      %5816 = vmatpush2.msra.mxu0 0.0
      %5817 = vmatprep.mubr.f32.mxu0 0.0
      %5818 = vmatmul.mubr.f32.gmra.mxu0 %v5742
      %v5819 = vpop.f32.mrf.mxu0
      %v5820 = vadd.f32 0.0, %v5819
      %v5821 = vpop.f32.mrf.mxu0
      %5822 = vmatprep.mubr.f32.mxu0 0.0
      %5823 = vmatmul.mubr.f32.gmra.mxu0 %v5745
      %v5824 = vpop.f32.mrf.mxu0
      %v5825 = vadd.f32 0.0, %v5824
      %v5826 = vpop.f32.mrf.mxu0
      %5827 = vmatprep.mubr.f32.mxu0 0.0
      %5828 = vmatmul.mubr.f32.gmra.mxu0 %v5748
      %v5829 = vpop.f32.mrf.mxu0
      %v5830 = vadd.f32 0.0, %v5829
      %v5831 = vpop.f32.mrf.mxu0
      %5832 = vmatprep.mubr.f32.mxu0 0.0
      %5833 = vmatmul.mubr.f32.gmra.mxu0 %v5751
      %v5834 = vpop.f32.mrf.mxu0
      %v5835 = vadd.f32 0.0, %v5834
      %v5836 = vpop.f32.mrf.mxu0
      %5837 = vdwg.mxu0
      %v5838 = vadd.f32 %v5720, %v5820
      %v5839 = vadd.f32 %v5721, %v5825
      %v5840 = vadd.f32 %v5722, %v5830
      %v5841 = vadd.f32 %v5723, %v5835
      %s5842 = scalar_lea.vmem %s7, 192
      %v5843 = vld [vmem:[%s5842] sm:$0xff]
      %v5844 = vld [vmem:[%s5842 + $0x8] sm:$0xff]
      %v5845 = vld [vmem:[%s5842 + $0x10] sm:$0xff]
      %v5846 = vld [vmem:[%s5842 + $0x18] sm:$0xff]
      %5848 = vset.pattern.permute.xlu0 0
      %5849 = vperm.xlu0 %5848, %v5843
      %v5850 = vpop.permute.xlu0 %5849
      %5853 = vset.pattern.permute.xlu0 0
      %5854 = vperm.xlu0 %5853, %v5844
      %v5855 = vpop.permute.xlu0 %5854
      %5858 = vset.pattern.permute.xlu0 0
      %5859 = vperm.xlu0 %5858, %v5845
      %v5860 = vpop.permute.xlu0 %5859
      %5863 = vset.pattern.permute.xlu0 0
      %5864 = vperm.xlu0 %5863, %v5846
      %v5865 = vpop.permute.xlu0 %5864
      %v5867 = vmul.f32 %v5850, %v1177
      %v5868 = vmul.f32 %v5855, %v1177
      %v5869 = vmul.f32 %v5860, %v1177
      %v5870 = vmul.f32 %v5865, %v1177
      %v5871 = vadd.f32 %v5838, %v5867
      %v5872 = vadd.f32 %v5839, %v5868
      %v5873 = vadd.f32 %v5840, %v5869
      %v5874 = vadd.f32 %v5841, %v5870
      %s5875 = scalar_lea.vmem %s7, 224
      %v5876 = vld [vmem:[%s5875] sm:$0xff]
      %v5877 = vld [vmem:[%s5875 + $0x8] sm:$0xff]
      %v5878 = vld [vmem:[%s5875 + $0x10] sm:$0xff]
      %v5879 = vld [vmem:[%s5875 + $0x18] sm:$0xff]
      %5881 = vset.pattern.permute.xlu0 0
      %5882 = vperm.xlu0 %5881, %v5876
      %v5883 = vpop.permute.xlu0 %5882
      %5886 = vset.pattern.permute.xlu0 0
      %5887 = vperm.xlu0 %5886, %v5877
      %v5888 = vpop.permute.xlu0 %5887
      %5891 = vset.pattern.permute.xlu0 0
      %5892 = vperm.xlu0 %5891, %v5878
      %v5893 = vpop.permute.xlu0 %5892
      %5896 = vset.pattern.permute.xlu0 0
      %5897 = vperm.xlu0 %5896, %v5879
      %v5898 = vpop.permute.xlu0 %5897
      %v5900 = vmul.f32 %v5883, %v1216
      %v5901 = vmul.f32 %v5888, %v1216
      %v5902 = vmul.f32 %v5893, %v1216
      %v5903 = vmul.f32 %v5898, %v1216
      %v5904 = vadd.f32 %v5871, %v5900
      %v5905 = vadd.f32 %v5872, %v5901
      %v5906 = vadd.f32 %v5873, %v5902
      %v5907 = vadd.f32 %v5874, %v5903
      %s5908 = scalar_lea.vmem %s6, 128
      %v5909 = vld [vmem:[%s5908] sm:$0xff]
      %v5910 = vld [vmem:[%s5908 + $0x8] sm:$0xff]
      %v5911 = vld [vmem:[%s5908 + $0x10] sm:$0xff]
      %v5912 = vld [vmem:[%s5908 + $0x18] sm:$0xff]
      %v5914 = vsel %vm5189, %v5909, 0
      %v5917 = vsel %vm5189, %v5910, 0
      %v5920 = vsel %vm5189, %v5911, 0
      %v5923 = vsel %vm5189, %v5912, 0
      %5925 = vmatprep.subr.mxu0 0.0
      %5926 = vmatpush1.msra.mxu0 0.0
      %5927 = vmatprep.subr.mxu0 0.0
      %5928 = vmatpush1.msra.mxu0 0.0
      %5929 = vmatprep.subr.mxu0 0.0
      %5930 = vmatpush1.msra.mxu0 0.0
      %5931 = vmatprep.subr.mxu0 0.0
      %5932 = vmatpush1.msra.mxu0 0.0
      %5933 = vmatprep.subr.mxu0 0.0
      %5934 = vmatpush1.msra.mxu0 0.0
      %5935 = vmatprep.subr.mxu0 0.0
      %5936 = vmatpush1.msra.mxu0 0.0
      %5937 = vmatprep.subr.mxu0 0.0
      %5938 = vmatpush1.msra.mxu0 0.0
      %5939 = vmatprep.subr.mxu0 0.0
      %5940 = vmatpush1.msra.mxu0 0.0
      %5941 = vmatprep.subr.mxu0 0.0
      %5942 = vmatpush1.msra.mxu0 0.0
      %5943 = vmatprep.subr.mxu0 0.0
      %5944 = vmatpush1.msra.mxu0 0.0
      %5945 = vmatprep.subr.mxu0 0.0
      %5946 = vmatpush1.msra.mxu0 0.0
      %5947 = vmatprep.subr.mxu0 0.0
      %5948 = vmatpush1.msra.mxu0 0.0
      %5949 = vmatprep.subr.mxu0 0.0
      %5950 = vmatpush1.msra.mxu0 %v2149
      %5951 = vmatprep.subr.mxu0 0.0
      %5952 = vmatpush1.msra.mxu0 %v2148
      %5953 = vmatprep.subr.mxu0 0.0
      %5954 = vmatpush1.msra.mxu0 %v2147
      %5955 = vmatprep.subr.mxu0 0.0
      %5956 = vmatpush1.msra.mxu0 %v2146
      %5957 = vmatprep.subr.mxu0 0.0
      %5958 = vmatpush2.msra.mxu0 0.0
      %5959 = vmatprep.subr.mxu0 0.0
      %5960 = vmatpush2.msra.mxu0 0.0
      %5961 = vmatprep.subr.mxu0 0.0
      %5962 = vmatpush2.msra.mxu0 0.0
      %5963 = vmatprep.subr.mxu0 0.0
      %5964 = vmatpush2.msra.mxu0 0.0
      %5965 = vmatprep.subr.mxu0 0.0
      %5966 = vmatpush2.msra.mxu0 0.0
      %5967 = vmatprep.subr.mxu0 0.0
      %5968 = vmatpush2.msra.mxu0 0.0
      %5969 = vmatprep.subr.mxu0 0.0
      %5970 = vmatpush2.msra.mxu0 0.0
      %5971 = vmatprep.subr.mxu0 0.0
      %5972 = vmatpush2.msra.mxu0 0.0
      %5973 = vmatprep.subr.mxu0 0.0
      %5974 = vmatpush2.msra.mxu0 0.0
      %5975 = vmatprep.subr.mxu0 0.0
      %5976 = vmatpush2.msra.mxu0 0.0
      %5977 = vmatprep.subr.mxu0 0.0
      %5978 = vmatpush2.msra.mxu0 0.0
      %5979 = vmatprep.subr.mxu0 0.0
      %5980 = vmatpush2.msra.mxu0 0.0
      %5981 = vmatprep.subr.mxu0 0.0
      %5982 = vmatpush2.msra.mxu0 0.0
      %5983 = vmatprep.subr.mxu0 0.0
      %5984 = vmatpush2.msra.mxu0 0.0
      %5985 = vmatprep.subr.mxu0 0.0
      %5986 = vmatpush2.msra.mxu0 0.0
      %5987 = vmatprep.subr.mxu0 0.0
      %5988 = vmatpush2.msra.mxu0 0.0
      %5989 = vmatprep.mubr.f32.mxu0 0.0
      %5990 = vmatmul.mubr.f32.gmra.mxu0 %v5914
      %v5991 = vpop.f32.mrf.mxu0
      %v5992 = vadd.f32 0.0, %v5991
      %v5993 = vpop.f32.mrf.mxu0
      %5994 = vmatprep.mubr.f32.mxu0 0.0
      %5995 = vmatmul.mubr.f32.gmra.mxu0 %v5917
      %v5996 = vpop.f32.mrf.mxu0
      %v5997 = vadd.f32 0.0, %v5996
      %v5998 = vpop.f32.mrf.mxu0
      %5999 = vmatprep.mubr.f32.mxu0 0.0
      %6000 = vmatmul.mubr.f32.gmra.mxu0 %v5920
      %v6001 = vpop.f32.mrf.mxu0
      %v6002 = vadd.f32 0.0, %v6001
      %v6003 = vpop.f32.mrf.mxu0
      %6004 = vmatprep.mubr.f32.mxu0 0.0
      %6005 = vmatmul.mubr.f32.gmra.mxu0 %v5923
      %v6006 = vpop.f32.mrf.mxu0
      %v6007 = vadd.f32 0.0, %v6006
      %v6008 = vpop.f32.mrf.mxu0
      %6009 = vdwg.mxu0
      %v6010 = vadd.f32 %v5904, %v5992
      %v6011 = vadd.f32 %v5905, %v5997
      %v6012 = vadd.f32 %v5906, %v6002
      %v6013 = vadd.f32 %v5907, %v6007
      %s6014 = scalar_lea.vmem %s7, 256
      %v6015 = vld [vmem:[%s6014] sm:$0xff]
      %v6016 = vld [vmem:[%s6014 + $0x8] sm:$0xff]
      %v6017 = vld [vmem:[%s6014 + $0x10] sm:$0xff]
      %v6018 = vld [vmem:[%s6014 + $0x18] sm:$0xff]
      %6020 = vset.pattern.permute.xlu0 0
      %6021 = vperm.xlu0 %6020, %v6015
      %v6022 = vpop.permute.xlu0 %6021
      %6025 = vset.pattern.permute.xlu0 0
      %6026 = vperm.xlu0 %6025, %v6016
      %v6027 = vpop.permute.xlu0 %6026
      %6030 = vset.pattern.permute.xlu0 0
      %6031 = vperm.xlu0 %6030, %v6017
      %v6032 = vpop.permute.xlu0 %6031
      %6035 = vset.pattern.permute.xlu0 0
      %6036 = vperm.xlu0 %6035, %v6018
      %v6037 = vpop.permute.xlu0 %6036
      %v6039 = vmul.f32 %v6022, %v1364
      %v6040 = vmul.f32 %v6027, %v1364
      %v6041 = vmul.f32 %v6032, %v1364
      %v6042 = vmul.f32 %v6037, %v1364
      %v6043 = vadd.f32 %v6010, %v6039
      %v6044 = vadd.f32 %v6011, %v6040
      %v6045 = vadd.f32 %v6012, %v6041
      %v6046 = vadd.f32 %v6013, %v6042
      %s6047 = scalar_lea.vmem %s7, 288
      %v6048 = vld [vmem:[%s6047] sm:$0xff]
      %v6049 = vld [vmem:[%s6047 + $0x8] sm:$0xff]
      %v6050 = vld [vmem:[%s6047 + $0x10] sm:$0xff]
      %v6051 = vld [vmem:[%s6047 + $0x18] sm:$0xff]
      %6053 = vset.pattern.permute.xlu0 0
      %6054 = vperm.xlu0 %6053, %v6048
      %v6055 = vpop.permute.xlu0 %6054
      %6058 = vset.pattern.permute.xlu0 0
      %6059 = vperm.xlu0 %6058, %v6049
      %v6060 = vpop.permute.xlu0 %6059
      %6063 = vset.pattern.permute.xlu0 0
      %6064 = vperm.xlu0 %6063, %v6050
      %v6065 = vpop.permute.xlu0 %6064
      %6068 = vset.pattern.permute.xlu0 0
      %6069 = vperm.xlu0 %6068, %v6051
      %v6070 = vpop.permute.xlu0 %6069
      %v6072 = vmul.f32 %v6055, %v1403
      %v6073 = vmul.f32 %v6060, %v1403
      %v6074 = vmul.f32 %v6065, %v1403
      %v6075 = vmul.f32 %v6070, %v1403
      %v6076 = vadd.f32 %v6043, %v6072
      %v6077 = vadd.f32 %v6044, %v6073
      %v6078 = vadd.f32 %v6045, %v6074
      %v6079 = vadd.f32 %v6046, %v6075
      %s6080 = scalar_lea.vmem %s6, 160
      %v6081 = vld [vmem:[%s6080] sm:$0xff]
      %v6082 = vld [vmem:[%s6080 + $0x8] sm:$0xff]
      %v6083 = vld [vmem:[%s6080 + $0x10] sm:$0xff]
      %v6084 = vld [vmem:[%s6080 + $0x18] sm:$0xff]
      %v6086 = vsel %vm5189, %v6081, 0
      %v6089 = vsel %vm5189, %v6082, 0
      %v6092 = vsel %vm5189, %v6083, 0
      %v6095 = vsel %vm5189, %v6084, 0
      %6097 = vmatprep.subr.mxu0 0.0
      %6098 = vmatpush1.msra.mxu0 0.0
      %6099 = vmatprep.subr.mxu0 0.0
      %6100 = vmatpush1.msra.mxu0 0.0
      %6101 = vmatprep.subr.mxu0 0.0
      %6102 = vmatpush1.msra.mxu0 0.0
      %6103 = vmatprep.subr.mxu0 0.0
      %6104 = vmatpush1.msra.mxu0 0.0
      %6105 = vmatprep.subr.mxu0 0.0
      %6106 = vmatpush1.msra.mxu0 0.0
      %6107 = vmatprep.subr.mxu0 0.0
      %6108 = vmatpush1.msra.mxu0 0.0
      %6109 = vmatprep.subr.mxu0 0.0
      %6110 = vmatpush1.msra.mxu0 0.0
      %6111 = vmatprep.subr.mxu0 0.0
      %6112 = vmatpush1.msra.mxu0 0.0
      %6113 = vmatprep.subr.mxu0 0.0
      %6114 = vmatpush1.msra.mxu0 0.0
      %6115 = vmatprep.subr.mxu0 0.0
      %6116 = vmatpush1.msra.mxu0 0.0
      %6117 = vmatprep.subr.mxu0 0.0
      %6118 = vmatpush1.msra.mxu0 0.0
      %6119 = vmatprep.subr.mxu0 0.0
      %6120 = vmatpush1.msra.mxu0 0.0
      %6121 = vmatprep.subr.mxu0 0.0
      %6122 = vmatpush1.msra.mxu0 %v3166
      %6123 = vmatprep.subr.mxu0 0.0
      %6124 = vmatpush1.msra.mxu0 %v3165
      %6125 = vmatprep.subr.mxu0 0.0
      %6126 = vmatpush1.msra.mxu0 %v3164
      %6127 = vmatprep.subr.mxu0 0.0
      %6128 = vmatpush1.msra.mxu0 %v3163
      %6129 = vmatprep.subr.mxu0 0.0
      %6130 = vmatpush2.msra.mxu0 0.0
      %6131 = vmatprep.subr.mxu0 0.0
      %6132 = vmatpush2.msra.mxu0 0.0
      %6133 = vmatprep.subr.mxu0 0.0
      %6134 = vmatpush2.msra.mxu0 0.0
      %6135 = vmatprep.subr.mxu0 0.0
      %6136 = vmatpush2.msra.mxu0 0.0
      %6137 = vmatprep.subr.mxu0 0.0
      %6138 = vmatpush2.msra.mxu0 0.0
      %6139 = vmatprep.subr.mxu0 0.0
      %6140 = vmatpush2.msra.mxu0 0.0
      %6141 = vmatprep.subr.mxu0 0.0
      %6142 = vmatpush2.msra.mxu0 0.0
      %6143 = vmatprep.subr.mxu0 0.0
      %6144 = vmatpush2.msra.mxu0 0.0
      %6145 = vmatprep.subr.mxu0 0.0
      %6146 = vmatpush2.msra.mxu0 0.0
      %6147 = vmatprep.subr.mxu0 0.0
      %6148 = vmatpush2.msra.mxu0 0.0
      %6149 = vmatprep.subr.mxu0 0.0
      %6150 = vmatpush2.msra.mxu0 0.0
      %6151 = vmatprep.subr.mxu0 0.0
      %6152 = vmatpush2.msra.mxu0 0.0
      %6153 = vmatprep.subr.mxu0 0.0
      %6154 = vmatpush2.msra.mxu0 0.0
      %6155 = vmatprep.subr.mxu0 0.0
      %6156 = vmatpush2.msra.mxu0 0.0
      %6157 = vmatprep.subr.mxu0 0.0
      %6158 = vmatpush2.msra.mxu0 0.0
      %6159 = vmatprep.subr.mxu0 0.0
      %6160 = vmatpush2.msra.mxu0 0.0
      %6161 = vmatprep.mubr.f32.mxu0 0.0
      %6162 = vmatmul.mubr.f32.gmra.mxu0 %v6086
      %v6163 = vpop.f32.mrf.mxu0
      %v6164 = vadd.f32 0.0, %v6163
      %v6165 = vpop.f32.mrf.mxu0
      %6166 = vmatprep.mubr.f32.mxu0 0.0
      %6167 = vmatmul.mubr.f32.gmra.mxu0 %v6089
      %v6168 = vpop.f32.mrf.mxu0
      %v6169 = vadd.f32 0.0, %v6168
      %v6170 = vpop.f32.mrf.mxu0
      %6171 = vmatprep.mubr.f32.mxu0 0.0
      %6172 = vmatmul.mubr.f32.gmra.mxu0 %v6092
      %v6173 = vpop.f32.mrf.mxu0
      %v6174 = vadd.f32 0.0, %v6173
      %v6175 = vpop.f32.mrf.mxu0
      %6176 = vmatprep.mubr.f32.mxu0 0.0
      %6177 = vmatmul.mubr.f32.gmra.mxu0 %v6095
      %v6178 = vpop.f32.mrf.mxu0
      %v6179 = vadd.f32 0.0, %v6178
      %v6180 = vpop.f32.mrf.mxu0
      %6181 = vdwg.mxu0
      %v6182 = vadd.f32 %v6076, %v6164
      %v6183 = vadd.f32 %v6077, %v6169
      %v6184 = vadd.f32 %v6078, %v6174
      %v6185 = vadd.f32 %v6079, %v6179
      %s6186 = scalar_lea.vmem %s7, 320
      %v6187 = vld [vmem:[%s6186] sm:$0xff]
      %v6188 = vld [vmem:[%s6186 + $0x8] sm:$0xff]
      %v6189 = vld [vmem:[%s6186 + $0x10] sm:$0xff]
      %v6190 = vld [vmem:[%s6186 + $0x18] sm:$0xff]
      %6192 = vset.pattern.permute.xlu0 0
      %6193 = vperm.xlu0 %6192, %v6187
      %v6194 = vpop.permute.xlu0 %6193
      %6197 = vset.pattern.permute.xlu0 0
      %6198 = vperm.xlu0 %6197, %v6188
      %v6199 = vpop.permute.xlu0 %6198
      %6202 = vset.pattern.permute.xlu0 0
      %6203 = vperm.xlu0 %6202, %v6189
      %v6204 = vpop.permute.xlu0 %6203
      %6207 = vset.pattern.permute.xlu0 0
      %6208 = vperm.xlu0 %6207, %v6190
      %v6209 = vpop.permute.xlu0 %6208
      %v6211 = vmul.f32 %v6194, %v1364
      %v6212 = vmul.f32 %v6199, %v1364
      %v6213 = vmul.f32 %v6204, %v1364
      %v6214 = vmul.f32 %v6209, %v1364
      %v6215 = vadd.f32 %v6182, %v6211
      %v6216 = vadd.f32 %v6183, %v6212
      %v6217 = vadd.f32 %v6184, %v6213
      %v6218 = vadd.f32 %v6185, %v6214
      %s6219 = scalar_lea.vmem %s7, 352
      %v6220 = vld [vmem:[%s6219] sm:$0xff]
      %v6221 = vld [vmem:[%s6219 + $0x8] sm:$0xff]
      %v6222 = vld [vmem:[%s6219 + $0x10] sm:$0xff]
      %v6223 = vld [vmem:[%s6219 + $0x18] sm:$0xff]
      %6225 = vset.pattern.permute.xlu0 0
      %6226 = vperm.xlu0 %6225, %v6220
      %v6227 = vpop.permute.xlu0 %6226
      %6230 = vset.pattern.permute.xlu0 0
      %6231 = vperm.xlu0 %6230, %v6221
      %v6232 = vpop.permute.xlu0 %6231
      %6235 = vset.pattern.permute.xlu0 0
      %6236 = vperm.xlu0 %6235, %v6222
      %v6237 = vpop.permute.xlu0 %6236
      %6240 = vset.pattern.permute.xlu0 0
      %6241 = vperm.xlu0 %6240, %v6223
      %v6242 = vpop.permute.xlu0 %6241
      %v6244 = vmul.f32 %v6227, %v1584
      %v6245 = vmul.f32 %v6232, %v1584
      %v6246 = vmul.f32 %v6237, %v1584
      %v6247 = vmul.f32 %v6242, %v1584
      %v6248 = vadd.f32 %v6215, %v6244
      %v6249 = vadd.f32 %v6216, %v6245
      %v6250 = vadd.f32 %v6217, %v6246
      %v6251 = vadd.f32 %v6218, %v6247
      %6252 = vrot.lane.b32.xlu0 %v5141, 1
      %v6253 = vpop.permute.xlu0 %6252
      %6254 = vrot.lane.b32.xlu0 %v5142, 1
      %v6255 = vpop.permute.xlu0 %6254
      %6256 = vrot.lane.b32.xlu0 %v5143, 1
      %v6257 = vpop.permute.xlu0 %6256
      %6258 = vrot.lane.b32.xlu0 %v5144, 1
      %v6259 = vpop.permute.xlu0 %6258
      %v6260 = vmul.f32 %v6253, %v1036
      %v6261 = vmul.f32 %v6255, %v1036
      %v6262 = vmul.f32 %v6257, %v1036
      %v6263 = vmul.f32 %v6259, %v1036
      %s6264 = scalar_lea.vmem %s6, 192
      %v6265 = vld [vmem:[%s6264] sm:$0xff]
      %v6266 = vld [vmem:[%s6264 + $0x8] sm:$0xff]
      %v6267 = vld [vmem:[%s6264 + $0x10] sm:$0xff]
      %v6268 = vld [vmem:[%s6264 + $0x18] sm:$0xff]
      %v6270 = vsel %vm5189, %v6265, 0
      %v6273 = vsel %vm5189, %v6266, 0
      %v6276 = vsel %vm5189, %v6267, 0
      %v6279 = vsel %vm5189, %v6268, 0
      %6281 = vmatprep.subr.mxu0 0.0
      %6282 = vmatpush1.msra.mxu0 0.0
      %6283 = vmatprep.subr.mxu0 0.0
      %6284 = vmatpush1.msra.mxu0 0.0
      %6285 = vmatprep.subr.mxu0 0.0
      %6286 = vmatpush1.msra.mxu0 0.0
      %6287 = vmatprep.subr.mxu0 0.0
      %6288 = vmatpush1.msra.mxu0 0.0
      %6289 = vmatprep.subr.mxu0 0.0
      %6290 = vmatpush1.msra.mxu0 0.0
      %6291 = vmatprep.subr.mxu0 0.0
      %6292 = vmatpush1.msra.mxu0 0.0
      %6293 = vmatprep.subr.mxu0 0.0
      %6294 = vmatpush1.msra.mxu0 0.0
      %6295 = vmatprep.subr.mxu0 0.0
      %6296 = vmatpush1.msra.mxu0 0.0
      %6297 = vmatprep.subr.mxu0 0.0
      %6298 = vmatpush1.msra.mxu0 0.0
      %6299 = vmatprep.subr.mxu0 0.0
      %6300 = vmatpush1.msra.mxu0 0.0
      %6301 = vmatprep.subr.mxu0 0.0
      %6302 = vmatpush1.msra.mxu0 0.0
      %6303 = vmatprep.subr.mxu0 0.0
      %6304 = vmatpush1.msra.mxu0 0.0
      %6305 = vmatprep.subr.mxu0 0.0
      %6306 = vmatpush1.msra.mxu0 %v6263
      %6307 = vmatprep.subr.mxu0 0.0
      %6308 = vmatpush1.msra.mxu0 %v6262
      %6309 = vmatprep.subr.mxu0 0.0
      %6310 = vmatpush1.msra.mxu0 %v6261
      %6311 = vmatprep.subr.mxu0 0.0
      %6312 = vmatpush1.msra.mxu0 %v6260
      %6313 = vmatprep.subr.mxu0 0.0
      %6314 = vmatpush2.msra.mxu0 0.0
      %6315 = vmatprep.subr.mxu0 0.0
      %6316 = vmatpush2.msra.mxu0 0.0
      %6317 = vmatprep.subr.mxu0 0.0
      %6318 = vmatpush2.msra.mxu0 0.0
      %6319 = vmatprep.subr.mxu0 0.0
      %6320 = vmatpush2.msra.mxu0 0.0
      %6321 = vmatprep.subr.mxu0 0.0
      %6322 = vmatpush2.msra.mxu0 0.0
      %6323 = vmatprep.subr.mxu0 0.0
      %6324 = vmatpush2.msra.mxu0 0.0
      %6325 = vmatprep.subr.mxu0 0.0
      %6326 = vmatpush2.msra.mxu0 0.0
      %6327 = vmatprep.subr.mxu0 0.0
      %6328 = vmatpush2.msra.mxu0 0.0
      %6329 = vmatprep.subr.mxu0 0.0
      %6330 = vmatpush2.msra.mxu0 0.0
      %6331 = vmatprep.subr.mxu0 0.0
      %6332 = vmatpush2.msra.mxu0 0.0
      %6333 = vmatprep.subr.mxu0 0.0
      %6334 = vmatpush2.msra.mxu0 0.0
      %6335 = vmatprep.subr.mxu0 0.0
      %6336 = vmatpush2.msra.mxu0 0.0
      %6337 = vmatprep.subr.mxu0 0.0
      %6338 = vmatpush2.msra.mxu0 0.0
      %6339 = vmatprep.subr.mxu0 0.0
      %6340 = vmatpush2.msra.mxu0 0.0
      %6341 = vmatprep.subr.mxu0 0.0
      %6342 = vmatpush2.msra.mxu0 0.0
      %6343 = vmatprep.subr.mxu0 0.0
      %6344 = vmatpush2.msra.mxu0 0.0
      %6345 = vmatprep.mubr.f32.mxu0 0.0
      %6346 = vmatmul.mubr.f32.gmra.mxu0 %v6270
      %v6347 = vpop.f32.mrf.mxu0
      %v6348 = vadd.f32 0.0, %v6347
      %v6349 = vpop.f32.mrf.mxu0
      %6350 = vmatprep.mubr.f32.mxu0 0.0
      %6351 = vmatmul.mubr.f32.gmra.mxu0 %v6273
      %v6352 = vpop.f32.mrf.mxu0
      %v6353 = vadd.f32 0.0, %v6352
      %v6354 = vpop.f32.mrf.mxu0
      %6355 = vmatprep.mubr.f32.mxu0 0.0
      %6356 = vmatmul.mubr.f32.gmra.mxu0 %v6276
      %v6357 = vpop.f32.mrf.mxu0
      %v6358 = vadd.f32 0.0, %v6357
      %v6359 = vpop.f32.mrf.mxu0
      %6360 = vmatprep.mubr.f32.mxu0 0.0
      %6361 = vmatmul.mubr.f32.gmra.mxu0 %v6279
      %v6362 = vpop.f32.mrf.mxu0
      %v6363 = vadd.f32 0.0, %v6362
      %v6364 = vpop.f32.mrf.mxu0
      %6365 = vdwg.mxu0
      %v6366 = vadd.f32 %v6248, %v6348
      %v6367 = vadd.f32 %v6249, %v6353
      %v6368 = vadd.f32 %v6250, %v6358
      %v6369 = vadd.f32 %v6251, %v6363
      %s6370 = scalar_lea.vmem %s7, 384
      %v6371 = vld [vmem:[%s6370] sm:$0xff]
      %v6372 = vld [vmem:[%s6370 + $0x8] sm:$0xff]
      %v6373 = vld [vmem:[%s6370 + $0x10] sm:$0xff]
      %v6374 = vld [vmem:[%s6370 + $0x18] sm:$0xff]
      %6376 = vset.pattern.permute.xlu0 0
      %6377 = vperm.xlu0 %6376, %v6371
      %v6378 = vpop.permute.xlu0 %6377
      %6381 = vset.pattern.permute.xlu0 0
      %6382 = vperm.xlu0 %6381, %v6372
      %v6383 = vpop.permute.xlu0 %6382
      %6386 = vset.pattern.permute.xlu0 0
      %6387 = vperm.xlu0 %6386, %v6373
      %v6388 = vpop.permute.xlu0 %6387
      %6391 = vset.pattern.permute.xlu0 0
      %6392 = vperm.xlu0 %6391, %v6374
      %v6393 = vpop.permute.xlu0 %6392
      %v6395 = vmul.f32 %v6378, %v1739
      %v6396 = vmul.f32 %v6383, %v1739
      %v6397 = vmul.f32 %v6388, %v1739
      %v6398 = vmul.f32 %v6393, %v1739
      %v6399 = vadd.f32 %v6366, %v6395
      %v6400 = vadd.f32 %v6367, %v6396
      %v6401 = vadd.f32 %v6368, %v6397
      %v6402 = vadd.f32 %v6369, %v6398
      %s6403 = scalar_lea.vmem %s7, 416
      %v6404 = vld [vmem:[%s6403] sm:$0xff]
      %v6405 = vld [vmem:[%s6403 + $0x8] sm:$0xff]
      %v6406 = vld [vmem:[%s6403 + $0x10] sm:$0xff]
      %v6407 = vld [vmem:[%s6403 + $0x18] sm:$0xff]
      %6409 = vset.pattern.permute.xlu0 0
      %6410 = vperm.xlu0 %6409, %v6404
      %v6411 = vpop.permute.xlu0 %6410
      %6414 = vset.pattern.permute.xlu0 0
      %6415 = vperm.xlu0 %6414, %v6405
      %v6416 = vpop.permute.xlu0 %6415
      %6419 = vset.pattern.permute.xlu0 0
      %6420 = vperm.xlu0 %6419, %v6406
      %v6421 = vpop.permute.xlu0 %6420
      %6424 = vset.pattern.permute.xlu0 0
      %6425 = vperm.xlu0 %6424, %v6407
      %v6426 = vpop.permute.xlu0 %6425
      %v6428 = vmul.f32 %v6411, %v1216
      %v6429 = vmul.f32 %v6416, %v1216
      %v6430 = vmul.f32 %v6421, %v1216
      %v6431 = vmul.f32 %v6426, %v1216
      %v6432 = vadd.f32 %v6399, %v6428
      %v6433 = vadd.f32 %v6400, %v6429
      %v6434 = vadd.f32 %v6401, %v6430
      %v6435 = vadd.f32 %v6402, %v6431
      %s6436 = scalar_lea.vmem %s6, 224
      %v6437 = vld [vmem:[%s6436] sm:$0xff]
      %v6438 = vld [vmem:[%s6436 + $0x8] sm:$0xff]
      %v6439 = vld [vmem:[%s6436 + $0x10] sm:$0xff]
      %v6440 = vld [vmem:[%s6436 + $0x18] sm:$0xff]
      %v6442 = vsel %vm5189, %v6437, 0
      %v6445 = vsel %vm5189, %v6438, 0
      %v6448 = vsel %vm5189, %v6439, 0
      %v6451 = vsel %vm5189, %v6440, 0
      %6453 = vmatprep.subr.mxu0 0.0
      %6454 = vmatpush1.msra.mxu0 0.0
      %6455 = vmatprep.subr.mxu0 0.0
      %6456 = vmatpush1.msra.mxu0 0.0
      %6457 = vmatprep.subr.mxu0 0.0
      %6458 = vmatpush1.msra.mxu0 0.0
      %6459 = vmatprep.subr.mxu0 0.0
      %6460 = vmatpush1.msra.mxu0 0.0
      %6461 = vmatprep.subr.mxu0 0.0
      %6462 = vmatpush1.msra.mxu0 0.0
      %6463 = vmatprep.subr.mxu0 0.0
      %6464 = vmatpush1.msra.mxu0 0.0
      %6465 = vmatprep.subr.mxu0 0.0
      %6466 = vmatpush1.msra.mxu0 0.0
      %6467 = vmatprep.subr.mxu0 0.0
      %6468 = vmatpush1.msra.mxu0 0.0
      %6469 = vmatprep.subr.mxu0 0.0
      %6470 = vmatpush1.msra.mxu0 0.0
      %6471 = vmatprep.subr.mxu0 0.0
      %6472 = vmatpush1.msra.mxu0 0.0
      %6473 = vmatprep.subr.mxu0 0.0
      %6474 = vmatpush1.msra.mxu0 0.0
      %6475 = vmatprep.subr.mxu0 0.0
      %6476 = vmatpush1.msra.mxu0 0.0
      %6477 = vmatprep.subr.mxu0 0.0
      %6478 = vmatpush1.msra.mxu0 %v4183
      %6479 = vmatprep.subr.mxu0 0.0
      %6480 = vmatpush1.msra.mxu0 %v4182
      %6481 = vmatprep.subr.mxu0 0.0
      %6482 = vmatpush1.msra.mxu0 %v4181
      %6483 = vmatprep.subr.mxu0 0.0
      %6484 = vmatpush1.msra.mxu0 %v4180
      %6485 = vmatprep.subr.mxu0 0.0
      %6486 = vmatpush2.msra.mxu0 0.0
      %6487 = vmatprep.subr.mxu0 0.0
      %6488 = vmatpush2.msra.mxu0 0.0
      %6489 = vmatprep.subr.mxu0 0.0
      %6490 = vmatpush2.msra.mxu0 0.0
      %6491 = vmatprep.subr.mxu0 0.0
      %6492 = vmatpush2.msra.mxu0 0.0
      %6493 = vmatprep.subr.mxu0 0.0
      %6494 = vmatpush2.msra.mxu0 0.0
      %6495 = vmatprep.subr.mxu0 0.0
      %6496 = vmatpush2.msra.mxu0 0.0
      %6497 = vmatprep.subr.mxu0 0.0
      %6498 = vmatpush2.msra.mxu0 0.0
      %6499 = vmatprep.subr.mxu0 0.0
      %6500 = vmatpush2.msra.mxu0 0.0
      %6501 = vmatprep.subr.mxu0 0.0
      %6502 = vmatpush2.msra.mxu0 0.0
      %6503 = vmatprep.subr.mxu0 0.0
      %6504 = vmatpush2.msra.mxu0 0.0
      %6505 = vmatprep.subr.mxu0 0.0
      %6506 = vmatpush2.msra.mxu0 0.0
      %6507 = vmatprep.subr.mxu0 0.0
      %6508 = vmatpush2.msra.mxu0 0.0
      %6509 = vmatprep.subr.mxu0 0.0
      %6510 = vmatpush2.msra.mxu0 0.0
      %6511 = vmatprep.subr.mxu0 0.0
      %6512 = vmatpush2.msra.mxu0 0.0
      %6513 = vmatprep.subr.mxu0 0.0
      %6514 = vmatpush2.msra.mxu0 0.0
      %6515 = vmatprep.subr.mxu0 0.0
      %6516 = vmatpush2.msra.mxu0 0.0
      %6517 = vmatprep.mubr.f32.mxu0 0.0
      %6518 = vmatmul.mubr.f32.gmra.mxu0 %v6442
      %v6519 = vpop.f32.mrf.mxu0
      %v6520 = vadd.f32 0.0, %v6519
      %v6521 = vpop.f32.mrf.mxu0
      %6522 = vmatprep.mubr.f32.mxu0 0.0
      %6523 = vmatmul.mubr.f32.gmra.mxu0 %v6445
      %v6524 = vpop.f32.mrf.mxu0
      %v6525 = vadd.f32 0.0, %v6524
      %v6526 = vpop.f32.mrf.mxu0
      %6527 = vmatprep.mubr.f32.mxu0 0.0
      %6528 = vmatmul.mubr.f32.gmra.mxu0 %v6448
      %v6529 = vpop.f32.mrf.mxu0
      %v6530 = vadd.f32 0.0, %v6529
      %v6531 = vpop.f32.mrf.mxu0
      %6532 = vmatprep.mubr.f32.mxu0 0.0
      %6533 = vmatmul.mubr.f32.gmra.mxu0 %v6451
      %v6534 = vpop.f32.mrf.mxu0
      %v6535 = vadd.f32 0.0, %v6534
      %v6536 = vpop.f32.mrf.mxu0
      %6537 = vdwg.mxu0
      %v6538 = vadd.f32 %v6432, %v6520
      %v6539 = vadd.f32 %v6433, %v6525
      %v6540 = vadd.f32 %v6434, %v6530
      %v6541 = vadd.f32 %v6435, %v6535
      %s6542 = scalar_lea.vmem %s7, 448
      %v6543 = vld [vmem:[%s6542] sm:$0xff]
      %v6544 = vld [vmem:[%s6542 + $0x8] sm:$0xff]
      %v6545 = vld [vmem:[%s6542 + $0x10] sm:$0xff]
      %v6546 = vld [vmem:[%s6542 + $0x18] sm:$0xff]
      %6548 = vset.pattern.permute.xlu0 0
      %6549 = vperm.xlu0 %6548, %v6543
      %v6550 = vpop.permute.xlu0 %6549
      %6553 = vset.pattern.permute.xlu0 0
      %6554 = vperm.xlu0 %6553, %v6544
      %v6555 = vpop.permute.xlu0 %6554
      %6558 = vset.pattern.permute.xlu0 0
      %6559 = vperm.xlu0 %6558, %v6545
      %v6560 = vpop.permute.xlu0 %6559
      %6563 = vset.pattern.permute.xlu0 0
      %6564 = vperm.xlu0 %6563, %v6546
      %v6565 = vpop.permute.xlu0 %6564
      %v6567 = vmul.f32 %v6550, %v1920
      %v6568 = vmul.f32 %v6555, %v1920
      %v6569 = vmul.f32 %v6560, %v1920
      %v6570 = vmul.f32 %v6565, %v1920
      %v6571 = vadd.f32 %v6538, %v6567
      %v6572 = vadd.f32 %v6539, %v6568
      %v6573 = vadd.f32 %v6540, %v6569
      %v6574 = vadd.f32 %v6541, %v6570
      %s6575 = scalar_lea.vmem %s7, 480
      %v6576 = vld [vmem:[%s6575] sm:$0xff]
      %v6577 = vld [vmem:[%s6575 + $0x8] sm:$0xff]
      %v6578 = vld [vmem:[%s6575 + $0x10] sm:$0xff]
      %v6579 = vld [vmem:[%s6575 + $0x18] sm:$0xff]
      %6581 = vset.pattern.permute.xlu0 0
      %6582 = vperm.xlu0 %6581, %v6576
      %v6583 = vpop.permute.xlu0 %6582
      %6586 = vset.pattern.permute.xlu0 0
      %6587 = vperm.xlu0 %6586, %v6577
      %v6588 = vpop.permute.xlu0 %6587
      %6591 = vset.pattern.permute.xlu0 0
      %6592 = vperm.xlu0 %6591, %v6578
      %v6593 = vpop.permute.xlu0 %6592
      %6596 = vset.pattern.permute.xlu0 0
      %6597 = vperm.xlu0 %6596, %v6579
      %v6598 = vpop.permute.xlu0 %6597
      %v6600 = vmul.f32 %v6583, %v1403
      %v6601 = vmul.f32 %v6588, %v1403
      %v6602 = vmul.f32 %v6593, %v1403
      %v6603 = vmul.f32 %v6598, %v1403
      %v6604 = vadd.f32 %v6571, %v6600
      %v6605 = vadd.f32 %v6572, %v6601
      %v6606 = vadd.f32 %v6573, %v6602
      %v6607 = vadd.f32 %v6574, %v6603
      %s6608 = scalar_lea.vmem %s6, 256
      %v6609 = vld [vmem:[%s6608] sm:$0xff]
      %v6610 = vld [vmem:[%s6608 + $0x8] sm:$0xff]
      %v6611 = vld [vmem:[%s6608 + $0x10] sm:$0xff]
      %v6612 = vld [vmem:[%s6608 + $0x18] sm:$0xff]
      %v6614 = vsel %vm5189, %v6609, 0
      %v6617 = vsel %vm5189, %v6610, 0
      %v6620 = vsel %vm5189, %v6611, 0
      %v6623 = vsel %vm5189, %v6612, 0
      %6625 = vmatprep.subr.mxu0 0.0
      %6626 = vmatpush1.msra.mxu0 0.0
      %6627 = vmatprep.subr.mxu0 0.0
      %6628 = vmatpush1.msra.mxu0 0.0
      %6629 = vmatprep.subr.mxu0 0.0
      %6630 = vmatpush1.msra.mxu0 0.0
      %6631 = vmatprep.subr.mxu0 0.0
      %6632 = vmatpush1.msra.mxu0 0.0
      %6633 = vmatprep.subr.mxu0 0.0
      %6634 = vmatpush1.msra.mxu0 0.0
      %6635 = vmatprep.subr.mxu0 0.0
      %6636 = vmatpush1.msra.mxu0 0.0
      %6637 = vmatprep.subr.mxu0 0.0
      %6638 = vmatpush1.msra.mxu0 0.0
      %6639 = vmatprep.subr.mxu0 0.0
      %6640 = vmatpush1.msra.mxu0 0.0
      %6641 = vmatprep.subr.mxu0 0.0
      %6642 = vmatpush1.msra.mxu0 0.0
      %6643 = vmatprep.subr.mxu0 0.0
      %6644 = vmatpush1.msra.mxu0 0.0
      %6645 = vmatprep.subr.mxu0 0.0
      %6646 = vmatpush1.msra.mxu0 0.0
      %6647 = vmatprep.subr.mxu0 0.0
      %6648 = vmatpush1.msra.mxu0 0.0
      %6649 = vmatprep.subr.mxu0 0.0
      %6650 = vmatpush1.msra.mxu0 %v5144
      %6651 = vmatprep.subr.mxu0 0.0
      %6652 = vmatpush1.msra.mxu0 %v5143
      %6653 = vmatprep.subr.mxu0 0.0
      %6654 = vmatpush1.msra.mxu0 %v5142
      %6655 = vmatprep.subr.mxu0 0.0
      %6656 = vmatpush1.msra.mxu0 %v5141
      %6657 = vmatprep.subr.mxu0 0.0
      %6658 = vmatpush2.msra.mxu0 0.0
      %6659 = vmatprep.subr.mxu0 0.0
      %6660 = vmatpush2.msra.mxu0 0.0
      %6661 = vmatprep.subr.mxu0 0.0
      %6662 = vmatpush2.msra.mxu0 0.0
      %6663 = vmatprep.subr.mxu0 0.0
      %6664 = vmatpush2.msra.mxu0 0.0
      %6665 = vmatprep.subr.mxu0 0.0
      %6666 = vmatpush2.msra.mxu0 0.0
      %6667 = vmatprep.subr.mxu0 0.0
      %6668 = vmatpush2.msra.mxu0 0.0
      %6669 = vmatprep.subr.mxu0 0.0
      %6670 = vmatpush2.msra.mxu0 0.0
      %6671 = vmatprep.subr.mxu0 0.0
      %6672 = vmatpush2.msra.mxu0 0.0
      %6673 = vmatprep.subr.mxu0 0.0
      %6674 = vmatpush2.msra.mxu0 0.0
      %6675 = vmatprep.subr.mxu0 0.0
      %6676 = vmatpush2.msra.mxu0 0.0
      %6677 = vmatprep.subr.mxu0 0.0
      %6678 = vmatpush2.msra.mxu0 0.0
      %6679 = vmatprep.subr.mxu0 0.0
      %6680 = vmatpush2.msra.mxu0 0.0
      %6681 = vmatprep.subr.mxu0 0.0
      %6682 = vmatpush2.msra.mxu0 0.0
      %6683 = vmatprep.subr.mxu0 0.0
      %6684 = vmatpush2.msra.mxu0 0.0
      %6685 = vmatprep.subr.mxu0 0.0
      %6686 = vmatpush2.msra.mxu0 0.0
      %6687 = vmatprep.subr.mxu0 0.0
      %6688 = vmatpush2.msra.mxu0 0.0
      %6689 = vmatprep.mubr.f32.mxu0 0.0
      %6690 = vmatmul.mubr.f32.gmra.mxu0 %v6614
      %v6691 = vpop.f32.mrf.mxu0
      %v6692 = vadd.f32 0.0, %v6691
      %v6693 = vpop.f32.mrf.mxu0
      %6694 = vmatprep.mubr.f32.mxu0 0.0
      %6695 = vmatmul.mubr.f32.gmra.mxu0 %v6617
      %v6696 = vpop.f32.mrf.mxu0
      %v6697 = vadd.f32 0.0, %v6696
      %v6698 = vpop.f32.mrf.mxu0
      %6699 = vmatprep.mubr.f32.mxu0 0.0
      %6700 = vmatmul.mubr.f32.gmra.mxu0 %v6620
      %v6701 = vpop.f32.mrf.mxu0
      %v6702 = vadd.f32 0.0, %v6701
      %v6703 = vpop.f32.mrf.mxu0
      %6704 = vmatprep.mubr.f32.mxu0 0.0
      %6705 = vmatmul.mubr.f32.gmra.mxu0 %v6623
      %v6706 = vpop.f32.mrf.mxu0
      %v6707 = vadd.f32 0.0, %v6706
      %v6708 = vpop.f32.mrf.mxu0
      %6709 = vdwg.mxu0
      %v6710 = vadd.f32 %v6604, %v6692
      %v6711 = vadd.f32 %v6605, %v6697
      %v6712 = vadd.f32 %v6606, %v6702
      %v6713 = vadd.f32 %v6607, %v6707
      %s6714 = scalar_lea.vmem %s7, 512
      %v6715 = vld [vmem:[%s6714] sm:$0xff]
      %v6716 = vld [vmem:[%s6714 + $0x8] sm:$0xff]
      %v6717 = vld [vmem:[%s6714 + $0x10] sm:$0xff]
      %v6718 = vld [vmem:[%s6714 + $0x18] sm:$0xff]
      %6720 = vset.pattern.permute.xlu0 0
      %6721 = vperm.xlu0 %6720, %v6715
      %v6722 = vpop.permute.xlu0 %6721
      %6725 = vset.pattern.permute.xlu0 0
      %6726 = vperm.xlu0 %6725, %v6716
      %v6727 = vpop.permute.xlu0 %6726
      %6730 = vset.pattern.permute.xlu0 0
      %6731 = vperm.xlu0 %6730, %v6717
      %v6732 = vpop.permute.xlu0 %6731
      %6735 = vset.pattern.permute.xlu0 0
      %6736 = vperm.xlu0 %6735, %v6718
      %v6737 = vpop.permute.xlu0 %6736
      %v6739 = vmul.f32 %v6722, %v1920
      %v6740 = vmul.f32 %v6727, %v1920
      %v6741 = vmul.f32 %v6732, %v1920
      %v6742 = vmul.f32 %v6737, %v1920
      %v6743 = vadd.f32 %v6710, %v6739
      %v6744 = vadd.f32 %v6711, %v6740
      %v6745 = vadd.f32 %v6712, %v6741
      %v6746 = vadd.f32 %v6713, %v6742
      %s6747 = scalar_lea.vmem %s7, 544
      %v6748 = vld [vmem:[%s6747] sm:$0xff]
      %v6749 = vld [vmem:[%s6747 + $0x8] sm:$0xff]
      %v6750 = vld [vmem:[%s6747 + $0x10] sm:$0xff]
      %v6751 = vld [vmem:[%s6747 + $0x18] sm:$0xff]
      %6753 = vset.pattern.permute.xlu0 0
      %6754 = vperm.xlu0 %6753, %v6748
      %v6755 = vpop.permute.xlu0 %6754
      %6758 = vset.pattern.permute.xlu0 0
      %6759 = vperm.xlu0 %6758, %v6749
      %v6760 = vpop.permute.xlu0 %6759
      %6763 = vset.pattern.permute.xlu0 0
      %6764 = vperm.xlu0 %6763, %v6750
      %v6765 = vpop.permute.xlu0 %6764
      %6768 = vset.pattern.permute.xlu0 0
      %6769 = vperm.xlu0 %6768, %v6751
      %v6770 = vpop.permute.xlu0 %6769
      %v6772 = vmul.f32 %v6755, %v1584
      %v6773 = vmul.f32 %v6760, %v1584
      %v6774 = vmul.f32 %v6765, %v1584
      %v6775 = vmul.f32 %v6770, %v1584
      %v6776 = vadd.f32 %v6743, %v6772
      %v6777 = vadd.f32 %v6744, %v6773
      %v6778 = vadd.f32 %v6745, %v6774
      %v6779 = vadd.f32 %v6746, %v6775
      %vm6780 = vcmp.gt.f32.partialorder %v6776, 0.0
      %vm6781 = vcmp.gt.f32.partialorder %v6777, 0.0
      %vm6782 = vcmp.gt.f32.partialorder %v6778, 0.0
      %vm6783 = vcmp.gt.f32.partialorder %v6779, 0.0
      %v6784 = vmul.f32 %v6776, 0.2
      %v6785 = vmul.f32 %v6777, 0.2
      %v6786 = vmul.f32 %v6778, 0.2
      %v6787 = vmul.f32 %v6779, 0.2
      %v6788 = vsel %vm6780, %v6776, %v6784
      %v6789 = vsel %vm6781, %v6777, %v6785
      %v6790 = vsel %vm6782, %v6778, %v6786
      %v6791 = vsel %vm6783, %v6779, %v6787
      %v6792 = vld [vmem:[%s10] sm:$0xff]
      %v6793 = vld [vmem:[%s10 + $0x8] sm:$0xff]
      %v6794 = vld [vmem:[%s10 + $0x10] sm:$0xff]
      %v6795 = vld [vmem:[%s10 + $0x18] sm:$0xff]
      %6797 = vset.pattern.permute.xlu0 0
      %6798 = vperm.xlu0 %6797, %v6792
      %v6799 = vpop.permute.xlu0 %6798
      %6802 = vset.pattern.permute.xlu0 0
      %6803 = vperm.xlu0 %6802, %v6793
      %v6804 = vpop.permute.xlu0 %6803
      %6807 = vset.pattern.permute.xlu0 0
      %6808 = vperm.xlu0 %6807, %v6794
      %v6809 = vpop.permute.xlu0 %6808
      %6812 = vset.pattern.permute.xlu0 0
      %6813 = vperm.xlu0 %6812, %v6795
      %v6814 = vpop.permute.xlu0 %6813
      %v6816 = vadd.f32 %v6799, 0.0
      %v6817 = vadd.f32 %v6804, 0.0
      %v6818 = vadd.f32 %v6809, 0.0
      %v6819 = vadd.f32 %v6814, 0.0
      %v6820 = vld [vmem:[%s9] sm:$0xff]
      %v6821 = vld [vmem:[%s9 + $0x8] sm:$0xff]
      %v6822 = vld [vmem:[%s9 + $0x10] sm:$0xff]
      %v6823 = vld [vmem:[%s9 + $0x18] sm:$0xff]
      %6825 = vset.pattern.permute.xlu0 0
      %6826 = vperm.xlu0 %6825, %v6820
      %v6827 = vpop.permute.xlu0 %6826
      %6830 = vset.pattern.permute.xlu0 0
      %6831 = vperm.xlu0 %6830, %v6821
      %v6832 = vpop.permute.xlu0 %6831
      %6835 = vset.pattern.permute.xlu0 0
      %6836 = vperm.xlu0 %6835, %v6822
      %v6837 = vpop.permute.xlu0 %6836
      %6840 = vset.pattern.permute.xlu0 0
      %6841 = vperm.xlu0 %6840, %v6823
      %v6842 = vpop.permute.xlu0 %6841
      %v6844 = vlaneseq
      %v6845 = vshrl.u32 %v6844, 7
      %v6846 = vsub.s32 0, %v6845
      %v6847 = vrot.slane %v389, %v6846
      %v6848 = vmul.f32 %v6827, %v6847
      %v6849 = vmul.f32 %v6832, %v6847
      %v6850 = vmul.f32 %v6837, %v6847
      %v6851 = vmul.f32 %v6842, %v6847
      %v6852 = vadd.f32 %v6816, %v6848
      %v6853 = vadd.f32 %v6817, %v6849
      %v6854 = vadd.f32 %v6818, %v6850
      %v6855 = vadd.f32 %v6819, %v6851
      %6856 = vset.pattern.permute.xlu0 1
      %6857 = vperm.xlu0 %6856, %v6820
      %v6858 = vpop.permute.xlu0 %6857
      %6860 = vset.pattern.permute.xlu0 1
      %6861 = vperm.xlu0 %6860, %v6821
      %v6862 = vpop.permute.xlu0 %6861
      %6864 = vset.pattern.permute.xlu0 1
      %6865 = vperm.xlu0 %6864, %v6822
      %v6866 = vpop.permute.xlu0 %6865
      %6868 = vset.pattern.permute.xlu0 1
      %6869 = vperm.xlu0 %6868, %v6823
      %v6870 = vpop.permute.xlu0 %6869
      %v6872 = vlaneseq
      %v6873 = vshrl.u32 %v6872, 7
      %v6874 = vsub.s32 1, %v6873
      %v6875 = vrot.slane %v389, %v6874
      %v6876 = vmul.f32 %v6858, %v6875
      %v6877 = vmul.f32 %v6862, %v6875
      %v6878 = vmul.f32 %v6866, %v6875
      %v6879 = vmul.f32 %v6870, %v6875
      %v6880 = vadd.f32 %v6852, %v6876
      %v6881 = vadd.f32 %v6853, %v6877
      %v6882 = vadd.f32 %v6854, %v6878
      %v6883 = vadd.f32 %v6855, %v6879
      %6884 = vset.pattern.permute.xlu0 2
      %6885 = vperm.xlu0 %6884, %v6820
      %v6886 = vpop.permute.xlu0 %6885
      %6888 = vset.pattern.permute.xlu0 2
      %6889 = vperm.xlu0 %6888, %v6821
      %v6890 = vpop.permute.xlu0 %6889
      %6892 = vset.pattern.permute.xlu0 2
      %6893 = vperm.xlu0 %6892, %v6822
      %v6894 = vpop.permute.xlu0 %6893
      %6896 = vset.pattern.permute.xlu0 2
      %6897 = vperm.xlu0 %6896, %v6823
      %v6898 = vpop.permute.xlu0 %6897
      %v6900 = vlaneseq
      %v6901 = vshrl.u32 %v6900, 7
      %v6902 = vsub.s32 2, %v6901
      %v6903 = vrot.slane %v389, %v6902
      %v6904 = vmul.f32 %v6886, %v6903
      %v6905 = vmul.f32 %v6890, %v6903
      %v6906 = vmul.f32 %v6894, %v6903
      %v6907 = vmul.f32 %v6898, %v6903
      %v6908 = vadd.f32 %v6880, %v6904
      %v6909 = vadd.f32 %v6881, %v6905
      %v6910 = vadd.f32 %v6882, %v6906
      %v6911 = vadd.f32 %v6883, %v6907
      %6912 = vset.pattern.permute.xlu0 3
      %6913 = vperm.xlu0 %6912, %v6820
      %v6914 = vpop.permute.xlu0 %6913
      %6916 = vset.pattern.permute.xlu0 3
      %6917 = vperm.xlu0 %6916, %v6821
      %v6918 = vpop.permute.xlu0 %6917
      %6920 = vset.pattern.permute.xlu0 3
      %6921 = vperm.xlu0 %6920, %v6822
      %v6922 = vpop.permute.xlu0 %6921
      %6924 = vset.pattern.permute.xlu0 3
      %6925 = vperm.xlu0 %6924, %v6823
      %v6926 = vpop.permute.xlu0 %6925
      %v6928 = vlaneseq
      %v6929 = vshrl.u32 %v6928, 7
      %v6930 = vsub.s32 3, %v6929
      %v6931 = vrot.slane %v389, %v6930
      %v6932 = vmul.f32 %v6914, %v6931
      %v6933 = vmul.f32 %v6918, %v6931
      %v6934 = vmul.f32 %v6922, %v6931
      %v6935 = vmul.f32 %v6926, %v6931
      %v6936 = vadd.f32 %v6908, %v6932
      %v6937 = vadd.f32 %v6909, %v6933
      %v6938 = vadd.f32 %v6910, %v6934
      %v6939 = vadd.f32 %v6911, %v6935
      %v6940 = vadd.f32 %v6788, %v6936
      %v6941 = vadd.f32 %v6789, %v6937
      %v6942 = vadd.f32 %v6790, %v6938
      %v6943 = vadd.f32 %v6791, %v6939
      %6944 = vst [vmem:[%s386] sm:$0xff] %v6940
      %6945 = vst [vmem:[%s386 + $0x8] sm:$0xff] %v6941
      %6946 = vst [vmem:[%s386 + $0x10] sm:$0xff] %v6942
      %6947 = vst [vmem:[%s386 + $0x18] sm:$0xff] %v6943
      %p6948 = scmp.lt.s32.totalorder %s22, 1
      %s6949 = scalar_select %p6948, %s22, 1
      %s6950 = smul.addr %s6949, 4
      %s6951 = smul.addr %s6950, 8
      %s6952 = scalar_lea.vmem %s11, %s6951
      // Predicated region
      $region65: #{residual_cc_block.1} parent=63 // pred_check
        %p6953 = pneg %p276
      $region66: #{residual_cc_block.1} parent=63 // pred_check_branch
        %6955 = sbr.rel (%p6953) target = $region68
      $region67: #{residual_cc_block.1} parent=63 // pred_region
        _
      $region68: #{residual_cc_block.1} parent=63 // pred_fallthru
        _
    $region64: #{residual_cc_block.1} parent=5 // pred_fallthru
      _
    %p6956 = scmp.le.s32.totalorder 2, %s17
    // Predicated region
    $region69: #{residual_cc_block.1} parent=5 // pred_check
      %p6957 = pneg %p6956
    $region70: #{residual_cc_block.1} parent=5 // pred_check_branch
      %6959 = sbr.rel (%p6957) target = $region72
    $region71: #{residual_cc_block.1} parent=5 // pred_region
      %s6960 = ssub.s32 %s17, 2
      // Predicated region
      $region73: #{residual_cc_block.1} parent=71 // pred_check
        %p6961 = pneg %p282
      $region74: #{residual_cc_block.1} parent=71 // pred_check_branch
        %6963 = sbr.rel (%p6961) target = $region76
      $region75: #{residual_cc_block.1} parent=71 // pred_region
        %p6964 = scmp.lt.s32.totalorder %s23, 1
        %s6965 = scalar_select %p6964, %s23, 1
        %s6966 = smul.addr %s6965, 4
        %s6967 = smul.addr %s6966, 8
        %s6968 = scalar_lea.vmem %s11, %s6967
      $region76: #{residual_cc_block.1} parent=71 // pred_fallthru
        _
    $region72: #{residual_cc_block.1} parent=5 // pred_fallthru
      _
  $region6: #{residual_cc_block.1} parent=0 // loop_footer
    %s21 = sadd.s32 1, %s17
  $region7: #{residual_cc_block.1} parent=0 // loop_footer_branch
    %16 = sbr.rel target = $region3
  $region8: #{residual_cc_block.1} parent=0 // loop_exit
    _

</llo_original>
